<compile_context>
chip_gen: v7x
topology: tpu7x:2x2x1
jax: 0.10.0
libtpu: 0.0.40
codegen_flags: <defaults>
</compile_context>

<pallas_src>
import math
from functools import partial

import jax
import jax.numpy as jnp
from jax import lax
from jax.experimental import pallas as pl
from jax.experimental.pallas import tpu as pltpu


def _soft_triplet_kernel(x_ref, ctr_ref, tgt_ref, bias_ref, ids_ref, out_ref,
                         m_sc, s_sc, corr_sc,
                         *, K, CB, la_over_gamma, la_margin):
    """One (row block, class block) grid step with an online logsumexp carry."""
    cb = pl.program_id(1)

    @pl.when(cb == 0)
    def _init():
        m_sc[...] = jnp.full_like(m_sc, -jnp.inf)
        s_sc[...] = jnp.zeros_like(s_sc)
        corr_sc[...] = jnp.zeros_like(corr_sc)

    # ---- lane-dense MXU matmul: (Nb, dim)bf16 @ (dim, K*CB)bf16 -> f32 ----
    # Centers are already L2-normalized AND pre-scaled by gamma in the wrapper,
    # so sim_all holds gamma * <x_i, center>.
    sim_all = jnp.dot(x_ref[...], ctr_ref[...],
                      preferred_element_type=jnp.float32)            # (Nb, K*CB)

    # Column k*CB + j holds gamma*<x_i, center_k of class (cb*CB + j)>;
    # CB is a multiple of 128 -> static, lane-aligned slices.
    sims = [sim_all[:, k * CB:(k + 1) * CB] for k in range(K)]       # K x (Nb, CB)

    # ---- softmax over the K centers of each class (gamma already folded in) ----
    zmax = sims[0]
    for k in range(1, K):
        zmax = jnp.maximum(zmax, sims[k])
    exps = [jnp.exp(s - zmax) for s in sims]
    denom = exps[0]
    for k in range(1, K):
        denom = denom + exps[k]
    inv_denom = pl.reciprocal(denom, approx=True)                    # EUP slot
    weighted = exps[0] * sims[0]
    for k in range(1, K):
        weighted = weighted + exps[k] * sims[k]
    simclass_scaled = weighted * inv_denom                           # = gamma*simClass

    # ---- logits: la*simClass - la*margin at target, -1e30 at padded classes ----
    tgt = tgt_ref[...]                                               # (Nb, 1) int32
    is_tgt = ids_ref[...] == tgt                                     # (Nb, CB) bool
    logits = (la_over_gamma * simclass_scaled
              + bias_ref[...]                                        # 0 / -1e30
              - jnp.where(is_tgt, la_margin, 0.0))

    # ---- online logsumexp across class blocks ----
    m_old = m_sc[...]
    blk_max = jnp.max(logits, axis=-1, keepdims=True)
    m_new = jnp.maximum(m_old, blk_max)
    s_sc[...] = s_sc[...] * jnp.exp(m_old - m_new) + \
        jnp.sum(jnp.exp(logits - m_new), axis=-1, keepdims=True)
    corr_sc[...] = corr_sc[...] + jnp.sum(
        jnp.where(is_tgt, logits, 0.0), axis=-1, keepdims=True)
    m_sc[...] = m_new

    @pl.when(cb == pl.num_programs(1) - 1)
    def _finalize():
        # per-sample cross entropy: logsumexp - correct-class logit
        out_ref[...] = m_sc[...] + jnp.log(s_sc[...]) - corr_sc[...]


def soft_triplet_loss(x, target, fc, *, cN, K, la, gamma, tau, margin,
                      n_block=256, class_block=512,
                      vmem_limit_bytes=None, center_buffer_count=None):
    """x: (N, dim) f32, target: (N,) int32, fc: (dim, cN*K) f32 -> scalar loss."""
    N, dim = x.shape

    # ---- hoisted (depends only on fc): L2-normalize centers, column-wise ----
    norm = jnp.sqrt(jnp.sum(fc * fc, axis=0, keepdims=True))
    centers = fc / jnp.maximum(norm, 1e-12)                          # (dim, cN*K) f32

    # ---- hoisted (depends only on fc): intra-class center regularizer, f32 ----
    reg = jnp.float32(0.0)
    if tau > 0.0 and K > 1:
        ctr3r = jnp.transpose(centers.reshape(dim, cN, K), (1, 0, 2))  # (cN, dim, K)
        gram = jnp.einsum('cdk,cdl->ckl', ctr3r, ctr3r)                # (cN, K, K)
        rows = lax.broadcasted_iota(jnp.int32, (cN, K, K), 1)
        cols = lax.broadcasted_iota(jnp.int32, (cN, K, K), 2)
        arg = jnp.maximum(2.0 + 1e-05 - 2.0 * gram, 0.0)   # clamp: no sqrt(<0) NaN
        reg = jnp.sum(jnp.where(cols > rows, jnp.sqrt(arg), 0.0)) \
            / (cN * K * (K - 1.0))

    # ---- pad classes to a multiple of class_block; pack per-block center tiles ----
    CB = class_block
    n_cb = -(-cN // CB)
    cN_pad = n_cb * CB
    # Fold gamma into the centers so the kernel never multiplies by gamma.
    ctr3 = (centers * gamma).reshape(dim, cN, K)
    ctr3 = jnp.pad(ctr3, ((0, 0), (0, cN_pad - cN), (0, 0)))
    # (dim, n_cb, CB, K) -> (n_cb, dim, K, CB) -> (n_cb, dim, K*CB); bf16 for MXU
    ctr_blocks = jnp.transpose(ctr3.reshape(dim, n_cb, CB, K), (1, 0, 3, 2))
    ctr_blocks = ctr_blocks.reshape(n_cb, dim, K * CB).astype(jnp.bfloat16)

    # ---- precomputed per-class-block metadata (tiny tiles, DMA fully hidden) ----
    cls_ids = jnp.arange(cN_pad, dtype=jnp.int32).reshape(n_cb, 1, CB)
    pad_bias = jnp.where(jnp.arange(cN_pad) < cN, 0.0, -1e30)
    pad_bias = pad_bias.astype(jnp.float32).reshape(n_cb, 1, CB)

    # ---- pad rows to a multiple of n_block; cast x to bf16 once here ----
    n_nb = -(-N // n_block)
    N_pad = n_nb * n_block
    x_p = jnp.pad(x, ((0, N_pad - N), (0, 0))).astype(jnp.bfloat16)
    tgt_p = jnp.pad(target.astype(jnp.int32), (0, N_pad - N)).reshape(N_pad, 1)

    kernel = partial(_soft_triplet_kernel, K=K, CB=CB,
                     la_over_gamma=la / gamma, la_margin=la * margin)

    # Optional deeper buffering on the (large) center stream, e.g. for v5e.
    ctr_spec_kwargs = {}
    if center_buffer_count is not None and center_buffer_count != 2:
        ctr_spec_kwargs["pipeline_mode"] = pl.Buffered(center_buffer_count)
    ctr_spec = pl.BlockSpec((None, dim, K * CB), lambda nb, cb: (cb, 0, 0),
                            **ctr_spec_kwargs)

    per_sample = pl.pallas_call(
        kernel,
        out_shape=jax.ShapeDtypeStruct((N_pad, 1), jnp.float32),
        grid_spec=pltpu.PrefetchScalarGridSpec(
            num_scalar_prefetch=0,
            grid=(n_nb, n_cb),                       # rows (parallel) x classes (reduce)
            in_specs=[
                pl.BlockSpec((n_block, dim), lambda nb, cb: (nb, 0)),     # x rows (bf16)
                ctr_spec,                                                 # centers
                pl.BlockSpec((n_block, 1), lambda nb, cb: (nb, 0)),       # targets
                pl.BlockSpec((None, 1, CB), lambda nb, cb: (cb, 0, 0)),   # pad bias
                pl.BlockSpec((None, 1, CB), lambda nb, cb: (cb, 0, 0)),   # class ids
            ],
            out_specs=pl.BlockSpec((n_block, 1), lambda nb, cb: (nb, 0)),
            scratch_shapes=[
                pltpu.VMEM((n_block, 1), jnp.float32),   # running max
                pltpu.VMEM((n_block, 1), jnp.float32),   # running sum-exp
                pltpu.VMEM((n_block, 1), jnp.float32),   # correct-class logit
            ],
        ),
        compiler_params=pltpu.CompilerParams(
            dimension_semantics=("parallel", "arbitrary"),
            vmem_limit_bytes=vmem_limit_bytes),
    )(x_p, ctr_blocks, tgt_p, pad_bias, cls_ids)

    loss = jnp.sum(per_sample[:N, 0]) / float(N)
    if tau > 0.0 and K > 1:
        loss = loss + tau * reg
    return loss


def _reference(x, target, fc, *, cN, K, la, gamma, tau, margin):
    """Pure-JAX f32 reference mirroring the PyTorch module."""
    N = x.shape[0]
    centers = fc / jnp.maximum(jnp.linalg.norm(fc, axis=0, keepdims=True), 1e-12)
    simStruc = (x @ centers).reshape(N, cN, K)
    prob = jax.nn.softmax(simStruc * gamma, axis=2)
    simClass = jnp.sum(prob * simStruc, axis=2)
    marginM = jnp.zeros_like(simClass).at[jnp.arange(N), target].set(margin)
    logits = la * (simClass - marginM)
    lse = jax.scipy.special.logsumexp(logits, axis=1)
    correct = logits[jnp.arange(N), target]
    loss = jnp.mean(lse - correct)
    if tau > 0.0 and K > 1:
        ctr3 = jnp.transpose(centers.reshape(-1, cN, K), (1, 0, 2))
        gram = jnp.einsum('cdk,cdl->ckl', ctr3, ctr3)
        rows = lax.broadcasted_iota(jnp.int32, (cN, K, K), 1)
        cols = lax.broadcasted_iota(jnp.int32, (cN, K, K), 2)
        vals = jnp.sqrt(jnp.maximum(2.0 + 1e-05 - 2.0 * gram, 0.0))
        reg = jnp.sum(jnp.where(cols > rows, vals, 0.0)) / (cN * K * (K - 1.0))
        loss = loss + tau * reg
    return loss


if __name__ == "__main__":
    # Small, deterministic config consistent with the module's __init__.
    # Sized so the performance-default blocks (n_block=256, class_block=512)
    # still exercise multiple row blocks (v7x 2-TC parallel axis) and multiple
    # class blocks (online logsumexp reduction).
    N = 300         # batch  -> 2 row blocks of 256
    dim = 64        # args.emb_size
    cN = 700        # args.num_classes -> 2 class blocks of 512 after padding
    K = 3           # args.K_stl
    la = 20.0       # args.lamda_stl
    gamma = 1.0 / 0.1   # 1 / args.gamma_stl
    tau = 0.2       # args.tau_stl
    margin = 0.01   # args.margin_stl

    key = jax.random.PRNGKey(0)
    kx, kt, kw = jax.random.split(key, 3)

    # kaiming_uniform_(fc, a=sqrt(5)) on a (dim, cN*K) tensor => U(-b, b),
    # b = 1/sqrt(fan_in) with fan_in = cN*K (deterministic synthetic init).
    bound = 1.0 / math.sqrt(cN * K)
    fc = jax.random.uniform(kw, (dim, cN * K), jnp.float32, -bound, bound)

    x = jax.random.normal(kx, (N, dim), jnp.float32)
    target = jax.random.randint(kt, (N,), 0, cN, jnp.int32)

    loss = soft_triplet_loss(x, target, fc, cN=cN, K=K, la=la, gamma=gamma,
                             tau=tau, margin=margin)   # defaults: 256 / 512
    loss = jax.block_until_ready(loss)

    ref = jax.block_until_ready(
        _reference(x, target, fc, cN=cN, K=K, la=la, gamma=gamma,
                   tau=tau, margin=margin))
    assert bool(jnp.isfinite(loss)), "kernel produced non-finite loss"
    assert abs(float(loss) - float(ref)) < 5e-2 * (1.0 + abs(float(ref))), \
        f"kernel {float(loss)} vs reference {float(ref)}"
    print("KERNEL_OK")
</pallas_src>

<mosaic_0001>
module attributes {stable_mosaic.version = 11 : i64} {
  func.func @_soft_triplet_kernel(%arg0: i32, %arg1: i32, %arg2: memref<256x64xbf16, #tpu.memory_space<vmem>>, %arg3: memref<1x64x1536xbf16, #tpu.memory_space<vmem>>, %arg4: memref<256x1xi32, #tpu.memory_space<vmem>>, %arg5: memref<1x1x512xf32, #tpu.memory_space<vmem>>, %arg6: memref<1x1x512xi32, #tpu.memory_space<vmem>>, %arg7: memref<256x1xf32, #tpu.memory_space<vmem>>, %arg8: memref<256x1xf32, #tpu.memory_space<vmem>>, %arg9: memref<256x1xf32, #tpu.memory_space<vmem>>, %arg10: memref<256x1xf32, #tpu.memory_space<vmem>>) attributes {dimension_semantics = [#tpu.dimension_semantics<parallel>, #tpu.dimension_semantics<arbitrary>], iteration_bounds = array<i64: 2, 2>, scalar_prefetch = 0 : i64, scratch_operands = 3 : i64, tpu.core_type = #tpu.core_type<tc>, window_params = [{transform_indices = @transform_0, window_bounds = array<i64: 256, 64>}, {transform_indices = @transform_1, window_bounds = array<i64: 1, 64, 1536>}, {transform_indices = @transform_2, window_bounds = array<i64: 256, 1>}, {transform_indices = @transform_3, window_bounds = array<i64: 1, 1, 512>}, {transform_indices = @transform_4, window_bounds = array<i64: 1, 1, 512>}, {transform_indices = @transform_5, window_bounds = array<i64: 256, 1>}]} {
    %c0_i32 = arith.constant 0 : i32
    %0 = arith.cmpi eq, %arg1, %c0_i32 : i32
    %1 = arith.extui %0 : i1 to i32
    %c0_i32_0 = arith.constant 0 : i32
    %2 = arith.cmpi ne, %1, %c0_i32_0 : i32
    scf.if %2 {
      %cst_33 = arith.constant 0xFF800000 : f32
      %69 = vector.broadcast %cst_33 : f32 to vector<256x1xf32>
      %c0_34 = arith.constant 0 : index
      %c0_35 = arith.constant 0 : index
      %70 = vector.load %arg8[%c0_34, %c0_35] : memref<256x1xf32, #tpu.memory_space<vmem>>, vector<256x1xf32>
      tpu.vector_store %arg8[%c0_34, %c0_35], %69 {strides = array<i32>} : memref<256x1xf32, #tpu.memory_space<vmem>>, vector<256x1xf32>,
      %cst_36 = arith.constant 0.000000e+00 : f32
      %71 = vector.broadcast %cst_36 : f32 to vector<256x1xf32>
      %c0_37 = arith.constant 0 : index
      %c0_38 = arith.constant 0 : index
      %72 = vector.load %arg9[%c0_37, %c0_38] : memref<256x1xf32, #tpu.memory_space<vmem>>, vector<256x1xf32>
      tpu.vector_store %arg9[%c0_37, %c0_38], %71 {strides = array<i32>} : memref<256x1xf32, #tpu.memory_space<vmem>>, vector<256x1xf32>,
      %cst_39 = arith.constant 0.000000e+00 : f32
      %73 = vector.broadcast %cst_39 : f32 to vector<256x1xf32>
      %c0_40 = arith.constant 0 : index
      %c0_41 = arith.constant 0 : index
      %74 = vector.load %arg10[%c0_40, %c0_41] : memref<256x1xf32, #tpu.memory_space<vmem>>, vector<256x1xf32>
      tpu.vector_store %arg10[%c0_40, %c0_41], %73 {strides = array<i32>} : memref<256x1xf32, #tpu.memory_space<vmem>>, vector<256x1xf32>,
    } else {
    }
    %c0 = arith.constant 0 : index
    %c0_1 = arith.constant 0 : index
    %3 = vector.load %arg2[%c0, %c0_1] : memref<256x64xbf16, #tpu.memory_space<vmem>>, vector<256x64xbf16>
    %c0_2 = arith.constant 0 : index
    %c0_3 = arith.constant 0 : index
    %c0_4 = arith.constant 0 : index
    %4 = vector.load %arg3[%c0_2, %c0_3, %c0_4] : memref<1x64x1536xbf16, #tpu.memory_space<vmem>>, vector<1x64x1536xbf16>
    %5 = vector.shape_cast %4 : vector<1x64x1536xbf16> to vector<64x1536xbf16>
    %cst = arith.constant dense<0.000000e+00> : vector<256x1536xf32>
    %6 = tpu.matmul %3, %5, %cst {dimension_numbers = #tpu.dot_dimension_numbers<[1], [0], [0], [1], [0, 0, 1, 1], [], []>} : vector<256x64xbf16>, vector<64x1536xbf16>, vector<256x1536xf32> -> vector<256x1536xf32>
    %7 = vector.extract_strided_slice %6 {offsets = [0, 0], sizes = [256, 512], strides = [1, 1]} : vector<256x1536xf32> to vector<256x512xf32>
    %8 = vector.extract_strided_slice %6 {offsets = [0, 512], sizes = [256, 512], strides = [1, 1]} : vector<256x1536xf32> to vector<256x512xf32>
    %9 = vector.extract_strided_slice %6 {offsets = [0, 1024], sizes = [256, 512], strides = [1, 1]} : vector<256x1536xf32> to vector<256x512xf32>
    %10 = arith.maximumf %7, %8 : vector<256x512xf32>
    %11 = arith.maximumf %10, %9 : vector<256x512xf32>
    %12 = arith.subf %7, %11 : vector<256x512xf32>
    %13 = math.exp %12 : vector<256x512xf32>
    %14 = arith.subf %8, %11 : vector<256x512xf32>
    %15 = math.exp %14 : vector<256x512xf32>
    %16 = arith.subf %9, %11 : vector<256x512xf32>
    %17 = math.exp %16 : vector<256x512xf32>
    %18 = arith.addf %13, %15 : vector<256x512xf32>
    %19 = arith.addf %18, %17 : vector<256x512xf32>
    %20 = tpu.reciprocal %19 {approx = true} : vector<256x512xf32> -> vector<256x512xf32>
    %21 = arith.mulf %13, %7 : vector<256x512xf32>
    %22 = arith.mulf %15, %8 : vector<256x512xf32>
    %23 = arith.addf %21, %22 : vector<256x512xf32>
    %24 = arith.mulf %17, %9 : vector<256x512xf32>
    %25 = arith.addf %23, %24 : vector<256x512xf32>
    %26 = arith.mulf %25, %20 : vector<256x512xf32>
    %c0_5 = arith.constant 0 : index
    %c0_6 = arith.constant 0 : index
    %27 = vector.load %arg4[%c0_5, %c0_6] : memref<256x1xi32, #tpu.memory_space<vmem>>, vector<256x1xi32>
    %c0_7 = arith.constant 0 : index
    %c0_8 = arith.constant 0 : index
    %c0_9 = arith.constant 0 : index
    %28 = vector.load %arg6[%c0_7, %c0_8, %c0_9] : memref<1x1x512xi32, #tpu.memory_space<vmem>>, vector<1x1x512xi32>
    %29 = vector.shape_cast %28 : vector<1x1x512xi32> to vector<1x512xi32>
    %30 = vector.broadcast %29 : vector<1x512xi32> to vector<256x512xi32>
    %31 = vector.broadcast %27 : vector<256x1xi32> to vector<256x512xi32>
    %32 = arith.cmpi eq, %30, %31 : vector<256x512xi32>
    %cst_10 = arith.constant 2.000000e+00 : f32
    %33 = vector.broadcast %cst_10 : f32 to vector<256x512xf32>
    %34 = arith.mulf %33, %26 : vector<256x512xf32>
    %c0_11 = arith.constant 0 : index
    %c0_12 = arith.constant 0 : index
    %c0_13 = arith.constant 0 : index
    %35 = vector.load %arg5[%c0_11, %c0_12, %c0_13] : memref<1x1x512xf32, #tpu.memory_space<vmem>>, vector<1x1x512xf32>
    %36 = vector.shape_cast %35 : vector<1x1x512xf32> to vector<1x512xf32>
    %37 = vector.broadcast %36 : vector<1x512xf32> to vector<256x512xf32>
    %38 = arith.addf %34, %37 : vector<256x512xf32>
    %cst_14 = arith.constant 2.000000e-01 : f32
    %cst_15 = arith.constant 0.000000e+00 : f32
    %39 = vector.broadcast %cst_14 : f32 to vector<256x512xf32>
    %40 = vector.broadcast %cst_15 : f32 to vector<256x512xf32>
    %41 = arith.select %32, %39, %40 : vector<256x512xi1>, vector<256x512xf32>
    %42 = arith.subf %38, %41 : vector<256x512xf32>
    %c0_16 = arith.constant 0 : index
    %c0_17 = arith.constant 0 : index
    %43 = vector.load %arg8[%c0_16, %c0_17] : memref<256x1xf32, #tpu.memory_space<vmem>>, vector<256x1xf32>
    %cst_18 = arith.constant dense<0xFF800000> : vector<256xf32>
    %44 = vector.multi_reduction <maximumf>, %42, %cst_18 [1] : vector<256x512xf32> to vector<256xf32>
    %45 = vector.shape_cast %44 : vector<256xf32> to vector<256x1xf32>
    %46 = arith.maximumf %43, %45 : vector<256x1xf32>
    %c0_19 = arith.constant 0 : index
    %c0_20 = arith.constant 0 : index
    %47 = vector.load %arg9[%c0_19, %c0_20] : memref<256x1xf32, #tpu.memory_space<vmem>>, vector<256x1xf32>
    %48 = arith.subf %43, %46 : vector<256x1xf32>
    %49 = math.exp %48 : vector<256x1xf32>
    %50 = arith.mulf %47, %49 : vector<256x1xf32>
    %51 = vector.broadcast %46 : vector<256x1xf32> to vector<256x512xf32>
    %52 = arith.subf %42, %51 : vector<256x512xf32>
    %53 = math.exp %52 : vector<256x512xf32>
    %cst_21 = arith.constant dense<0.000000e+00> : vector<256xf32>
    %54 = vector.multi_reduction <add>, %53, %cst_21 [1] : vector<256x512xf32> to vector<256xf32>
    %55 = vector.shape_cast %54 : vector<256xf32> to vector<256x1xf32>
    %56 = arith.addf %50, %55 : vector<256x1xf32>
    %c0_22 = arith.constant 0 : index
    %c0_23 = arith.constant 0 : index
    %57 = vector.load %arg9[%c0_22, %c0_23] : memref<256x1xf32, #tpu.memory_space<vmem>>, vector<256x1xf32>
    tpu.vector_store %arg9[%c0_22, %c0_23], %56 {strides = array<i32>} : memref<256x1xf32, #tpu.memory_space<vmem>>, vector<256x1xf32>,
    %c0_24 = arith.constant 0 : index
    %c0_25 = arith.constant 0 : index
    %58 = vector.load %arg10[%c0_24, %c0_25] : memref<256x1xf32, #tpu.memory_space<vmem>>, vector<256x1xf32>
    %cst_26 = arith.constant 0.000000e+00 : f32
    %59 = vector.broadcast %cst_26 : f32 to vector<256x512xf32>
    %60 = arith.select %32, %42, %59 : vector<256x512xi1>, vector<256x512xf32>
    %cst_27 = arith.constant dense<0.000000e+00> : vector<256xf32>
    %61 = vector.multi_reduction <add>, %60, %cst_27 [1] : vector<256x512xf32> to vector<256xf32>
    %62 = vector.shape_cast %61 : vector<256xf32> to vector<256x1xf32>
    %63 = arith.addf %58, %62 : vector<256x1xf32>
    %c0_28 = arith.constant 0 : index
    %c0_29 = arith.constant 0 : index
    %64 = vector.load %arg10[%c0_28, %c0_29] : memref<256x1xf32, #tpu.memory_space<vmem>>, vector<256x1xf32>
    tpu.vector_store %arg10[%c0_28, %c0_29], %63 {strides = array<i32>} : memref<256x1xf32, #tpu.memory_space<vmem>>, vector<256x1xf32>,
    %c0_30 = arith.constant 0 : index
    %c0_31 = arith.constant 0 : index
    %65 = vector.load %arg8[%c0_30, %c0_31] : memref<256x1xf32, #tpu.memory_space<vmem>>, vector<256x1xf32>
    tpu.vector_store %arg8[%c0_30, %c0_31], %46 {strides = array<i32>} : memref<256x1xf32, #tpu.memory_space<vmem>>, vector<256x1xf32>,
    %c1_i32 = arith.constant 1 : i32
    %66 = arith.cmpi eq, %arg1, %c1_i32 : i32
    %67 = arith.extui %66 : i1 to i32
    %c0_i32_32 = arith.constant 0 : i32
    %68 = arith.cmpi ne, %67, %c0_i32_32 : i32
    scf.if %68 {
      %c0_33 = arith.constant 0 : index
      %c0_34 = arith.constant 0 : index
      %69 = vector.load %arg8[%c0_33, %c0_34] : memref<256x1xf32, #tpu.memory_space<vmem>>, vector<256x1xf32>
      %c0_35 = arith.constant 0 : index
      %c0_36 = arith.constant 0 : index
      %70 = vector.load %arg9[%c0_35, %c0_36] : memref<256x1xf32, #tpu.memory_space<vmem>>, vector<256x1xf32>
      %71 = math.log %70 : vector<256x1xf32>
      %72 = arith.addf %69, %71 : vector<256x1xf32>
      %c0_37 = arith.constant 0 : index
      %c0_38 = arith.constant 0 : index
      %73 = vector.load %arg10[%c0_37, %c0_38] : memref<256x1xf32, #tpu.memory_space<vmem>>, vector<256x1xf32>
      %74 = arith.subf %72, %73 : vector<256x1xf32>
      %c0_39 = arith.constant 0 : index
      %c0_40 = arith.constant 0 : index
      %75 = vector.load %arg7[%c0_39, %c0_40] : memref<256x1xf32, #tpu.memory_space<vmem>>, vector<256x1xf32>
      tpu.vector_store %arg7[%c0_39, %c0_40], %74 {strides = array<i32>} : memref<256x1xf32, #tpu.memory_space<vmem>>, vector<256x1xf32>,
    } else {
    }
    return
  }
  func.func @transform_0(%arg0: i32, %arg1: i32) -> (i32, i32) {
    %c0_i32 = arith.constant 0 : i32
    %c0_i32_0 = arith.constant 0 : i32
    return %arg0, %c0_i32 : i32, i32
  }
  func.func @transform_1(%arg0: i32, %arg1: i32) -> (i32, i32, i32) {
    %c0_i32 = arith.constant 0 : i32
    %c0_i32_0 = arith.constant 0 : i32
    %c0_i32_1 = arith.constant 0 : i32
    return %arg1, %c0_i32, %c0_i32_0 : i32, i32, i32
  }
  func.func @transform_2(%arg0: i32, %arg1: i32) -> (i32, i32) {
    %c0_i32 = arith.constant 0 : i32
    %c0_i32_0 = arith.constant 0 : i32
    return %arg0, %c0_i32 : i32, i32
  }
  func.func @transform_3(%arg0: i32, %arg1: i32) -> (i32, i32, i32) {
    %c0_i32 = arith.constant 0 : i32
    %c0_i32_0 = arith.constant 0 : i32
    %c0_i32_1 = arith.constant 0 : i32
    return %arg1, %c0_i32, %c0_i32_0 : i32, i32, i32
  }
  func.func @transform_4(%arg0: i32, %arg1: i32) -> (i32, i32, i32) {
    %c0_i32 = arith.constant 0 : i32
    %c0_i32_0 = arith.constant 0 : i32
    %c0_i32_1 = arith.constant 0 : i32
    return %arg1, %c0_i32, %c0_i32_0 : i32, i32, i32
  }
  func.func @transform_5(%arg0: i32, %arg1: i32) -> (i32, i32) {
    %c0_i32 = arith.constant 0 : i32
    %c0_i32_0 = arith.constant 0 : i32
    return %arg0, %c0_i32 : i32, i32
  }
}

</mosaic_0001>

<llo_original>
// kernel: tpu_custom_call.1
$region0: #{tpu_custom_call.1}
  #allocation0 [shape = 'u32[]', space=smem, size = 0x4, offset = 0x4, fixed_abs, tag = 'smem constant byte address 0x4 - core index']
  #allocation1 [shape = 'u32[144,128]{1,0:T(1,128)}', space=vmem, size = 0x12000, scoped, tag = 'internal scratch']
  #allocation2 [shape = 'f32[256,1]{1,0:T(8,128)}', space=vmem, size = 0x20000, scoped, tag = 'scratch operand']
  #allocation3 [shape = 'f32[256,1]{1,0:T(8,128)}', space=vmem, size = 0x20000, scoped, tag = 'scratch operand']
  #allocation4 [shape = 'f32[256,1]{1,0:T(8,128)}', space=vmem, size = 0x20000, scoped, tag = 'scratch operand']
  %s0 = inlined_call_operand.vmem [shape: bf16[512,64], index: 0, kind: input, shape index: {}]
  %s1 = inlined_call_operand.vmem [shape: bf16[2,64,1536], index: 1, kind: input, shape index: {}]
  %s2 = inlined_call_operand.vmem [shape: s32[512,1], index: 2, kind: input, shape index: {}]
  %s3 = inlined_call_operand.vmem [shape: f32[2,1,512], index: 3, kind: input, shape index: {}]
  %s4 = inlined_call_operand.vmem [shape: s32[2,1,512], index: 4, kind: input, shape index: {}]
  %s5 = inlined_call_operand.vmem [shape: f32[512,1], index: 5, kind: output, shape index: {}]
  %s6 = sld [smem:[#allocation0]]
  $region61: #{tpu_custom_call.1} parent=0
    _
  %s8 = ssub.s32 1, %s6
  %s9 = scalar_select 0, %s8, %s6
  loop: start=0, step=1, limit=6
  $region2: #{tpu_custom_call.1} parent=0 // loop_pre_header
    _
  $region3: #{tpu_custom_call.1} parent=0 // loop_header
    %s11 = sphi 0, %s15
    %p12 = scmp.ge.s32.totalorder %s11, 6
    %s18 = sphi 0, %s30
    %s19 = sphi 0, %s26
    %s20 = sphi 0, %s18
    %s21 = sphi 0, %s19
    %s22 = sphi 0, %s20
    %s23 = sphi 0, %s21
    %s33 = sphi 0, %s35
    %s36 = sphi 0, %s33
    %s37 = sphi 0, %s36
    %s53 = sphi 0, %s37
    %s59 = sphi 0, %s61
    %s62 = sphi 0, %s59
    %s63 = sphi 0, %s62
    %s79 = sphi 0, %s63
    %s85 = sphi 0, %s87
    %s88 = sphi 0, %s85
    %s89 = sphi 0, %s88
    %s105 = sphi 0, %s89
    %s111 = sphi 0, %s113
    %s114 = sphi 0, %s111
    %s115 = sphi 0, %s114
    %s131 = sphi 0, %s115
    %s137 = sphi 0, %s139
    %s140 = sphi 0, %s137
    %s141 = sphi 0, %s140
    %s157 = sphi 0, %s141
    %s163 = sphi 0, %s165
    %s166 = sphi 0, %s163
    %s167 = sphi 0, %s166
    %s183 = sphi 0, %s167
  $region4: #{tpu_custom_call.1} parent=0 // loop_header_branch
    %14 = sbr.rel (%p12) target = $region8
  $region5: #{tpu_custom_call.1} parent=0 // loop_body
    %s16 = ssub.s32 %s11, 1
    %s17 = ssub.s32 %s11, 2
    %s24 = sadd.s32 1, %s19
    %p25 = scmp.ge.s32.totalorder %s24, 2
    %s26 = scalar_select %p25, 0, %s24
    %s27 = sadd.s32 1, %s18
    %s28 = scalar_select %p25, %s27, %s18
    %p29 = scmp.ge.s32.totalorder %s28, 2
    %s30 = scalar_select %p29, 0, %s28
    %s31 = ssub.s32 %s18, %s30
    %p32 = scmp.eq.s32.totalorder %s31, 0
    %s34 = sadd.s32 %s33, 1
    %s35 = scalar_select %p32, %s33, %s34
    %p38 = pneg %p32
    %p39 = scmp.eq.s32.totalorder %s11, 3
    %p40 = por %p38, %p39
    %p41 = scmp.ne.s32.totalorder %s33, %s36
    %p42 = scmp.eq.s32.totalorder %s11, 0
    %p43 = por %p41, %p42
    %p44 = scmp.ne.s32.totalorder %s33, %s36
    %p45 = scmp.eq.s32.totalorder %s16, 3
    %p46 = por %p44, %p45
    %p47 = scmp.ne.s32.totalorder %s36, %s37
    %p48 = scmp.eq.s32.totalorder %s16, 0
    %p49 = por %p47, %p48
    %p50 = scmp.ne.s32.totalorder %s36, %s37
    %p51 = scmp.eq.s32.totalorder %s17, 3
    %p52 = por %p50, %p51
    %p54 = scmp.ne.s32.totalorder %s37, %s53
    %p55 = scmp.eq.s32.totalorder %s17, 0
    %p56 = por %p54, %p55
    %s57 = ssub.s32 %s19, %s26
    %p58 = scmp.eq.s32.totalorder %s57, 0
    %s60 = sadd.s32 %s59, 1
    %s61 = scalar_select %p58, %s59, %s60
    %p64 = pneg %p58
    %p65 = scmp.eq.s32.totalorder %s11, 3
    %p66 = por %p64, %p65
    %p67 = scmp.ne.s32.totalorder %s59, %s62
    %p68 = scmp.eq.s32.totalorder %s11, 0
    %p69 = por %p67, %p68
    %p70 = scmp.ne.s32.totalorder %s59, %s62
    %p71 = scmp.eq.s32.totalorder %s16, 3
    %p72 = por %p70, %p71
    %p73 = scmp.ne.s32.totalorder %s62, %s63
    %p74 = scmp.eq.s32.totalorder %s16, 0
    %p75 = por %p73, %p74
    %p76 = scmp.ne.s32.totalorder %s62, %s63
    %p77 = scmp.eq.s32.totalorder %s17, 3
    %p78 = por %p76, %p77
    %p80 = scmp.ne.s32.totalorder %s63, %s79
    %p81 = scmp.eq.s32.totalorder %s17, 0
    %p82 = por %p80, %p81
    %s83 = ssub.s32 %s18, %s30
    %p84 = scmp.eq.s32.totalorder %s83, 0
    %s86 = sadd.s32 %s85, 1
    %s87 = scalar_select %p84, %s85, %s86
    %p90 = pneg %p84
    %p91 = scmp.eq.s32.totalorder %s11, 3
    %p92 = por %p90, %p91
    %p93 = scmp.ne.s32.totalorder %s85, %s88
    %p94 = scmp.eq.s32.totalorder %s11, 0
    %p95 = por %p93, %p94
    %p96 = scmp.ne.s32.totalorder %s85, %s88
    %p97 = scmp.eq.s32.totalorder %s16, 3
    %p98 = por %p96, %p97
    %p99 = scmp.ne.s32.totalorder %s88, %s89
    %p100 = scmp.eq.s32.totalorder %s16, 0
    %p101 = por %p99, %p100
    %p102 = scmp.ne.s32.totalorder %s88, %s89
    %p103 = scmp.eq.s32.totalorder %s17, 3
    %p104 = por %p102, %p103
    %p106 = scmp.ne.s32.totalorder %s89, %s105
    %p107 = scmp.eq.s32.totalorder %s17, 0
    %p108 = por %p106, %p107
    %s109 = ssub.s32 %s19, %s26
    %p110 = scmp.eq.s32.totalorder %s109, 0
    %s112 = sadd.s32 %s111, 1
    %s113 = scalar_select %p110, %s111, %s112
    %p116 = pneg %p110
    %p117 = scmp.eq.s32.totalorder %s11, 3
    %p118 = por %p116, %p117
    %p119 = scmp.ne.s32.totalorder %s111, %s114
    %p120 = scmp.eq.s32.totalorder %s11, 0
    %p121 = por %p119, %p120
    %p122 = scmp.ne.s32.totalorder %s111, %s114
    %p123 = scmp.eq.s32.totalorder %s16, 3
    %p124 = por %p122, %p123
    %p125 = scmp.ne.s32.totalorder %s114, %s115
    %p126 = scmp.eq.s32.totalorder %s16, 0
    %p127 = por %p125, %p126
    %p128 = scmp.ne.s32.totalorder %s114, %s115
    %p129 = scmp.eq.s32.totalorder %s17, 3
    %p130 = por %p128, %p129
    %p132 = scmp.ne.s32.totalorder %s115, %s131
    %p133 = scmp.eq.s32.totalorder %s17, 0
    %p134 = por %p132, %p133
    %s135 = ssub.s32 %s19, %s26
    %p136 = scmp.eq.s32.totalorder %s135, 0
    %s138 = sadd.s32 %s137, 1
    %s139 = scalar_select %p136, %s137, %s138
    %p142 = pneg %p136
    %p143 = scmp.eq.s32.totalorder %s11, 3
    %p144 = por %p142, %p143
    %p145 = scmp.ne.s32.totalorder %s137, %s140
    %p146 = scmp.eq.s32.totalorder %s11, 0
    %p147 = por %p145, %p146
    %p148 = scmp.ne.s32.totalorder %s137, %s140
    %p149 = scmp.eq.s32.totalorder %s16, 3
    %p150 = por %p148, %p149
    %p151 = scmp.ne.s32.totalorder %s140, %s141
    %p152 = scmp.eq.s32.totalorder %s16, 0
    %p153 = por %p151, %p152
    %p154 = scmp.ne.s32.totalorder %s140, %s141
    %p155 = scmp.eq.s32.totalorder %s17, 3
    %p156 = por %p154, %p155
    %p158 = scmp.ne.s32.totalorder %s141, %s157
    %p159 = scmp.eq.s32.totalorder %s17, 0
    %p160 = por %p158, %p159
    %s161 = ssub.s32 %s18, %s30
    %p162 = scmp.eq.s32.totalorder %s161, 0
    %s164 = sadd.s32 %s163, 1
    %s165 = scalar_select %p162, %s163, %s164
    %p168 = pneg %p162
    %p169 = scmp.eq.s32.totalorder %s11, 3
    %p170 = por %p168, %p169
    %p171 = scmp.ne.s32.totalorder %s163, %s166
    %p172 = scmp.eq.s32.totalorder %s11, 0
    %p173 = por %p171, %p172
    %p174 = scmp.ne.s32.totalorder %s163, %s166
    %p175 = scmp.eq.s32.totalorder %s16, 3
    %p176 = por %p174, %p175
    %p177 = scmp.ne.s32.totalorder %s166, %s167
    %p178 = scmp.eq.s32.totalorder %s16, 0
    %p179 = por %p177, %p178
    %p180 = scmp.ne.s32.totalorder %s166, %s167
    %p181 = scmp.eq.s32.totalorder %s17, 3
    %p182 = por %p180, %p181
    %p184 = scmp.ne.s32.totalorder %s167, %s183
    %p185 = scmp.eq.s32.totalorder %s17, 0
    %p186 = por %p184, %p185
    %p187 = scmp.le.s32.totalorder 1, %s11
    %p188 = scmp.lt.s32.totalorder %s11, 5
    %p189 = pnand %p187, %p188
    %p190 = pneg %p189
    // Predicated region
    $region9: #{tpu_custom_call.1} parent=5 // pred_check
      _
    $region10: #{tpu_custom_call.1} parent=5 // pred_check_branch
      %192 = sbr.rel (%p189) target = $region12
    $region11: #{tpu_custom_call.1} parent=5 // pred_region
      %s193 = ssub.s32 %s11, 1
    $region12: #{tpu_custom_call.1} parent=5 // pred_fallthru
      _
    %p194 = scmp.lt.s32.totalorder %s11, 4
    // Predicated region
    $region13: #{tpu_custom_call.1} parent=5 // pred_check
      %p195 = pneg %p194
    $region14: #{tpu_custom_call.1} parent=5 // pred_check_branch
      %197 = sbr.rel (%p195) target = $region16
    $region15: #{tpu_custom_call.1} parent=5 // pred_region
      // Predicated region
      $region17: #{tpu_custom_call.1} parent=15 // pred_check
        %p198 = pneg %p43
      $region18: #{tpu_custom_call.1} parent=15 // pred_check_branch
        %200 = sbr.rel (%p198) target = $region20
      $region19: #{tpu_custom_call.1} parent=15 // pred_region
        %s201 = smul.u32 32, %s18
        %p202 = scmp.lt.s32.totalorder %s201, 63
        %s203 = scalar_select %p202, %s201, 63
        %s204 = smul.addr %s203, 4
        %s205 = scalar_lea.vmem %s0, %s204
        %s206 = smul.u32 32, %s18
      $region20: #{tpu_custom_call.1} parent=15 // pred_fallthru
        _
      // Predicated region
      $region21: #{tpu_custom_call.1} parent=15 // pred_check
        %p207 = pneg %p69
      $region22: #{tpu_custom_call.1} parent=15 // pred_check_branch
        %209 = sbr.rel (%p207) target = $region24
      $region23: #{tpu_custom_call.1} parent=15 // pred_region
        %p210 = scmp.lt.s32.totalorder %s19, 1
        %s211 = scalar_select %p210, %s19, 1
        %s212 = smul.addr %s211, 96
        %s213 = smul.addr %s212, 4
        %s214 = scalar_lea.vmem %s1, %s213
      $region24: #{tpu_custom_call.1} parent=15 // pred_fallthru
        _
      // Predicated region
      $region25: #{tpu_custom_call.1} parent=15 // pred_check
        %p215 = pneg %p95
      $region26: #{tpu_custom_call.1} parent=15 // pred_check_branch
        %217 = sbr.rel (%p215) target = $region28
      $region27: #{tpu_custom_call.1} parent=15 // pred_region
        %s218 = smul.u32 32, %s18
        %p219 = scmp.lt.s32.totalorder %s218, 63
        %s220 = scalar_select %p219, %s218, 63
        %s221 = smul.addr %s220, 8
        %s222 = scalar_lea.vmem %s2, %s221
        %s223 = smul.u32 32, %s18
      $region28: #{tpu_custom_call.1} parent=15 // pred_fallthru
        _
      // Predicated region
      $region29: #{tpu_custom_call.1} parent=15 // pred_check
        %p224 = pneg %p121
      $region30: #{tpu_custom_call.1} parent=15 // pred_check_branch
        %226 = sbr.rel (%p224) target = $region32
      $region31: #{tpu_custom_call.1} parent=15 // pred_region
        %p227 = scmp.lt.s32.totalorder %s19, 1
        %s228 = scalar_select %p227, %s19, 1
        %s229 = smul.addr %s228, 4
        %s230 = scalar_lea.vmem %s3, %s229
      $region32: #{tpu_custom_call.1} parent=15 // pred_fallthru
        _
      // Predicated region
      $region33: #{tpu_custom_call.1} parent=15 // pred_check
        %p231 = pneg %p147
      $region34: #{tpu_custom_call.1} parent=15 // pred_check_branch
        %233 = sbr.rel (%p231) target = $region36
      $region35: #{tpu_custom_call.1} parent=15 // pred_region
        %p234 = scmp.lt.s32.totalorder %s19, 1
        %s235 = scalar_select %p234, %s19, 1
        %s236 = smul.addr %s235, 4
        %s237 = scalar_lea.vmem %s4, %s236
      $region36: #{tpu_custom_call.1} parent=15 // pred_fallthru
        _
    $region16: #{tpu_custom_call.1} parent=5 // pred_fallthru
      _
    %p238 = scmp.le.s32.totalorder 1, %s11
    %p239 = scmp.lt.s32.totalorder %s11, 5
    %p240 = pnand %p238, %p239
    %p241 = pneg %p240
    // Predicated region
    $region37: #{tpu_custom_call.1} parent=5 // pred_check
      _
    $region38: #{tpu_custom_call.1} parent=5 // pred_check_branch
      %243 = sbr.rel (%p240) target = $region40
    $region39: #{tpu_custom_call.1} parent=5 // pred_region
      %s244 = ssub.s32 %s11, 1
      %s245 = smul.u32 32, %s20
      %p246 = scmp.lt.s32.totalorder %s245, 63
      %s247 = scalar_select %p246, %s245, 63
      %s248 = smul.addr %s247, 4
      %s249 = scalar_lea.vmem %s0, %s248
      %p250 = pneg %p49
      %p251 = pneg %p46
      %p252 = scmp.lt.s32.totalorder %s21, 1
      %s253 = scalar_select %p252, %s21, 1
      %s254 = smul.addr %s253, 96
      %s255 = smul.addr %s254, 4
      %s256 = scalar_lea.vmem %s1, %s255
      %p257 = pneg %p75
      %p258 = pneg %p72
      %s259 = smul.u32 32, %s20
      %p260 = scmp.lt.s32.totalorder %s259, 63
      %s261 = scalar_select %p260, %s259, 63
      %s262 = smul.addr %s261, 8
      %s263 = scalar_lea.vmem %s2, %s262
      %p264 = pneg %p101
      %p265 = pneg %p98
      %p266 = scmp.lt.s32.totalorder %s21, 1
      %s267 = scalar_select %p266, %s21, 1
      %s268 = smul.addr %s267, 4
      %s269 = scalar_lea.vmem %s3, %s268
      %p270 = pneg %p127
      %p271 = pneg %p124
      %p272 = scmp.lt.s32.totalorder %s21, 1
      %s273 = scalar_select %p272, %s21, 1
      %s274 = smul.addr %s273, 4
      %s275 = scalar_lea.vmem %s4, %s274
      %p276 = pneg %p153
      %p277 = pneg %p150
      %p278 = pneg %p179
      %p279 = pneg %p176
      %s280 = smul.u32 32, %s20
      %p281 = scmp.lt.s32.totalorder %s280, 63
      %s282 = scalar_select %p281, %s280, 63
      %s283 = smul.addr %s282, 8
      %s284 = scalar_lea.vmem %s5, %s283
      %s285 = smul.u32 32, %s20
      %p286 = scmp.lt.s32.totalorder %s285, 63
      %s287 = scalar_select %p286, %s285, 63
      %s288 = smul.addr %s287, 4
      %s289 = scalar_lea.vmem %s0, %s288
      %s290 = smul.u32 32, %s20
      %p291 = scmp.lt.s32.totalorder %s21, 1
      %s292 = scalar_select %p291, %s21, 1
      %s293 = smul.addr %s292, 96
      %s294 = smul.addr %s293, 4
      %s295 = scalar_lea.vmem %s1, %s294
      %s296 = smul.u32 32, %s20
      %p297 = scmp.lt.s32.totalorder %s296, 63
      %s298 = scalar_select %p297, %s296, 63
      %s299 = smul.addr %s298, 8
      %s300 = scalar_lea.vmem %s2, %s299
      %s301 = smul.u32 32, %s20
      %p302 = scmp.lt.s32.totalorder %s21, 1
      %s303 = scalar_select %p302, %s21, 1
      %s304 = smul.addr %s303, 4
      %s305 = scalar_lea.vmem %s3, %s304
      %p306 = scmp.lt.s32.totalorder %s21, 1
      %s307 = scalar_select %p306, %s21, 1
      %s308 = smul.addr %s307, 4
      %s309 = scalar_lea.vmem %s4, %s308
      %s310 = smul.u32 32, %s20
      %p311 = scmp.lt.s32.totalorder %s310, 63
      %s312 = scalar_select %p311, %s310, 63
      %s313 = smul.addr %s312, 8
      %s314 = scalar_lea.vmem %s5, %s313
      %s315 = smul.u32 32, %s20
      %p317 = scmp.eq.s32.totalorder %s21, 0
      // Predicated region
      $region41: #{tpu_custom_call.1} parent=39 // pred_check
        %p318 = pneg %p317
      $region42: #{tpu_custom_call.1} parent=39 // pred_check_branch
        %320 = sbr.rel (%p318) target = $region44
      $region43: #{tpu_custom_call.1} parent=39 // pred_region
        %vm321 = vcmask 7168
        %322 = vst.msk [vmem:[#allocation2] sm:$0xff] %vm321, -inf
        %323 = vst.msk [vmem:[#allocation2 + $0x8] sm:$0xff] %vm321, -inf
        %324 = vst.msk [vmem:[#allocation2 + $0x10] sm:$0xff] %vm321, -inf
        %325 = vst.msk [vmem:[#allocation2 + $0x18] sm:$0xff] %vm321, -inf
        %326 = vst.msk [vmem:[#allocation2 + $0x20] sm:$0xff] %vm321, -inf
        %327 = vst.msk [vmem:[#allocation2 + $0x28] sm:$0xff] %vm321, -inf
        %328 = vst.msk [vmem:[#allocation2 + $0x30] sm:$0xff] %vm321, -inf
        %329 = vst.msk [vmem:[#allocation2 + $0x38] sm:$0xff] %vm321, -inf
        %330 = vst.msk [vmem:[#allocation2 + $0x40] sm:$0xff] %vm321, -inf
        %331 = vst.msk [vmem:[#allocation2 + $0x48] sm:$0xff] %vm321, -inf
        %332 = vst.msk [vmem:[#allocation2 + $0x50] sm:$0xff] %vm321, -inf
        %333 = vst.msk [vmem:[#allocation2 + $0x58] sm:$0xff] %vm321, -inf
        %334 = vst.msk [vmem:[#allocation2 + $0x60] sm:$0xff] %vm321, -inf
        %335 = vst.msk [vmem:[#allocation2 + $0x68] sm:$0xff] %vm321, -inf
        %336 = vst.msk [vmem:[#allocation2 + $0x70] sm:$0xff] %vm321, -inf
        %337 = vst.msk [vmem:[#allocation2 + $0x78] sm:$0xff] %vm321, -inf
        %338 = vst.msk [vmem:[#allocation2 + $0x80] sm:$0xff] %vm321, -inf
        %339 = vst.msk [vmem:[#allocation2 + $0x88] sm:$0xff] %vm321, -inf
        %340 = vst.msk [vmem:[#allocation2 + $0x90] sm:$0xff] %vm321, -inf
        %341 = vst.msk [vmem:[#allocation2 + $0x98] sm:$0xff] %vm321, -inf
        %342 = vst.msk [vmem:[#allocation2 + $0xa0] sm:$0xff] %vm321, -inf
        %343 = vst.msk [vmem:[#allocation2 + $0xa8] sm:$0xff] %vm321, -inf
        %344 = vst.msk [vmem:[#allocation2 + $0xb0] sm:$0xff] %vm321, -inf
        %345 = vst.msk [vmem:[#allocation2 + $0xb8] sm:$0xff] %vm321, -inf
        %346 = vst.msk [vmem:[#allocation2 + $0xc0] sm:$0xff] %vm321, -inf
        %347 = vst.msk [vmem:[#allocation2 + $0xc8] sm:$0xff] %vm321, -inf
        %348 = vst.msk [vmem:[#allocation2 + $0xd0] sm:$0xff] %vm321, -inf
        %349 = vst.msk [vmem:[#allocation2 + $0xd8] sm:$0xff] %vm321, -inf
        %350 = vst.msk [vmem:[#allocation2 + $0xe0] sm:$0xff] %vm321, -inf
        %351 = vst.msk [vmem:[#allocation2 + $0xe8] sm:$0xff] %vm321, -inf
        %352 = vst.msk [vmem:[#allocation2 + $0xf0] sm:$0xff] %vm321, -inf
        %353 = vst.msk [vmem:[#allocation2 + $0xf8] sm:$0xff] %vm321, -inf
        %354 = vst.msk [vmem:[#allocation3] sm:$0xff] %vm321, 0.0
        %355 = vst.msk [vmem:[#allocation3 + $0x8] sm:$0xff] %vm321, 0.0
        %356 = vst.msk [vmem:[#allocation3 + $0x10] sm:$0xff] %vm321, 0.0
        %357 = vst.msk [vmem:[#allocation3 + $0x18] sm:$0xff] %vm321, 0.0
        %358 = vst.msk [vmem:[#allocation3 + $0x20] sm:$0xff] %vm321, 0.0
        %359 = vst.msk [vmem:[#allocation3 + $0x28] sm:$0xff] %vm321, 0.0
        %360 = vst.msk [vmem:[#allocation3 + $0x30] sm:$0xff] %vm321, 0.0
        %361 = vst.msk [vmem:[#allocation3 + $0x38] sm:$0xff] %vm321, 0.0
        %362 = vst.msk [vmem:[#allocation3 + $0x40] sm:$0xff] %vm321, 0.0
        %363 = vst.msk [vmem:[#allocation3 + $0x48] sm:$0xff] %vm321, 0.0
        %364 = vst.msk [vmem:[#allocation3 + $0x50] sm:$0xff] %vm321, 0.0
        %365 = vst.msk [vmem:[#allocation3 + $0x58] sm:$0xff] %vm321, 0.0
        %366 = vst.msk [vmem:[#allocation3 + $0x60] sm:$0xff] %vm321, 0.0
        %367 = vst.msk [vmem:[#allocation3 + $0x68] sm:$0xff] %vm321, 0.0
        %368 = vst.msk [vmem:[#allocation3 + $0x70] sm:$0xff] %vm321, 0.0
        %369 = vst.msk [vmem:[#allocation3 + $0x78] sm:$0xff] %vm321, 0.0
        %370 = vst.msk [vmem:[#allocation3 + $0x80] sm:$0xff] %vm321, 0.0
        %371 = vst.msk [vmem:[#allocation3 + $0x88] sm:$0xff] %vm321, 0.0
        %372 = vst.msk [vmem:[#allocation3 + $0x90] sm:$0xff] %vm321, 0.0
        %373 = vst.msk [vmem:[#allocation3 + $0x98] sm:$0xff] %vm321, 0.0
        %374 = vst.msk [vmem:[#allocation3 + $0xa0] sm:$0xff] %vm321, 0.0
        %375 = vst.msk [vmem:[#allocation3 + $0xa8] sm:$0xff] %vm321, 0.0
        %376 = vst.msk [vmem:[#allocation3 + $0xb0] sm:$0xff] %vm321, 0.0
        %377 = vst.msk [vmem:[#allocation3 + $0xb8] sm:$0xff] %vm321, 0.0
        %378 = vst.msk [vmem:[#allocation3 + $0xc0] sm:$0xff] %vm321, 0.0
        %379 = vst.msk [vmem:[#allocation3 + $0xc8] sm:$0xff] %vm321, 0.0
        %380 = vst.msk [vmem:[#allocation3 + $0xd0] sm:$0xff] %vm321, 0.0
        %381 = vst.msk [vmem:[#allocation3 + $0xd8] sm:$0xff] %vm321, 0.0
        %382 = vst.msk [vmem:[#allocation3 + $0xe0] sm:$0xff] %vm321, 0.0
        %383 = vst.msk [vmem:[#allocation3 + $0xe8] sm:$0xff] %vm321, 0.0
        %384 = vst.msk [vmem:[#allocation3 + $0xf0] sm:$0xff] %vm321, 0.0
        %385 = vst.msk [vmem:[#allocation3 + $0xf8] sm:$0xff] %vm321, 0.0
        %386 = vst.msk [vmem:[#allocation4] sm:$0xff] %vm321, 0.0
        %387 = vst.msk [vmem:[#allocation4 + $0x8] sm:$0xff] %vm321, 0.0
        %388 = vst.msk [vmem:[#allocation4 + $0x10] sm:$0xff] %vm321, 0.0
        %389 = vst.msk [vmem:[#allocation4 + $0x18] sm:$0xff] %vm321, 0.0
        %390 = vst.msk [vmem:[#allocation4 + $0x20] sm:$0xff] %vm321, 0.0
        %391 = vst.msk [vmem:[#allocation4 + $0x28] sm:$0xff] %vm321, 0.0
        %392 = vst.msk [vmem:[#allocation4 + $0x30] sm:$0xff] %vm321, 0.0
        %393 = vst.msk [vmem:[#allocation4 + $0x38] sm:$0xff] %vm321, 0.0
        %394 = vst.msk [vmem:[#allocation4 + $0x40] sm:$0xff] %vm321, 0.0
        %395 = vst.msk [vmem:[#allocation4 + $0x48] sm:$0xff] %vm321, 0.0
        %396 = vst.msk [vmem:[#allocation4 + $0x50] sm:$0xff] %vm321, 0.0
        %397 = vst.msk [vmem:[#allocation4 + $0x58] sm:$0xff] %vm321, 0.0
        %398 = vst.msk [vmem:[#allocation4 + $0x60] sm:$0xff] %vm321, 0.0
        %399 = vst.msk [vmem:[#allocation4 + $0x68] sm:$0xff] %vm321, 0.0
        %400 = vst.msk [vmem:[#allocation4 + $0x70] sm:$0xff] %vm321, 0.0
        %401 = vst.msk [vmem:[#allocation4 + $0x78] sm:$0xff] %vm321, 0.0
        %402 = vst.msk [vmem:[#allocation4 + $0x80] sm:$0xff] %vm321, 0.0
        %403 = vst.msk [vmem:[#allocation4 + $0x88] sm:$0xff] %vm321, 0.0
        %404 = vst.msk [vmem:[#allocation4 + $0x90] sm:$0xff] %vm321, 0.0
        %405 = vst.msk [vmem:[#allocation4 + $0x98] sm:$0xff] %vm321, 0.0
        %406 = vst.msk [vmem:[#allocation4 + $0xa0] sm:$0xff] %vm321, 0.0
        %407 = vst.msk [vmem:[#allocation4 + $0xa8] sm:$0xff] %vm321, 0.0
        %408 = vst.msk [vmem:[#allocation4 + $0xb0] sm:$0xff] %vm321, 0.0
        %409 = vst.msk [vmem:[#allocation4 + $0xb8] sm:$0xff] %vm321, 0.0
        %410 = vst.msk [vmem:[#allocation4 + $0xc0] sm:$0xff] %vm321, 0.0
        %411 = vst.msk [vmem:[#allocation4 + $0xc8] sm:$0xff] %vm321, 0.0
        %412 = vst.msk [vmem:[#allocation4 + $0xd0] sm:$0xff] %vm321, 0.0
        %413 = vst.msk [vmem:[#allocation4 + $0xd8] sm:$0xff] %vm321, 0.0
        %414 = vst.msk [vmem:[#allocation4 + $0xe0] sm:$0xff] %vm321, 0.0
        %415 = vst.msk [vmem:[#allocation4 + $0xe8] sm:$0xff] %vm321, 0.0
        %416 = vst.msk [vmem:[#allocation4 + $0xf0] sm:$0xff] %vm321, 0.0
        %417 = vst.msk [vmem:[#allocation4 + $0xf8] sm:$0xff] %vm321, 0.0
      $region44: #{tpu_custom_call.1} parent=39 // pred_fallthru
        _
      %v418 = vld [vmem:[%s289] sm:$0xf]
      %v419 = vld [vmem:[%s289 + $0x4] sm:$0xf]
      %v420 = vld [vmem:[%s289 + $0x8] sm:$0xf]
      %v421 = vld [vmem:[%s289 + $0xc] sm:$0xf]
      %v422 = vld [vmem:[%s289 + $0x10] sm:$0xf]
      %v423 = vld [vmem:[%s289 + $0x14] sm:$0xf]
      %v424 = vld [vmem:[%s289 + $0x18] sm:$0xf]
      %v425 = vld [vmem:[%s289 + $0x1c] sm:$0xf]
      %v426 = vld [vmem:[%s289 + $0x20] sm:$0xf]
      %v427 = vld [vmem:[%s289 + $0x24] sm:$0xf]
      %v428 = vld [vmem:[%s289 + $0x28] sm:$0xf]
      %v429 = vld [vmem:[%s289 + $0x2c] sm:$0xf]
      %v430 = vld [vmem:[%s289 + $0x30] sm:$0xf]
      %v431 = vld [vmem:[%s289 + $0x34] sm:$0xf]
      %v432 = vld [vmem:[%s289 + $0x38] sm:$0xf]
      %v433 = vld [vmem:[%s289 + $0x3c] sm:$0xf]
      %v434 = vld [vmem:[%s289 + $0x40] sm:$0xf]
      %v435 = vld [vmem:[%s289 + $0x44] sm:$0xf]
      %v436 = vld [vmem:[%s289 + $0x48] sm:$0xf]
      %v437 = vld [vmem:[%s289 + $0x4c] sm:$0xf]
      %v438 = vld [vmem:[%s289 + $0x50] sm:$0xf]
      %v439 = vld [vmem:[%s289 + $0x54] sm:$0xf]
      %v440 = vld [vmem:[%s289 + $0x58] sm:$0xf]
      %v441 = vld [vmem:[%s289 + $0x5c] sm:$0xf]
      %v442 = vld [vmem:[%s289 + $0x60] sm:$0xf]
      %v443 = vld [vmem:[%s289 + $0x64] sm:$0xf]
      %v444 = vld [vmem:[%s289 + $0x68] sm:$0xf]
      %v445 = vld [vmem:[%s289 + $0x6c] sm:$0xf]
      %v446 = vld [vmem:[%s289 + $0x70] sm:$0xf]
      %v447 = vld [vmem:[%s289 + $0x74] sm:$0xf]
      %v448 = vld [vmem:[%s289 + $0x78] sm:$0xf]
      %v449 = vld [vmem:[%s289 + $0x7c] sm:$0xf]
      %v450 = vld [vmem:[%s295] sm:$0xff]
      %v451 = vld [vmem:[%s295 + $0x8] sm:$0xff]
      %v452 = vld [vmem:[%s295 + $0x10] sm:$0xff]
      %v453 = vld [vmem:[%s295 + $0x18] sm:$0xff]
      %v454 = vld [vmem:[%s295 + $0x20] sm:$0xff]
      %v455 = vld [vmem:[%s295 + $0x28] sm:$0xff]
      %v456 = vld [vmem:[%s295 + $0x30] sm:$0xff]
      %v457 = vld [vmem:[%s295 + $0x38] sm:$0xff]
      %v458 = vld [vmem:[%s295 + $0x40] sm:$0xff]
      %v459 = vld [vmem:[%s295 + $0x48] sm:$0xff]
      %v460 = vld [vmem:[%s295 + $0x50] sm:$0xff]
      %v461 = vld [vmem:[%s295 + $0x58] sm:$0xff]
      %v462 = vld [vmem:[%s295 + $0x60] sm:$0xff]
      %v463 = vld [vmem:[%s295 + $0x68] sm:$0xff]
      %v464 = vld [vmem:[%s295 + $0x70] sm:$0xff]
      %v465 = vld [vmem:[%s295 + $0x78] sm:$0xff]
      %v466 = vld [vmem:[%s295 + $0x80] sm:$0xff]
      %v467 = vld [vmem:[%s295 + $0x88] sm:$0xff]
      %v468 = vld [vmem:[%s295 + $0x90] sm:$0xff]
      %v469 = vld [vmem:[%s295 + $0x98] sm:$0xff]
      %v470 = vld [vmem:[%s295 + $0xa0] sm:$0xff]
      %v471 = vld [vmem:[%s295 + $0xa8] sm:$0xff]
      %v472 = vld [vmem:[%s295 + $0xb0] sm:$0xff]
      %v473 = vld [vmem:[%s295 + $0xb8] sm:$0xff]
      %v474 = vld [vmem:[%s295 + $0xc0] sm:$0xff]
      %v475 = vld [vmem:[%s295 + $0xc8] sm:$0xff]
      %v476 = vld [vmem:[%s295 + $0xd0] sm:$0xff]
      %v477 = vld [vmem:[%s295 + $0xd8] sm:$0xff]
      %v478 = vld [vmem:[%s295 + $0xe0] sm:$0xff]
      %v479 = vld [vmem:[%s295 + $0xe8] sm:$0xff]
      %v480 = vld [vmem:[%s295 + $0xf0] sm:$0xff]
      %v481 = vld [vmem:[%s295 + $0xf8] sm:$0xff]
      %v482 = vld [vmem:[%s295 + $0x100] sm:$0xff]
      %v483 = vld [vmem:[%s295 + $0x108] sm:$0xff]
      %v484 = vld [vmem:[%s295 + $0x110] sm:$0xff]
      %v485 = vld [vmem:[%s295 + $0x118] sm:$0xff]
      %v486 = vld [vmem:[%s295 + $0x120] sm:$0xff]
      %v487 = vld [vmem:[%s295 + $0x128] sm:$0xff]
      %v488 = vld [vmem:[%s295 + $0x130] sm:$0xff]
      %v489 = vld [vmem:[%s295 + $0x138] sm:$0xff]
      %v490 = vld [vmem:[%s295 + $0x140] sm:$0xff]
      %v491 = vld [vmem:[%s295 + $0x148] sm:$0xff]
      %v492 = vld [vmem:[%s295 + $0x150] sm:$0xff]
      %v493 = vld [vmem:[%s295 + $0x158] sm:$0xff]
      %v494 = vld [vmem:[%s295 + $0x160] sm:$0xff]
      %v495 = vld [vmem:[%s295 + $0x168] sm:$0xff]
      %v496 = vld [vmem:[%s295 + $0x170] sm:$0xff]
      %v497 = vld [vmem:[%s295 + $0x178] sm:$0xff]
      %v530 = vunpack.c.l.b16 %v418
      %v531 = vunpack.c.l.b16 %v419
      %v532 = vunpack.c.l.b16 %v420
      %v533 = vunpack.c.l.b16 %v421
      %v534 = vunpack.c.l.b16 %v422
      %v535 = vunpack.c.l.b16 %v423
      %v536 = vunpack.c.l.b16 %v424
      %v537 = vunpack.c.l.b16 %v425
      %v538 = vunpack.c.l.b16 %v426
      %v539 = vunpack.c.l.b16 %v427
      %v540 = vunpack.c.l.b16 %v428
      %v541 = vunpack.c.l.b16 %v429
      %v542 = vunpack.c.l.b16 %v430
      %v543 = vunpack.c.l.b16 %v431
      %v544 = vunpack.c.l.b16 %v432
      %v545 = vunpack.c.l.b16 %v433
      %v546 = vunpack.c.l.b16 %v434
      %v547 = vunpack.c.l.b16 %v435
      %v548 = vunpack.c.l.b16 %v436
      %v549 = vunpack.c.l.b16 %v437
      %v550 = vunpack.c.l.b16 %v438
      %v551 = vunpack.c.l.b16 %v439
      %v552 = vunpack.c.l.b16 %v440
      %v553 = vunpack.c.l.b16 %v441
      %v554 = vunpack.c.l.b16 %v442
      %v555 = vunpack.c.l.b16 %v443
      %v556 = vunpack.c.l.b16 %v444
      %v557 = vunpack.c.l.b16 %v445
      %v558 = vunpack.c.l.b16 %v446
      %v559 = vunpack.c.l.b16 %v447
      %v560 = vunpack.c.l.b16 %v448
      %v561 = vunpack.c.l.b16 %v449
      %v562 = vpack.c.b16 %v531, %v530
      %v563 = vpack.c.b16 %v533, %v532
      %v564 = vpack.c.b16 %v535, %v534
      %v565 = vpack.c.b16 %v537, %v536
      %v566 = vpack.c.b16 %v539, %v538
      %v567 = vpack.c.b16 %v541, %v540
      %v568 = vpack.c.b16 %v543, %v542
      %v569 = vpack.c.b16 %v545, %v544
      %v570 = vpack.c.b16 %v547, %v546
      %v571 = vpack.c.b16 %v549, %v548
      %v572 = vpack.c.b16 %v551, %v550
      %v573 = vpack.c.b16 %v553, %v552
      %v574 = vpack.c.b16 %v555, %v554
      %v575 = vpack.c.b16 %v557, %v556
      %v576 = vpack.c.b16 %v559, %v558
      %v577 = vpack.c.b16 %v561, %v560
      %v626 = vunpack.c.l.b16 %v450
      %v627 = vunpack.c.h.b16 %v450
      %v628 = vunpack.c.l.b16 %v451
      %v629 = vunpack.c.h.b16 %v451
      %v630 = vunpack.c.l.b16 %v452
      %v631 = vunpack.c.h.b16 %v452
      %v632 = vunpack.c.l.b16 %v453
      %v633 = vunpack.c.h.b16 %v453
      %v634 = vunpack.c.l.b16 %v454
      %v635 = vunpack.c.h.b16 %v454
      %v636 = vunpack.c.l.b16 %v455
      %v637 = vunpack.c.h.b16 %v455
      %v638 = vunpack.c.l.b16 %v456
      %v639 = vunpack.c.h.b16 %v456
      %v640 = vunpack.c.l.b16 %v457
      %v641 = vunpack.c.h.b16 %v457
      %v642 = vunpack.c.l.b16 %v458
      %v643 = vunpack.c.h.b16 %v458
      %v644 = vunpack.c.l.b16 %v459
      %v645 = vunpack.c.h.b16 %v459
      %v646 = vunpack.c.l.b16 %v460
      %v647 = vunpack.c.h.b16 %v460
      %v648 = vunpack.c.l.b16 %v461
      %v649 = vunpack.c.h.b16 %v461
      %v650 = vunpack.c.l.b16 %v462
      %v651 = vunpack.c.h.b16 %v462
      %v652 = vunpack.c.l.b16 %v463
      %v653 = vunpack.c.h.b16 %v463
      %v654 = vunpack.c.l.b16 %v464
      %v655 = vunpack.c.h.b16 %v464
      %v656 = vunpack.c.l.b16 %v465
      %v657 = vunpack.c.h.b16 %v465
      %v658 = vunpack.c.l.b16 %v466
      %v659 = vunpack.c.h.b16 %v466
      %v660 = vunpack.c.l.b16 %v467
      %v661 = vunpack.c.h.b16 %v467
      %v662 = vunpack.c.l.b16 %v468
      %v663 = vunpack.c.h.b16 %v468
      %v664 = vunpack.c.l.b16 %v469
      %v665 = vunpack.c.h.b16 %v469
      %v666 = vunpack.c.l.b16 %v470
      %v667 = vunpack.c.h.b16 %v470
      %v668 = vunpack.c.l.b16 %v471
      %v669 = vunpack.c.h.b16 %v471
      %v670 = vunpack.c.l.b16 %v472
      %v671 = vunpack.c.h.b16 %v472
      %v672 = vunpack.c.l.b16 %v473
      %v673 = vunpack.c.h.b16 %v473
      %v674 = vunpack.c.l.b16 %v474
      %v675 = vunpack.c.h.b16 %v474
      %v676 = vunpack.c.l.b16 %v475
      %v677 = vunpack.c.h.b16 %v475
      %v678 = vunpack.c.l.b16 %v476
      %v679 = vunpack.c.h.b16 %v476
      %v680 = vunpack.c.l.b16 %v477
      %v681 = vunpack.c.h.b16 %v477
      %v682 = vunpack.c.l.b16 %v478
      %v683 = vunpack.c.h.b16 %v478
      %v684 = vunpack.c.l.b16 %v479
      %v685 = vunpack.c.h.b16 %v479
      %v686 = vunpack.c.l.b16 %v480
      %v687 = vunpack.c.h.b16 %v480
      %v688 = vunpack.c.l.b16 %v481
      %v689 = vunpack.c.h.b16 %v481
      %v690 = vunpack.c.l.b16 %v482
      %v691 = vunpack.c.h.b16 %v482
      %v692 = vunpack.c.l.b16 %v483
      %v693 = vunpack.c.h.b16 %v483
      %v694 = vunpack.c.l.b16 %v484
      %v695 = vunpack.c.h.b16 %v484
      %v696 = vunpack.c.l.b16 %v485
      %v697 = vunpack.c.h.b16 %v485
      %v698 = vunpack.c.l.b16 %v486
      %v699 = vunpack.c.h.b16 %v486
      %v700 = vunpack.c.l.b16 %v487
      %v701 = vunpack.c.h.b16 %v487
      %v702 = vunpack.c.l.b16 %v488
      %v703 = vunpack.c.h.b16 %v488
      %v704 = vunpack.c.l.b16 %v489
      %v705 = vunpack.c.h.b16 %v489
      %v706 = vunpack.c.l.b16 %v490
      %v707 = vunpack.c.h.b16 %v490
      %v708 = vunpack.c.l.b16 %v491
      %v709 = vunpack.c.h.b16 %v491
      %v710 = vunpack.c.l.b16 %v492
      %v711 = vunpack.c.h.b16 %v492
      %v712 = vunpack.c.l.b16 %v493
      %v713 = vunpack.c.h.b16 %v493
      %v714 = vunpack.c.l.b16 %v494
      %v715 = vunpack.c.h.b16 %v494
      %v716 = vunpack.c.l.b16 %v495
      %v717 = vunpack.c.h.b16 %v495
      %v718 = vunpack.c.l.b16 %v496
      %v719 = vunpack.c.h.b16 %v496
      %v720 = vunpack.c.l.b16 %v497
      %v721 = vunpack.c.h.b16 %v497
      %v722 = vpack.c.b16 %v638, %v626
      %v723 = vpack.c.b16 %v639, %v627
      %v724 = vpack.c.b16 %v640, %v628
      %v725 = vpack.c.b16 %v641, %v629
      %v726 = vpack.c.b16 %v642, %v630
      %v727 = vpack.c.b16 %v643, %v631
      %v728 = vpack.c.b16 %v644, %v632
      %v729 = vpack.c.b16 %v645, %v633
      %v730 = vpack.c.b16 %v646, %v634
      %v731 = vpack.c.b16 %v647, %v635
      %v732 = vpack.c.b16 %v648, %v636
      %v733 = vpack.c.b16 %v649, %v637
      %v734 = vpack.c.b16 %v662, %v650
      %v735 = vpack.c.b16 %v663, %v651
      %v736 = vpack.c.b16 %v664, %v652
      %v737 = vpack.c.b16 %v665, %v653
      %v738 = vpack.c.b16 %v666, %v654
      %v739 = vpack.c.b16 %v667, %v655
      %v740 = vpack.c.b16 %v668, %v656
      %v741 = vpack.c.b16 %v669, %v657
      %v742 = vpack.c.b16 %v670, %v658
      %v743 = vpack.c.b16 %v671, %v659
      %v744 = vpack.c.b16 %v672, %v660
      %v745 = vpack.c.b16 %v673, %v661
      %v746 = vpack.c.b16 %v686, %v674
      %v747 = vpack.c.b16 %v687, %v675
      %v748 = vpack.c.b16 %v688, %v676
      %v749 = vpack.c.b16 %v689, %v677
      %v750 = vpack.c.b16 %v690, %v678
      %v751 = vpack.c.b16 %v691, %v679
      %v752 = vpack.c.b16 %v692, %v680
      %v753 = vpack.c.b16 %v693, %v681
      %v754 = vpack.c.b16 %v694, %v682
      %v755 = vpack.c.b16 %v695, %v683
      %v756 = vpack.c.b16 %v696, %v684
      %v757 = vpack.c.b16 %v697, %v685
      %v758 = vpack.c.b16 %v710, %v698
      %v759 = vpack.c.b16 %v711, %v699
      %v760 = vpack.c.b16 %v712, %v700
      %v761 = vpack.c.b16 %v713, %v701
      %v762 = vpack.c.b16 %v714, %v702
      %v763 = vpack.c.b16 %v715, %v703
      %v764 = vpack.c.b16 %v716, %v704
      %v765 = vpack.c.b16 %v717, %v705
      %v766 = vpack.c.b16 %v718, %v706
      %v767 = vpack.c.b16 %v719, %v707
      %v768 = vpack.c.b16 %v720, %v708
      %v769 = vpack.c.b16 %v721, %v709
      %vm818 = vcmask 523264
      %v820 = vsel %vm818, %v562, 0
      %v823 = vsel %vm818, %v563, 0
      %v826 = vsel %vm818, %v564, 0
      %v829 = vsel %vm818, %v565, 0
      %v832 = vsel %vm818, %v566, 0
      %v835 = vsel %vm818, %v567, 0
      %v838 = vsel %vm818, %v568, 0
      %v841 = vsel %vm818, %v569, 0
      %v844 = vsel %vm818, %v570, 0
      %v847 = vsel %vm818, %v571, 0
      %v850 = vsel %vm818, %v572, 0
      %v853 = vsel %vm818, %v573, 0
      %v856 = vsel %vm818, %v574, 0
      %v859 = vsel %vm818, %v575, 0
      %v862 = vsel %vm818, %v576, 0
      %v865 = vsel %vm818, %v577, 0
      %867 = vmatprep.subr.bf16.mxu0 %v723
      %868 = vmatpush1.bf16.msra.mxu0 %v722
      %869 = vmatprep.subr.bf16.mxu0 %v735
      %870 = vmatpush1.bf16.msra.mxu0 %v734
      %871 = vmatprep.subr.bf16.mxu0 %v747
      %872 = vmatpush1.bf16.msra.mxu0 %v746
      %873 = vmatprep.subr.bf16.mxu0 %v759
      %874 = vmatpush1.bf16.msra.mxu0 %v758
      %875 = vmatprep.subr.bf16.mxu0 0
      %876 = vmatpush1.bf16.msra.mxu0 0
      %877 = vmatprep.subr.bf16.mxu0 0
      %878 = vmatpush1.bf16.msra.mxu0 0
      %879 = vmatprep.subr.bf16.mxu0 0
      %880 = vmatpush1.bf16.msra.mxu0 0
      %881 = vmatprep.subr.bf16.mxu0 0
      %882 = vmatpush1.bf16.msra.mxu0 0
      %883 = vmatprep.subr.bf16.mxu0 0
      %884 = vmatpush1.bf16.msra.mxu0 0
      %885 = vmatprep.subr.bf16.mxu0 0
      %886 = vmatpush1.bf16.msra.mxu0 0
      %887 = vmatprep.subr.bf16.mxu0 0
      %888 = vmatpush1.bf16.msra.mxu0 0
      %889 = vmatprep.subr.bf16.mxu0 0
      %890 = vmatpush1.bf16.msra.mxu0 0
      %891 = vmatprep.subr.bf16.mxu0 0
      %892 = vmatpush1.bf16.msra.mxu0 0
      %893 = vmatprep.subr.bf16.mxu0 0
      %894 = vmatpush1.bf16.msra.mxu0 0
      %895 = vmatprep.subr.bf16.mxu0 0
      %896 = vmatpush1.bf16.msra.mxu0 0
      %897 = vmatprep.subr.bf16.mxu0 0
      %898 = vmatpush1.bf16.msra.mxu0 0
      %899 = vmatprep.mubr.bf16.mxu0 0
      %900 = vmatmul.mubr.bf16.gmra.mrb[0].mxu0 %v820
      %v901 = vpop.f32.mrb[0].mxu0
      %v902 = vadd.f32 0.0, %v901
      %v903 = vpop.f32.mrb[0].mxu0
      %v904 = vadd.f32 0.0, %v903
      %v905 = vpop.f32.mrb[0].mxu0
      %v906 = vadd.f32 0.0, %v905
      %v907 = vpop.f32.mrb[0].mxu0
      %v908 = vadd.f32 0.0, %v907
      %909 = vmatprep.mubr.bf16.mxu0 0
      %910 = vmatmul.mubr.bf16.gmra.mrb[0].mxu0 %v823
      %v911 = vpop.f32.mrb[0].mxu0
      %v912 = vadd.f32 0.0, %v911
      %v913 = vpop.f32.mrb[0].mxu0
      %v914 = vadd.f32 0.0, %v913
      %v915 = vpop.f32.mrb[0].mxu0
      %v916 = vadd.f32 0.0, %v915
      %v917 = vpop.f32.mrb[0].mxu0
      %v918 = vadd.f32 0.0, %v917
      %919 = vmatprep.mubr.bf16.mxu0 0
      %920 = vmatmul.mubr.bf16.gmra.mrb[0].mxu0 %v826
      %v921 = vpop.f32.mrb[0].mxu0
      %v922 = vadd.f32 0.0, %v921
      %v923 = vpop.f32.mrb[0].mxu0
      %v924 = vadd.f32 0.0, %v923
      %v925 = vpop.f32.mrb[0].mxu0
      %v926 = vadd.f32 0.0, %v925
      %v927 = vpop.f32.mrb[0].mxu0
      %v928 = vadd.f32 0.0, %v927
      %929 = vmatprep.mubr.bf16.mxu0 0
      %930 = vmatmul.mubr.bf16.gmra.mrb[0].mxu0 %v829
      %v931 = vpop.f32.mrb[0].mxu0
      %v932 = vadd.f32 0.0, %v931
      %v933 = vpop.f32.mrb[0].mxu0
      %v934 = vadd.f32 0.0, %v933
      %v935 = vpop.f32.mrb[0].mxu0
      %v936 = vadd.f32 0.0, %v935
      %v937 = vpop.f32.mrb[0].mxu0
      %v938 = vadd.f32 0.0, %v937
      %939 = vmatprep.mubr.bf16.mxu0 0
      %940 = vmatmul.mubr.bf16.gmra.mrb[0].mxu0 %v832
      %v941 = vpop.f32.mrb[0].mxu0
      %v942 = vadd.f32 0.0, %v941
      %v943 = vpop.f32.mrb[0].mxu0
      %v944 = vadd.f32 0.0, %v943
      %v945 = vpop.f32.mrb[0].mxu0
      %v946 = vadd.f32 0.0, %v945
      %v947 = vpop.f32.mrb[0].mxu0
      %v948 = vadd.f32 0.0, %v947
      %949 = vmatprep.mubr.bf16.mxu0 0
      %950 = vmatmul.mubr.bf16.gmra.mrb[0].mxu0 %v835
      %v951 = vpop.f32.mrb[0].mxu0
      %v952 = vadd.f32 0.0, %v951
      %v953 = vpop.f32.mrb[0].mxu0
      %v954 = vadd.f32 0.0, %v953
      %v955 = vpop.f32.mrb[0].mxu0
      %v956 = vadd.f32 0.0, %v955
      %v957 = vpop.f32.mrb[0].mxu0
      %v958 = vadd.f32 0.0, %v957
      %959 = vmatprep.mubr.bf16.mxu0 0
      %960 = vmatmul.mubr.bf16.gmra.mrb[0].mxu0 %v838
      %v961 = vpop.f32.mrb[0].mxu0
      %v962 = vadd.f32 0.0, %v961
      %v963 = vpop.f32.mrb[0].mxu0
      %v964 = vadd.f32 0.0, %v963
      %v965 = vpop.f32.mrb[0].mxu0
      %v966 = vadd.f32 0.0, %v965
      %v967 = vpop.f32.mrb[0].mxu0
      %v968 = vadd.f32 0.0, %v967
      %969 = vmatprep.mubr.bf16.mxu0 0
      %970 = vmatmul.mubr.bf16.gmra.mrb[0].mxu0 %v841
      %v971 = vpop.f32.mrb[0].mxu0
      %v972 = vadd.f32 0.0, %v971
      %v973 = vpop.f32.mrb[0].mxu0
      %v974 = vadd.f32 0.0, %v973
      %v975 = vpop.f32.mrb[0].mxu0
      %v976 = vadd.f32 0.0, %v975
      %v977 = vpop.f32.mrb[0].mxu0
      %v978 = vadd.f32 0.0, %v977
      %979 = vmatprep.mubr.bf16.mxu0 0
      %980 = vmatmul.mubr.bf16.gmra.mrb[0].mxu0 %v844
      %v981 = vpop.f32.mrb[0].mxu0
      %v982 = vadd.f32 0.0, %v981
      %v983 = vpop.f32.mrb[0].mxu0
      %v984 = vadd.f32 0.0, %v983
      %v985 = vpop.f32.mrb[0].mxu0
      %v986 = vadd.f32 0.0, %v985
      %v987 = vpop.f32.mrb[0].mxu0
      %v988 = vadd.f32 0.0, %v987
      %989 = vmatprep.mubr.bf16.mxu0 0
      %990 = vmatmul.mubr.bf16.gmra.mrb[0].mxu0 %v847
      %v991 = vpop.f32.mrb[0].mxu0
      %v992 = vadd.f32 0.0, %v991
      %v993 = vpop.f32.mrb[0].mxu0
      %v994 = vadd.f32 0.0, %v993
      %v995 = vpop.f32.mrb[0].mxu0
      %v996 = vadd.f32 0.0, %v995
      %v997 = vpop.f32.mrb[0].mxu0
      %v998 = vadd.f32 0.0, %v997
      %999 = vmatprep.mubr.bf16.mxu0 0
      %1000 = vmatmul.mubr.bf16.gmra.mrb[0].mxu0 %v850
      %v1001 = vpop.f32.mrb[0].mxu0
      %v1002 = vadd.f32 0.0, %v1001
      %v1003 = vpop.f32.mrb[0].mxu0
      %v1004 = vadd.f32 0.0, %v1003
      %v1005 = vpop.f32.mrb[0].mxu0
      %v1006 = vadd.f32 0.0, %v1005
      %v1007 = vpop.f32.mrb[0].mxu0
      %v1008 = vadd.f32 0.0, %v1007
      %1009 = vmatprep.mubr.bf16.mxu0 0
      %1010 = vmatmul.mubr.bf16.gmra.mrb[0].mxu0 %v853
      %v1011 = vpop.f32.mrb[0].mxu0
      %v1012 = vadd.f32 0.0, %v1011
      %v1013 = vpop.f32.mrb[0].mxu0
      %v1014 = vadd.f32 0.0, %v1013
      %v1015 = vpop.f32.mrb[0].mxu0
      %v1016 = vadd.f32 0.0, %v1015
      %v1017 = vpop.f32.mrb[0].mxu0
      %v1018 = vadd.f32 0.0, %v1017
      %1019 = vmatprep.mubr.bf16.mxu0 0
      %1020 = vmatmul.mubr.bf16.gmra.mrb[0].mxu0 %v856
      %v1021 = vpop.f32.mrb[0].mxu0
      %v1022 = vadd.f32 0.0, %v1021
      %v1023 = vpop.f32.mrb[0].mxu0
      %v1024 = vadd.f32 0.0, %v1023
      %v1025 = vpop.f32.mrb[0].mxu0
      %v1026 = vadd.f32 0.0, %v1025
      %v1027 = vpop.f32.mrb[0].mxu0
      %v1028 = vadd.f32 0.0, %v1027
      %1029 = vmatprep.mubr.bf16.mxu0 0
      %1030 = vmatmul.mubr.bf16.gmra.mrb[0].mxu0 %v859
      %v1031 = vpop.f32.mrb[0].mxu0
      %v1032 = vadd.f32 0.0, %v1031
      %v1033 = vpop.f32.mrb[0].mxu0
      %v1034 = vadd.f32 0.0, %v1033
      %v1035 = vpop.f32.mrb[0].mxu0
      %v1036 = vadd.f32 0.0, %v1035
      %v1037 = vpop.f32.mrb[0].mxu0
      %v1038 = vadd.f32 0.0, %v1037
      %1039 = vmatprep.mubr.bf16.mxu0 0
      %1040 = vmatmul.mubr.bf16.gmra.mrb[0].mxu0 %v862
      %v1041 = vpop.f32.mrb[0].mxu0
      %v1042 = vadd.f32 0.0, %v1041
      %v1043 = vpop.f32.mrb[0].mxu0
      %v1044 = vadd.f32 0.0, %v1043
      %v1045 = vpop.f32.mrb[0].mxu0
      %v1046 = vadd.f32 0.0, %v1045
      %v1047 = vpop.f32.mrb[0].mxu0
      %v1048 = vadd.f32 0.0, %v1047
      %1049 = vmatprep.mubr.bf16.mxu0 0
      %1050 = vmatmul.mubr.bf16.gmra.mrb[0].mxu0 %v865
      %v1051 = vpop.f32.mrb[0].mxu0
      %v1052 = vadd.f32 0.0, %v1051
      %v1053 = vpop.f32.mrb[0].mxu0
      %v1054 = vadd.f32 0.0, %v1053
      %v1055 = vpop.f32.mrb[0].mxu0
      %v1056 = vadd.f32 0.0, %v1055
      %v1057 = vpop.f32.mrb[0].mxu0
      %v1058 = vadd.f32 0.0, %v1057
      %1059 = vdwg.mxu0
      %1060 = vmatprep.subr.bf16.mxu0 %v725
      %1061 = vmatpush1.bf16.msra.mxu0 %v724
      %1062 = vmatprep.subr.bf16.mxu0 %v737
      %1063 = vmatpush1.bf16.msra.mxu0 %v736
      %1064 = vmatprep.subr.bf16.mxu0 %v749
      %1065 = vmatpush1.bf16.msra.mxu0 %v748
      %1066 = vmatprep.subr.bf16.mxu0 %v761
      %1067 = vmatpush1.bf16.msra.mxu0 %v760
      %1068 = vmatprep.subr.bf16.mxu0 0
      %1069 = vmatpush1.bf16.msra.mxu0 0
      %1070 = vmatprep.subr.bf16.mxu0 0
      %1071 = vmatpush1.bf16.msra.mxu0 0
      %1072 = vmatprep.subr.bf16.mxu0 0
      %1073 = vmatpush1.bf16.msra.mxu0 0
      %1074 = vmatprep.subr.bf16.mxu0 0
      %1075 = vmatpush1.bf16.msra.mxu0 0
      %1076 = vmatprep.subr.bf16.mxu0 0
      %1077 = vmatpush1.bf16.msra.mxu0 0
      %1078 = vmatprep.subr.bf16.mxu0 0
      %1079 = vmatpush1.bf16.msra.mxu0 0
      %1080 = vmatprep.subr.bf16.mxu0 0
      %1081 = vmatpush1.bf16.msra.mxu0 0
      %1082 = vmatprep.subr.bf16.mxu0 0
      %1083 = vmatpush1.bf16.msra.mxu0 0
      %1084 = vmatprep.subr.bf16.mxu0 0
      %1085 = vmatpush1.bf16.msra.mxu0 0
      %1086 = vmatprep.subr.bf16.mxu0 0
      %1087 = vmatpush1.bf16.msra.mxu0 0
      %1088 = vmatprep.subr.bf16.mxu0 0
      %1089 = vmatpush1.bf16.msra.mxu0 0
      %1090 = vmatprep.subr.bf16.mxu0 0
      %1091 = vmatpush1.bf16.msra.mxu0 0
      %1092 = vmatprep.mubr.bf16.mxu0 0
      %1093 = vmatmul.mubr.bf16.gmra.mrb[0].mxu0 %v820
      %v1094 = vpop.f32.mrb[0].mxu0
      %v1095 = vadd.f32 0.0, %v1094
      %v1096 = vpop.f32.mrb[0].mxu0
      %v1097 = vadd.f32 0.0, %v1096
      %v1098 = vpop.f32.mrb[0].mxu0
      %v1099 = vadd.f32 0.0, %v1098
      %v1100 = vpop.f32.mrb[0].mxu0
      %v1101 = vadd.f32 0.0, %v1100
      %1102 = vmatprep.mubr.bf16.mxu0 0
      %1103 = vmatmul.mubr.bf16.gmra.mrb[0].mxu0 %v823
      %v1104 = vpop.f32.mrb[0].mxu0
      %v1105 = vadd.f32 0.0, %v1104
      %v1106 = vpop.f32.mrb[0].mxu0
      %v1107 = vadd.f32 0.0, %v1106
      %v1108 = vpop.f32.mrb[0].mxu0
      %v1109 = vadd.f32 0.0, %v1108
      %v1110 = vpop.f32.mrb[0].mxu0
      %v1111 = vadd.f32 0.0, %v1110
      %1112 = vmatprep.mubr.bf16.mxu0 0
      %1113 = vmatmul.mubr.bf16.gmra.mrb[0].mxu0 %v826
      %v1114 = vpop.f32.mrb[0].mxu0
      %v1115 = vadd.f32 0.0, %v1114
      %v1116 = vpop.f32.mrb[0].mxu0
      %v1117 = vadd.f32 0.0, %v1116
      %v1118 = vpop.f32.mrb[0].mxu0
      %v1119 = vadd.f32 0.0, %v1118
      %v1120 = vpop.f32.mrb[0].mxu0
      %v1121 = vadd.f32 0.0, %v1120
      %1122 = vmatprep.mubr.bf16.mxu0 0
      %1123 = vmatmul.mubr.bf16.gmra.mrb[0].mxu0 %v829
      %v1124 = vpop.f32.mrb[0].mxu0
      %v1125 = vadd.f32 0.0, %v1124
      %v1126 = vpop.f32.mrb[0].mxu0
      %v1127 = vadd.f32 0.0, %v1126
      %v1128 = vpop.f32.mrb[0].mxu0
      %v1129 = vadd.f32 0.0, %v1128
      %v1130 = vpop.f32.mrb[0].mxu0
      %v1131 = vadd.f32 0.0, %v1130
      %1132 = vmatprep.mubr.bf16.mxu0 0
      %1133 = vmatmul.mubr.bf16.gmra.mrb[0].mxu0 %v832
      %v1134 = vpop.f32.mrb[0].mxu0
      %v1135 = vadd.f32 0.0, %v1134
      %v1136 = vpop.f32.mrb[0].mxu0
      %v1137 = vadd.f32 0.0, %v1136
      %v1138 = vpop.f32.mrb[0].mxu0
      %v1139 = vadd.f32 0.0, %v1138
      %v1140 = vpop.f32.mrb[0].mxu0
      %v1141 = vadd.f32 0.0, %v1140
      %1142 = vmatprep.mubr.bf16.mxu0 0
      %1143 = vmatmul.mubr.bf16.gmra.mrb[0].mxu0 %v835
      %v1144 = vpop.f32.mrb[0].mxu0
      %v1145 = vadd.f32 0.0, %v1144
      %v1146 = vpop.f32.mrb[0].mxu0
      %v1147 = vadd.f32 0.0, %v1146
      %v1148 = vpop.f32.mrb[0].mxu0
      %v1149 = vadd.f32 0.0, %v1148
      %v1150 = vpop.f32.mrb[0].mxu0
      %v1151 = vadd.f32 0.0, %v1150
      %1152 = vmatprep.mubr.bf16.mxu0 0
      %1153 = vmatmul.mubr.bf16.gmra.mrb[0].mxu0 %v838
      %v1154 = vpop.f32.mrb[0].mxu0
      %v1155 = vadd.f32 0.0, %v1154
      %v1156 = vpop.f32.mrb[0].mxu0
      %v1157 = vadd.f32 0.0, %v1156
      %v1158 = vpop.f32.mrb[0].mxu0
      %v1159 = vadd.f32 0.0, %v1158
      %v1160 = vpop.f32.mrb[0].mxu0
      %v1161 = vadd.f32 0.0, %v1160
      %1162 = vmatprep.mubr.bf16.mxu0 0
      %1163 = vmatmul.mubr.bf16.gmra.mrb[0].mxu0 %v841
      %v1164 = vpop.f32.mrb[0].mxu0
      %v1165 = vadd.f32 0.0, %v1164
      %v1166 = vpop.f32.mrb[0].mxu0
      %v1167 = vadd.f32 0.0, %v1166
      %v1168 = vpop.f32.mrb[0].mxu0
      %v1169 = vadd.f32 0.0, %v1168
      %v1170 = vpop.f32.mrb[0].mxu0
      %v1171 = vadd.f32 0.0, %v1170
      %1172 = vmatprep.mubr.bf16.mxu0 0
      %1173 = vmatmul.mubr.bf16.gmra.mrb[0].mxu0 %v844
      %v1174 = vpop.f32.mrb[0].mxu0
      %v1175 = vadd.f32 0.0, %v1174
      %v1176 = vpop.f32.mrb[0].mxu0
      %v1177 = vadd.f32 0.0, %v1176
      %v1178 = vpop.f32.mrb[0].mxu0
      %v1179 = vadd.f32 0.0, %v1178
      %v1180 = vpop.f32.mrb[0].mxu0
      %v1181 = vadd.f32 0.0, %v1180
      %1182 = vmatprep.mubr.bf16.mxu0 0
      %1183 = vmatmul.mubr.bf16.gmra.mrb[0].mxu0 %v847
      %v1184 = vpop.f32.mrb[0].mxu0
      %v1185 = vadd.f32 0.0, %v1184
      %v1186 = vpop.f32.mrb[0].mxu0
      %v1187 = vadd.f32 0.0, %v1186
      %v1188 = vpop.f32.mrb[0].mxu0
      %v1189 = vadd.f32 0.0, %v1188
      %v1190 = vpop.f32.mrb[0].mxu0
      %v1191 = vadd.f32 0.0, %v1190
      %1192 = vmatprep.mubr.bf16.mxu0 0
      %1193 = vmatmul.mubr.bf16.gmra.mrb[0].mxu0 %v850
      %v1194 = vpop.f32.mrb[0].mxu0
      %v1195 = vadd.f32 0.0, %v1194
      %v1196 = vpop.f32.mrb[0].mxu0
      %v1197 = vadd.f32 0.0, %v1196
      %v1198 = vpop.f32.mrb[0].mxu0
      %v1199 = vadd.f32 0.0, %v1198
      %v1200 = vpop.f32.mrb[0].mxu0
      %v1201 = vadd.f32 0.0, %v1200
      %1202 = vmatprep.mubr.bf16.mxu0 0
      %1203 = vmatmul.mubr.bf16.gmra.mrb[0].mxu0 %v853
      %v1204 = vpop.f32.mrb[0].mxu0
      %v1205 = vadd.f32 0.0, %v1204
      %v1206 = vpop.f32.mrb[0].mxu0
      %v1207 = vadd.f32 0.0, %v1206
      %v1208 = vpop.f32.mrb[0].mxu0
      %v1209 = vadd.f32 0.0, %v1208
      %v1210 = vpop.f32.mrb[0].mxu0
      %v1211 = vadd.f32 0.0, %v1210
      %1212 = vmatprep.mubr.bf16.mxu0 0
      %1213 = vmatmul.mubr.bf16.gmra.mrb[0].mxu0 %v856
      %v1214 = vpop.f32.mrb[0].mxu0
      %v1215 = vadd.f32 0.0, %v1214
      %v1216 = vpop.f32.mrb[0].mxu0
      %v1217 = vadd.f32 0.0, %v1216
      %v1218 = vpop.f32.mrb[0].mxu0
      %v1219 = vadd.f32 0.0, %v1218
      %v1220 = vpop.f32.mrb[0].mxu0
      %v1221 = vadd.f32 0.0, %v1220
      %1222 = vmatprep.mubr.bf16.mxu0 0
      %1223 = vmatmul.mubr.bf16.gmra.mrb[0].mxu0 %v859
      %v1224 = vpop.f32.mrb[0].mxu0
      %v1225 = vadd.f32 0.0, %v1224
      %v1226 = vpop.f32.mrb[0].mxu0
      %v1227 = vadd.f32 0.0, %v1226
      %v1228 = vpop.f32.mrb[0].mxu0
      %v1229 = vadd.f32 0.0, %v1228
      %v1230 = vpop.f32.mrb[0].mxu0
      %v1231 = vadd.f32 0.0, %v1230
      %1232 = vmatprep.mubr.bf16.mxu0 0
      %1233 = vmatmul.mubr.bf16.gmra.mrb[0].mxu0 %v862
      %v1234 = vpop.f32.mrb[0].mxu0
      %v1235 = vadd.f32 0.0, %v1234
      %v1236 = vpop.f32.mrb[0].mxu0
      %v1237 = vadd.f32 0.0, %v1236
      %v1238 = vpop.f32.mrb[0].mxu0
      %v1239 = vadd.f32 0.0, %v1238
      %v1240 = vpop.f32.mrb[0].mxu0
      %v1241 = vadd.f32 0.0, %v1240
      %1242 = vmatprep.mubr.bf16.mxu0 0
      %1243 = vmatmul.mubr.bf16.gmra.mrb[0].mxu0 %v865
      %v1244 = vpop.f32.mrb[0].mxu0
      %v1245 = vadd.f32 0.0, %v1244
      %v1246 = vpop.f32.mrb[0].mxu0
      %v1247 = vadd.f32 0.0, %v1246
      %v1248 = vpop.f32.mrb[0].mxu0
      %v1249 = vadd.f32 0.0, %v1248
      %v1250 = vpop.f32.mrb[0].mxu0
      %v1251 = vadd.f32 0.0, %v1250
      %1252 = vdwg.mxu0
      %1253 = vmatprep.subr.bf16.mxu0 %v727
      %1254 = vmatpush1.bf16.msra.mxu0 %v726
      %1255 = vmatprep.subr.bf16.mxu0 %v739
      %1256 = vmatpush1.bf16.msra.mxu0 %v738
      %1257 = vmatprep.subr.bf16.mxu0 %v751
      %1258 = vmatpush1.bf16.msra.mxu0 %v750
      %1259 = vmatprep.subr.bf16.mxu0 %v763
      %1260 = vmatpush1.bf16.msra.mxu0 %v762
      %1261 = vmatprep.subr.bf16.mxu0 0
      %1262 = vmatpush1.bf16.msra.mxu0 0
      %1263 = vmatprep.subr.bf16.mxu0 0
      %1264 = vmatpush1.bf16.msra.mxu0 0
      %1265 = vmatprep.subr.bf16.mxu0 0
      %1266 = vmatpush1.bf16.msra.mxu0 0
      %1267 = vmatprep.subr.bf16.mxu0 0
      %1268 = vmatpush1.bf16.msra.mxu0 0
      %1269 = vmatprep.subr.bf16.mxu0 0
      %1270 = vmatpush1.bf16.msra.mxu0 0
      %1271 = vmatprep.subr.bf16.mxu0 0
      %1272 = vmatpush1.bf16.msra.mxu0 0
      %1273 = vmatprep.subr.bf16.mxu0 0
      %1274 = vmatpush1.bf16.msra.mxu0 0
      %1275 = vmatprep.subr.bf16.mxu0 0
      %1276 = vmatpush1.bf16.msra.mxu0 0
      %1277 = vmatprep.subr.bf16.mxu0 0
      %1278 = vmatpush1.bf16.msra.mxu0 0
      %1279 = vmatprep.subr.bf16.mxu0 0
      %1280 = vmatpush1.bf16.msra.mxu0 0
      %1281 = vmatprep.subr.bf16.mxu0 0
      %1282 = vmatpush1.bf16.msra.mxu0 0
      %1283 = vmatprep.subr.bf16.mxu0 0
      %1284 = vmatpush1.bf16.msra.mxu0 0
      %1285 = vmatprep.mubr.bf16.mxu0 0
      %1286 = vmatmul.mubr.bf16.gmra.mrb[0].mxu0 %v820
      %v1287 = vpop.f32.mrb[0].mxu0
      %v1288 = vadd.f32 0.0, %v1287
      %v1289 = vpop.f32.mrb[0].mxu0
      %v1290 = vadd.f32 0.0, %v1289
      %v1291 = vpop.f32.mrb[0].mxu0
      %v1292 = vadd.f32 0.0, %v1291
      %v1293 = vpop.f32.mrb[0].mxu0
      %v1294 = vadd.f32 0.0, %v1293
      %1295 = vmatprep.mubr.bf16.mxu0 0
      %1296 = vmatmul.mubr.bf16.gmra.mrb[0].mxu0 %v823
      %v1297 = vpop.f32.mrb[0].mxu0
      %v1298 = vadd.f32 0.0, %v1297
      %v1299 = vpop.f32.mrb[0].mxu0
      %v1300 = vadd.f32 0.0, %v1299
      %v1301 = vpop.f32.mrb[0].mxu0
      %v1302 = vadd.f32 0.0, %v1301
      %v1303 = vpop.f32.mrb[0].mxu0
      %v1304 = vadd.f32 0.0, %v1303
      %1305 = vmatprep.mubr.bf16.mxu0 0
      %1306 = vmatmul.mubr.bf16.gmra.mrb[0].mxu0 %v826
      %v1307 = vpop.f32.mrb[0].mxu0
      %v1308 = vadd.f32 0.0, %v1307
      %v1309 = vpop.f32.mrb[0].mxu0
      %v1310 = vadd.f32 0.0, %v1309
      %v1311 = vpop.f32.mrb[0].mxu0
      %v1312 = vadd.f32 0.0, %v1311
      %v1313 = vpop.f32.mrb[0].mxu0
      %v1314 = vadd.f32 0.0, %v1313
      %1315 = vmatprep.mubr.bf16.mxu0 0
      %1316 = vmatmul.mubr.bf16.gmra.mrb[0].mxu0 %v829
      %v1317 = vpop.f32.mrb[0].mxu0
      %v1318 = vadd.f32 0.0, %v1317
      %v1319 = vpop.f32.mrb[0].mxu0
      %v1320 = vadd.f32 0.0, %v1319
      %v1321 = vpop.f32.mrb[0].mxu0
      %v1322 = vadd.f32 0.0, %v1321
      %v1323 = vpop.f32.mrb[0].mxu0
      %v1324 = vadd.f32 0.0, %v1323
      %1325 = vmatprep.mubr.bf16.mxu0 0
      %1326 = vmatmul.mubr.bf16.gmra.mrb[0].mxu0 %v832
      %v1327 = vpop.f32.mrb[0].mxu0
      %v1328 = vadd.f32 0.0, %v1327
      %v1329 = vpop.f32.mrb[0].mxu0
      %v1330 = vadd.f32 0.0, %v1329
      %v1331 = vpop.f32.mrb[0].mxu0
      %v1332 = vadd.f32 0.0, %v1331
      %v1333 = vpop.f32.mrb[0].mxu0
      %v1334 = vadd.f32 0.0, %v1333
      %1335 = vmatprep.mubr.bf16.mxu0 0
      %1336 = vmatmul.mubr.bf16.gmra.mrb[0].mxu0 %v835
      %v1337 = vpop.f32.mrb[0].mxu0
      %v1338 = vadd.f32 0.0, %v1337
      %v1339 = vpop.f32.mrb[0].mxu0
      %v1340 = vadd.f32 0.0, %v1339
      %v1341 = vpop.f32.mrb[0].mxu0
      %v1342 = vadd.f32 0.0, %v1341
      %v1343 = vpop.f32.mrb[0].mxu0
      %v1344 = vadd.f32 0.0, %v1343
      %1345 = vmatprep.mubr.bf16.mxu0 0
      %1346 = vmatmul.mubr.bf16.gmra.mrb[0].mxu0 %v838
      %v1347 = vpop.f32.mrb[0].mxu0
      %v1348 = vadd.f32 0.0, %v1347
      %v1349 = vpop.f32.mrb[0].mxu0
      %v1350 = vadd.f32 0.0, %v1349
      %v1351 = vpop.f32.mrb[0].mxu0
      %v1352 = vadd.f32 0.0, %v1351
      %v1353 = vpop.f32.mrb[0].mxu0
      %v1354 = vadd.f32 0.0, %v1353
      %1355 = vmatprep.mubr.bf16.mxu0 0
      %1356 = vmatmul.mubr.bf16.gmra.mrb[0].mxu0 %v841
      %v1357 = vpop.f32.mrb[0].mxu0
      %v1358 = vadd.f32 0.0, %v1357
      %v1359 = vpop.f32.mrb[0].mxu0
      %v1360 = vadd.f32 0.0, %v1359
      %v1361 = vpop.f32.mrb[0].mxu0
      %v1362 = vadd.f32 0.0, %v1361
      %v1363 = vpop.f32.mrb[0].mxu0
      %v1364 = vadd.f32 0.0, %v1363
      %1365 = vmatprep.mubr.bf16.mxu0 0
      %1366 = vmatmul.mubr.bf16.gmra.mrb[0].mxu0 %v844
      %v1367 = vpop.f32.mrb[0].mxu0
      %v1368 = vadd.f32 0.0, %v1367
      %v1369 = vpop.f32.mrb[0].mxu0
      %v1370 = vadd.f32 0.0, %v1369
      %v1371 = vpop.f32.mrb[0].mxu0
      %v1372 = vadd.f32 0.0, %v1371
      %v1373 = vpop.f32.mrb[0].mxu0
      %v1374 = vadd.f32 0.0, %v1373
      %1375 = vmatprep.mubr.bf16.mxu0 0
      %1376 = vmatmul.mubr.bf16.gmra.mrb[0].mxu0 %v847
      %v1377 = vpop.f32.mrb[0].mxu0
      %v1378 = vadd.f32 0.0, %v1377
      %v1379 = vpop.f32.mrb[0].mxu0
      %v1380 = vadd.f32 0.0, %v1379
      %v1381 = vpop.f32.mrb[0].mxu0
      %v1382 = vadd.f32 0.0, %v1381
      %v1383 = vpop.f32.mrb[0].mxu0
      %v1384 = vadd.f32 0.0, %v1383
      %1385 = vmatprep.mubr.bf16.mxu0 0
      %1386 = vmatmul.mubr.bf16.gmra.mrb[0].mxu0 %v850
      %v1387 = vpop.f32.mrb[0].mxu0
      %v1388 = vadd.f32 0.0, %v1387
      %v1389 = vpop.f32.mrb[0].mxu0
      %v1390 = vadd.f32 0.0, %v1389
      %v1391 = vpop.f32.mrb[0].mxu0
      %v1392 = vadd.f32 0.0, %v1391
      %v1393 = vpop.f32.mrb[0].mxu0
      %v1394 = vadd.f32 0.0, %v1393
      %1395 = vmatprep.mubr.bf16.mxu0 0
      %1396 = vmatmul.mubr.bf16.gmra.mrb[0].mxu0 %v853
      %v1397 = vpop.f32.mrb[0].mxu0
      %v1398 = vadd.f32 0.0, %v1397
      %v1399 = vpop.f32.mrb[0].mxu0
      %v1400 = vadd.f32 0.0, %v1399
      %v1401 = vpop.f32.mrb[0].mxu0
      %v1402 = vadd.f32 0.0, %v1401
      %v1403 = vpop.f32.mrb[0].mxu0
      %v1404 = vadd.f32 0.0, %v1403
      %1405 = vmatprep.mubr.bf16.mxu0 0
      %1406 = vmatmul.mubr.bf16.gmra.mrb[0].mxu0 %v856
      %v1407 = vpop.f32.mrb[0].mxu0
      %v1408 = vadd.f32 0.0, %v1407
      %v1409 = vpop.f32.mrb[0].mxu0
      %v1410 = vadd.f32 0.0, %v1409
      %v1411 = vpop.f32.mrb[0].mxu0
      %v1412 = vadd.f32 0.0, %v1411
      %v1413 = vpop.f32.mrb[0].mxu0
      %v1414 = vadd.f32 0.0, %v1413
      %1415 = vmatprep.mubr.bf16.mxu0 0
      %1416 = vmatmul.mubr.bf16.gmra.mrb[0].mxu0 %v859
      %v1417 = vpop.f32.mrb[0].mxu0
      %v1418 = vadd.f32 0.0, %v1417
      %v1419 = vpop.f32.mrb[0].mxu0
      %v1420 = vadd.f32 0.0, %v1419
      %v1421 = vpop.f32.mrb[0].mxu0
      %v1422 = vadd.f32 0.0, %v1421
      %v1423 = vpop.f32.mrb[0].mxu0
      %v1424 = vadd.f32 0.0, %v1423
      %1425 = vmatprep.mubr.bf16.mxu0 0
      %1426 = vmatmul.mubr.bf16.gmra.mrb[0].mxu0 %v862
      %v1427 = vpop.f32.mrb[0].mxu0
      %v1428 = vadd.f32 0.0, %v1427
      %v1429 = vpop.f32.mrb[0].mxu0
      %v1430 = vadd.f32 0.0, %v1429
      %v1431 = vpop.f32.mrb[0].mxu0
      %v1432 = vadd.f32 0.0, %v1431
      %v1433 = vpop.f32.mrb[0].mxu0
      %v1434 = vadd.f32 0.0, %v1433
      %1435 = vmatprep.mubr.bf16.mxu0 0
      %1436 = vmatmul.mubr.bf16.gmra.mrb[0].mxu0 %v865
      %v1437 = vpop.f32.mrb[0].mxu0
      %v1438 = vadd.f32 0.0, %v1437
      %v1439 = vpop.f32.mrb[0].mxu0
      %v1440 = vadd.f32 0.0, %v1439
      %v1441 = vpop.f32.mrb[0].mxu0
      %v1442 = vadd.f32 0.0, %v1441
      %v1443 = vpop.f32.mrb[0].mxu0
      %v1444 = vadd.f32 0.0, %v1443
      %1445 = vdwg.mxu0
      %1446 = vmatprep.subr.bf16.mxu0 %v729
      %1447 = vmatpush1.bf16.msra.mxu0 %v728
      %1448 = vmatprep.subr.bf16.mxu0 %v741
      %1449 = vmatpush1.bf16.msra.mxu0 %v740
      %1450 = vmatprep.subr.bf16.mxu0 %v753
      %1451 = vmatpush1.bf16.msra.mxu0 %v752
      %1452 = vmatprep.subr.bf16.mxu0 %v765
      %1453 = vmatpush1.bf16.msra.mxu0 %v764
      %1454 = vmatprep.subr.bf16.mxu0 0
      %1455 = vmatpush1.bf16.msra.mxu0 0
      %1456 = vmatprep.subr.bf16.mxu0 0
      %1457 = vmatpush1.bf16.msra.mxu0 0
      %1458 = vmatprep.subr.bf16.mxu0 0
      %1459 = vmatpush1.bf16.msra.mxu0 0
      %1460 = vmatprep.subr.bf16.mxu0 0
      %1461 = vmatpush1.bf16.msra.mxu0 0
      %1462 = vmatprep.subr.bf16.mxu0 0
      %1463 = vmatpush1.bf16.msra.mxu0 0
      %1464 = vmatprep.subr.bf16.mxu0 0
      %1465 = vmatpush1.bf16.msra.mxu0 0
      %1466 = vmatprep.subr.bf16.mxu0 0
      %1467 = vmatpush1.bf16.msra.mxu0 0
      %1468 = vmatprep.subr.bf16.mxu0 0
      %1469 = vmatpush1.bf16.msra.mxu0 0
      %1470 = vmatprep.subr.bf16.mxu0 0
      %1471 = vmatpush1.bf16.msra.mxu0 0
      %1472 = vmatprep.subr.bf16.mxu0 0
      %1473 = vmatpush1.bf16.msra.mxu0 0
      %1474 = vmatprep.subr.bf16.mxu0 0
      %1475 = vmatpush1.bf16.msra.mxu0 0
      %1476 = vmatprep.subr.bf16.mxu0 0
      %1477 = vmatpush1.bf16.msra.mxu0 0
      %1478 = vmatprep.mubr.bf16.mxu0 0
      %1479 = vmatmul.mubr.bf16.gmra.mrb[0].mxu0 %v820
      %v1480 = vpop.f32.mrb[0].mxu0
      %v1481 = vadd.f32 0.0, %v1480
      %v1482 = vpop.f32.mrb[0].mxu0
      %v1483 = vadd.f32 0.0, %v1482
      %v1484 = vpop.f32.mrb[0].mxu0
      %v1485 = vadd.f32 0.0, %v1484
      %v1486 = vpop.f32.mrb[0].mxu0
      %v1487 = vadd.f32 0.0, %v1486
      %1488 = vmatprep.mubr.bf16.mxu0 0
      %1489 = vmatmul.mubr.bf16.gmra.mrb[0].mxu0 %v823
      %v1490 = vpop.f32.mrb[0].mxu0
      %v1491 = vadd.f32 0.0, %v1490
      %v1492 = vpop.f32.mrb[0].mxu0
      %v1493 = vadd.f32 0.0, %v1492
      %v1494 = vpop.f32.mrb[0].mxu0
      %v1495 = vadd.f32 0.0, %v1494
      %v1496 = vpop.f32.mrb[0].mxu0
      %v1497 = vadd.f32 0.0, %v1496
      %1498 = vmatprep.mubr.bf16.mxu0 0
      %1499 = vmatmul.mubr.bf16.gmra.mrb[0].mxu0 %v826
      %v1500 = vpop.f32.mrb[0].mxu0
      %v1501 = vadd.f32 0.0, %v1500
      %v1502 = vpop.f32.mrb[0].mxu0
      %v1503 = vadd.f32 0.0, %v1502
      %v1504 = vpop.f32.mrb[0].mxu0
      %v1505 = vadd.f32 0.0, %v1504
      %v1506 = vpop.f32.mrb[0].mxu0
      %v1507 = vadd.f32 0.0, %v1506
      %1508 = vmatprep.mubr.bf16.mxu0 0
      %1509 = vmatmul.mubr.bf16.gmra.mrb[0].mxu0 %v829
      %v1510 = vpop.f32.mrb[0].mxu0
      %v1511 = vadd.f32 0.0, %v1510
      %v1512 = vpop.f32.mrb[0].mxu0
      %v1513 = vadd.f32 0.0, %v1512
      %v1514 = vpop.f32.mrb[0].mxu0
      %v1515 = vadd.f32 0.0, %v1514
      %v1516 = vpop.f32.mrb[0].mxu0
      %v1517 = vadd.f32 0.0, %v1516
      %1518 = vmatprep.mubr.bf16.mxu0 0
      %1519 = vmatmul.mubr.bf16.gmra.mrb[0].mxu0 %v832
      %v1520 = vpop.f32.mrb[0].mxu0
      %v1521 = vadd.f32 0.0, %v1520
      %v1522 = vpop.f32.mrb[0].mxu0
      %v1523 = vadd.f32 0.0, %v1522
      %v1524 = vpop.f32.mrb[0].mxu0
      %v1525 = vadd.f32 0.0, %v1524
      %v1526 = vpop.f32.mrb[0].mxu0
      %v1527 = vadd.f32 0.0, %v1526
      %1528 = vmatprep.mubr.bf16.mxu0 0
      %1529 = vmatmul.mubr.bf16.gmra.mrb[0].mxu0 %v835
      %v1530 = vpop.f32.mrb[0].mxu0
      %v1531 = vadd.f32 0.0, %v1530
      %v1532 = vpop.f32.mrb[0].mxu0
      %v1533 = vadd.f32 0.0, %v1532
      %v1534 = vpop.f32.mrb[0].mxu0
      %v1535 = vadd.f32 0.0, %v1534
      %v1536 = vpop.f32.mrb[0].mxu0
      %v1537 = vadd.f32 0.0, %v1536
      %1538 = vmatprep.mubr.bf16.mxu0 0
      %1539 = vmatmul.mubr.bf16.gmra.mrb[0].mxu0 %v838
      %v1540 = vpop.f32.mrb[0].mxu0
      %v1541 = vadd.f32 0.0, %v1540
      %v1542 = vpop.f32.mrb[0].mxu0
      %v1543 = vadd.f32 0.0, %v1542
      %v1544 = vpop.f32.mrb[0].mxu0
      %v1545 = vadd.f32 0.0, %v1544
      %v1546 = vpop.f32.mrb[0].mxu0
      %v1547 = vadd.f32 0.0, %v1546
      %1548 = vmatprep.mubr.bf16.mxu0 0
      %1549 = vmatmul.mubr.bf16.gmra.mrb[0].mxu0 %v841
      %v1550 = vpop.f32.mrb[0].mxu0
      %v1551 = vadd.f32 0.0, %v1550
      %v1552 = vpop.f32.mrb[0].mxu0
      %v1553 = vadd.f32 0.0, %v1552
      %v1554 = vpop.f32.mrb[0].mxu0
      %v1555 = vadd.f32 0.0, %v1554
      %v1556 = vpop.f32.mrb[0].mxu0
      %v1557 = vadd.f32 0.0, %v1556
      %1558 = vmatprep.mubr.bf16.mxu0 0
      %1559 = vmatmul.mubr.bf16.gmra.mrb[0].mxu0 %v844
      %v1560 = vpop.f32.mrb[0].mxu0
      %v1561 = vadd.f32 0.0, %v1560
      %v1562 = vpop.f32.mrb[0].mxu0
      %v1563 = vadd.f32 0.0, %v1562
      %v1564 = vpop.f32.mrb[0].mxu0
      %v1565 = vadd.f32 0.0, %v1564
      %v1566 = vpop.f32.mrb[0].mxu0
      %v1567 = vadd.f32 0.0, %v1566
      %1568 = vmatprep.mubr.bf16.mxu0 0
      %1569 = vmatmul.mubr.bf16.gmra.mrb[0].mxu0 %v847
      %v1570 = vpop.f32.mrb[0].mxu0
      %v1571 = vadd.f32 0.0, %v1570
      %v1572 = vpop.f32.mrb[0].mxu0
      %v1573 = vadd.f32 0.0, %v1572
      %v1574 = vpop.f32.mrb[0].mxu0
      %v1575 = vadd.f32 0.0, %v1574
      %v1576 = vpop.f32.mrb[0].mxu0
      %v1577 = vadd.f32 0.0, %v1576
      %1578 = vmatprep.mubr.bf16.mxu0 0
      %1579 = vmatmul.mubr.bf16.gmra.mrb[0].mxu0 %v850
      %v1580 = vpop.f32.mrb[0].mxu0
      %v1581 = vadd.f32 0.0, %v1580
      %v1582 = vpop.f32.mrb[0].mxu0
      %v1583 = vadd.f32 0.0, %v1582
      %v1584 = vpop.f32.mrb[0].mxu0
      %v1585 = vadd.f32 0.0, %v1584
      %v1586 = vpop.f32.mrb[0].mxu0
      %v1587 = vadd.f32 0.0, %v1586
      %1588 = vmatprep.mubr.bf16.mxu0 0
      %1589 = vmatmul.mubr.bf16.gmra.mrb[0].mxu0 %v853
      %v1590 = vpop.f32.mrb[0].mxu0
      %v1591 = vadd.f32 0.0, %v1590
      %v1592 = vpop.f32.mrb[0].mxu0
      %v1593 = vadd.f32 0.0, %v1592
      %v1594 = vpop.f32.mrb[0].mxu0
      %v1595 = vadd.f32 0.0, %v1594
      %v1596 = vpop.f32.mrb[0].mxu0
      %v1597 = vadd.f32 0.0, %v1596
      %1598 = vmatprep.mubr.bf16.mxu0 0
      %1599 = vmatmul.mubr.bf16.gmra.mrb[0].mxu0 %v856
      %v1600 = vpop.f32.mrb[0].mxu0
      %v1601 = vadd.f32 0.0, %v1600
      %v1602 = vpop.f32.mrb[0].mxu0
      %v1603 = vadd.f32 0.0, %v1602
      %v1604 = vpop.f32.mrb[0].mxu0
      %v1605 = vadd.f32 0.0, %v1604
      %v1606 = vpop.f32.mrb[0].mxu0
      %v1607 = vadd.f32 0.0, %v1606
      %1608 = vmatprep.mubr.bf16.mxu0 0
      %1609 = vmatmul.mubr.bf16.gmra.mrb[0].mxu0 %v859
      %v1610 = vpop.f32.mrb[0].mxu0
      %v1611 = vadd.f32 0.0, %v1610
      %v1612 = vpop.f32.mrb[0].mxu0
      %v1613 = vadd.f32 0.0, %v1612
      %v1614 = vpop.f32.mrb[0].mxu0
      %v1615 = vadd.f32 0.0, %v1614
      %v1616 = vpop.f32.mrb[0].mxu0
      %v1617 = vadd.f32 0.0, %v1616
      %1618 = vmatprep.mubr.bf16.mxu0 0
      %1619 = vmatmul.mubr.bf16.gmra.mrb[0].mxu0 %v862
      %v1620 = vpop.f32.mrb[0].mxu0
      %v1621 = vadd.f32 0.0, %v1620
      %v1622 = vpop.f32.mrb[0].mxu0
      %v1623 = vadd.f32 0.0, %v1622
      %v1624 = vpop.f32.mrb[0].mxu0
      %v1625 = vadd.f32 0.0, %v1624
      %v1626 = vpop.f32.mrb[0].mxu0
      %v1627 = vadd.f32 0.0, %v1626
      %1628 = vmatprep.mubr.bf16.mxu0 0
      %1629 = vmatmul.mubr.bf16.gmra.mrb[0].mxu0 %v865
      %v1630 = vpop.f32.mrb[0].mxu0
      %v1631 = vadd.f32 0.0, %v1630
      %v1632 = vpop.f32.mrb[0].mxu0
      %v1633 = vadd.f32 0.0, %v1632
      %v1634 = vpop.f32.mrb[0].mxu0
      %v1635 = vadd.f32 0.0, %v1634
      %v1636 = vpop.f32.mrb[0].mxu0
      %v1637 = vadd.f32 0.0, %v1636
      %1638 = vdwg.mxu0
      %1639 = vmatprep.subr.bf16.mxu0 %v731
      %1640 = vmatpush1.bf16.msra.mxu0 %v730
      %1641 = vmatprep.subr.bf16.mxu0 %v743
      %1642 = vmatpush1.bf16.msra.mxu0 %v742
      %1643 = vmatprep.subr.bf16.mxu0 %v755
      %1644 = vmatpush1.bf16.msra.mxu0 %v754
      %1645 = vmatprep.subr.bf16.mxu0 %v767
      %1646 = vmatpush1.bf16.msra.mxu0 %v766
      %1647 = vmatprep.subr.bf16.mxu0 0
      %1648 = vmatpush1.bf16.msra.mxu0 0
      %1649 = vmatprep.subr.bf16.mxu0 0
      %1650 = vmatpush1.bf16.msra.mxu0 0
      %1651 = vmatprep.subr.bf16.mxu0 0
      %1652 = vmatpush1.bf16.msra.mxu0 0
      %1653 = vmatprep.subr.bf16.mxu0 0
      %1654 = vmatpush1.bf16.msra.mxu0 0
      %1655 = vmatprep.subr.bf16.mxu0 0
      %1656 = vmatpush1.bf16.msra.mxu0 0
      %1657 = vmatprep.subr.bf16.mxu0 0
      %1658 = vmatpush1.bf16.msra.mxu0 0
      %1659 = vmatprep.subr.bf16.mxu0 0
      %1660 = vmatpush1.bf16.msra.mxu0 0
      %1661 = vmatprep.subr.bf16.mxu0 0
      %1662 = vmatpush1.bf16.msra.mxu0 0
      %1663 = vmatprep.subr.bf16.mxu0 0
      %1664 = vmatpush1.bf16.msra.mxu0 0
      %1665 = vmatprep.subr.bf16.mxu0 0
      %1666 = vmatpush1.bf16.msra.mxu0 0
      %1667 = vmatprep.subr.bf16.mxu0 0
      %1668 = vmatpush1.bf16.msra.mxu0 0
      %1669 = vmatprep.subr.bf16.mxu0 0
      %1670 = vmatpush1.bf16.msra.mxu0 0
      %1671 = vmatprep.mubr.bf16.mxu0 0
      %1672 = vmatmul.mubr.bf16.gmra.mrb[0].mxu0 %v820
      %v1673 = vpop.f32.mrb[0].mxu0
      %v1674 = vadd.f32 0.0, %v1673
      %v1675 = vpop.f32.mrb[0].mxu0
      %v1676 = vadd.f32 0.0, %v1675
      %v1677 = vpop.f32.mrb[0].mxu0
      %v1678 = vadd.f32 0.0, %v1677
      %v1679 = vpop.f32.mrb[0].mxu0
      %v1680 = vadd.f32 0.0, %v1679
      %1681 = vmatprep.mubr.bf16.mxu0 0
      %1682 = vmatmul.mubr.bf16.gmra.mrb[0].mxu0 %v823
      %v1683 = vpop.f32.mrb[0].mxu0
      %v1684 = vadd.f32 0.0, %v1683
      %v1685 = vpop.f32.mrb[0].mxu0
      %v1686 = vadd.f32 0.0, %v1685
      %v1687 = vpop.f32.mrb[0].mxu0
      %v1688 = vadd.f32 0.0, %v1687
      %v1689 = vpop.f32.mrb[0].mxu0
      %v1690 = vadd.f32 0.0, %v1689
      %1691 = vmatprep.mubr.bf16.mxu0 0
      %1692 = vmatmul.mubr.bf16.gmra.mrb[0].mxu0 %v826
      %v1693 = vpop.f32.mrb[0].mxu0
      %v1694 = vadd.f32 0.0, %v1693
      %v1695 = vpop.f32.mrb[0].mxu0
      %v1696 = vadd.f32 0.0, %v1695
      %v1697 = vpop.f32.mrb[0].mxu0
      %v1698 = vadd.f32 0.0, %v1697
      %v1699 = vpop.f32.mrb[0].mxu0
      %v1700 = vadd.f32 0.0, %v1699
      %1701 = vmatprep.mubr.bf16.mxu0 0
      %1702 = vmatmul.mubr.bf16.gmra.mrb[0].mxu0 %v829
      %v1703 = vpop.f32.mrb[0].mxu0
      %v1704 = vadd.f32 0.0, %v1703
      %v1705 = vpop.f32.mrb[0].mxu0
      %v1706 = vadd.f32 0.0, %v1705
      %v1707 = vpop.f32.mrb[0].mxu0
      %v1708 = vadd.f32 0.0, %v1707
      %v1709 = vpop.f32.mrb[0].mxu0
      %v1710 = vadd.f32 0.0, %v1709
      %1711 = vmatprep.mubr.bf16.mxu0 0
      %1712 = vmatmul.mubr.bf16.gmra.mrb[0].mxu0 %v832
      %v1713 = vpop.f32.mrb[0].mxu0
      %v1714 = vadd.f32 0.0, %v1713
      %v1715 = vpop.f32.mrb[0].mxu0
      %v1716 = vadd.f32 0.0, %v1715
      %v1717 = vpop.f32.mrb[0].mxu0
      %v1718 = vadd.f32 0.0, %v1717
      %v1719 = vpop.f32.mrb[0].mxu0
      %v1720 = vadd.f32 0.0, %v1719
      %1721 = vmatprep.mubr.bf16.mxu0 0
      %1722 = vmatmul.mubr.bf16.gmra.mrb[0].mxu0 %v835
      %v1723 = vpop.f32.mrb[0].mxu0
      %v1724 = vadd.f32 0.0, %v1723
      %v1725 = vpop.f32.mrb[0].mxu0
      %v1726 = vadd.f32 0.0, %v1725
      %v1727 = vpop.f32.mrb[0].mxu0
      %v1728 = vadd.f32 0.0, %v1727
      %v1729 = vpop.f32.mrb[0].mxu0
      %v1730 = vadd.f32 0.0, %v1729
      %1731 = vmatprep.mubr.bf16.mxu0 0
      %1732 = vmatmul.mubr.bf16.gmra.mrb[0].mxu0 %v838
      %v1733 = vpop.f32.mrb[0].mxu0
      %v1734 = vadd.f32 0.0, %v1733
      %v1735 = vpop.f32.mrb[0].mxu0
      %v1736 = vadd.f32 0.0, %v1735
      %v1737 = vpop.f32.mrb[0].mxu0
      %v1738 = vadd.f32 0.0, %v1737
      %v1739 = vpop.f32.mrb[0].mxu0
      %v1740 = vadd.f32 0.0, %v1739
      %1741 = vmatprep.mubr.bf16.mxu0 0
      %1742 = vmatmul.mubr.bf16.gmra.mrb[0].mxu0 %v841
      %v1743 = vpop.f32.mrb[0].mxu0
      %v1744 = vadd.f32 0.0, %v1743
      %v1745 = vpop.f32.mrb[0].mxu0
      %v1746 = vadd.f32 0.0, %v1745
      %v1747 = vpop.f32.mrb[0].mxu0
      %v1748 = vadd.f32 0.0, %v1747
      %v1749 = vpop.f32.mrb[0].mxu0
      %v1750 = vadd.f32 0.0, %v1749
      %1751 = vmatprep.mubr.bf16.mxu0 0
      %1752 = vmatmul.mubr.bf16.gmra.mrb[0].mxu0 %v844
      %v1753 = vpop.f32.mrb[0].mxu0
      %v1754 = vadd.f32 0.0, %v1753
      %v1755 = vpop.f32.mrb[0].mxu0
      %v1756 = vadd.f32 0.0, %v1755
      %v1757 = vpop.f32.mrb[0].mxu0
      %v1758 = vadd.f32 0.0, %v1757
      %v1759 = vpop.f32.mrb[0].mxu0
      %v1760 = vadd.f32 0.0, %v1759
      %1761 = vmatprep.mubr.bf16.mxu0 0
      %1762 = vmatmul.mubr.bf16.gmra.mrb[0].mxu0 %v847
      %v1763 = vpop.f32.mrb[0].mxu0
      %v1764 = vadd.f32 0.0, %v1763
      %v1765 = vpop.f32.mrb[0].mxu0
      %v1766 = vadd.f32 0.0, %v1765
      %v1767 = vpop.f32.mrb[0].mxu0
      %v1768 = vadd.f32 0.0, %v1767
      %v1769 = vpop.f32.mrb[0].mxu0
      %v1770 = vadd.f32 0.0, %v1769
      %1771 = vmatprep.mubr.bf16.mxu0 0
      %1772 = vmatmul.mubr.bf16.gmra.mrb[0].mxu0 %v850
      %v1773 = vpop.f32.mrb[0].mxu0
      %v1774 = vadd.f32 0.0, %v1773
      %v1775 = vpop.f32.mrb[0].mxu0
      %v1776 = vadd.f32 0.0, %v1775
      %v1777 = vpop.f32.mrb[0].mxu0
      %v1778 = vadd.f32 0.0, %v1777
      %v1779 = vpop.f32.mrb[0].mxu0
      %v1780 = vadd.f32 0.0, %v1779
      %1781 = vmatprep.mubr.bf16.mxu0 0
      %1782 = vmatmul.mubr.bf16.gmra.mrb[0].mxu0 %v853
      %v1783 = vpop.f32.mrb[0].mxu0
      %v1784 = vadd.f32 0.0, %v1783
      %v1785 = vpop.f32.mrb[0].mxu0
      %v1786 = vadd.f32 0.0, %v1785
      %v1787 = vpop.f32.mrb[0].mxu0
      %v1788 = vadd.f32 0.0, %v1787
      %v1789 = vpop.f32.mrb[0].mxu0
      %v1790 = vadd.f32 0.0, %v1789
      %1791 = vmatprep.mubr.bf16.mxu0 0
      %1792 = vmatmul.mubr.bf16.gmra.mrb[0].mxu0 %v856
      %v1793 = vpop.f32.mrb[0].mxu0
      %v1794 = vadd.f32 0.0, %v1793
      %v1795 = vpop.f32.mrb[0].mxu0
      %v1796 = vadd.f32 0.0, %v1795
      %v1797 = vpop.f32.mrb[0].mxu0
      %v1798 = vadd.f32 0.0, %v1797
      %v1799 = vpop.f32.mrb[0].mxu0
      %v1800 = vadd.f32 0.0, %v1799
      %1801 = vmatprep.mubr.bf16.mxu0 0
      %1802 = vmatmul.mubr.bf16.gmra.mrb[0].mxu0 %v859
      %v1803 = vpop.f32.mrb[0].mxu0
      %v1804 = vadd.f32 0.0, %v1803
      %v1805 = vpop.f32.mrb[0].mxu0
      %v1806 = vadd.f32 0.0, %v1805
      %v1807 = vpop.f32.mrb[0].mxu0
      %v1808 = vadd.f32 0.0, %v1807
      %v1809 = vpop.f32.mrb[0].mxu0
      %v1810 = vadd.f32 0.0, %v1809
      %1811 = vmatprep.mubr.bf16.mxu0 0
      %1812 = vmatmul.mubr.bf16.gmra.mrb[0].mxu0 %v862
      %v1813 = vpop.f32.mrb[0].mxu0
      %v1814 = vadd.f32 0.0, %v1813
      %v1815 = vpop.f32.mrb[0].mxu0
      %v1816 = vadd.f32 0.0, %v1815
      %v1817 = vpop.f32.mrb[0].mxu0
      %v1818 = vadd.f32 0.0, %v1817
      %v1819 = vpop.f32.mrb[0].mxu0
      %v1820 = vadd.f32 0.0, %v1819
      %1821 = vmatprep.mubr.bf16.mxu0 0
      %1822 = vmatmul.mubr.bf16.gmra.mrb[0].mxu0 %v865
      %v1823 = vpop.f32.mrb[0].mxu0
      %v1824 = vadd.f32 0.0, %v1823
      %v1825 = vpop.f32.mrb[0].mxu0
      %v1826 = vadd.f32 0.0, %v1825
      %v1827 = vpop.f32.mrb[0].mxu0
      %v1828 = vadd.f32 0.0, %v1827
      %v1829 = vpop.f32.mrb[0].mxu0
      %v1830 = vadd.f32 0.0, %v1829
      %1831 = vdwg.mxu0
      %1832 = vmatprep.subr.bf16.mxu0 %v733
      %1833 = vmatpush1.bf16.msra.mxu0 %v732
      %1834 = vmatprep.subr.bf16.mxu0 %v745
      %1835 = vmatpush1.bf16.msra.mxu0 %v744
      %1836 = vmatprep.subr.bf16.mxu0 %v757
      %1837 = vmatpush1.bf16.msra.mxu0 %v756
      %1838 = vmatprep.subr.bf16.mxu0 %v769
      %1839 = vmatpush1.bf16.msra.mxu0 %v768
      %1840 = vmatprep.subr.bf16.mxu0 0
      %1841 = vmatpush1.bf16.msra.mxu0 0
      %1842 = vmatprep.subr.bf16.mxu0 0
      %1843 = vmatpush1.bf16.msra.mxu0 0
      %1844 = vmatprep.subr.bf16.mxu0 0
      %1845 = vmatpush1.bf16.msra.mxu0 0
      %1846 = vmatprep.subr.bf16.mxu0 0
      %1847 = vmatpush1.bf16.msra.mxu0 0
      %1848 = vmatprep.subr.bf16.mxu0 0
      %1849 = vmatpush1.bf16.msra.mxu0 0
      %1850 = vmatprep.subr.bf16.mxu0 0
      %1851 = vmatpush1.bf16.msra.mxu0 0
      %1852 = vmatprep.subr.bf16.mxu0 0
      %1853 = vmatpush1.bf16.msra.mxu0 0
      %1854 = vmatprep.subr.bf16.mxu0 0
      %1855 = vmatpush1.bf16.msra.mxu0 0
      %1856 = vmatprep.subr.bf16.mxu0 0
      %1857 = vmatpush1.bf16.msra.mxu0 0
      %1858 = vmatprep.subr.bf16.mxu0 0
      %1859 = vmatpush1.bf16.msra.mxu0 0
      %1860 = vmatprep.subr.bf16.mxu0 0
      %1861 = vmatpush1.bf16.msra.mxu0 0
      %1862 = vmatprep.subr.bf16.mxu0 0
      %1863 = vmatpush1.bf16.msra.mxu0 0
      %1864 = vmatprep.mubr.bf16.mxu0 0
      %1865 = vmatmul.mubr.bf16.gmra.mrb[0].mxu0 %v820
      %v1866 = vpop.f32.mrb[0].mxu0
      %v1867 = vadd.f32 0.0, %v1866
      %v1868 = vpop.f32.mrb[0].mxu0
      %v1869 = vadd.f32 0.0, %v1868
      %v1870 = vpop.f32.mrb[0].mxu0
      %v1871 = vadd.f32 0.0, %v1870
      %v1872 = vpop.f32.mrb[0].mxu0
      %v1873 = vadd.f32 0.0, %v1872
      %1874 = vmatprep.mubr.bf16.mxu0 0
      %1875 = vmatmul.mubr.bf16.gmra.mrb[0].mxu0 %v823
      %v1876 = vpop.f32.mrb[0].mxu0
      %v1877 = vadd.f32 0.0, %v1876
      %v1878 = vpop.f32.mrb[0].mxu0
      %v1879 = vadd.f32 0.0, %v1878
      %v1880 = vpop.f32.mrb[0].mxu0
      %v1881 = vadd.f32 0.0, %v1880
      %v1882 = vpop.f32.mrb[0].mxu0
      %v1883 = vadd.f32 0.0, %v1882
      %1884 = vmatprep.mubr.bf16.mxu0 0
      %1885 = vmatmul.mubr.bf16.gmra.mrb[0].mxu0 %v826
      %v1886 = vpop.f32.mrb[0].mxu0
      %v1887 = vadd.f32 0.0, %v1886
      %v1888 = vpop.f32.mrb[0].mxu0
      %v1889 = vadd.f32 0.0, %v1888
      %v1890 = vpop.f32.mrb[0].mxu0
      %v1891 = vadd.f32 0.0, %v1890
      %v1892 = vpop.f32.mrb[0].mxu0
      %v1893 = vadd.f32 0.0, %v1892
      %1894 = vmatprep.mubr.bf16.mxu0 0
      %1895 = vmatmul.mubr.bf16.gmra.mrb[0].mxu0 %v829
      %v1896 = vpop.f32.mrb[0].mxu0
      %v1897 = vadd.f32 0.0, %v1896
      %v1898 = vpop.f32.mrb[0].mxu0
      %v1899 = vadd.f32 0.0, %v1898
      %v1900 = vpop.f32.mrb[0].mxu0
      %v1901 = vadd.f32 0.0, %v1900
      %v1902 = vpop.f32.mrb[0].mxu0
      %v1903 = vadd.f32 0.0, %v1902
      %1904 = vmatprep.mubr.bf16.mxu0 0
      %1905 = vmatmul.mubr.bf16.gmra.mrb[0].mxu0 %v832
      %v1906 = vpop.f32.mrb[0].mxu0
      %v1907 = vadd.f32 0.0, %v1906
      %v1908 = vpop.f32.mrb[0].mxu0
      %v1909 = vadd.f32 0.0, %v1908
      %v1910 = vpop.f32.mrb[0].mxu0
      %v1911 = vadd.f32 0.0, %v1910
      %v1912 = vpop.f32.mrb[0].mxu0
      %v1913 = vadd.f32 0.0, %v1912
      %1914 = vmatprep.mubr.bf16.mxu0 0
      %1915 = vmatmul.mubr.bf16.gmra.mrb[0].mxu0 %v835
      %v1916 = vpop.f32.mrb[0].mxu0
      %v1917 = vadd.f32 0.0, %v1916
      %v1918 = vpop.f32.mrb[0].mxu0
      %v1919 = vadd.f32 0.0, %v1918
      %v1920 = vpop.f32.mrb[0].mxu0
      %v1921 = vadd.f32 0.0, %v1920
      %v1922 = vpop.f32.mrb[0].mxu0
      %v1923 = vadd.f32 0.0, %v1922
      %1924 = vmatprep.mubr.bf16.mxu0 0
      %1925 = vmatmul.mubr.bf16.gmra.mrb[0].mxu0 %v838
      %v1926 = vpop.f32.mrb[0].mxu0
      %v1927 = vadd.f32 0.0, %v1926
      %v1928 = vpop.f32.mrb[0].mxu0
      %v1929 = vadd.f32 0.0, %v1928
      %v1930 = vpop.f32.mrb[0].mxu0
      %v1931 = vadd.f32 0.0, %v1930
      %v1932 = vpop.f32.mrb[0].mxu0
      %v1933 = vadd.f32 0.0, %v1932
      %1934 = vmatprep.mubr.bf16.mxu0 0
      %1935 = vmatmul.mubr.bf16.gmra.mrb[0].mxu0 %v841
      %v1936 = vpop.f32.mrb[0].mxu0
      %v1937 = vadd.f32 0.0, %v1936
      %v1938 = vpop.f32.mrb[0].mxu0
      %v1939 = vadd.f32 0.0, %v1938
      %v1940 = vpop.f32.mrb[0].mxu0
      %v1941 = vadd.f32 0.0, %v1940
      %v1942 = vpop.f32.mrb[0].mxu0
      %v1943 = vadd.f32 0.0, %v1942
      %1944 = vmatprep.mubr.bf16.mxu0 0
      %1945 = vmatmul.mubr.bf16.gmra.mrb[0].mxu0 %v844
      %v1946 = vpop.f32.mrb[0].mxu0
      %v1947 = vadd.f32 0.0, %v1946
      %v1948 = vpop.f32.mrb[0].mxu0
      %v1949 = vadd.f32 0.0, %v1948
      %v1950 = vpop.f32.mrb[0].mxu0
      %v1951 = vadd.f32 0.0, %v1950
      %v1952 = vpop.f32.mrb[0].mxu0
      %v1953 = vadd.f32 0.0, %v1952
      %1954 = vmatprep.mubr.bf16.mxu0 0
      %1955 = vmatmul.mubr.bf16.gmra.mrb[0].mxu0 %v847
      %v1956 = vpop.f32.mrb[0].mxu0
      %v1957 = vadd.f32 0.0, %v1956
      %v1958 = vpop.f32.mrb[0].mxu0
      %v1959 = vadd.f32 0.0, %v1958
      %v1960 = vpop.f32.mrb[0].mxu0
      %v1961 = vadd.f32 0.0, %v1960
      %v1962 = vpop.f32.mrb[0].mxu0
      %v1963 = vadd.f32 0.0, %v1962
      %1964 = vmatprep.mubr.bf16.mxu0 0
      %1965 = vmatmul.mubr.bf16.gmra.mrb[0].mxu0 %v850
      %v1966 = vpop.f32.mrb[0].mxu0
      %v1967 = vadd.f32 0.0, %v1966
      %v1968 = vpop.f32.mrb[0].mxu0
      %v1969 = vadd.f32 0.0, %v1968
      %v1970 = vpop.f32.mrb[0].mxu0
      %v1971 = vadd.f32 0.0, %v1970
      %v1972 = vpop.f32.mrb[0].mxu0
      %v1973 = vadd.f32 0.0, %v1972
      %1974 = vmatprep.mubr.bf16.mxu0 0
      %1975 = vmatmul.mubr.bf16.gmra.mrb[0].mxu0 %v853
      %v1976 = vpop.f32.mrb[0].mxu0
      %v1977 = vadd.f32 0.0, %v1976
      %v1978 = vpop.f32.mrb[0].mxu0
      %v1979 = vadd.f32 0.0, %v1978
      %v1980 = vpop.f32.mrb[0].mxu0
      %v1981 = vadd.f32 0.0, %v1980
      %v1982 = vpop.f32.mrb[0].mxu0
      %v1983 = vadd.f32 0.0, %v1982
      %1984 = vmatprep.mubr.bf16.mxu0 0
      %1985 = vmatmul.mubr.bf16.gmra.mrb[0].mxu0 %v856
      %v1986 = vpop.f32.mrb[0].mxu0
      %v1987 = vadd.f32 0.0, %v1986
      %v1988 = vpop.f32.mrb[0].mxu0
      %v1989 = vadd.f32 0.0, %v1988
      %v1990 = vpop.f32.mrb[0].mxu0
      %v1991 = vadd.f32 0.0, %v1990
      %v1992 = vpop.f32.mrb[0].mxu0
      %v1993 = vadd.f32 0.0, %v1992
      %1994 = vmatprep.mubr.bf16.mxu0 0
      %1995 = vmatmul.mubr.bf16.gmra.mrb[0].mxu0 %v859
      %v1996 = vpop.f32.mrb[0].mxu0
      %v1997 = vadd.f32 0.0, %v1996
      %v1998 = vpop.f32.mrb[0].mxu0
      %v1999 = vadd.f32 0.0, %v1998
      %v2000 = vpop.f32.mrb[0].mxu0
      %v2001 = vadd.f32 0.0, %v2000
      %v2002 = vpop.f32.mrb[0].mxu0
      %v2003 = vadd.f32 0.0, %v2002
      %2004 = vmatprep.mubr.bf16.mxu0 0
      %2005 = vmatmul.mubr.bf16.gmra.mrb[0].mxu0 %v862
      %v2006 = vpop.f32.mrb[0].mxu0
      %v2007 = vadd.f32 0.0, %v2006
      %v2008 = vpop.f32.mrb[0].mxu0
      %v2009 = vadd.f32 0.0, %v2008
      %v2010 = vpop.f32.mrb[0].mxu0
      %v2011 = vadd.f32 0.0, %v2010
      %v2012 = vpop.f32.mrb[0].mxu0
      %v2013 = vadd.f32 0.0, %v2012
      %2014 = vmatprep.mubr.bf16.mxu0 0
      %2015 = vmatmul.mubr.bf16.gmra.mrb[0].mxu0 %v865
      %v2016 = vpop.f32.mrb[0].mxu0
      %v2017 = vadd.f32 0.0, %v2016
      %v2018 = vpop.f32.mrb[0].mxu0
      %v2019 = vadd.f32 0.0, %v2018
      %v2020 = vpop.f32.mrb[0].mxu0
      %v2021 = vadd.f32 0.0, %v2020
      %v2022 = vpop.f32.mrb[0].mxu0
      %v2023 = vadd.f32 0.0, %v2022
      %2024 = vdwg.mxu0
      %v2025 = vmax.f32 %v902, %v1288
      %v2026 = vmax.f32 %v904, %v1290
      %v2027 = vmax.f32 %v1095, %v1481
      %v2028 = vmax.f32 %v1097, %v1483
      %v2029 = vmax.f32 %v906, %v1292
      %v2030 = vmax.f32 %v908, %v1294
      %v2031 = vmax.f32 %v1099, %v1485
      %v2032 = vmax.f32 %v1101, %v1487
      %v2033 = vmax.f32 %v912, %v1298
      %v2034 = vmax.f32 %v914, %v1300
      %v2035 = vmax.f32 %v1105, %v1491
      %v2036 = vmax.f32 %v1107, %v1493
      %v2037 = vmax.f32 %v916, %v1302
      %v2038 = vmax.f32 %v918, %v1304
      %v2039 = vmax.f32 %v1109, %v1495
      %v2040 = vmax.f32 %v1111, %v1497
      %v2041 = vmax.f32 %v922, %v1308
      %v2042 = vmax.f32 %v924, %v1310
      %v2043 = vmax.f32 %v1115, %v1501
      %v2044 = vmax.f32 %v1117, %v1503
      %v2045 = vmax.f32 %v926, %v1312
      %v2046 = vmax.f32 %v928, %v1314
      %v2047 = vmax.f32 %v1119, %v1505
      %v2048 = vmax.f32 %v1121, %v1507
      %v2049 = vmax.f32 %v932, %v1318
      %v2050 = vmax.f32 %v934, %v1320
      %v2051 = vmax.f32 %v1125, %v1511
      %v2052 = vmax.f32 %v1127, %v1513
      %v2053 = vmax.f32 %v936, %v1322
      %v2054 = vmax.f32 %v938, %v1324
      %v2055 = vmax.f32 %v1129, %v1515
      %v2056 = vmax.f32 %v1131, %v1517
      %v2057 = vmax.f32 %v942, %v1328
      %v2058 = vmax.f32 %v944, %v1330
      %v2059 = vmax.f32 %v1135, %v1521
      %v2060 = vmax.f32 %v1137, %v1523
      %v2061 = vmax.f32 %v946, %v1332
      %v2062 = vmax.f32 %v948, %v1334
      %v2063 = vmax.f32 %v1139, %v1525
      %v2064 = vmax.f32 %v1141, %v1527
      %v2065 = vmax.f32 %v952, %v1338
      %v2066 = vmax.f32 %v954, %v1340
      %v2067 = vmax.f32 %v1145, %v1531
      %v2068 = vmax.f32 %v1147, %v1533
      %v2069 = vmax.f32 %v956, %v1342
      %v2070 = vmax.f32 %v958, %v1344
      %v2071 = vmax.f32 %v1149, %v1535
      %v2072 = vmax.f32 %v1151, %v1537
      %v2073 = vmax.f32 %v962, %v1348
      %v2074 = vmax.f32 %v964, %v1350
      %v2075 = vmax.f32 %v1155, %v1541
      %v2076 = vmax.f32 %v1157, %v1543
      %v2077 = vmax.f32 %v966, %v1352
      %v2078 = vmax.f32 %v968, %v1354
      %v2079 = vmax.f32 %v1159, %v1545
      %v2080 = vmax.f32 %v1161, %v1547
      %v2081 = vmax.f32 %v972, %v1358
      %v2082 = vmax.f32 %v974, %v1360
      %v2083 = vmax.f32 %v1165, %v1551
      %v2084 = vmax.f32 %v1167, %v1553
      %v2085 = vmax.f32 %v976, %v1362
      %v2086 = vmax.f32 %v978, %v1364
      %v2087 = vmax.f32 %v1169, %v1555
      %v2088 = vmax.f32 %v1171, %v1557
      %v2089 = vmax.f32 %v982, %v1368
      %v2090 = vmax.f32 %v984, %v1370
      %v2091 = vmax.f32 %v1175, %v1561
      %v2092 = vmax.f32 %v1177, %v1563
      %v2093 = vmax.f32 %v986, %v1372
      %v2094 = vmax.f32 %v988, %v1374
      %v2095 = vmax.f32 %v1179, %v1565
      %v2096 = vmax.f32 %v1181, %v1567
      %v2097 = vmax.f32 %v992, %v1378
      %v2098 = vmax.f32 %v994, %v1380
      %v2099 = vmax.f32 %v1185, %v1571
      %v2100 = vmax.f32 %v1187, %v1573
      %v2101 = vmax.f32 %v996, %v1382
      %v2102 = vmax.f32 %v998, %v1384
      %v2103 = vmax.f32 %v1189, %v1575
      %v2104 = vmax.f32 %v1191, %v1577
      %v2105 = vmax.f32 %v1002, %v1388
      %v2106 = vmax.f32 %v1004, %v1390
      %v2107 = vmax.f32 %v1195, %v1581
      %v2108 = vmax.f32 %v1197, %v1583
      %v2109 = vmax.f32 %v1006, %v1392
      %v2110 = vmax.f32 %v1008, %v1394
      %v2111 = vmax.f32 %v1199, %v1585
      %v2112 = vmax.f32 %v1201, %v1587
      %v2113 = vmax.f32 %v1012, %v1398
      %v2114 = vmax.f32 %v1014, %v1400
      %v2115 = vmax.f32 %v1205, %v1591
      %v2116 = vmax.f32 %v1207, %v1593
      %v2117 = vmax.f32 %v1016, %v1402
      %v2118 = vmax.f32 %v1018, %v1404
      %v2119 = vmax.f32 %v1209, %v1595
      %v2120 = vmax.f32 %v1211, %v1597
      %v2121 = vmax.f32 %v1022, %v1408
      %v2122 = vmax.f32 %v1024, %v1410
      %v2123 = vmax.f32 %v1215, %v1601
      %v2124 = vmax.f32 %v1217, %v1603
      %v2125 = vmax.f32 %v1026, %v1412
      %v2126 = vmax.f32 %v1028, %v1414
      %v2127 = vmax.f32 %v1219, %v1605
      %v2128 = vmax.f32 %v1221, %v1607
      %v2129 = vmax.f32 %v1032, %v1418
      %v2130 = vmax.f32 %v1034, %v1420
      %v2131 = vmax.f32 %v1225, %v1611
      %v2132 = vmax.f32 %v1227, %v1613
      %v2133 = vmax.f32 %v1036, %v1422
      %v2134 = vmax.f32 %v1038, %v1424
      %v2135 = vmax.f32 %v1229, %v1615
      %v2136 = vmax.f32 %v1231, %v1617
      %v2137 = vmax.f32 %v1042, %v1428
      %v2138 = vmax.f32 %v1044, %v1430
      %v2139 = vmax.f32 %v1235, %v1621
      %v2140 = vmax.f32 %v1237, %v1623
      %v2141 = vmax.f32 %v1046, %v1432
      %v2142 = vmax.f32 %v1048, %v1434
      %v2143 = vmax.f32 %v1239, %v1625
      %v2144 = vmax.f32 %v1241, %v1627
      %v2145 = vmax.f32 %v1052, %v1438
      %v2146 = vmax.f32 %v1054, %v1440
      %v2147 = vmax.f32 %v1245, %v1631
      %v2148 = vmax.f32 %v1247, %v1633
      %v2149 = vmax.f32 %v1056, %v1442
      %v2150 = vmax.f32 %v1058, %v1444
      %v2151 = vmax.f32 %v1249, %v1635
      %v2152 = vmax.f32 %v1251, %v1637
      %v2153 = vmax.f32 %v2025, %v1674
      %v2154 = vmax.f32 %v2026, %v1676
      %v2155 = vmax.f32 %v2027, %v1867
      %v2156 = vmax.f32 %v2028, %v1869
      %v2157 = vmax.f32 %v2029, %v1678
      %v2158 = vmax.f32 %v2030, %v1680
      %v2159 = vmax.f32 %v2031, %v1871
      %v2160 = vmax.f32 %v2032, %v1873
      %v2161 = vmax.f32 %v2033, %v1684
      %v2162 = vmax.f32 %v2034, %v1686
      %v2163 = vmax.f32 %v2035, %v1877
      %v2164 = vmax.f32 %v2036, %v1879
      %v2165 = vmax.f32 %v2037, %v1688
      %v2166 = vmax.f32 %v2038, %v1690
      %v2167 = vmax.f32 %v2039, %v1881
      %v2168 = vmax.f32 %v2040, %v1883
      %v2169 = vmax.f32 %v2041, %v1694
      %v2170 = vmax.f32 %v2042, %v1696
      %v2171 = vmax.f32 %v2043, %v1887
      %v2172 = vmax.f32 %v2044, %v1889
      %v2173 = vmax.f32 %v2045, %v1698
      %v2174 = vmax.f32 %v2046, %v1700
      %v2175 = vmax.f32 %v2047, %v1891
      %v2176 = vmax.f32 %v2048, %v1893
      %v2177 = vmax.f32 %v2049, %v1704
      %v2178 = vmax.f32 %v2050, %v1706
      %v2179 = vmax.f32 %v2051, %v1897
      %v2180 = vmax.f32 %v2052, %v1899
      %v2181 = vmax.f32 %v2053, %v1708
      %v2182 = vmax.f32 %v2054, %v1710
      %v2183 = vmax.f32 %v2055, %v1901
      %v2184 = vmax.f32 %v2056, %v1903
      %v2185 = vmax.f32 %v2057, %v1714
      %v2186 = vmax.f32 %v2058, %v1716
      %v2187 = vmax.f32 %v2059, %v1907
      %v2188 = vmax.f32 %v2060, %v1909
      %v2189 = vmax.f32 %v2061, %v1718
      %v2190 = vmax.f32 %v2062, %v1720
      %v2191 = vmax.f32 %v2063, %v1911
      %v2192 = vmax.f32 %v2064, %v1913
      %v2193 = vmax.f32 %v2065, %v1724
      %v2194 = vmax.f32 %v2066, %v1726
      %v2195 = vmax.f32 %v2067, %v1917
      %v2196 = vmax.f32 %v2068, %v1919
      %v2197 = vmax.f32 %v2069, %v1728
      %v2198 = vmax.f32 %v2070, %v1730
      %v2199 = vmax.f32 %v2071, %v1921
      %v2200 = vmax.f32 %v2072, %v1923
      %v2201 = vmax.f32 %v2073, %v1734
      %v2202 = vmax.f32 %v2074, %v1736
      %v2203 = vmax.f32 %v2075, %v1927
      %v2204 = vmax.f32 %v2076, %v1929
      %v2205 = vmax.f32 %v2077, %v1738
      %v2206 = vmax.f32 %v2078, %v1740
      %v2207 = vmax.f32 %v2079, %v1931
      %v2208 = vmax.f32 %v2080, %v1933
      %v2209 = vmax.f32 %v2081, %v1744
      %v2210 = vmax.f32 %v2082, %v1746
      %v2211 = vmax.f32 %v2083, %v1937
      %v2212 = vmax.f32 %v2084, %v1939
      %v2213 = vmax.f32 %v2085, %v1748
      %v2214 = vmax.f32 %v2086, %v1750
      %v2215 = vmax.f32 %v2087, %v1941
      %v2216 = vmax.f32 %v2088, %v1943
      %v2217 = vmax.f32 %v2089, %v1754
      %v2218 = vmax.f32 %v2090, %v1756
      %v2219 = vmax.f32 %v2091, %v1947
      %v2220 = vmax.f32 %v2092, %v1949
      %v2221 = vmax.f32 %v2093, %v1758
      %v2222 = vmax.f32 %v2094, %v1760
      %v2223 = vmax.f32 %v2095, %v1951
      %v2224 = vmax.f32 %v2096, %v1953
      %v2225 = vmax.f32 %v2097, %v1764
      %v2226 = vmax.f32 %v2098, %v1766
      %v2227 = vmax.f32 %v2099, %v1957
      %v2228 = vmax.f32 %v2100, %v1959
      %v2229 = vmax.f32 %v2101, %v1768
      %v2230 = vmax.f32 %v2102, %v1770
      %v2231 = vmax.f32 %v2103, %v1961
      %v2232 = vmax.f32 %v2104, %v1963
      %v2233 = vmax.f32 %v2105, %v1774
      %v2234 = vmax.f32 %v2106, %v1776
      %v2235 = vmax.f32 %v2107, %v1967
      %v2236 = vmax.f32 %v2108, %v1969
      %v2237 = vmax.f32 %v2109, %v1778
      %v2238 = vmax.f32 %v2110, %v1780
      %v2239 = vmax.f32 %v2111, %v1971
      %v2240 = vmax.f32 %v2112, %v1973
      %v2241 = vmax.f32 %v2113, %v1784
      %v2242 = vmax.f32 %v2114, %v1786
      %v2243 = vmax.f32 %v2115, %v1977
      %v2244 = vmax.f32 %v2116, %v1979
      %v2245 = vmax.f32 %v2117, %v1788
      %v2246 = vmax.f32 %v2118, %v1790
      %v2247 = vmax.f32 %v2119, %v1981
      %v2248 = vmax.f32 %v2120, %v1983
      %v2249 = vmax.f32 %v2121, %v1794
      %v2250 = vmax.f32 %v2122, %v1796
      %v2251 = vmax.f32 %v2123, %v1987
      %v2252 = vmax.f32 %v2124, %v1989
      %v2253 = vmax.f32 %v2125, %v1798
      %v2254 = vmax.f32 %v2126, %v1800
      %v2255 = vmax.f32 %v2127, %v1991
      %v2256 = vmax.f32 %v2128, %v1993
      %v2257 = vmax.f32 %v2129, %v1804
      %v2258 = vmax.f32 %v2130, %v1806
      %v2259 = vmax.f32 %v2131, %v1997
      %v2260 = vmax.f32 %v2132, %v1999
      %v2261 = vmax.f32 %v2133, %v1808
      %v2262 = vmax.f32 %v2134, %v1810
      %v2263 = vmax.f32 %v2135, %v2001
      %v2264 = vmax.f32 %v2136, %v2003
      %v2265 = vmax.f32 %v2137, %v1814
      %v2266 = vmax.f32 %v2138, %v1816
      %v2267 = vmax.f32 %v2139, %v2007
      %v2268 = vmax.f32 %v2140, %v2009
      %v2269 = vmax.f32 %v2141, %v1818
      %v2270 = vmax.f32 %v2142, %v1820
      %v2271 = vmax.f32 %v2143, %v2011
      %v2272 = vmax.f32 %v2144, %v2013
      %v2273 = vmax.f32 %v2145, %v1824
      %v2274 = vmax.f32 %v2146, %v1826
      %v2275 = vmax.f32 %v2147, %v2017
      %v2276 = vmax.f32 %v2148, %v2019
      %v2277 = vmax.f32 %v2149, %v1828
      %v2278 = vmax.f32 %v2150, %v1830
      %v2279 = vmax.f32 %v2151, %v2021
      %v2280 = vmax.f32 %v2152, %v2023
      %v2281 = vsub.f32 %v902, %v2153
      %v2282 = vsub.f32 %v904, %v2154
      %v2283 = vsub.f32 %v1095, %v2155
      %v2284 = vsub.f32 %v1097, %v2156
      %v2285 = vsub.f32 %v906, %v2157
      %v2286 = vsub.f32 %v908, %v2158
      %v2287 = vsub.f32 %v1099, %v2159
      %v2288 = vsub.f32 %v1101, %v2160
      %v2289 = vsub.f32 %v912, %v2161
      %v2290 = vsub.f32 %v914, %v2162
      %v2291 = vsub.f32 %v1105, %v2163
      %v2292 = vsub.f32 %v1107, %v2164
      %v2293 = vsub.f32 %v916, %v2165
      %v2294 = vsub.f32 %v918, %v2166
      %v2295 = vsub.f32 %v1109, %v2167
      %v2296 = vsub.f32 %v1111, %v2168
      %v2297 = vsub.f32 %v922, %v2169
      %v2298 = vsub.f32 %v924, %v2170
      %v2299 = vsub.f32 %v1115, %v2171
      %v2300 = vsub.f32 %v1117, %v2172
      %v2301 = vsub.f32 %v926, %v2173
      %v2302 = vsub.f32 %v928, %v2174
      %v2303 = vsub.f32 %v1119, %v2175
      %v2304 = vsub.f32 %v1121, %v2176
      %v2305 = vsub.f32 %v932, %v2177
      %v2306 = vsub.f32 %v934, %v2178
      %v2307 = vsub.f32 %v1125, %v2179
      %v2308 = vsub.f32 %v1127, %v2180
      %v2309 = vsub.f32 %v936, %v2181
      %v2310 = vsub.f32 %v938, %v2182
      %v2311 = vsub.f32 %v1129, %v2183
      %v2312 = vsub.f32 %v1131, %v2184
      %v2313 = vsub.f32 %v942, %v2185
      %v2314 = vsub.f32 %v944, %v2186
      %v2315 = vsub.f32 %v1135, %v2187
      %v2316 = vsub.f32 %v1137, %v2188
      %v2317 = vsub.f32 %v946, %v2189
      %v2318 = vsub.f32 %v948, %v2190
      %v2319 = vsub.f32 %v1139, %v2191
      %v2320 = vsub.f32 %v1141, %v2192
      %v2321 = vsub.f32 %v952, %v2193
      %v2322 = vsub.f32 %v954, %v2194
      %v2323 = vsub.f32 %v1145, %v2195
      %v2324 = vsub.f32 %v1147, %v2196
      %v2325 = vsub.f32 %v956, %v2197
      %v2326 = vsub.f32 %v958, %v2198
      %v2327 = vsub.f32 %v1149, %v2199
      %v2328 = vsub.f32 %v1151, %v2200
      %v2329 = vsub.f32 %v962, %v2201
      %v2330 = vsub.f32 %v964, %v2202
      %v2331 = vsub.f32 %v1155, %v2203
      %v2332 = vsub.f32 %v1157, %v2204
      %v2333 = vsub.f32 %v966, %v2205
      %v2334 = vsub.f32 %v968, %v2206
      %v2335 = vsub.f32 %v1159, %v2207
      %v2336 = vsub.f32 %v1161, %v2208
      %v2337 = vsub.f32 %v972, %v2209
      %v2338 = vsub.f32 %v974, %v2210
      %v2339 = vsub.f32 %v1165, %v2211
      %v2340 = vsub.f32 %v1167, %v2212
      %v2341 = vsub.f32 %v976, %v2213
      %v2342 = vsub.f32 %v978, %v2214
      %v2343 = vsub.f32 %v1169, %v2215
      %v2344 = vsub.f32 %v1171, %v2216
      %v2345 = vsub.f32 %v982, %v2217
      %v2346 = vsub.f32 %v984, %v2218
      %v2347 = vsub.f32 %v1175, %v2219
      %v2348 = vsub.f32 %v1177, %v2220
      %v2349 = vsub.f32 %v986, %v2221
      %v2350 = vsub.f32 %v988, %v2222
      %v2351 = vsub.f32 %v1179, %v2223
      %v2352 = vsub.f32 %v1181, %v2224
      %v2353 = vsub.f32 %v992, %v2225
      %v2354 = vsub.f32 %v994, %v2226
      %v2355 = vsub.f32 %v1185, %v2227
      %v2356 = vsub.f32 %v1187, %v2228
      %v2357 = vsub.f32 %v996, %v2229
      %v2358 = vsub.f32 %v998, %v2230
      %v2359 = vsub.f32 %v1189, %v2231
      %v2360 = vsub.f32 %v1191, %v2232
      %v2361 = vsub.f32 %v1002, %v2233
      %v2362 = vsub.f32 %v1004, %v2234
      %v2363 = vsub.f32 %v1195, %v2235
      %v2364 = vsub.f32 %v1197, %v2236
      %v2365 = vsub.f32 %v1006, %v2237
      %v2366 = vsub.f32 %v1008, %v2238
      %v2367 = vsub.f32 %v1199, %v2239
      %v2368 = vsub.f32 %v1201, %v2240
      %v2369 = vsub.f32 %v1012, %v2241
      %v2370 = vsub.f32 %v1014, %v2242
      %v2371 = vsub.f32 %v1205, %v2243
      %v2372 = vsub.f32 %v1207, %v2244
      %v2373 = vsub.f32 %v1016, %v2245
      %v2374 = vsub.f32 %v1018, %v2246
      %v2375 = vsub.f32 %v1209, %v2247
      %v2376 = vsub.f32 %v1211, %v2248
      %v2377 = vsub.f32 %v1022, %v2249
      %v2378 = vsub.f32 %v1024, %v2250
      %v2379 = vsub.f32 %v1215, %v2251
      %v2380 = vsub.f32 %v1217, %v2252
      %v2381 = vsub.f32 %v1026, %v2253
      %v2382 = vsub.f32 %v1028, %v2254
      %v2383 = vsub.f32 %v1219, %v2255
      %v2384 = vsub.f32 %v1221, %v2256
      %v2385 = vsub.f32 %v1032, %v2257
      %v2386 = vsub.f32 %v1034, %v2258
      %v2387 = vsub.f32 %v1225, %v2259
      %v2388 = vsub.f32 %v1227, %v2260
      %v2389 = vsub.f32 %v1036, %v2261
      %v2390 = vsub.f32 %v1038, %v2262
      %v2391 = vsub.f32 %v1229, %v2263
      %v2392 = vsub.f32 %v1231, %v2264
      %v2393 = vsub.f32 %v1042, %v2265
      %v2394 = vsub.f32 %v1044, %v2266
      %v2395 = vsub.f32 %v1235, %v2267
      %v2396 = vsub.f32 %v1237, %v2268
      %v2397 = vsub.f32 %v1046, %v2269
      %v2398 = vsub.f32 %v1048, %v2270
      %v2399 = vsub.f32 %v1239, %v2271
      %v2400 = vsub.f32 %v1241, %v2272
      %v2401 = vsub.f32 %v1052, %v2273
      %v2402 = vsub.f32 %v1054, %v2274
      %v2403 = vsub.f32 %v1245, %v2275
      %v2404 = vsub.f32 %v1247, %v2276
      %v2405 = vsub.f32 %v1056, %v2277
      %v2406 = vsub.f32 %v1058, %v2278
      %v2407 = vsub.f32 %v1249, %v2279
      %v2408 = vsub.f32 %v1251, %v2280
      %v2409 = vmul.f32 %v2281, 1.442695
      %v2410 = vpow.pop %v2409
      %v2411 = vmul.f32 %v2282, 1.442695
      %v2412 = vpow.pop %v2411
      %v2413 = vmul.f32 %v2283, 1.442695
      %v2414 = vpow.pop %v2413
      %v2415 = vmul.f32 %v2284, 1.442695
      %v2416 = vpow.pop %v2415
      %v2417 = vmul.f32 %v2285, 1.442695
      %v2418 = vpow.pop %v2417
      %v2419 = vmul.f32 %v2286, 1.442695
      %v2420 = vpow.pop %v2419
      %v2421 = vmul.f32 %v2287, 1.442695
      %v2422 = vpow.pop %v2421
      %v2423 = vmul.f32 %v2288, 1.442695
      %v2424 = vpow.pop %v2423
      %v2425 = vmul.f32 %v2289, 1.442695
      %v2426 = vpow.pop %v2425
      %v2427 = vmul.f32 %v2290, 1.442695
      %v2428 = vpow.pop %v2427
      %v2429 = vmul.f32 %v2291, 1.442695
      %v2430 = vpow.pop %v2429
      %v2431 = vmul.f32 %v2292, 1.442695
      %v2432 = vpow.pop %v2431
      %v2433 = vmul.f32 %v2293, 1.442695
      %v2434 = vpow.pop %v2433
      %v2435 = vmul.f32 %v2294, 1.442695
      %v2436 = vpow.pop %v2435
      %v2437 = vmul.f32 %v2295, 1.442695
      %v2438 = vpow.pop %v2437
      %v2439 = vmul.f32 %v2296, 1.442695
      %v2440 = vpow.pop %v2439
      %v2441 = vmul.f32 %v2297, 1.442695
      %v2442 = vpow.pop %v2441
      %v2443 = vmul.f32 %v2298, 1.442695
      %v2444 = vpow.pop %v2443
      %v2445 = vmul.f32 %v2299, 1.442695
      %v2446 = vpow.pop %v2445
      %v2447 = vmul.f32 %v2300, 1.442695
      %v2448 = vpow.pop %v2447
      %v2449 = vmul.f32 %v2301, 1.442695
      %v2450 = vpow.pop %v2449
      %v2451 = vmul.f32 %v2302, 1.442695
      %v2452 = vpow.pop %v2451
      %v2453 = vmul.f32 %v2303, 1.442695
      %v2454 = vpow.pop %v2453
      %v2455 = vmul.f32 %v2304, 1.442695
      %v2456 = vpow.pop %v2455
      %v2457 = vmul.f32 %v2305, 1.442695
      %v2458 = vpow.pop %v2457
      %v2459 = vmul.f32 %v2306, 1.442695
      %v2460 = vpow.pop %v2459
      %v2461 = vmul.f32 %v2307, 1.442695
      %v2462 = vpow.pop %v2461
      %v2463 = vmul.f32 %v2308, 1.442695
      %v2464 = vpow.pop %v2463
      %v2465 = vmul.f32 %v2309, 1.442695
      %v2466 = vpow.pop %v2465
      %v2467 = vmul.f32 %v2310, 1.442695
      %v2468 = vpow.pop %v2467
      %v2469 = vmul.f32 %v2311, 1.442695
      %v2470 = vpow.pop %v2469
      %v2471 = vmul.f32 %v2312, 1.442695
      %v2472 = vpow.pop %v2471
      %v2473 = vmul.f32 %v2313, 1.442695
      %v2474 = vpow.pop %v2473
      %v2475 = vmul.f32 %v2314, 1.442695
      %v2476 = vpow.pop %v2475
      %v2477 = vmul.f32 %v2315, 1.442695
      %v2478 = vpow.pop %v2477
      %v2479 = vmul.f32 %v2316, 1.442695
      %v2480 = vpow.pop %v2479
      %v2481 = vmul.f32 %v2317, 1.442695
      %v2482 = vpow.pop %v2481
      %v2483 = vmul.f32 %v2318, 1.442695
      %v2484 = vpow.pop %v2483
      %v2485 = vmul.f32 %v2319, 1.442695
      %v2486 = vpow.pop %v2485
      %v2487 = vmul.f32 %v2320, 1.442695
      %v2488 = vpow.pop %v2487
      %v2489 = vmul.f32 %v2321, 1.442695
      %v2490 = vpow.pop %v2489
      %v2491 = vmul.f32 %v2322, 1.442695
      %v2492 = vpow.pop %v2491
      %v2493 = vmul.f32 %v2323, 1.442695
      %v2494 = vpow.pop %v2493
      %v2495 = vmul.f32 %v2324, 1.442695
      %v2496 = vpow.pop %v2495
      %v2497 = vmul.f32 %v2325, 1.442695
      %v2498 = vpow.pop %v2497
      %v2499 = vmul.f32 %v2326, 1.442695
      %v2500 = vpow.pop %v2499
      %v2501 = vmul.f32 %v2327, 1.442695
      %v2502 = vpow.pop %v2501
      %v2503 = vmul.f32 %v2328, 1.442695
      %v2504 = vpow.pop %v2503
      %v2505 = vmul.f32 %v2329, 1.442695
      %v2506 = vpow.pop %v2505
      %v2507 = vmul.f32 %v2330, 1.442695
      %v2508 = vpow.pop %v2507
      %v2509 = vmul.f32 %v2331, 1.442695
      %v2510 = vpow.pop %v2509
      %v2511 = vmul.f32 %v2332, 1.442695
      %v2512 = vpow.pop %v2511
      %v2513 = vmul.f32 %v2333, 1.442695
      %v2514 = vpow.pop %v2513
      %v2515 = vmul.f32 %v2334, 1.442695
      %v2516 = vpow.pop %v2515
      %v2517 = vmul.f32 %v2335, 1.442695
      %v2518 = vpow.pop %v2517
      %v2519 = vmul.f32 %v2336, 1.442695
      %v2520 = vpow.pop %v2519
      %v2521 = vmul.f32 %v2337, 1.442695
      %v2522 = vpow.pop %v2521
      %v2523 = vmul.f32 %v2338, 1.442695
      %v2524 = vpow.pop %v2523
      %v2525 = vmul.f32 %v2339, 1.442695
      %v2526 = vpow.pop %v2525
      %v2527 = vmul.f32 %v2340, 1.442695
      %v2528 = vpow.pop %v2527
      %v2529 = vmul.f32 %v2341, 1.442695
      %v2530 = vpow.pop %v2529
      %v2531 = vmul.f32 %v2342, 1.442695
      %v2532 = vpow.pop %v2531
      %v2533 = vmul.f32 %v2343, 1.442695
      %v2534 = vpow.pop %v2533
      %v2535 = vmul.f32 %v2344, 1.442695
      %v2536 = vpow.pop %v2535
      %v2537 = vmul.f32 %v2345, 1.442695
      %v2538 = vpow.pop %v2537
      %v2539 = vmul.f32 %v2346, 1.442695
      %v2540 = vpow.pop %v2539
      %v2541 = vmul.f32 %v2347, 1.442695
      %v2542 = vpow.pop %v2541
      %v2543 = vmul.f32 %v2348, 1.442695
      %v2544 = vpow.pop %v2543
      %v2545 = vmul.f32 %v2349, 1.442695
      %v2546 = vpow.pop %v2545
      %v2547 = vmul.f32 %v2350, 1.442695
      %v2548 = vpow.pop %v2547
      %v2549 = vmul.f32 %v2351, 1.442695
      %v2550 = vpow.pop %v2549
      %v2551 = vmul.f32 %v2352, 1.442695
      %v2552 = vpow.pop %v2551
      %v2553 = vmul.f32 %v2353, 1.442695
      %v2554 = vpow.pop %v2553
      %v2555 = vmul.f32 %v2354, 1.442695
      %v2556 = vpow.pop %v2555
      %v2557 = vmul.f32 %v2355, 1.442695
      %v2558 = vpow.pop %v2557
      %v2559 = vmul.f32 %v2356, 1.442695
      %v2560 = vpow.pop %v2559
      %v2561 = vmul.f32 %v2357, 1.442695
      %v2562 = vpow.pop %v2561
      %v2563 = vmul.f32 %v2358, 1.442695
      %v2564 = vpow.pop %v2563
      %v2565 = vmul.f32 %v2359, 1.442695
      %v2566 = vpow.pop %v2565
      %v2567 = vmul.f32 %v2360, 1.442695
      %v2568 = vpow.pop %v2567
      %v2569 = vmul.f32 %v2361, 1.442695
      %v2570 = vpow.pop %v2569
      %v2571 = vmul.f32 %v2362, 1.442695
      %v2572 = vpow.pop %v2571
      %v2573 = vmul.f32 %v2363, 1.442695
      %v2574 = vpow.pop %v2573
      %v2575 = vmul.f32 %v2364, 1.442695
      %v2576 = vpow.pop %v2575
      %v2577 = vmul.f32 %v2365, 1.442695
      %v2578 = vpow.pop %v2577
      %v2579 = vmul.f32 %v2366, 1.442695
      %v2580 = vpow.pop %v2579
      %v2581 = vmul.f32 %v2367, 1.442695
      %v2582 = vpow.pop %v2581
      %v2583 = vmul.f32 %v2368, 1.442695
      %v2584 = vpow.pop %v2583
      %v2585 = vmul.f32 %v2369, 1.442695
      %v2586 = vpow.pop %v2585
      %v2587 = vmul.f32 %v2370, 1.442695
      %v2588 = vpow.pop %v2587
      %v2589 = vmul.f32 %v2371, 1.442695
      %v2590 = vpow.pop %v2589
      %v2591 = vmul.f32 %v2372, 1.442695
      %v2592 = vpow.pop %v2591
      %v2593 = vmul.f32 %v2373, 1.442695
      %v2594 = vpow.pop %v2593
      %v2595 = vmul.f32 %v2374, 1.442695
      %v2596 = vpow.pop %v2595
      %v2597 = vmul.f32 %v2375, 1.442695
      %v2598 = vpow.pop %v2597
      %v2599 = vmul.f32 %v2376, 1.442695
      %v2600 = vpow.pop %v2599
      %v2601 = vmul.f32 %v2377, 1.442695
      %v2602 = vpow.pop %v2601
      %v2603 = vmul.f32 %v2378, 1.442695
      %v2604 = vpow.pop %v2603
      %v2605 = vmul.f32 %v2379, 1.442695
      %v2606 = vpow.pop %v2605
      %v2607 = vmul.f32 %v2380, 1.442695
      %v2608 = vpow.pop %v2607
      %v2609 = vmul.f32 %v2381, 1.442695
      %v2610 = vpow.pop %v2609
      %v2611 = vmul.f32 %v2382, 1.442695
      %v2612 = vpow.pop %v2611
      %v2613 = vmul.f32 %v2383, 1.442695
      %v2614 = vpow.pop %v2613
      %v2615 = vmul.f32 %v2384, 1.442695
      %v2616 = vpow.pop %v2615
      %v2617 = vmul.f32 %v2385, 1.442695
      %v2618 = vpow.pop %v2617
      %v2619 = vmul.f32 %v2386, 1.442695
      %v2620 = vpow.pop %v2619
      %v2621 = vmul.f32 %v2387, 1.442695
      %v2622 = vpow.pop %v2621
      %v2623 = vmul.f32 %v2388, 1.442695
      %v2624 = vpow.pop %v2623
      %v2625 = vmul.f32 %v2389, 1.442695
      %v2626 = vpow.pop %v2625
      %v2627 = vmul.f32 %v2390, 1.442695
      %v2628 = vpow.pop %v2627
      %v2629 = vmul.f32 %v2391, 1.442695
      %v2630 = vpow.pop %v2629
      %v2631 = vmul.f32 %v2392, 1.442695
      %v2632 = vpow.pop %v2631
      %v2633 = vmul.f32 %v2393, 1.442695
      %v2634 = vpow.pop %v2633
      %v2635 = vmul.f32 %v2394, 1.442695
      %v2636 = vpow.pop %v2635
      %v2637 = vmul.f32 %v2395, 1.442695
      %v2638 = vpow.pop %v2637
      %v2639 = vmul.f32 %v2396, 1.442695
      %v2640 = vpow.pop %v2639
      %v2641 = vmul.f32 %v2397, 1.442695
      %v2642 = vpow.pop %v2641
      %v2643 = vmul.f32 %v2398, 1.442695
      %v2644 = vpow.pop %v2643
      %v2645 = vmul.f32 %v2399, 1.442695
      %v2646 = vpow.pop %v2645
      %v2647 = vmul.f32 %v2400, 1.442695
      %v2648 = vpow.pop %v2647
      %v2649 = vmul.f32 %v2401, 1.442695
      %v2650 = vpow.pop %v2649
      %v2651 = vmul.f32 %v2402, 1.442695
      %v2652 = vpow.pop %v2651
      %v2653 = vmul.f32 %v2403, 1.442695
      %v2654 = vpow.pop %v2653
      %v2655 = vmul.f32 %v2404, 1.442695
      %v2656 = vpow.pop %v2655
      %v2657 = vmul.f32 %v2405, 1.442695
      %v2658 = vpow.pop %v2657
      %v2659 = vmul.f32 %v2406, 1.442695
      %v2660 = vpow.pop %v2659
      %v2661 = vmul.f32 %v2407, 1.442695
      %v2662 = vpow.pop %v2661
      %v2663 = vmul.f32 %v2408, 1.442695
      %v2664 = vpow.pop %v2663
      %v2665 = vsub.f32 %v1288, %v2153
      %v2666 = vsub.f32 %v1290, %v2154
      %v2667 = vsub.f32 %v1481, %v2155
      %v2668 = vsub.f32 %v1483, %v2156
      %v2669 = vsub.f32 %v1292, %v2157
      %v2670 = vsub.f32 %v1294, %v2158
      %v2671 = vsub.f32 %v1485, %v2159
      %v2672 = vsub.f32 %v1487, %v2160
      %v2673 = vsub.f32 %v1298, %v2161
      %v2674 = vsub.f32 %v1300, %v2162
      %v2675 = vsub.f32 %v1491, %v2163
      %v2676 = vsub.f32 %v1493, %v2164
      %v2677 = vsub.f32 %v1302, %v2165
      %v2678 = vsub.f32 %v1304, %v2166
      %v2679 = vsub.f32 %v1495, %v2167
      %v2680 = vsub.f32 %v1497, %v2168
      %v2681 = vsub.f32 %v1308, %v2169
      %v2682 = vsub.f32 %v1310, %v2170
      %v2683 = vsub.f32 %v1501, %v2171
      %v2684 = vsub.f32 %v1503, %v2172
      %v2685 = vsub.f32 %v1312, %v2173
      %v2686 = vsub.f32 %v1314, %v2174
      %v2687 = vsub.f32 %v1505, %v2175
      %v2688 = vsub.f32 %v1507, %v2176
      %v2689 = vsub.f32 %v1318, %v2177
      %v2690 = vsub.f32 %v1320, %v2178
      %v2691 = vsub.f32 %v1511, %v2179
      %v2692 = vsub.f32 %v1513, %v2180
      %v2693 = vsub.f32 %v1322, %v2181
      %v2694 = vsub.f32 %v1324, %v2182
      %v2695 = vsub.f32 %v1515, %v2183
      %v2696 = vsub.f32 %v1517, %v2184
      %v2697 = vsub.f32 %v1328, %v2185
      %v2698 = vsub.f32 %v1330, %v2186
      %v2699 = vsub.f32 %v1521, %v2187
      %v2700 = vsub.f32 %v1523, %v2188
      %v2701 = vsub.f32 %v1332, %v2189
      %v2702 = vsub.f32 %v1334, %v2190
      %v2703 = vsub.f32 %v1525, %v2191
      %v2704 = vsub.f32 %v1527, %v2192
      %v2705 = vsub.f32 %v1338, %v2193
      %v2706 = vsub.f32 %v1340, %v2194
      %v2707 = vsub.f32 %v1531, %v2195
      %v2708 = vsub.f32 %v1533, %v2196
      %v2709 = vsub.f32 %v1342, %v2197
      %v2710 = vsub.f32 %v1344, %v2198
      %v2711 = vsub.f32 %v1535, %v2199
      %v2712 = vsub.f32 %v1537, %v2200
      %v2713 = vsub.f32 %v1348, %v2201
      %v2714 = vsub.f32 %v1350, %v2202
      %v2715 = vsub.f32 %v1541, %v2203
      %v2716 = vsub.f32 %v1543, %v2204
      %v2717 = vsub.f32 %v1352, %v2205
      %v2718 = vsub.f32 %v1354, %v2206
      %v2719 = vsub.f32 %v1545, %v2207
      %v2720 = vsub.f32 %v1547, %v2208
      %v2721 = vsub.f32 %v1358, %v2209
      %v2722 = vsub.f32 %v1360, %v2210
      %v2723 = vsub.f32 %v1551, %v2211
      %v2724 = vsub.f32 %v1553, %v2212
      %v2725 = vsub.f32 %v1362, %v2213
      %v2726 = vsub.f32 %v1364, %v2214
      %v2727 = vsub.f32 %v1555, %v2215
      %v2728 = vsub.f32 %v1557, %v2216
      %v2729 = vsub.f32 %v1368, %v2217
      %v2730 = vsub.f32 %v1370, %v2218
      %v2731 = vsub.f32 %v1561, %v2219
      %v2732 = vsub.f32 %v1563, %v2220
      %v2733 = vsub.f32 %v1372, %v2221
      %v2734 = vsub.f32 %v1374, %v2222
      %v2735 = vsub.f32 %v1565, %v2223
      %v2736 = vsub.f32 %v1567, %v2224
      %v2737 = vsub.f32 %v1378, %v2225
      %v2738 = vsub.f32 %v1380, %v2226
      %v2739 = vsub.f32 %v1571, %v2227
      %v2740 = vsub.f32 %v1573, %v2228
      %v2741 = vsub.f32 %v1382, %v2229
      %v2742 = vsub.f32 %v1384, %v2230
      %v2743 = vsub.f32 %v1575, %v2231
      %v2744 = vsub.f32 %v1577, %v2232
      %v2745 = vsub.f32 %v1388, %v2233
      %v2746 = vsub.f32 %v1390, %v2234
      %v2747 = vsub.f32 %v1581, %v2235
      %v2748 = vsub.f32 %v1583, %v2236
      %v2749 = vsub.f32 %v1392, %v2237
      %v2750 = vsub.f32 %v1394, %v2238
      %v2751 = vsub.f32 %v1585, %v2239
      %v2752 = vsub.f32 %v1587, %v2240
      %v2753 = vsub.f32 %v1398, %v2241
      %v2754 = vsub.f32 %v1400, %v2242
      %v2755 = vsub.f32 %v1591, %v2243
      %v2756 = vsub.f32 %v1593, %v2244
      %v2757 = vsub.f32 %v1402, %v2245
      %v2758 = vsub.f32 %v1404, %v2246
      %v2759 = vsub.f32 %v1595, %v2247
      %v2760 = vsub.f32 %v1597, %v2248
      %v2761 = vsub.f32 %v1408, %v2249
      %v2762 = vsub.f32 %v1410, %v2250
      %v2763 = vsub.f32 %v1601, %v2251
      %v2764 = vsub.f32 %v1603, %v2252
      %v2765 = vsub.f32 %v1412, %v2253
      %v2766 = vsub.f32 %v1414, %v2254
      %v2767 = vsub.f32 %v1605, %v2255
      %v2768 = vsub.f32 %v1607, %v2256
      %v2769 = vsub.f32 %v1418, %v2257
      %v2770 = vsub.f32 %v1420, %v2258
      %v2771 = vsub.f32 %v1611, %v2259
      %v2772 = vsub.f32 %v1613, %v2260
      %v2773 = vsub.f32 %v1422, %v2261
      %v2774 = vsub.f32 %v1424, %v2262
      %v2775 = vsub.f32 %v1615, %v2263
      %v2776 = vsub.f32 %v1617, %v2264
      %v2777 = vsub.f32 %v1428, %v2265
      %v2778 = vsub.f32 %v1430, %v2266
      %v2779 = vsub.f32 %v1621, %v2267
      %v2780 = vsub.f32 %v1623, %v2268
      %v2781 = vsub.f32 %v1432, %v2269
      %v2782 = vsub.f32 %v1434, %v2270
      %v2783 = vsub.f32 %v1625, %v2271
      %v2784 = vsub.f32 %v1627, %v2272
      %v2785 = vsub.f32 %v1438, %v2273
      %v2786 = vsub.f32 %v1440, %v2274
      %v2787 = vsub.f32 %v1631, %v2275
      %v2788 = vsub.f32 %v1633, %v2276
      %v2789 = vsub.f32 %v1442, %v2277
      %v2790 = vsub.f32 %v1444, %v2278
      %v2791 = vsub.f32 %v1635, %v2279
      %v2792 = vsub.f32 %v1637, %v2280
      %v2793 = vmul.f32 %v2665, 1.442695
      %v2794 = vpow.pop %v2793
      %v2795 = vmul.f32 %v2666, 1.442695
      %v2796 = vpow.pop %v2795
      %v2797 = vmul.f32 %v2667, 1.442695
      %v2798 = vpow.pop %v2797
      %v2799 = vmul.f32 %v2668, 1.442695
      %v2800 = vpow.pop %v2799
      %v2801 = vmul.f32 %v2669, 1.442695
      %v2802 = vpow.pop %v2801
      %v2803 = vmul.f32 %v2670, 1.442695
      %v2804 = vpow.pop %v2803
      %v2805 = vmul.f32 %v2671, 1.442695
      %v2806 = vpow.pop %v2805
      %v2807 = vmul.f32 %v2672, 1.442695
      %v2808 = vpow.pop %v2807
      %v2809 = vmul.f32 %v2673, 1.442695
      %v2810 = vpow.pop %v2809
      %v2811 = vmul.f32 %v2674, 1.442695
      %v2812 = vpow.pop %v2811
      %v2813 = vmul.f32 %v2675, 1.442695
      %v2814 = vpow.pop %v2813
      %v2815 = vmul.f32 %v2676, 1.442695
      %v2816 = vpow.pop %v2815
      %v2817 = vmul.f32 %v2677, 1.442695
      %v2818 = vpow.pop %v2817
      %v2819 = vmul.f32 %v2678, 1.442695
      %v2820 = vpow.pop %v2819
      %v2821 = vmul.f32 %v2679, 1.442695
      %v2822 = vpow.pop %v2821
      %v2823 = vmul.f32 %v2680, 1.442695
      %v2824 = vpow.pop %v2823
      %v2825 = vmul.f32 %v2681, 1.442695
      %v2826 = vpow.pop %v2825
      %v2827 = vmul.f32 %v2682, 1.442695
      %v2828 = vpow.pop %v2827
      %v2829 = vmul.f32 %v2683, 1.442695
      %v2830 = vpow.pop %v2829
      %v2831 = vmul.f32 %v2684, 1.442695
      %v2832 = vpow.pop %v2831
      %v2833 = vmul.f32 %v2685, 1.442695
      %v2834 = vpow.pop %v2833
      %v2835 = vmul.f32 %v2686, 1.442695
      %v2836 = vpow.pop %v2835
      %v2837 = vmul.f32 %v2687, 1.442695
      %v2838 = vpow.pop %v2837
      %v2839 = vmul.f32 %v2688, 1.442695
      %v2840 = vpow.pop %v2839
      %v2841 = vmul.f32 %v2689, 1.442695
      %v2842 = vpow.pop %v2841
      %v2843 = vmul.f32 %v2690, 1.442695
      %v2844 = vpow.pop %v2843
      %v2845 = vmul.f32 %v2691, 1.442695
      %v2846 = vpow.pop %v2845
      %v2847 = vmul.f32 %v2692, 1.442695
      %v2848 = vpow.pop %v2847
      %v2849 = vmul.f32 %v2693, 1.442695
      %v2850 = vpow.pop %v2849
      %v2851 = vmul.f32 %v2694, 1.442695
      %v2852 = vpow.pop %v2851
      %v2853 = vmul.f32 %v2695, 1.442695
      %v2854 = vpow.pop %v2853
      %v2855 = vmul.f32 %v2696, 1.442695
      %v2856 = vpow.pop %v2855
      %v2857 = vmul.f32 %v2697, 1.442695
      %v2858 = vpow.pop %v2857
      %v2859 = vmul.f32 %v2698, 1.442695
      %v2860 = vpow.pop %v2859
      %v2861 = vmul.f32 %v2699, 1.442695
      %v2862 = vpow.pop %v2861
      %v2863 = vmul.f32 %v2700, 1.442695
      %v2864 = vpow.pop %v2863
      %v2865 = vmul.f32 %v2701, 1.442695
      %v2866 = vpow.pop %v2865
      %v2867 = vmul.f32 %v2702, 1.442695
      %v2868 = vpow.pop %v2867
      %v2869 = vmul.f32 %v2703, 1.442695
      %v2870 = vpow.pop %v2869
      %v2871 = vmul.f32 %v2704, 1.442695
      %v2872 = vpow.pop %v2871
      %v2873 = vmul.f32 %v2705, 1.442695
      %v2874 = vpow.pop %v2873
      %v2875 = vmul.f32 %v2706, 1.442695
      %v2876 = vpow.pop %v2875
      %v2877 = vmul.f32 %v2707, 1.442695
      %v2878 = vpow.pop %v2877
      %v2879 = vmul.f32 %v2708, 1.442695
      %v2880 = vpow.pop %v2879
      %v2881 = vmul.f32 %v2709, 1.442695
      %v2882 = vpow.pop %v2881
      %v2883 = vmul.f32 %v2710, 1.442695
      %v2884 = vpow.pop %v2883
      %v2885 = vmul.f32 %v2711, 1.442695
      %v2886 = vpow.pop %v2885
      %v2887 = vmul.f32 %v2712, 1.442695
      %v2888 = vpow.pop %v2887
      %v2889 = vmul.f32 %v2713, 1.442695
      %v2890 = vpow.pop %v2889
      %v2891 = vmul.f32 %v2714, 1.442695
      %v2892 = vpow.pop %v2891
      %v2893 = vmul.f32 %v2715, 1.442695
      %v2894 = vpow.pop %v2893
      %v2895 = vmul.f32 %v2716, 1.442695
      %v2896 = vpow.pop %v2895
      %v2897 = vmul.f32 %v2717, 1.442695
      %v2898 = vpow.pop %v2897
      %v2899 = vmul.f32 %v2718, 1.442695
      %v2900 = vpow.pop %v2899
      %v2901 = vmul.f32 %v2719, 1.442695
      %v2902 = vpow.pop %v2901
      %v2903 = vmul.f32 %v2720, 1.442695
      %v2904 = vpow.pop %v2903
      %v2905 = vmul.f32 %v2721, 1.442695
      %v2906 = vpow.pop %v2905
      %v2907 = vmul.f32 %v2722, 1.442695
      %v2908 = vpow.pop %v2907
      %v2909 = vmul.f32 %v2723, 1.442695
      %v2910 = vpow.pop %v2909
      %v2911 = vmul.f32 %v2724, 1.442695
      %v2912 = vpow.pop %v2911
      %v2913 = vmul.f32 %v2725, 1.442695
      %v2914 = vpow.pop %v2913
      %v2915 = vmul.f32 %v2726, 1.442695
      %v2916 = vpow.pop %v2915
      %v2917 = vmul.f32 %v2727, 1.442695
      %v2918 = vpow.pop %v2917
      %v2919 = vmul.f32 %v2728, 1.442695
      %v2920 = vpow.pop %v2919
      %v2921 = vmul.f32 %v2729, 1.442695
      %v2922 = vpow.pop %v2921
      %v2923 = vmul.f32 %v2730, 1.442695
      %v2924 = vpow.pop %v2923
      %v2925 = vmul.f32 %v2731, 1.442695
      %v2926 = vpow.pop %v2925
      %v2927 = vmul.f32 %v2732, 1.442695
      %v2928 = vpow.pop %v2927
      %v2929 = vmul.f32 %v2733, 1.442695
      %v2930 = vpow.pop %v2929
      %v2931 = vmul.f32 %v2734, 1.442695
      %v2932 = vpow.pop %v2931
      %v2933 = vmul.f32 %v2735, 1.442695
      %v2934 = vpow.pop %v2933
      %v2935 = vmul.f32 %v2736, 1.442695
      %v2936 = vpow.pop %v2935
      %v2937 = vmul.f32 %v2737, 1.442695
      %v2938 = vpow.pop %v2937
      %v2939 = vmul.f32 %v2738, 1.442695
      %v2940 = vpow.pop %v2939
      %v2941 = vmul.f32 %v2739, 1.442695
      %v2942 = vpow.pop %v2941
      %v2943 = vmul.f32 %v2740, 1.442695
      %v2944 = vpow.pop %v2943
      %v2945 = vmul.f32 %v2741, 1.442695
      %v2946 = vpow.pop %v2945
      %v2947 = vmul.f32 %v2742, 1.442695
      %v2948 = vpow.pop %v2947
      %v2949 = vmul.f32 %v2743, 1.442695
      %v2950 = vpow.pop %v2949
      %v2951 = vmul.f32 %v2744, 1.442695
      %v2952 = vpow.pop %v2951
      %v2953 = vmul.f32 %v2745, 1.442695
      %v2954 = vpow.pop %v2953
      %v2955 = vmul.f32 %v2746, 1.442695
      %v2956 = vpow.pop %v2955
      %v2957 = vmul.f32 %v2747, 1.442695
      %v2958 = vpow.pop %v2957
      %v2959 = vmul.f32 %v2748, 1.442695
      %v2960 = vpow.pop %v2959
      %v2961 = vmul.f32 %v2749, 1.442695
      %v2962 = vpow.pop %v2961
      %v2963 = vmul.f32 %v2750, 1.442695
      %v2964 = vpow.pop %v2963
      %v2965 = vmul.f32 %v2751, 1.442695
      %v2966 = vpow.pop %v2965
      %v2967 = vmul.f32 %v2752, 1.442695
      %v2968 = vpow.pop %v2967
      %v2969 = vmul.f32 %v2753, 1.442695
      %v2970 = vpow.pop %v2969
      %v2971 = vmul.f32 %v2754, 1.442695
      %v2972 = vpow.pop %v2971
      %v2973 = vmul.f32 %v2755, 1.442695
      %v2974 = vpow.pop %v2973
      %v2975 = vmul.f32 %v2756, 1.442695
      %v2976 = vpow.pop %v2975
      %v2977 = vmul.f32 %v2757, 1.442695
      %v2978 = vpow.pop %v2977
      %v2979 = vmul.f32 %v2758, 1.442695
      %v2980 = vpow.pop %v2979
      %v2981 = vmul.f32 %v2759, 1.442695
      %v2982 = vpow.pop %v2981
      %v2983 = vmul.f32 %v2760, 1.442695
      %v2984 = vpow.pop %v2983
      %v2985 = vmul.f32 %v2761, 1.442695
      %v2986 = vpow.pop %v2985
      %v2987 = vmul.f32 %v2762, 1.442695
      %v2988 = vpow.pop %v2987
      %v2989 = vmul.f32 %v2763, 1.442695
      %v2990 = vpow.pop %v2989
      %v2991 = vmul.f32 %v2764, 1.442695
      %v2992 = vpow.pop %v2991
      %v2993 = vmul.f32 %v2765, 1.442695
      %v2994 = vpow.pop %v2993
      %v2995 = vmul.f32 %v2766, 1.442695
      %v2996 = vpow.pop %v2995
      %v2997 = vmul.f32 %v2767, 1.442695
      %v2998 = vpow.pop %v2997
      %v2999 = vmul.f32 %v2768, 1.442695
      %v3000 = vpow.pop %v2999
      %v3001 = vmul.f32 %v2769, 1.442695
      %v3002 = vpow.pop %v3001
      %v3003 = vmul.f32 %v2770, 1.442695
      %v3004 = vpow.pop %v3003
      %v3005 = vmul.f32 %v2771, 1.442695
      %v3006 = vpow.pop %v3005
      %v3007 = vmul.f32 %v2772, 1.442695
      %v3008 = vpow.pop %v3007
      %v3009 = vmul.f32 %v2773, 1.442695
      %v3010 = vpow.pop %v3009
      %v3011 = vmul.f32 %v2774, 1.442695
      %v3012 = vpow.pop %v3011
      %v3013 = vmul.f32 %v2775, 1.442695
      %v3014 = vpow.pop %v3013
      %v3015 = vmul.f32 %v2776, 1.442695
      %v3016 = vpow.pop %v3015
      %v3017 = vmul.f32 %v2777, 1.442695
      %v3018 = vpow.pop %v3017
      %v3019 = vmul.f32 %v2778, 1.442695
      %v3020 = vpow.pop %v3019
      %v3021 = vmul.f32 %v2779, 1.442695
      %v3022 = vpow.pop %v3021
      %v3023 = vmul.f32 %v2780, 1.442695
      %v3024 = vpow.pop %v3023
      %v3025 = vmul.f32 %v2781, 1.442695
      %v3026 = vpow.pop %v3025
      %v3027 = vmul.f32 %v2782, 1.442695
      %v3028 = vpow.pop %v3027
      %v3029 = vmul.f32 %v2783, 1.442695
      %v3030 = vpow.pop %v3029
      %v3031 = vmul.f32 %v2784, 1.442695
      %v3032 = vpow.pop %v3031
      %v3033 = vmul.f32 %v2785, 1.442695
      %v3034 = vpow.pop %v3033
      %v3035 = vmul.f32 %v2786, 1.442695
      %v3036 = vpow.pop %v3035
      %v3037 = vmul.f32 %v2787, 1.442695
      %v3038 = vpow.pop %v3037
      %v3039 = vmul.f32 %v2788, 1.442695
      %v3040 = vpow.pop %v3039
      %v3041 = vmul.f32 %v2789, 1.442695
      %v3042 = vpow.pop %v3041
      %v3043 = vmul.f32 %v2790, 1.442695
      %v3044 = vpow.pop %v3043
      %v3045 = vmul.f32 %v2791, 1.442695
      %v3046 = vpow.pop %v3045
      %v3047 = vmul.f32 %v2792, 1.442695
      %v3048 = vpow.pop %v3047
      %v3049 = vsub.f32 %v1674, %v2153
      %v3050 = vsub.f32 %v1676, %v2154
      %v3051 = vsub.f32 %v1867, %v2155
      %v3052 = vsub.f32 %v1869, %v2156
      %v3053 = vsub.f32 %v1678, %v2157
      %v3054 = vsub.f32 %v1680, %v2158
      %v3055 = vsub.f32 %v1871, %v2159
      %v3056 = vsub.f32 %v1873, %v2160
      %v3057 = vsub.f32 %v1684, %v2161
      %v3058 = vsub.f32 %v1686, %v2162
      %v3059 = vsub.f32 %v1877, %v2163
      %v3060 = vsub.f32 %v1879, %v2164
      %v3061 = vsub.f32 %v1688, %v2165
      %v3062 = vsub.f32 %v1690, %v2166
      %v3063 = vsub.f32 %v1881, %v2167
      %v3064 = vsub.f32 %v1883, %v2168
      %v3065 = vsub.f32 %v1694, %v2169
      %v3066 = vsub.f32 %v1696, %v2170
      %v3067 = vsub.f32 %v1887, %v2171
      %v3068 = vsub.f32 %v1889, %v2172
      %v3069 = vsub.f32 %v1698, %v2173
      %v3070 = vsub.f32 %v1700, %v2174
      %v3071 = vsub.f32 %v1891, %v2175
      %v3072 = vsub.f32 %v1893, %v2176
      %v3073 = vsub.f32 %v1704, %v2177
      %v3074 = vsub.f32 %v1706, %v2178
      %v3075 = vsub.f32 %v1897, %v2179
      %v3076 = vsub.f32 %v1899, %v2180
      %v3077 = vsub.f32 %v1708, %v2181
      %v3078 = vsub.f32 %v1710, %v2182
      %v3079 = vsub.f32 %v1901, %v2183
      %v3080 = vsub.f32 %v1903, %v2184
      %v3081 = vsub.f32 %v1714, %v2185
      %v3082 = vsub.f32 %v1716, %v2186
      %v3083 = vsub.f32 %v1907, %v2187
      %v3084 = vsub.f32 %v1909, %v2188
      %v3085 = vsub.f32 %v1718, %v2189
      %v3086 = vsub.f32 %v1720, %v2190
      %v3087 = vsub.f32 %v1911, %v2191
      %v3088 = vsub.f32 %v1913, %v2192
      %v3089 = vsub.f32 %v1724, %v2193
      %v3090 = vsub.f32 %v1726, %v2194
      %v3091 = vsub.f32 %v1917, %v2195
      %v3092 = vsub.f32 %v1919, %v2196
      %v3093 = vsub.f32 %v1728, %v2197
      %v3094 = vsub.f32 %v1730, %v2198
      %v3095 = vsub.f32 %v1921, %v2199
      %v3096 = vsub.f32 %v1923, %v2200
      %v3097 = vsub.f32 %v1734, %v2201
      %v3098 = vsub.f32 %v1736, %v2202
      %v3099 = vsub.f32 %v1927, %v2203
      %v3100 = vsub.f32 %v1929, %v2204
      %v3101 = vsub.f32 %v1738, %v2205
      %v3102 = vsub.f32 %v1740, %v2206
      %v3103 = vsub.f32 %v1931, %v2207
      %v3104 = vsub.f32 %v1933, %v2208
      %v3105 = vsub.f32 %v1744, %v2209
      %v3106 = vsub.f32 %v1746, %v2210
      %v3107 = vsub.f32 %v1937, %v2211
      %v3108 = vsub.f32 %v1939, %v2212
      %v3109 = vsub.f32 %v1748, %v2213
      %v3110 = vsub.f32 %v1750, %v2214
      %v3111 = vsub.f32 %v1941, %v2215
      %v3112 = vsub.f32 %v1943, %v2216
      %v3113 = vsub.f32 %v1754, %v2217
      %v3114 = vsub.f32 %v1756, %v2218
      %v3115 = vsub.f32 %v1947, %v2219
      %v3116 = vsub.f32 %v1949, %v2220
      %v3117 = vsub.f32 %v1758, %v2221
      %v3118 = vsub.f32 %v1760, %v2222
      %v3119 = vsub.f32 %v1951, %v2223
      %v3120 = vsub.f32 %v1953, %v2224
      %v3121 = vsub.f32 %v1764, %v2225
      %v3122 = vsub.f32 %v1766, %v2226
      %v3123 = vsub.f32 %v1957, %v2227
      %v3124 = vsub.f32 %v1959, %v2228
      %v3125 = vsub.f32 %v1768, %v2229
      %v3126 = vsub.f32 %v1770, %v2230
      %v3127 = vsub.f32 %v1961, %v2231
      %v3128 = vsub.f32 %v1963, %v2232
      %v3129 = vsub.f32 %v1774, %v2233
      %v3130 = vsub.f32 %v1776, %v2234
      %v3131 = vsub.f32 %v1967, %v2235
      %v3132 = vsub.f32 %v1969, %v2236
      %v3133 = vsub.f32 %v1778, %v2237
      %v3134 = vsub.f32 %v1780, %v2238
      %v3135 = vsub.f32 %v1971, %v2239
      %v3136 = vsub.f32 %v1973, %v2240
      %v3137 = vsub.f32 %v1784, %v2241
      %v3138 = vsub.f32 %v1786, %v2242
      %v3139 = vsub.f32 %v1977, %v2243
      %v3140 = vsub.f32 %v1979, %v2244
      %v3141 = vsub.f32 %v1788, %v2245
      %v3142 = vsub.f32 %v1790, %v2246
      %v3143 = vsub.f32 %v1981, %v2247
      %v3144 = vsub.f32 %v1983, %v2248
      %v3145 = vsub.f32 %v1794, %v2249
      %v3146 = vsub.f32 %v1796, %v2250
      %v3147 = vsub.f32 %v1987, %v2251
      %v3148 = vsub.f32 %v1989, %v2252
      %v3149 = vsub.f32 %v1798, %v2253
      %v3150 = vsub.f32 %v1800, %v2254
      %v3151 = vsub.f32 %v1991, %v2255
      %v3152 = vsub.f32 %v1993, %v2256
      %v3153 = vsub.f32 %v1804, %v2257
      %v3154 = vsub.f32 %v1806, %v2258
      %v3155 = vsub.f32 %v1997, %v2259
      %v3156 = vsub.f32 %v1999, %v2260
      %v3157 = vsub.f32 %v1808, %v2261
      %v3158 = vsub.f32 %v1810, %v2262
      %v3159 = vsub.f32 %v2001, %v2263
      %v3160 = vsub.f32 %v2003, %v2264
      %v3161 = vsub.f32 %v1814, %v2265
      %v3162 = vsub.f32 %v1816, %v2266
      %v3163 = vsub.f32 %v2007, %v2267
      %v3164 = vsub.f32 %v2009, %v2268
      %v3165 = vsub.f32 %v1818, %v2269
      %v3166 = vsub.f32 %v1820, %v2270
      %v3167 = vsub.f32 %v2011, %v2271
      %v3168 = vsub.f32 %v2013, %v2272
      %v3169 = vsub.f32 %v1824, %v2273
      %v3170 = vsub.f32 %v1826, %v2274
      %v3171 = vsub.f32 %v2017, %v2275
      %v3172 = vsub.f32 %v2019, %v2276
      %v3173 = vsub.f32 %v1828, %v2277
      %v3174 = vsub.f32 %v1830, %v2278
      %v3175 = vsub.f32 %v2021, %v2279
      %v3176 = vsub.f32 %v2023, %v2280
      %v3177 = vmul.f32 %v3049, 1.442695
      %v3178 = vpow.pop %v3177
      %v3179 = vmul.f32 %v3050, 1.442695
      %v3180 = vpow.pop %v3179
      %v3181 = vmul.f32 %v3051, 1.442695
      %v3182 = vpow.pop %v3181
      %v3183 = vmul.f32 %v3052, 1.442695
      %v3184 = vpow.pop %v3183
      %v3185 = vmul.f32 %v3053, 1.442695
      %v3186 = vpow.pop %v3185
      %v3187 = vmul.f32 %v3054, 1.442695
      %v3188 = vpow.pop %v3187
      %v3189 = vmul.f32 %v3055, 1.442695
      %v3190 = vpow.pop %v3189
      %v3191 = vmul.f32 %v3056, 1.442695
      %v3192 = vpow.pop %v3191
      %v3193 = vmul.f32 %v3057, 1.442695
      %v3194 = vpow.pop %v3193
      %v3195 = vmul.f32 %v3058, 1.442695
      %v3196 = vpow.pop %v3195
      %v3197 = vmul.f32 %v3059, 1.442695
      %v3198 = vpow.pop %v3197
      %v3199 = vmul.f32 %v3060, 1.442695
      %v3200 = vpow.pop %v3199
      %v3201 = vmul.f32 %v3061, 1.442695
      %v3202 = vpow.pop %v3201
      %v3203 = vmul.f32 %v3062, 1.442695
      %v3204 = vpow.pop %v3203
      %v3205 = vmul.f32 %v3063, 1.442695
      %v3206 = vpow.pop %v3205
      %v3207 = vmul.f32 %v3064, 1.442695
      %v3208 = vpow.pop %v3207
      %v3209 = vmul.f32 %v3065, 1.442695
      %v3210 = vpow.pop %v3209
      %v3211 = vmul.f32 %v3066, 1.442695
      %v3212 = vpow.pop %v3211
      %v3213 = vmul.f32 %v3067, 1.442695
      %v3214 = vpow.pop %v3213
      %v3215 = vmul.f32 %v3068, 1.442695
      %v3216 = vpow.pop %v3215
      %v3217 = vmul.f32 %v3069, 1.442695
      %v3218 = vpow.pop %v3217
      %v3219 = vmul.f32 %v3070, 1.442695
      %v3220 = vpow.pop %v3219
      %v3221 = vmul.f32 %v3071, 1.442695
      %v3222 = vpow.pop %v3221
      %v3223 = vmul.f32 %v3072, 1.442695
      %v3224 = vpow.pop %v3223
      %v3225 = vmul.f32 %v3073, 1.442695
      %v3226 = vpow.pop %v3225
      %v3227 = vmul.f32 %v3074, 1.442695
      %v3228 = vpow.pop %v3227
      %v3229 = vmul.f32 %v3075, 1.442695
      %v3230 = vpow.pop %v3229
      %v3231 = vmul.f32 %v3076, 1.442695
      %v3232 = vpow.pop %v3231
      %v3233 = vmul.f32 %v3077, 1.442695
      %v3234 = vpow.pop %v3233
      %v3235 = vmul.f32 %v3078, 1.442695
      %v3236 = vpow.pop %v3235
      %v3237 = vmul.f32 %v3079, 1.442695
      %v3238 = vpow.pop %v3237
      %v3239 = vmul.f32 %v3080, 1.442695
      %v3240 = vpow.pop %v3239
      %v3241 = vmul.f32 %v3081, 1.442695
      %v3242 = vpow.pop %v3241
      %v3243 = vmul.f32 %v3082, 1.442695
      %v3244 = vpow.pop %v3243
      %v3245 = vmul.f32 %v3083, 1.442695
      %v3246 = vpow.pop %v3245
      %v3247 = vmul.f32 %v3084, 1.442695
      %v3248 = vpow.pop %v3247
      %v3249 = vmul.f32 %v3085, 1.442695
      %v3250 = vpow.pop %v3249
      %v3251 = vmul.f32 %v3086, 1.442695
      %v3252 = vpow.pop %v3251
      %v3253 = vmul.f32 %v3087, 1.442695
      %v3254 = vpow.pop %v3253
      %v3255 = vmul.f32 %v3088, 1.442695
      %v3256 = vpow.pop %v3255
      %v3257 = vmul.f32 %v3089, 1.442695
      %v3258 = vpow.pop %v3257
      %v3259 = vmul.f32 %v3090, 1.442695
      %v3260 = vpow.pop %v3259
      %v3261 = vmul.f32 %v3091, 1.442695
      %v3262 = vpow.pop %v3261
      %v3263 = vmul.f32 %v3092, 1.442695
      %v3264 = vpow.pop %v3263
      %v3265 = vmul.f32 %v3093, 1.442695
      %v3266 = vpow.pop %v3265
      %v3267 = vmul.f32 %v3094, 1.442695
      %v3268 = vpow.pop %v3267
      %v3269 = vmul.f32 %v3095, 1.442695
      %v3270 = vpow.pop %v3269
      %v3271 = vmul.f32 %v3096, 1.442695
      %v3272 = vpow.pop %v3271
      %v3273 = vmul.f32 %v3097, 1.442695
      %v3274 = vpow.pop %v3273
      %v3275 = vmul.f32 %v3098, 1.442695
      %v3276 = vpow.pop %v3275
      %v3277 = vmul.f32 %v3099, 1.442695
      %v3278 = vpow.pop %v3277
      %v3279 = vmul.f32 %v3100, 1.442695
      %v3280 = vpow.pop %v3279
      %v3281 = vmul.f32 %v3101, 1.442695
      %v3282 = vpow.pop %v3281
      %v3283 = vmul.f32 %v3102, 1.442695
      %v3284 = vpow.pop %v3283
      %v3285 = vmul.f32 %v3103, 1.442695
      %v3286 = vpow.pop %v3285
      %v3287 = vmul.f32 %v3104, 1.442695
      %v3288 = vpow.pop %v3287
      %v3289 = vmul.f32 %v3105, 1.442695
      %v3290 = vpow.pop %v3289
      %v3291 = vmul.f32 %v3106, 1.442695
      %v3292 = vpow.pop %v3291
      %v3293 = vmul.f32 %v3107, 1.442695
      %v3294 = vpow.pop %v3293
      %v3295 = vmul.f32 %v3108, 1.442695
      %v3296 = vpow.pop %v3295
      %v3297 = vmul.f32 %v3109, 1.442695
      %v3298 = vpow.pop %v3297
      %v3299 = vmul.f32 %v3110, 1.442695
      %v3300 = vpow.pop %v3299
      %v3301 = vmul.f32 %v3111, 1.442695
      %v3302 = vpow.pop %v3301
      %v3303 = vmul.f32 %v3112, 1.442695
      %v3304 = vpow.pop %v3303
      %v3305 = vmul.f32 %v3113, 1.442695
      %v3306 = vpow.pop %v3305
      %v3307 = vmul.f32 %v3114, 1.442695
      %v3308 = vpow.pop %v3307
      %v3309 = vmul.f32 %v3115, 1.442695
      %v3310 = vpow.pop %v3309
      %v3311 = vmul.f32 %v3116, 1.442695
      %v3312 = vpow.pop %v3311
      %v3313 = vmul.f32 %v3117, 1.442695
      %v3314 = vpow.pop %v3313
      %v3315 = vmul.f32 %v3118, 1.442695
      %v3316 = vpow.pop %v3315
      %v3317 = vmul.f32 %v3119, 1.442695
      %v3318 = vpow.pop %v3317
      %v3319 = vmul.f32 %v3120, 1.442695
      %v3320 = vpow.pop %v3319
      %v3321 = vmul.f32 %v3121, 1.442695
      %v3322 = vpow.pop %v3321
      %v3323 = vmul.f32 %v3122, 1.442695
      %v3324 = vpow.pop %v3323
      %v3325 = vmul.f32 %v3123, 1.442695
      %v3326 = vpow.pop %v3325
      %v3327 = vmul.f32 %v3124, 1.442695
      %v3328 = vpow.pop %v3327
      %v3329 = vmul.f32 %v3125, 1.442695
      %v3330 = vpow.pop %v3329
      %v3331 = vmul.f32 %v3126, 1.442695
      %v3332 = vpow.pop %v3331
      %v3333 = vmul.f32 %v3127, 1.442695
      %v3334 = vpow.pop %v3333
      %v3335 = vmul.f32 %v3128, 1.442695
      %v3336 = vpow.pop %v3335
      %v3337 = vmul.f32 %v3129, 1.442695
      %v3338 = vpow.pop %v3337
      %v3339 = vmul.f32 %v3130, 1.442695
      %v3340 = vpow.pop %v3339
      %v3341 = vmul.f32 %v3131, 1.442695
      %v3342 = vpow.pop %v3341
      %v3343 = vmul.f32 %v3132, 1.442695
      %v3344 = vpow.pop %v3343
      %v3345 = vmul.f32 %v3133, 1.442695
      %v3346 = vpow.pop %v3345
      %v3347 = vmul.f32 %v3134, 1.442695
      %v3348 = vpow.pop %v3347
      %v3349 = vmul.f32 %v3135, 1.442695
      %v3350 = vpow.pop %v3349
      %v3351 = vmul.f32 %v3136, 1.442695
      %v3352 = vpow.pop %v3351
      %v3353 = vmul.f32 %v3137, 1.442695
      %v3354 = vpow.pop %v3353
      %v3355 = vmul.f32 %v3138, 1.442695
      %v3356 = vpow.pop %v3355
      %v3357 = vmul.f32 %v3139, 1.442695
      %v3358 = vpow.pop %v3357
      %v3359 = vmul.f32 %v3140, 1.442695
      %v3360 = vpow.pop %v3359
      %v3361 = vmul.f32 %v3141, 1.442695
      %v3362 = vpow.pop %v3361
      %v3363 = vmul.f32 %v3142, 1.442695
      %v3364 = vpow.pop %v3363
      %v3365 = vmul.f32 %v3143, 1.442695
      %v3366 = vpow.pop %v3365
      %v3367 = vmul.f32 %v3144, 1.442695
      %v3368 = vpow.pop %v3367
      %v3369 = vmul.f32 %v3145, 1.442695
      %v3370 = vpow.pop %v3369
      %v3371 = vmul.f32 %v3146, 1.442695
      %v3372 = vpow.pop %v3371
      %v3373 = vmul.f32 %v3147, 1.442695
      %v3374 = vpow.pop %v3373
      %v3375 = vmul.f32 %v3148, 1.442695
      %v3376 = vpow.pop %v3375
      %v3377 = vmul.f32 %v3149, 1.442695
      %v3378 = vpow.pop %v3377
      %v3379 = vmul.f32 %v3150, 1.442695
      %v3380 = vpow.pop %v3379
      %v3381 = vmul.f32 %v3151, 1.442695
      %v3382 = vpow.pop %v3381
      %v3383 = vmul.f32 %v3152, 1.442695
      %v3384 = vpow.pop %v3383
      %v3385 = vmul.f32 %v3153, 1.442695
      %v3386 = vpow.pop %v3385
      %v3387 = vmul.f32 %v3154, 1.442695
      %v3388 = vpow.pop %v3387
      %v3389 = vmul.f32 %v3155, 1.442695
      %v3390 = vpow.pop %v3389
      %v3391 = vmul.f32 %v3156, 1.442695
      %v3392 = vpow.pop %v3391
      %v3393 = vmul.f32 %v3157, 1.442695
      %v3394 = vpow.pop %v3393
      %v3395 = vmul.f32 %v3158, 1.442695
      %v3396 = vpow.pop %v3395
      %v3397 = vmul.f32 %v3159, 1.442695
      %v3398 = vpow.pop %v3397
      %v3399 = vmul.f32 %v3160, 1.442695
      %v3400 = vpow.pop %v3399
      %v3401 = vmul.f32 %v3161, 1.442695
      %v3402 = vpow.pop %v3401
      %v3403 = vmul.f32 %v3162, 1.442695
      %v3404 = vpow.pop %v3403
      %v3405 = vmul.f32 %v3163, 1.442695
      %v3406 = vpow.pop %v3405
      %v3407 = vmul.f32 %v3164, 1.442695
      %v3408 = vpow.pop %v3407
      %v3409 = vmul.f32 %v3165, 1.442695
      %v3410 = vpow.pop %v3409
      %v3411 = vmul.f32 %v3166, 1.442695
      %v3412 = vpow.pop %v3411
      %v3413 = vmul.f32 %v3167, 1.442695
      %v3414 = vpow.pop %v3413
      %v3415 = vmul.f32 %v3168, 1.442695
      %v3416 = vpow.pop %v3415
      %v3417 = vmul.f32 %v3169, 1.442695
      %v3418 = vpow.pop %v3417
      %v3419 = vmul.f32 %v3170, 1.442695
      %v3420 = vpow.pop %v3419
      %v3421 = vmul.f32 %v3171, 1.442695
      %v3422 = vpow.pop %v3421
      %v3423 = vmul.f32 %v3172, 1.442695
      %v3424 = vpow.pop %v3423
      %v3425 = vmul.f32 %v3173, 1.442695
      %v3426 = vpow.pop %v3425
      %v3427 = vmul.f32 %v3174, 1.442695
      %v3428 = vpow.pop %v3427
      %v3429 = vmul.f32 %v3175, 1.442695
      %v3430 = vpow.pop %v3429
      %v3431 = vmul.f32 %v3176, 1.442695
      %v3432 = vpow.pop %v3431
      %v3433 = vadd.f32 %v2410, %v2794
      %v3434 = vadd.f32 %v2412, %v2796
      %v3435 = vadd.f32 %v2414, %v2798
      %v3436 = vadd.f32 %v2416, %v2800
      %v3437 = vadd.f32 %v2418, %v2802
      %v3438 = vadd.f32 %v2420, %v2804
      %v3439 = vadd.f32 %v2422, %v2806
      %v3440 = vadd.f32 %v2424, %v2808
      %v3441 = vadd.f32 %v2426, %v2810
      %v3442 = vadd.f32 %v2428, %v2812
      %v3443 = vadd.f32 %v2430, %v2814
      %v3444 = vadd.f32 %v2432, %v2816
      %v3445 = vadd.f32 %v2434, %v2818
      %v3446 = vadd.f32 %v2436, %v2820
      %v3447 = vadd.f32 %v2438, %v2822
      %v3448 = vadd.f32 %v2440, %v2824
      %v3449 = vadd.f32 %v2442, %v2826
      %v3450 = vadd.f32 %v2444, %v2828
      %v3451 = vadd.f32 %v2446, %v2830
      %v3452 = vadd.f32 %v2448, %v2832
      %v3453 = vadd.f32 %v2450, %v2834
      %v3454 = vadd.f32 %v2452, %v2836
      %v3455 = vadd.f32 %v2454, %v2838
      %v3456 = vadd.f32 %v2456, %v2840
      %v3457 = vadd.f32 %v2458, %v2842
      %v3458 = vadd.f32 %v2460, %v2844
      %v3459 = vadd.f32 %v2462, %v2846
      %v3460 = vadd.f32 %v2464, %v2848
      %v3461 = vadd.f32 %v2466, %v2850
      %v3462 = vadd.f32 %v2468, %v2852
      %v3463 = vadd.f32 %v2470, %v2854
      %v3464 = vadd.f32 %v2472, %v2856
      %v3465 = vadd.f32 %v2474, %v2858
      %v3466 = vadd.f32 %v2476, %v2860
      %v3467 = vadd.f32 %v2478, %v2862
      %v3468 = vadd.f32 %v2480, %v2864
      %v3469 = vadd.f32 %v2482, %v2866
      %v3470 = vadd.f32 %v2484, %v2868
      %v3471 = vadd.f32 %v2486, %v2870
      %v3472 = vadd.f32 %v2488, %v2872
      %v3473 = vadd.f32 %v2490, %v2874
      %v3474 = vadd.f32 %v2492, %v2876
      %v3475 = vadd.f32 %v2494, %v2878
      %v3476 = vadd.f32 %v2496, %v2880
      %v3477 = vadd.f32 %v2498, %v2882
      %v3478 = vadd.f32 %v2500, %v2884
      %v3479 = vadd.f32 %v2502, %v2886
      %v3480 = vadd.f32 %v2504, %v2888
      %v3481 = vadd.f32 %v2506, %v2890
      %v3482 = vadd.f32 %v2508, %v2892
      %v3483 = vadd.f32 %v2510, %v2894
      %v3484 = vadd.f32 %v2512, %v2896
      %v3485 = vadd.f32 %v2514, %v2898
      %v3486 = vadd.f32 %v2516, %v2900
      %v3487 = vadd.f32 %v2518, %v2902
      %v3488 = vadd.f32 %v2520, %v2904
      %v3489 = vadd.f32 %v2522, %v2906
      %v3490 = vadd.f32 %v2524, %v2908
      %v3491 = vadd.f32 %v2526, %v2910
      %v3492 = vadd.f32 %v2528, %v2912
      %v3493 = vadd.f32 %v2530, %v2914
      %v3494 = vadd.f32 %v2532, %v2916
      %v3495 = vadd.f32 %v2534, %v2918
      %v3496 = vadd.f32 %v2536, %v2920
      %v3497 = vadd.f32 %v2538, %v2922
      %v3498 = vadd.f32 %v2540, %v2924
      %v3499 = vadd.f32 %v2542, %v2926
      %v3500 = vadd.f32 %v2544, %v2928
      %v3501 = vadd.f32 %v2546, %v2930
      %v3502 = vadd.f32 %v2548, %v2932
      %v3503 = vadd.f32 %v2550, %v2934
      %v3504 = vadd.f32 %v2552, %v2936
      %v3505 = vadd.f32 %v2554, %v2938
      %v3506 = vadd.f32 %v2556, %v2940
      %v3507 = vadd.f32 %v2558, %v2942
      %v3508 = vadd.f32 %v2560, %v2944
      %v3509 = vadd.f32 %v2562, %v2946
      %v3510 = vadd.f32 %v2564, %v2948
      %v3511 = vadd.f32 %v2566, %v2950
      %v3512 = vadd.f32 %v2568, %v2952
      %v3513 = vadd.f32 %v2570, %v2954
      %v3514 = vadd.f32 %v2572, %v2956
      %v3515 = vadd.f32 %v2574, %v2958
      %v3516 = vadd.f32 %v2576, %v2960
      %v3517 = vadd.f32 %v2578, %v2962
      %v3518 = vadd.f32 %v2580, %v2964
      %v3519 = vadd.f32 %v2582, %v2966
      %v3520 = vadd.f32 %v2584, %v2968
      %v3521 = vadd.f32 %v2586, %v2970
      %v3522 = vadd.f32 %v2588, %v2972
      %v3523 = vadd.f32 %v2590, %v2974
      %v3524 = vadd.f32 %v2592, %v2976
      %v3525 = vadd.f32 %v2594, %v2978
      %v3526 = vadd.f32 %v2596, %v2980
      %v3527 = vadd.f32 %v2598, %v2982
      %v3528 = vadd.f32 %v2600, %v2984
      %v3529 = vadd.f32 %v2602, %v2986
      %v3530 = vadd.f32 %v2604, %v2988
      %v3531 = vadd.f32 %v2606, %v2990
      %v3532 = vadd.f32 %v2608, %v2992
      %v3533 = vadd.f32 %v2610, %v2994
      %v3534 = vadd.f32 %v2612, %v2996
      %v3535 = vadd.f32 %v2614, %v2998
      %v3536 = vadd.f32 %v2616, %v3000
      %v3537 = vadd.f32 %v2618, %v3002
      %v3538 = vadd.f32 %v2620, %v3004
      %v3539 = vadd.f32 %v2622, %v3006
      %v3540 = vadd.f32 %v2624, %v3008
      %v3541 = vadd.f32 %v2626, %v3010
      %v3542 = vadd.f32 %v2628, %v3012
      %v3543 = vadd.f32 %v2630, %v3014
      %v3544 = vadd.f32 %v2632, %v3016
      %v3545 = vadd.f32 %v2634, %v3018
      %v3546 = vadd.f32 %v2636, %v3020
      %v3547 = vadd.f32 %v2638, %v3022
      %v3548 = vadd.f32 %v2640, %v3024
      %v3549 = vadd.f32 %v2642, %v3026
      %v3550 = vadd.f32 %v2644, %v3028
      %v3551 = vadd.f32 %v2646, %v3030
      %v3552 = vadd.f32 %v2648, %v3032
      %v3553 = vadd.f32 %v2650, %v3034
      %v3554 = vadd.f32 %v2652, %v3036
      %v3555 = vadd.f32 %v2654, %v3038
      %v3556 = vadd.f32 %v2656, %v3040
      %v3557 = vadd.f32 %v2658, %v3042
      %v3558 = vadd.f32 %v2660, %v3044
      %v3559 = vadd.f32 %v2662, %v3046
      %v3560 = vadd.f32 %v2664, %v3048
      %v3561 = vadd.f32 %v3433, %v3178
      %v3562 = vadd.f32 %v3434, %v3180
      %v3563 = vadd.f32 %v3435, %v3182
      %v3564 = vadd.f32 %v3436, %v3184
      %v3565 = vadd.f32 %v3437, %v3186
      %v3566 = vadd.f32 %v3438, %v3188
      %v3567 = vadd.f32 %v3439, %v3190
      %v3568 = vadd.f32 %v3440, %v3192
      %v3569 = vadd.f32 %v3441, %v3194
      %v3570 = vadd.f32 %v3442, %v3196
      %v3571 = vadd.f32 %v3443, %v3198
      %v3572 = vadd.f32 %v3444, %v3200
      %v3573 = vadd.f32 %v3445, %v3202
      %v3574 = vadd.f32 %v3446, %v3204
      %v3575 = vadd.f32 %v3447, %v3206
      %v3576 = vadd.f32 %v3448, %v3208
      %v3577 = vadd.f32 %v3449, %v3210
      %v3578 = vadd.f32 %v3450, %v3212
      %v3579 = vadd.f32 %v3451, %v3214
      %v3580 = vadd.f32 %v3452, %v3216
      %v3581 = vadd.f32 %v3453, %v3218
      %v3582 = vadd.f32 %v3454, %v3220
      %v3583 = vadd.f32 %v3455, %v3222
      %v3584 = vadd.f32 %v3456, %v3224
      %v3585 = vadd.f32 %v3457, %v3226
      %v3586 = vadd.f32 %v3458, %v3228
      %v3587 = vadd.f32 %v3459, %v3230
      %v3588 = vadd.f32 %v3460, %v3232
      %v3589 = vadd.f32 %v3461, %v3234
      %v3590 = vadd.f32 %v3462, %v3236
      %v3591 = vadd.f32 %v3463, %v3238
      %v3592 = vadd.f32 %v3464, %v3240
      %v3593 = vadd.f32 %v3465, %v3242
      %v3594 = vadd.f32 %v3466, %v3244
      %v3595 = vadd.f32 %v3467, %v3246
      %v3596 = vadd.f32 %v3468, %v3248
      %v3597 = vadd.f32 %v3469, %v3250
      %v3598 = vadd.f32 %v3470, %v3252
      %v3599 = vadd.f32 %v3471, %v3254
      %v3600 = vadd.f32 %v3472, %v3256
      %v3601 = vadd.f32 %v3473, %v3258
      %v3602 = vadd.f32 %v3474, %v3260
      %v3603 = vadd.f32 %v3475, %v3262
      %v3604 = vadd.f32 %v3476, %v3264
      %v3605 = vadd.f32 %v3477, %v3266
      %v3606 = vadd.f32 %v3478, %v3268
      %v3607 = vadd.f32 %v3479, %v3270
      %v3608 = vadd.f32 %v3480, %v3272
      %v3609 = vadd.f32 %v3481, %v3274
      %v3610 = vadd.f32 %v3482, %v3276
      %v3611 = vadd.f32 %v3483, %v3278
      %v3612 = vadd.f32 %v3484, %v3280
      %v3613 = vadd.f32 %v3485, %v3282
      %v3614 = vadd.f32 %v3486, %v3284
      %v3615 = vadd.f32 %v3487, %v3286
      %v3616 = vadd.f32 %v3488, %v3288
      %v3617 = vadd.f32 %v3489, %v3290
      %v3618 = vadd.f32 %v3490, %v3292
      %v3619 = vadd.f32 %v3491, %v3294
      %v3620 = vadd.f32 %v3492, %v3296
      %v3621 = vadd.f32 %v3493, %v3298
      %v3622 = vadd.f32 %v3494, %v3300
      %v3623 = vadd.f32 %v3495, %v3302
      %v3624 = vadd.f32 %v3496, %v3304
      %v3625 = vadd.f32 %v3497, %v3306
      %v3626 = vadd.f32 %v3498, %v3308
      %v3627 = vadd.f32 %v3499, %v3310
      %v3628 = vadd.f32 %v3500, %v3312
      %v3629 = vadd.f32 %v3501, %v3314
      %v3630 = vadd.f32 %v3502, %v3316
      %v3631 = vadd.f32 %v3503, %v3318
      %v3632 = vadd.f32 %v3504, %v3320
      %v3633 = vadd.f32 %v3505, %v3322
      %v3634 = vadd.f32 %v3506, %v3324
      %v3635 = vadd.f32 %v3507, %v3326
      %v3636 = vadd.f32 %v3508, %v3328
      %v3637 = vadd.f32 %v3509, %v3330
      %v3638 = vadd.f32 %v3510, %v3332
      %v3639 = vadd.f32 %v3511, %v3334
      %v3640 = vadd.f32 %v3512, %v3336
      %v3641 = vadd.f32 %v3513, %v3338
      %v3642 = vadd.f32 %v3514, %v3340
      %v3643 = vadd.f32 %v3515, %v3342
      %v3644 = vadd.f32 %v3516, %v3344
      %v3645 = vadd.f32 %v3517, %v3346
      %v3646 = vadd.f32 %v3518, %v3348
      %v3647 = vadd.f32 %v3519, %v3350
      %v3648 = vadd.f32 %v3520, %v3352
      %v3649 = vadd.f32 %v3521, %v3354
      %v3650 = vadd.f32 %v3522, %v3356
      %v3651 = vadd.f32 %v3523, %v3358
      %v3652 = vadd.f32 %v3524, %v3360
      %v3653 = vadd.f32 %v3525, %v3362
      %v3654 = vadd.f32 %v3526, %v3364
      %v3655 = vadd.f32 %v3527, %v3366
      %v3656 = vadd.f32 %v3528, %v3368
      %v3657 = vadd.f32 %v3529, %v3370
      %v3658 = vadd.f32 %v3530, %v3372
      %v3659 = vadd.f32 %v3531, %v3374
      %v3660 = vadd.f32 %v3532, %v3376
      %v3661 = vadd.f32 %v3533, %v3378
      %v3662 = vadd.f32 %v3534, %v3380
      %v3663 = vadd.f32 %v3535, %v3382
      %v3664 = vadd.f32 %v3536, %v3384
      %v3665 = vadd.f32 %v3537, %v3386
      %v3666 = vadd.f32 %v3538, %v3388
      %v3667 = vadd.f32 %v3539, %v3390
      %v3668 = vadd.f32 %v3540, %v3392
      %v3669 = vadd.f32 %v3541, %v3394
      %v3670 = vadd.f32 %v3542, %v3396
      %v3671 = vadd.f32 %v3543, %v3398
      %v3672 = vadd.f32 %v3544, %v3400
      %v3673 = vadd.f32 %v3545, %v3402
      %v3674 = vadd.f32 %v3546, %v3404
      %v3675 = vadd.f32 %v3547, %v3406
      %v3676 = vadd.f32 %v3548, %v3408
      %v3677 = vadd.f32 %v3549, %v3410
      %v3678 = vadd.f32 %v3550, %v3412
      %v3679 = vadd.f32 %v3551, %v3414
      %v3680 = vadd.f32 %v3552, %v3416
      %v3681 = vadd.f32 %v3553, %v3418
      %v3682 = vadd.f32 %v3554, %v3420
      %v3683 = vadd.f32 %v3555, %v3422
      %v3684 = vadd.f32 %v3556, %v3424
      %v3685 = vadd.f32 %v3557, %v3426
      %v3686 = vadd.f32 %v3558, %v3428
      %v3687 = vadd.f32 %v3559, %v3430
      %v3688 = vadd.f32 %v3560, %v3432
      %v3689 = vrcp.pop %v3561
      %v3690 = vrcp.pop %v3562
      %v3691 = vrcp.pop %v3563
      %v3692 = vrcp.pop %v3564
      %v3693 = vrcp.pop %v3565
      %v3694 = vrcp.pop %v3566
      %v3695 = vrcp.pop %v3567
      %v3696 = vrcp.pop %v3568
      %v3697 = vrcp.pop %v3569
      %v3698 = vrcp.pop %v3570
      %v3699 = vrcp.pop %v3571
      %v3700 = vrcp.pop %v3572
      %v3701 = vrcp.pop %v3573
      %v3702 = vrcp.pop %v3574
      %v3703 = vrcp.pop %v3575
      %v3704 = vrcp.pop %v3576
      %v3705 = vrcp.pop %v3577
      %v3706 = vrcp.pop %v3578
      %v3707 = vrcp.pop %v3579
      %v3708 = vrcp.pop %v3580
      %v3709 = vrcp.pop %v3581
      %v3710 = vrcp.pop %v3582
      %v3711 = vrcp.pop %v3583
      %v3712 = vrcp.pop %v3584
      %v3713 = vrcp.pop %v3585
      %v3714 = vrcp.pop %v3586
      %v3715 = vrcp.pop %v3587
      %v3716 = vrcp.pop %v3588
      %v3717 = vrcp.pop %v3589
      %v3718 = vrcp.pop %v3590
      %v3719 = vrcp.pop %v3591
      %v3720 = vrcp.pop %v3592
      %v3721 = vrcp.pop %v3593
      %v3722 = vrcp.pop %v3594
      %v3723 = vrcp.pop %v3595
      %v3724 = vrcp.pop %v3596
      %v3725 = vrcp.pop %v3597
      %v3726 = vrcp.pop %v3598
      %v3727 = vrcp.pop %v3599
      %v3728 = vrcp.pop %v3600
      %v3729 = vrcp.pop %v3601
      %v3730 = vrcp.pop %v3602
      %v3731 = vrcp.pop %v3603
      %v3732 = vrcp.pop %v3604
      %v3733 = vrcp.pop %v3605
      %v3734 = vrcp.pop %v3606
      %v3735 = vrcp.pop %v3607
      %v3736 = vrcp.pop %v3608
      %v3737 = vrcp.pop %v3609
      %v3738 = vrcp.pop %v3610
      %v3739 = vrcp.pop %v3611
      %v3740 = vrcp.pop %v3612
      %v3741 = vrcp.pop %v3613
      %v3742 = vrcp.pop %v3614
      %v3743 = vrcp.pop %v3615
      %v3744 = vrcp.pop %v3616
      %v3745 = vrcp.pop %v3617
      %v3746 = vrcp.pop %v3618
      %v3747 = vrcp.pop %v3619
      %v3748 = vrcp.pop %v3620
      %v3749 = vrcp.pop %v3621
      %v3750 = vrcp.pop %v3622
      %v3751 = vrcp.pop %v3623
      %v3752 = vrcp.pop %v3624
      %v3753 = vrcp.pop %v3625
      %v3754 = vrcp.pop %v3626
      %v3755 = vrcp.pop %v3627
      %v3756 = vrcp.pop %v3628
      %v3757 = vrcp.pop %v3629
      %v3758 = vrcp.pop %v3630
      %v3759 = vrcp.pop %v3631
      %v3760 = vrcp.pop %v3632
      %v3761 = vrcp.pop %v3633
      %v3762 = vrcp.pop %v3634
      %v3763 = vrcp.pop %v3635
      %v3764 = vrcp.pop %v3636
      %v3765 = vrcp.pop %v3637
      %v3766 = vrcp.pop %v3638
      %v3767 = vrcp.pop %v3639
      %v3768 = vrcp.pop %v3640
      %v3769 = vrcp.pop %v3641
      %v3770 = vrcp.pop %v3642
      %v3771 = vrcp.pop %v3643
      %v3772 = vrcp.pop %v3644
      %v3773 = vrcp.pop %v3645
      %v3774 = vrcp.pop %v3646
      %v3775 = vrcp.pop %v3647
      %v3776 = vrcp.pop %v3648
      %v3777 = vrcp.pop %v3649
      %v3778 = vrcp.pop %v3650
      %v3779 = vrcp.pop %v3651
      %v3780 = vrcp.pop %v3652
      %v3781 = vrcp.pop %v3653
      %v3782 = vrcp.pop %v3654
      %v3783 = vrcp.pop %v3655
      %v3784 = vrcp.pop %v3656
      %v3785 = vrcp.pop %v3657
      %v3786 = vrcp.pop %v3658
      %v3787 = vrcp.pop %v3659
      %v3788 = vrcp.pop %v3660
      %v3789 = vrcp.pop %v3661
      %v3790 = vrcp.pop %v3662
      %v3791 = vrcp.pop %v3663
      %v3792 = vrcp.pop %v3664
      %v3793 = vrcp.pop %v3665
      %v3794 = vrcp.pop %v3666
      %v3795 = vrcp.pop %v3667
      %v3796 = vrcp.pop %v3668
      %v3797 = vrcp.pop %v3669
      %v3798 = vrcp.pop %v3670
      %v3799 = vrcp.pop %v3671
      %v3800 = vrcp.pop %v3672
      %v3801 = vrcp.pop %v3673
      %v3802 = vrcp.pop %v3674
      %v3803 = vrcp.pop %v3675
      %v3804 = vrcp.pop %v3676
      %v3805 = vrcp.pop %v3677
      %v3806 = vrcp.pop %v3678
      %v3807 = vrcp.pop %v3679
      %v3808 = vrcp.pop %v3680
      %v3809 = vrcp.pop %v3681
      %v3810 = vrcp.pop %v3682
      %v3811 = vrcp.pop %v3683
      %v3812 = vrcp.pop %v3684
      %v3813 = vrcp.pop %v3685
      %v3814 = vrcp.pop %v3686
      %v3815 = vrcp.pop %v3687
      %v3816 = vrcp.pop %v3688
      %v3817 = vmul.f32 %v2410, %v902
      %v3818 = vmul.f32 %v2412, %v904
      %v3819 = vmul.f32 %v2414, %v1095
      %v3820 = vmul.f32 %v2416, %v1097
      %v3821 = vmul.f32 %v2418, %v906
      %v3822 = vmul.f32 %v2420, %v908
      %v3823 = vmul.f32 %v2422, %v1099
      %v3824 = vmul.f32 %v2424, %v1101
      %v3825 = vmul.f32 %v2426, %v912
      %v3826 = vmul.f32 %v2428, %v914
      %v3827 = vmul.f32 %v2430, %v1105
      %v3828 = vmul.f32 %v2432, %v1107
      %v3829 = vmul.f32 %v2434, %v916
      %v3830 = vmul.f32 %v2436, %v918
      %v3831 = vmul.f32 %v2438, %v1109
      %v3832 = vmul.f32 %v2440, %v1111
      %v3833 = vmul.f32 %v2442, %v922
      %v3834 = vmul.f32 %v2444, %v924
      %v3835 = vmul.f32 %v2446, %v1115
      %v3836 = vmul.f32 %v2448, %v1117
      %v3837 = vmul.f32 %v2450, %v926
      %v3838 = vmul.f32 %v2452, %v928
      %v3839 = vmul.f32 %v2454, %v1119
      %v3840 = vmul.f32 %v2456, %v1121
      %v3841 = vmul.f32 %v2458, %v932
      %v3842 = vmul.f32 %v2460, %v934
      %v3843 = vmul.f32 %v2462, %v1125
      %v3844 = vmul.f32 %v2464, %v1127
      %v3845 = vmul.f32 %v2466, %v936
      %v3846 = vmul.f32 %v2468, %v938
      %v3847 = vmul.f32 %v2470, %v1129
      %v3848 = vmul.f32 %v2472, %v1131
      %v3849 = vmul.f32 %v2474, %v942
      %v3850 = vmul.f32 %v2476, %v944
      %v3851 = vmul.f32 %v2478, %v1135
      %v3852 = vmul.f32 %v2480, %v1137
      %v3853 = vmul.f32 %v2482, %v946
      %v3854 = vmul.f32 %v2484, %v948
      %v3855 = vmul.f32 %v2486, %v1139
      %v3856 = vmul.f32 %v2488, %v1141
      %v3857 = vmul.f32 %v2490, %v952
      %v3858 = vmul.f32 %v2492, %v954
      %v3859 = vmul.f32 %v2494, %v1145
      %v3860 = vmul.f32 %v2496, %v1147
      %v3861 = vmul.f32 %v2498, %v956
      %v3862 = vmul.f32 %v2500, %v958
      %v3863 = vmul.f32 %v2502, %v1149
      %v3864 = vmul.f32 %v2504, %v1151
      %v3865 = vmul.f32 %v2506, %v962
      %v3866 = vmul.f32 %v2508, %v964
      %v3867 = vmul.f32 %v2510, %v1155
      %v3868 = vmul.f32 %v2512, %v1157
      %v3869 = vmul.f32 %v2514, %v966
      %v3870 = vmul.f32 %v2516, %v968
      %v3871 = vmul.f32 %v2518, %v1159
      %v3872 = vmul.f32 %v2520, %v1161
      %v3873 = vmul.f32 %v2522, %v972
      %v3874 = vmul.f32 %v2524, %v974
      %v3875 = vmul.f32 %v2526, %v1165
      %v3876 = vmul.f32 %v2528, %v1167
      %v3877 = vmul.f32 %v2530, %v976
      %v3878 = vmul.f32 %v2532, %v978
      %v3879 = vmul.f32 %v2534, %v1169
      %v3880 = vmul.f32 %v2536, %v1171
      %v3881 = vmul.f32 %v2538, %v982
      %v3882 = vmul.f32 %v2540, %v984
      %v3883 = vmul.f32 %v2542, %v1175
      %v3884 = vmul.f32 %v2544, %v1177
      %v3885 = vmul.f32 %v2546, %v986
      %v3886 = vmul.f32 %v2548, %v988
      %v3887 = vmul.f32 %v2550, %v1179
      %v3888 = vmul.f32 %v2552, %v1181
      %v3889 = vmul.f32 %v2554, %v992
      %v3890 = vmul.f32 %v2556, %v994
      %v3891 = vmul.f32 %v2558, %v1185
      %v3892 = vmul.f32 %v2560, %v1187
      %v3893 = vmul.f32 %v2562, %v996
      %v3894 = vmul.f32 %v2564, %v998
      %v3895 = vmul.f32 %v2566, %v1189
      %v3896 = vmul.f32 %v2568, %v1191
      %v3897 = vmul.f32 %v2570, %v1002
      %v3898 = vmul.f32 %v2572, %v1004
      %v3899 = vmul.f32 %v2574, %v1195
      %v3900 = vmul.f32 %v2576, %v1197
      %v3901 = vmul.f32 %v2578, %v1006
      %v3902 = vmul.f32 %v2580, %v1008
      %v3903 = vmul.f32 %v2582, %v1199
      %v3904 = vmul.f32 %v2584, %v1201
      %v3905 = vmul.f32 %v2586, %v1012
      %v3906 = vmul.f32 %v2588, %v1014
      %v3907 = vmul.f32 %v2590, %v1205
      %v3908 = vmul.f32 %v2592, %v1207
      %v3909 = vmul.f32 %v2594, %v1016
      %v3910 = vmul.f32 %v2596, %v1018
      %v3911 = vmul.f32 %v2598, %v1209
      %v3912 = vmul.f32 %v2600, %v1211
      %v3913 = vmul.f32 %v2602, %v1022
      %v3914 = vmul.f32 %v2604, %v1024
      %v3915 = vmul.f32 %v2606, %v1215
      %v3916 = vmul.f32 %v2608, %v1217
      %v3917 = vmul.f32 %v2610, %v1026
      %v3918 = vmul.f32 %v2612, %v1028
      %v3919 = vmul.f32 %v2614, %v1219
      %v3920 = vmul.f32 %v2616, %v1221
      %v3921 = vmul.f32 %v2618, %v1032
      %v3922 = vmul.f32 %v2620, %v1034
      %v3923 = vmul.f32 %v2622, %v1225
      %v3924 = vmul.f32 %v2624, %v1227
      %v3925 = vmul.f32 %v2626, %v1036
      %v3926 = vmul.f32 %v2628, %v1038
      %v3927 = vmul.f32 %v2630, %v1229
      %v3928 = vmul.f32 %v2632, %v1231
      %v3929 = vmul.f32 %v2634, %v1042
      %v3930 = vmul.f32 %v2636, %v1044
      %v3931 = vmul.f32 %v2638, %v1235
      %v3932 = vmul.f32 %v2640, %v1237
      %v3933 = vmul.f32 %v2642, %v1046
      %v3934 = vmul.f32 %v2644, %v1048
      %v3935 = vmul.f32 %v2646, %v1239
      %v3936 = vmul.f32 %v2648, %v1241
      %v3937 = vmul.f32 %v2650, %v1052
      %v3938 = vmul.f32 %v2652, %v1054
      %v3939 = vmul.f32 %v2654, %v1245
      %v3940 = vmul.f32 %v2656, %v1247
      %v3941 = vmul.f32 %v2658, %v1056
      %v3942 = vmul.f32 %v2660, %v1058
      %v3943 = vmul.f32 %v2662, %v1249
      %v3944 = vmul.f32 %v2664, %v1251
      %v3945 = vmul.f32 %v2794, %v1288
      %v3946 = vmul.f32 %v2796, %v1290
      %v3947 = vmul.f32 %v2798, %v1481
      %v3948 = vmul.f32 %v2800, %v1483
      %v3949 = vmul.f32 %v2802, %v1292
      %v3950 = vmul.f32 %v2804, %v1294
      %v3951 = vmul.f32 %v2806, %v1485
      %v3952 = vmul.f32 %v2808, %v1487
      %v3953 = vmul.f32 %v2810, %v1298
      %v3954 = vmul.f32 %v2812, %v1300
      %v3955 = vmul.f32 %v2814, %v1491
      %v3956 = vmul.f32 %v2816, %v1493
      %v3957 = vmul.f32 %v2818, %v1302
      %v3958 = vmul.f32 %v2820, %v1304
      %v3959 = vmul.f32 %v2822, %v1495
      %v3960 = vmul.f32 %v2824, %v1497
      %v3961 = vmul.f32 %v2826, %v1308
      %v3962 = vmul.f32 %v2828, %v1310
      %v3963 = vmul.f32 %v2830, %v1501
      %v3964 = vmul.f32 %v2832, %v1503
      %v3965 = vmul.f32 %v2834, %v1312
      %v3966 = vmul.f32 %v2836, %v1314
      %v3967 = vmul.f32 %v2838, %v1505
      %v3968 = vmul.f32 %v2840, %v1507
      %v3969 = vmul.f32 %v2842, %v1318
      %v3970 = vmul.f32 %v2844, %v1320
      %v3971 = vmul.f32 %v2846, %v1511
      %v3972 = vmul.f32 %v2848, %v1513
      %v3973 = vmul.f32 %v2850, %v1322
      %v3974 = vmul.f32 %v2852, %v1324
      %v3975 = vmul.f32 %v2854, %v1515
      %v3976 = vmul.f32 %v2856, %v1517
      %v3977 = vmul.f32 %v2858, %v1328
      %v3978 = vmul.f32 %v2860, %v1330
      %v3979 = vmul.f32 %v2862, %v1521
      %v3980 = vmul.f32 %v2864, %v1523
      %v3981 = vmul.f32 %v2866, %v1332
      %v3982 = vmul.f32 %v2868, %v1334
      %v3983 = vmul.f32 %v2870, %v1525
      %v3984 = vmul.f32 %v2872, %v1527
      %v3985 = vmul.f32 %v2874, %v1338
      %v3986 = vmul.f32 %v2876, %v1340
      %v3987 = vmul.f32 %v2878, %v1531
      %v3988 = vmul.f32 %v2880, %v1533
      %v3989 = vmul.f32 %v2882, %v1342
      %v3990 = vmul.f32 %v2884, %v1344
      %v3991 = vmul.f32 %v2886, %v1535
      %v3992 = vmul.f32 %v2888, %v1537
      %v3993 = vmul.f32 %v2890, %v1348
      %v3994 = vmul.f32 %v2892, %v1350
      %v3995 = vmul.f32 %v2894, %v1541
      %v3996 = vmul.f32 %v2896, %v1543
      %v3997 = vmul.f32 %v2898, %v1352
      %v3998 = vmul.f32 %v2900, %v1354
      %v3999 = vmul.f32 %v2902, %v1545
      %v4000 = vmul.f32 %v2904, %v1547
      %v4001 = vmul.f32 %v2906, %v1358
      %v4002 = vmul.f32 %v2908, %v1360
      %v4003 = vmul.f32 %v2910, %v1551
      %v4004 = vmul.f32 %v2912, %v1553
      %v4005 = vmul.f32 %v2914, %v1362
      %v4006 = vmul.f32 %v2916, %v1364
      %v4007 = vmul.f32 %v2918, %v1555
      %v4008 = vmul.f32 %v2920, %v1557
      %v4009 = vmul.f32 %v2922, %v1368
      %v4010 = vmul.f32 %v2924, %v1370
      %v4011 = vmul.f32 %v2926, %v1561
      %v4012 = vmul.f32 %v2928, %v1563
      %v4013 = vmul.f32 %v2930, %v1372
      %v4014 = vmul.f32 %v2932, %v1374
      %v4015 = vmul.f32 %v2934, %v1565
      %v4016 = vmul.f32 %v2936, %v1567
      %v4017 = vmul.f32 %v2938, %v1378
      %v4018 = vmul.f32 %v2940, %v1380
      %v4019 = vmul.f32 %v2942, %v1571
      %v4020 = vmul.f32 %v2944, %v1573
      %v4021 = vmul.f32 %v2946, %v1382
      %v4022 = vmul.f32 %v2948, %v1384
      %v4023 = vmul.f32 %v2950, %v1575
      %v4024 = vmul.f32 %v2952, %v1577
      %v4025 = vmul.f32 %v2954, %v1388
      %v4026 = vmul.f32 %v2956, %v1390
      %v4027 = vmul.f32 %v2958, %v1581
      %v4028 = vmul.f32 %v2960, %v1583
      %v4029 = vmul.f32 %v2962, %v1392
      %v4030 = vmul.f32 %v2964, %v1394
      %v4031 = vmul.f32 %v2966, %v1585
      %v4032 = vmul.f32 %v2968, %v1587
      %v4033 = vmul.f32 %v2970, %v1398
      %v4034 = vmul.f32 %v2972, %v1400
      %v4035 = vmul.f32 %v2974, %v1591
      %v4036 = vmul.f32 %v2976, %v1593
      %v4037 = vmul.f32 %v2978, %v1402
      %v4038 = vmul.f32 %v2980, %v1404
      %v4039 = vmul.f32 %v2982, %v1595
      %v4040 = vmul.f32 %v2984, %v1597
      %v4041 = vmul.f32 %v2986, %v1408
      %v4042 = vmul.f32 %v2988, %v1410
      %v4043 = vmul.f32 %v2990, %v1601
      %v4044 = vmul.f32 %v2992, %v1603
      %v4045 = vmul.f32 %v2994, %v1412
      %v4046 = vmul.f32 %v2996, %v1414
      %v4047 = vmul.f32 %v2998, %v1605
      %v4048 = vmul.f32 %v3000, %v1607
      %v4049 = vmul.f32 %v3002, %v1418
      %v4050 = vmul.f32 %v3004, %v1420
      %v4051 = vmul.f32 %v3006, %v1611
      %v4052 = vmul.f32 %v3008, %v1613
      %v4053 = vmul.f32 %v3010, %v1422
      %v4054 = vmul.f32 %v3012, %v1424
      %v4055 = vmul.f32 %v3014, %v1615
      %v4056 = vmul.f32 %v3016, %v1617
      %v4057 = vmul.f32 %v3018, %v1428
      %v4058 = vmul.f32 %v3020, %v1430
      %v4059 = vmul.f32 %v3022, %v1621
      %v4060 = vmul.f32 %v3024, %v1623
      %v4061 = vmul.f32 %v3026, %v1432
      %v4062 = vmul.f32 %v3028, %v1434
      %v4063 = vmul.f32 %v3030, %v1625
      %v4064 = vmul.f32 %v3032, %v1627
      %v4065 = vmul.f32 %v3034, %v1438
      %v4066 = vmul.f32 %v3036, %v1440
      %v4067 = vmul.f32 %v3038, %v1631
      %v4068 = vmul.f32 %v3040, %v1633
      %v4069 = vmul.f32 %v3042, %v1442
      %v4070 = vmul.f32 %v3044, %v1444
      %v4071 = vmul.f32 %v3046, %v1635
      %v4072 = vmul.f32 %v3048, %v1637
      %v4073 = vadd.f32 %v3817, %v3945
      %v4074 = vadd.f32 %v3818, %v3946
      %v4075 = vadd.f32 %v3819, %v3947
      %v4076 = vadd.f32 %v3820, %v3948
      %v4077 = vadd.f32 %v3821, %v3949
      %v4078 = vadd.f32 %v3822, %v3950
      %v4079 = vadd.f32 %v3823, %v3951
      %v4080 = vadd.f32 %v3824, %v3952
      %v4081 = vadd.f32 %v3825, %v3953
      %v4082 = vadd.f32 %v3826, %v3954
      %v4083 = vadd.f32 %v3827, %v3955
      %v4084 = vadd.f32 %v3828, %v3956
      %v4085 = vadd.f32 %v3829, %v3957
      %v4086 = vadd.f32 %v3830, %v3958
      %v4087 = vadd.f32 %v3831, %v3959
      %v4088 = vadd.f32 %v3832, %v3960
      %v4089 = vadd.f32 %v3833, %v3961
      %v4090 = vadd.f32 %v3834, %v3962
      %v4091 = vadd.f32 %v3835, %v3963
      %v4092 = vadd.f32 %v3836, %v3964
      %v4093 = vadd.f32 %v3837, %v3965
      %v4094 = vadd.f32 %v3838, %v3966
      %v4095 = vadd.f32 %v3839, %v3967
      %v4096 = vadd.f32 %v3840, %v3968
      %v4097 = vadd.f32 %v3841, %v3969
      %v4098 = vadd.f32 %v3842, %v3970
      %v4099 = vadd.f32 %v3843, %v3971
      %v4100 = vadd.f32 %v3844, %v3972
      %v4101 = vadd.f32 %v3845, %v3973
      %v4102 = vadd.f32 %v3846, %v3974
      %v4103 = vadd.f32 %v3847, %v3975
      %v4104 = vadd.f32 %v3848, %v3976
      %v4105 = vadd.f32 %v3849, %v3977
      %v4106 = vadd.f32 %v3850, %v3978
      %v4107 = vadd.f32 %v3851, %v3979
      %v4108 = vadd.f32 %v3852, %v3980
      %v4109 = vadd.f32 %v3853, %v3981
      %v4110 = vadd.f32 %v3854, %v3982
      %v4111 = vadd.f32 %v3855, %v3983
      %v4112 = vadd.f32 %v3856, %v3984
      %v4113 = vadd.f32 %v3857, %v3985
      %v4114 = vadd.f32 %v3858, %v3986
      %v4115 = vadd.f32 %v3859, %v3987
      %v4116 = vadd.f32 %v3860, %v3988
      %v4117 = vadd.f32 %v3861, %v3989
      %v4118 = vadd.f32 %v3862, %v3990
      %v4119 = vadd.f32 %v3863, %v3991
      %v4120 = vadd.f32 %v3864, %v3992
      %v4121 = vadd.f32 %v3865, %v3993
      %v4122 = vadd.f32 %v3866, %v3994
      %v4123 = vadd.f32 %v3867, %v3995
      %v4124 = vadd.f32 %v3868, %v3996
      %v4125 = vadd.f32 %v3869, %v3997
      %v4126 = vadd.f32 %v3870, %v3998
      %v4127 = vadd.f32 %v3871, %v3999
      %v4128 = vadd.f32 %v3872, %v4000
      %v4129 = vadd.f32 %v3873, %v4001
      %v4130 = vadd.f32 %v3874, %v4002
      %v4131 = vadd.f32 %v3875, %v4003
      %v4132 = vadd.f32 %v3876, %v4004
      %v4133 = vadd.f32 %v3877, %v4005
      %v4134 = vadd.f32 %v3878, %v4006
      %v4135 = vadd.f32 %v3879, %v4007
      %v4136 = vadd.f32 %v3880, %v4008
      %v4137 = vadd.f32 %v3881, %v4009
      %v4138 = vadd.f32 %v3882, %v4010
      %v4139 = vadd.f32 %v3883, %v4011
      %v4140 = vadd.f32 %v3884, %v4012
      %v4141 = vadd.f32 %v3885, %v4013
      %v4142 = vadd.f32 %v3886, %v4014
      %v4143 = vadd.f32 %v3887, %v4015
      %v4144 = vadd.f32 %v3888, %v4016
      %v4145 = vadd.f32 %v3889, %v4017
      %v4146 = vadd.f32 %v3890, %v4018
      %v4147 = vadd.f32 %v3891, %v4019
      %v4148 = vadd.f32 %v3892, %v4020
      %v4149 = vadd.f32 %v3893, %v4021
      %v4150 = vadd.f32 %v3894, %v4022
      %v4151 = vadd.f32 %v3895, %v4023
      %v4152 = vadd.f32 %v3896, %v4024
      %v4153 = vadd.f32 %v3897, %v4025
      %v4154 = vadd.f32 %v3898, %v4026
      %v4155 = vadd.f32 %v3899, %v4027
      %v4156 = vadd.f32 %v3900, %v4028
      %v4157 = vadd.f32 %v3901, %v4029
      %v4158 = vadd.f32 %v3902, %v4030
      %v4159 = vadd.f32 %v3903, %v4031
      %v4160 = vadd.f32 %v3904, %v4032
      %v4161 = vadd.f32 %v3905, %v4033
      %v4162 = vadd.f32 %v3906, %v4034
      %v4163 = vadd.f32 %v3907, %v4035
      %v4164 = vadd.f32 %v3908, %v4036
      %v4165 = vadd.f32 %v3909, %v4037
      %v4166 = vadd.f32 %v3910, %v4038
      %v4167 = vadd.f32 %v3911, %v4039
      %v4168 = vadd.f32 %v3912, %v4040
      %v4169 = vadd.f32 %v3913, %v4041
      %v4170 = vadd.f32 %v3914, %v4042
      %v4171 = vadd.f32 %v3915, %v4043
      %v4172 = vadd.f32 %v3916, %v4044
      %v4173 = vadd.f32 %v3917, %v4045
      %v4174 = vadd.f32 %v3918, %v4046
      %v4175 = vadd.f32 %v3919, %v4047
      %v4176 = vadd.f32 %v3920, %v4048
      %v4177 = vadd.f32 %v3921, %v4049
      %v4178 = vadd.f32 %v3922, %v4050
      %v4179 = vadd.f32 %v3923, %v4051
      %v4180 = vadd.f32 %v3924, %v4052
      %v4181 = vadd.f32 %v3925, %v4053
      %v4182 = vadd.f32 %v3926, %v4054
      %v4183 = vadd.f32 %v3927, %v4055
      %v4184 = vadd.f32 %v3928, %v4056
      %v4185 = vadd.f32 %v3929, %v4057
      %v4186 = vadd.f32 %v3930, %v4058
      %v4187 = vadd.f32 %v3931, %v4059
      %v4188 = vadd.f32 %v3932, %v4060
      %v4189 = vadd.f32 %v3933, %v4061
      %v4190 = vadd.f32 %v3934, %v4062
      %v4191 = vadd.f32 %v3935, %v4063
      %v4192 = vadd.f32 %v3936, %v4064
      %v4193 = vadd.f32 %v3937, %v4065
      %v4194 = vadd.f32 %v3938, %v4066
      %v4195 = vadd.f32 %v3939, %v4067
      %v4196 = vadd.f32 %v3940, %v4068
      %v4197 = vadd.f32 %v3941, %v4069
      %v4198 = vadd.f32 %v3942, %v4070
      %v4199 = vadd.f32 %v3943, %v4071
      %v4200 = vadd.f32 %v3944, %v4072
      %v4201 = vmul.f32 %v3178, %v1674
      %v4202 = vmul.f32 %v3180, %v1676
      %v4203 = vmul.f32 %v3182, %v1867
      %v4204 = vmul.f32 %v3184, %v1869
      %v4205 = vmul.f32 %v3186, %v1678
      %v4206 = vmul.f32 %v3188, %v1680
      %v4207 = vmul.f32 %v3190, %v1871
      %v4208 = vmul.f32 %v3192, %v1873
      %v4209 = vmul.f32 %v3194, %v1684
      %v4210 = vmul.f32 %v3196, %v1686
      %v4211 = vmul.f32 %v3198, %v1877
      %v4212 = vmul.f32 %v3200, %v1879
      %v4213 = vmul.f32 %v3202, %v1688
      %v4214 = vmul.f32 %v3204, %v1690
      %v4215 = vmul.f32 %v3206, %v1881
      %v4216 = vmul.f32 %v3208, %v1883
      %v4217 = vmul.f32 %v3210, %v1694
      %v4218 = vmul.f32 %v3212, %v1696
      %v4219 = vmul.f32 %v3214, %v1887
      %v4220 = vmul.f32 %v3216, %v1889
      %v4221 = vmul.f32 %v3218, %v1698
      %v4222 = vmul.f32 %v3220, %v1700
      %v4223 = vmul.f32 %v3222, %v1891
      %v4224 = vmul.f32 %v3224, %v1893
      %v4225 = vmul.f32 %v3226, %v1704
      %v4226 = vmul.f32 %v3228, %v1706
      %v4227 = vmul.f32 %v3230, %v1897
      %v4228 = vmul.f32 %v3232, %v1899
      %v4229 = vmul.f32 %v3234, %v1708
      %v4230 = vmul.f32 %v3236, %v1710
      %v4231 = vmul.f32 %v3238, %v1901
      %v4232 = vmul.f32 %v3240, %v1903
      %v4233 = vmul.f32 %v3242, %v1714
      %v4234 = vmul.f32 %v3244, %v1716
      %v4235 = vmul.f32 %v3246, %v1907
      %v4236 = vmul.f32 %v3248, %v1909
      %v4237 = vmul.f32 %v3250, %v1718
      %v4238 = vmul.f32 %v3252, %v1720
      %v4239 = vmul.f32 %v3254, %v1911
      %v4240 = vmul.f32 %v3256, %v1913
      %v4241 = vmul.f32 %v3258, %v1724
      %v4242 = vmul.f32 %v3260, %v1726
      %v4243 = vmul.f32 %v3262, %v1917
      %v4244 = vmul.f32 %v3264, %v1919
      %v4245 = vmul.f32 %v3266, %v1728
      %v4246 = vmul.f32 %v3268, %v1730
      %v4247 = vmul.f32 %v3270, %v1921
      %v4248 = vmul.f32 %v3272, %v1923
      %v4249 = vmul.f32 %v3274, %v1734
      %v4250 = vmul.f32 %v3276, %v1736
      %v4251 = vmul.f32 %v3278, %v1927
      %v4252 = vmul.f32 %v3280, %v1929
      %v4253 = vmul.f32 %v3282, %v1738
      %v4254 = vmul.f32 %v3284, %v1740
      %v4255 = vmul.f32 %v3286, %v1931
      %v4256 = vmul.f32 %v3288, %v1933
      %v4257 = vmul.f32 %v3290, %v1744
      %v4258 = vmul.f32 %v3292, %v1746
      %v4259 = vmul.f32 %v3294, %v1937
      %v4260 = vmul.f32 %v3296, %v1939
      %v4261 = vmul.f32 %v3298, %v1748
      %v4262 = vmul.f32 %v3300, %v1750
      %v4263 = vmul.f32 %v3302, %v1941
      %v4264 = vmul.f32 %v3304, %v1943
      %v4265 = vmul.f32 %v3306, %v1754
      %v4266 = vmul.f32 %v3308, %v1756
      %v4267 = vmul.f32 %v3310, %v1947
      %v4268 = vmul.f32 %v3312, %v1949
      %v4269 = vmul.f32 %v3314, %v1758
      %v4270 = vmul.f32 %v3316, %v1760
      %v4271 = vmul.f32 %v3318, %v1951
      %v4272 = vmul.f32 %v3320, %v1953
      %v4273 = vmul.f32 %v3322, %v1764
      %v4274 = vmul.f32 %v3324, %v1766
      %v4275 = vmul.f32 %v3326, %v1957
      %v4276 = vmul.f32 %v3328, %v1959
      %v4277 = vmul.f32 %v3330, %v1768
      %v4278 = vmul.f32 %v3332, %v1770
      %v4279 = vmul.f32 %v3334, %v1961
      %v4280 = vmul.f32 %v3336, %v1963
      %v4281 = vmul.f32 %v3338, %v1774
      %v4282 = vmul.f32 %v3340, %v1776
      %v4283 = vmul.f32 %v3342, %v1967
      %v4284 = vmul.f32 %v3344, %v1969
      %v4285 = vmul.f32 %v3346, %v1778
      %v4286 = vmul.f32 %v3348, %v1780
      %v4287 = vmul.f32 %v3350, %v1971
      %v4288 = vmul.f32 %v3352, %v1973
      %v4289 = vmul.f32 %v3354, %v1784
      %v4290 = vmul.f32 %v3356, %v1786
      %v4291 = vmul.f32 %v3358, %v1977
      %v4292 = vmul.f32 %v3360, %v1979
      %v4293 = vmul.f32 %v3362, %v1788
      %v4294 = vmul.f32 %v3364, %v1790
      %v4295 = vmul.f32 %v3366, %v1981
      %v4296 = vmul.f32 %v3368, %v1983
      %v4297 = vmul.f32 %v3370, %v1794
      %v4298 = vmul.f32 %v3372, %v1796
      %v4299 = vmul.f32 %v3374, %v1987
      %v4300 = vmul.f32 %v3376, %v1989
      %v4301 = vmul.f32 %v3378, %v1798
      %v4302 = vmul.f32 %v3380, %v1800
      %v4303 = vmul.f32 %v3382, %v1991
      %v4304 = vmul.f32 %v3384, %v1993
      %v4305 = vmul.f32 %v3386, %v1804
      %v4306 = vmul.f32 %v3388, %v1806
      %v4307 = vmul.f32 %v3390, %v1997
      %v4308 = vmul.f32 %v3392, %v1999
      %v4309 = vmul.f32 %v3394, %v1808
      %v4310 = vmul.f32 %v3396, %v1810
      %v4311 = vmul.f32 %v3398, %v2001
      %v4312 = vmul.f32 %v3400, %v2003
      %v4313 = vmul.f32 %v3402, %v1814
      %v4314 = vmul.f32 %v3404, %v1816
      %v4315 = vmul.f32 %v3406, %v2007
      %v4316 = vmul.f32 %v3408, %v2009
      %v4317 = vmul.f32 %v3410, %v1818
      %v4318 = vmul.f32 %v3412, %v1820
      %v4319 = vmul.f32 %v3414, %v2011
      %v4320 = vmul.f32 %v3416, %v2013
      %v4321 = vmul.f32 %v3418, %v1824
      %v4322 = vmul.f32 %v3420, %v1826
      %v4323 = vmul.f32 %v3422, %v2017
      %v4324 = vmul.f32 %v3424, %v2019
      %v4325 = vmul.f32 %v3426, %v1828
      %v4326 = vmul.f32 %v3428, %v1830
      %v4327 = vmul.f32 %v3430, %v2021
      %v4328 = vmul.f32 %v3432, %v2023
      %v4329 = vadd.f32 %v4073, %v4201
      %v4330 = vadd.f32 %v4074, %v4202
      %v4331 = vadd.f32 %v4075, %v4203
      %v4332 = vadd.f32 %v4076, %v4204
      %v4333 = vadd.f32 %v4077, %v4205
      %v4334 = vadd.f32 %v4078, %v4206
      %v4335 = vadd.f32 %v4079, %v4207
      %v4336 = vadd.f32 %v4080, %v4208
      %v4337 = vadd.f32 %v4081, %v4209
      %v4338 = vadd.f32 %v4082, %v4210
      %v4339 = vadd.f32 %v4083, %v4211
      %v4340 = vadd.f32 %v4084, %v4212
      %v4341 = vadd.f32 %v4085, %v4213
      %v4342 = vadd.f32 %v4086, %v4214
      %v4343 = vadd.f32 %v4087, %v4215
      %v4344 = vadd.f32 %v4088, %v4216
      %v4345 = vadd.f32 %v4089, %v4217
      %v4346 = vadd.f32 %v4090, %v4218
      %v4347 = vadd.f32 %v4091, %v4219
      %v4348 = vadd.f32 %v4092, %v4220
      %v4349 = vadd.f32 %v4093, %v4221
      %v4350 = vadd.f32 %v4094, %v4222
      %v4351 = vadd.f32 %v4095, %v4223
      %v4352 = vadd.f32 %v4096, %v4224
      %v4353 = vadd.f32 %v4097, %v4225
      %v4354 = vadd.f32 %v4098, %v4226
      %v4355 = vadd.f32 %v4099, %v4227
      %v4356 = vadd.f32 %v4100, %v4228
      %v4357 = vadd.f32 %v4101, %v4229
      %v4358 = vadd.f32 %v4102, %v4230
      %v4359 = vadd.f32 %v4103, %v4231
      %v4360 = vadd.f32 %v4104, %v4232
      %v4361 = vadd.f32 %v4105, %v4233
      %v4362 = vadd.f32 %v4106, %v4234
      %v4363 = vadd.f32 %v4107, %v4235
      %v4364 = vadd.f32 %v4108, %v4236
      %v4365 = vadd.f32 %v4109, %v4237
      %v4366 = vadd.f32 %v4110, %v4238
      %v4367 = vadd.f32 %v4111, %v4239
      %v4368 = vadd.f32 %v4112, %v4240
      %v4369 = vadd.f32 %v4113, %v4241
      %v4370 = vadd.f32 %v4114, %v4242
      %v4371 = vadd.f32 %v4115, %v4243
      %v4372 = vadd.f32 %v4116, %v4244
      %v4373 = vadd.f32 %v4117, %v4245
      %v4374 = vadd.f32 %v4118, %v4246
      %v4375 = vadd.f32 %v4119, %v4247
      %v4376 = vadd.f32 %v4120, %v4248
      %v4377 = vadd.f32 %v4121, %v4249
      %v4378 = vadd.f32 %v4122, %v4250
      %v4379 = vadd.f32 %v4123, %v4251
      %v4380 = vadd.f32 %v4124, %v4252
      %v4381 = vadd.f32 %v4125, %v4253
      %v4382 = vadd.f32 %v4126, %v4254
      %v4383 = vadd.f32 %v4127, %v4255
      %v4384 = vadd.f32 %v4128, %v4256
      %v4385 = vadd.f32 %v4129, %v4257
      %v4386 = vadd.f32 %v4130, %v4258
      %v4387 = vadd.f32 %v4131, %v4259
      %v4388 = vadd.f32 %v4132, %v4260
      %v4389 = vadd.f32 %v4133, %v4261
      %v4390 = vadd.f32 %v4134, %v4262
      %v4391 = vadd.f32 %v4135, %v4263
      %v4392 = vadd.f32 %v4136, %v4264
      %v4393 = vadd.f32 %v4137, %v4265
      %v4394 = vadd.f32 %v4138, %v4266
      %v4395 = vadd.f32 %v4139, %v4267
      %v4396 = vadd.f32 %v4140, %v4268
      %v4397 = vadd.f32 %v4141, %v4269
      %v4398 = vadd.f32 %v4142, %v4270
      %v4399 = vadd.f32 %v4143, %v4271
      %v4400 = vadd.f32 %v4144, %v4272
      %v4401 = vadd.f32 %v4145, %v4273
      %v4402 = vadd.f32 %v4146, %v4274
      %v4403 = vadd.f32 %v4147, %v4275
      %v4404 = vadd.f32 %v4148, %v4276
      %v4405 = vadd.f32 %v4149, %v4277
      %v4406 = vadd.f32 %v4150, %v4278
      %v4407 = vadd.f32 %v4151, %v4279
      %v4408 = vadd.f32 %v4152, %v4280
      %v4409 = vadd.f32 %v4153, %v4281
      %v4410 = vadd.f32 %v4154, %v4282
      %v4411 = vadd.f32 %v4155, %v4283
      %v4412 = vadd.f32 %v4156, %v4284
      %v4413 = vadd.f32 %v4157, %v4285
      %v4414 = vadd.f32 %v4158, %v4286
      %v4415 = vadd.f32 %v4159, %v4287
      %v4416 = vadd.f32 %v4160, %v4288
      %v4417 = vadd.f32 %v4161, %v4289
      %v4418 = vadd.f32 %v4162, %v4290
      %v4419 = vadd.f32 %v4163, %v4291
      %v4420 = vadd.f32 %v4164, %v4292
      %v4421 = vadd.f32 %v4165, %v4293
      %v4422 = vadd.f32 %v4166, %v4294
      %v4423 = vadd.f32 %v4167, %v4295
      %v4424 = vadd.f32 %v4168, %v4296
      %v4425 = vadd.f32 %v4169, %v4297
      %v4426 = vadd.f32 %v4170, %v4298
      %v4427 = vadd.f32 %v4171, %v4299
      %v4428 = vadd.f32 %v4172, %v4300
      %v4429 = vadd.f32 %v4173, %v4301
      %v4430 = vadd.f32 %v4174, %v4302
      %v4431 = vadd.f32 %v4175, %v4303
      %v4432 = vadd.f32 %v4176, %v4304
      %v4433 = vadd.f32 %v4177, %v4305
      %v4434 = vadd.f32 %v4178, %v4306
      %v4435 = vadd.f32 %v4179, %v4307
      %v4436 = vadd.f32 %v4180, %v4308
      %v4437 = vadd.f32 %v4181, %v4309
      %v4438 = vadd.f32 %v4182, %v4310
      %v4439 = vadd.f32 %v4183, %v4311
      %v4440 = vadd.f32 %v4184, %v4312
      %v4441 = vadd.f32 %v4185, %v4313
      %v4442 = vadd.f32 %v4186, %v4314
      %v4443 = vadd.f32 %v4187, %v4315
      %v4444 = vadd.f32 %v4188, %v4316
      %v4445 = vadd.f32 %v4189, %v4317
      %v4446 = vadd.f32 %v4190, %v4318
      %v4447 = vadd.f32 %v4191, %v4319
      %v4448 = vadd.f32 %v4192, %v4320
      %v4449 = vadd.f32 %v4193, %v4321
      %v4450 = vadd.f32 %v4194, %v4322
      %v4451 = vadd.f32 %v4195, %v4323
      %v4452 = vadd.f32 %v4196, %v4324
      %v4453 = vadd.f32 %v4197, %v4325
      %v4454 = vadd.f32 %v4198, %v4326
      %v4455 = vadd.f32 %v4199, %v4327
      %v4456 = vadd.f32 %v4200, %v4328
      %v4457 = vmul.f32 %v4329, %v3689
      %v4458 = vmul.f32 %v4330, %v3690
      %v4459 = vmul.f32 %v4331, %v3691
      %v4460 = vmul.f32 %v4332, %v3692
      %v4461 = vmul.f32 %v4333, %v3693
      %v4462 = vmul.f32 %v4334, %v3694
      %v4463 = vmul.f32 %v4335, %v3695
      %v4464 = vmul.f32 %v4336, %v3696
      %v4465 = vmul.f32 %v4337, %v3697
      %v4466 = vmul.f32 %v4338, %v3698
      %v4467 = vmul.f32 %v4339, %v3699
      %v4468 = vmul.f32 %v4340, %v3700
      %v4469 = vmul.f32 %v4341, %v3701
      %v4470 = vmul.f32 %v4342, %v3702
      %v4471 = vmul.f32 %v4343, %v3703
      %v4472 = vmul.f32 %v4344, %v3704
      %v4473 = vmul.f32 %v4345, %v3705
      %v4474 = vmul.f32 %v4346, %v3706
      %v4475 = vmul.f32 %v4347, %v3707
      %v4476 = vmul.f32 %v4348, %v3708
      %v4477 = vmul.f32 %v4349, %v3709
      %v4478 = vmul.f32 %v4350, %v3710
      %v4479 = vmul.f32 %v4351, %v3711
      %v4480 = vmul.f32 %v4352, %v3712
      %v4481 = vmul.f32 %v4353, %v3713
      %v4482 = vmul.f32 %v4354, %v3714
      %v4483 = vmul.f32 %v4355, %v3715
      %v4484 = vmul.f32 %v4356, %v3716
      %v4485 = vmul.f32 %v4357, %v3717
      %v4486 = vmul.f32 %v4358, %v3718
      %v4487 = vmul.f32 %v4359, %v3719
      %v4488 = vmul.f32 %v4360, %v3720
      %v4489 = vmul.f32 %v4361, %v3721
      %v4490 = vmul.f32 %v4362, %v3722
      %v4491 = vmul.f32 %v4363, %v3723
      %v4492 = vmul.f32 %v4364, %v3724
      %v4493 = vmul.f32 %v4365, %v3725
      %v4494 = vmul.f32 %v4366, %v3726
      %v4495 = vmul.f32 %v4367, %v3727
      %v4496 = vmul.f32 %v4368, %v3728
      %v4497 = vmul.f32 %v4369, %v3729
      %v4498 = vmul.f32 %v4370, %v3730
      %v4499 = vmul.f32 %v4371, %v3731
      %v4500 = vmul.f32 %v4372, %v3732
      %v4501 = vmul.f32 %v4373, %v3733
      %v4502 = vmul.f32 %v4374, %v3734
      %v4503 = vmul.f32 %v4375, %v3735
      %v4504 = vmul.f32 %v4376, %v3736
      %v4505 = vmul.f32 %v4377, %v3737
      %v4506 = vmul.f32 %v4378, %v3738
      %v4507 = vmul.f32 %v4379, %v3739
      %v4508 = vmul.f32 %v4380, %v3740
      %v4509 = vmul.f32 %v4381, %v3741
      %v4510 = vmul.f32 %v4382, %v3742
      %v4511 = vmul.f32 %v4383, %v3743
      %v4512 = vmul.f32 %v4384, %v3744
      %v4513 = vmul.f32 %v4385, %v3745
      %v4514 = vmul.f32 %v4386, %v3746
      %v4515 = vmul.f32 %v4387, %v3747
      %v4516 = vmul.f32 %v4388, %v3748
      %v4517 = vmul.f32 %v4389, %v3749
      %v4518 = vmul.f32 %v4390, %v3750
      %v4519 = vmul.f32 %v4391, %v3751
      %v4520 = vmul.f32 %v4392, %v3752
      %v4521 = vmul.f32 %v4393, %v3753
      %v4522 = vmul.f32 %v4394, %v3754
      %v4523 = vmul.f32 %v4395, %v3755
      %v4524 = vmul.f32 %v4396, %v3756
      %v4525 = vmul.f32 %v4397, %v3757
      %v4526 = vmul.f32 %v4398, %v3758
      %v4527 = vmul.f32 %v4399, %v3759
      %v4528 = vmul.f32 %v4400, %v3760
      %v4529 = vmul.f32 %v4401, %v3761
      %v4530 = vmul.f32 %v4402, %v3762
      %v4531 = vmul.f32 %v4403, %v3763
      %v4532 = vmul.f32 %v4404, %v3764
      %v4533 = vmul.f32 %v4405, %v3765
      %v4534 = vmul.f32 %v4406, %v3766
      %v4535 = vmul.f32 %v4407, %v3767
      %v4536 = vmul.f32 %v4408, %v3768
      %v4537 = vmul.f32 %v4409, %v3769
      %v4538 = vmul.f32 %v4410, %v3770
      %v4539 = vmul.f32 %v4411, %v3771
      %v4540 = vmul.f32 %v4412, %v3772
      %v4541 = vmul.f32 %v4413, %v3773
      %v4542 = vmul.f32 %v4414, %v3774
      %v4543 = vmul.f32 %v4415, %v3775
      %v4544 = vmul.f32 %v4416, %v3776
      %v4545 = vmul.f32 %v4417, %v3777
      %v4546 = vmul.f32 %v4418, %v3778
      %v4547 = vmul.f32 %v4419, %v3779
      %v4548 = vmul.f32 %v4420, %v3780
      %v4549 = vmul.f32 %v4421, %v3781
      %v4550 = vmul.f32 %v4422, %v3782
      %v4551 = vmul.f32 %v4423, %v3783
      %v4552 = vmul.f32 %v4424, %v3784
      %v4553 = vmul.f32 %v4425, %v3785
      %v4554 = vmul.f32 %v4426, %v3786
      %v4555 = vmul.f32 %v4427, %v3787
      %v4556 = vmul.f32 %v4428, %v3788
      %v4557 = vmul.f32 %v4429, %v3789
      %v4558 = vmul.f32 %v4430, %v3790
      %v4559 = vmul.f32 %v4431, %v3791
      %v4560 = vmul.f32 %v4432, %v3792
      %v4561 = vmul.f32 %v4433, %v3793
      %v4562 = vmul.f32 %v4434, %v3794
      %v4563 = vmul.f32 %v4435, %v3795
      %v4564 = vmul.f32 %v4436, %v3796
      %v4565 = vmul.f32 %v4437, %v3797
      %v4566 = vmul.f32 %v4438, %v3798
      %v4567 = vmul.f32 %v4439, %v3799
      %v4568 = vmul.f32 %v4440, %v3800
      %v4569 = vmul.f32 %v4441, %v3801
      %v4570 = vmul.f32 %v4442, %v3802
      %v4571 = vmul.f32 %v4443, %v3803
      %v4572 = vmul.f32 %v4444, %v3804
      %v4573 = vmul.f32 %v4445, %v3805
      %v4574 = vmul.f32 %v4446, %v3806
      %v4575 = vmul.f32 %v4447, %v3807
      %v4576 = vmul.f32 %v4448, %v3808
      %v4577 = vmul.f32 %v4449, %v3809
      %v4578 = vmul.f32 %v4450, %v3810
      %v4579 = vmul.f32 %v4451, %v3811
      %v4580 = vmul.f32 %v4452, %v3812
      %v4581 = vmul.f32 %v4453, %v3813
      %v4582 = vmul.f32 %v4454, %v3814
      %v4583 = vmul.f32 %v4455, %v3815
      %v4584 = vmul.f32 %v4456, %v3816
      %v4585 = vld [vmem:[%s300] sm:$0xff]
      %v4586 = vld [vmem:[%s300 + $0x8] sm:$0xff]
      %v4587 = vld [vmem:[%s300 + $0x10] sm:$0xff]
      %v4588 = vld [vmem:[%s300 + $0x18] sm:$0xff]
      %v4589 = vld [vmem:[%s300 + $0x20] sm:$0xff]
      %v4590 = vld [vmem:[%s300 + $0x28] sm:$0xff]
      %v4591 = vld [vmem:[%s300 + $0x30] sm:$0xff]
      %v4592 = vld [vmem:[%s300 + $0x38] sm:$0xff]
      %v4593 = vld [vmem:[%s300 + $0x40] sm:$0xff]
      %v4594 = vld [vmem:[%s300 + $0x48] sm:$0xff]
      %v4595 = vld [vmem:[%s300 + $0x50] sm:$0xff]
      %v4596 = vld [vmem:[%s300 + $0x58] sm:$0xff]
      %v4597 = vld [vmem:[%s300 + $0x60] sm:$0xff]
      %v4598 = vld [vmem:[%s300 + $0x68] sm:$0xff]
      %v4599 = vld [vmem:[%s300 + $0x70] sm:$0xff]
      %v4600 = vld [vmem:[%s300 + $0x78] sm:$0xff]
      %v4601 = vld [vmem:[%s300 + $0x80] sm:$0xff]
      %v4602 = vld [vmem:[%s300 + $0x88] sm:$0xff]
      %v4603 = vld [vmem:[%s300 + $0x90] sm:$0xff]
      %v4604 = vld [vmem:[%s300 + $0x98] sm:$0xff]
      %v4605 = vld [vmem:[%s300 + $0xa0] sm:$0xff]
      %v4606 = vld [vmem:[%s300 + $0xa8] sm:$0xff]
      %v4607 = vld [vmem:[%s300 + $0xb0] sm:$0xff]
      %v4608 = vld [vmem:[%s300 + $0xb8] sm:$0xff]
      %v4609 = vld [vmem:[%s300 + $0xc0] sm:$0xff]
      %v4610 = vld [vmem:[%s300 + $0xc8] sm:$0xff]
      %v4611 = vld [vmem:[%s300 + $0xd0] sm:$0xff]
      %v4612 = vld [vmem:[%s300 + $0xd8] sm:$0xff]
      %v4613 = vld [vmem:[%s300 + $0xe0] sm:$0xff]
      %v4614 = vld [vmem:[%s300 + $0xe8] sm:$0xff]
      %v4615 = vld [vmem:[%s300 + $0xf0] sm:$0xff]
      %v4616 = vld [vmem:[%s300 + $0xf8] sm:$0xff]
      %v4617 = vld [vmem:[%s309] sm:$0xf]
      %v4618 = vlaneseq
      %v4619 = vshrl.u32 %v4618, 7
      %v4620 = vsub.s32 0, %v4619
      %v4621 = vrot.slane %v4617, %v4620
      %v4622 = vlaneseq
      %v4623 = vshrl.u32 %v4622, 7
      %v4624 = vsub.s32 1, %v4623
      %v4625 = vrot.slane %v4617, %v4624
      %v4626 = vlaneseq
      %v4627 = vshrl.u32 %v4626, 7
      %v4628 = vsub.s32 2, %v4627
      %v4629 = vrot.slane %v4617, %v4628
      %v4630 = vlaneseq
      %v4631 = vshrl.u32 %v4630, 7
      %v4632 = vsub.s32 3, %v4631
      %v4633 = vrot.slane %v4617, %v4632
      %4634 = vset.pattern.permute.xlu0 0
      %4635 = vperm.xlu0 %4634, %v4585
      %v4636 = vpop.permute.xlu0 %4635
      %4637 = vset.pattern.permute.xlu0 0
      %4638 = vperm.xlu0 %4637, %v4586
      %v4639 = vpop.permute.xlu0 %4638
      %4640 = vset.pattern.permute.xlu0 0
      %4641 = vperm.xlu0 %4640, %v4587
      %v4642 = vpop.permute.xlu0 %4641
      %4643 = vset.pattern.permute.xlu0 0
      %4644 = vperm.xlu0 %4643, %v4588
      %v4645 = vpop.permute.xlu0 %4644
      %4646 = vset.pattern.permute.xlu0 0
      %4647 = vperm.xlu0 %4646, %v4589
      %v4648 = vpop.permute.xlu0 %4647
      %4649 = vset.pattern.permute.xlu0 0
      %4650 = vperm.xlu0 %4649, %v4590
      %v4651 = vpop.permute.xlu0 %4650
      %4652 = vset.pattern.permute.xlu0 0
      %4653 = vperm.xlu0 %4652, %v4591
      %v4654 = vpop.permute.xlu0 %4653
      %4655 = vset.pattern.permute.xlu0 0
      %4656 = vperm.xlu0 %4655, %v4592
      %v4657 = vpop.permute.xlu0 %4656
      %4658 = vset.pattern.permute.xlu0 0
      %4659 = vperm.xlu0 %4658, %v4593
      %v4660 = vpop.permute.xlu0 %4659
      %4661 = vset.pattern.permute.xlu0 0
      %4662 = vperm.xlu0 %4661, %v4594
      %v4663 = vpop.permute.xlu0 %4662
      %4664 = vset.pattern.permute.xlu0 0
      %4665 = vperm.xlu0 %4664, %v4595
      %v4666 = vpop.permute.xlu0 %4665
      %4667 = vset.pattern.permute.xlu0 0
      %4668 = vperm.xlu0 %4667, %v4596
      %v4669 = vpop.permute.xlu0 %4668
      %4670 = vset.pattern.permute.xlu0 0
      %4671 = vperm.xlu0 %4670, %v4597
      %v4672 = vpop.permute.xlu0 %4671
      %4673 = vset.pattern.permute.xlu0 0
      %4674 = vperm.xlu0 %4673, %v4598
      %v4675 = vpop.permute.xlu0 %4674
      %4676 = vset.pattern.permute.xlu0 0
      %4677 = vperm.xlu0 %4676, %v4599
      %v4678 = vpop.permute.xlu0 %4677
      %4679 = vset.pattern.permute.xlu0 0
      %4680 = vperm.xlu0 %4679, %v4600
      %v4681 = vpop.permute.xlu0 %4680
      %4682 = vset.pattern.permute.xlu0 0
      %4683 = vperm.xlu0 %4682, %v4601
      %v4684 = vpop.permute.xlu0 %4683
      %4685 = vset.pattern.permute.xlu0 0
      %4686 = vperm.xlu0 %4685, %v4602
      %v4687 = vpop.permute.xlu0 %4686
      %4688 = vset.pattern.permute.xlu0 0
      %4689 = vperm.xlu0 %4688, %v4603
      %v4690 = vpop.permute.xlu0 %4689
      %4691 = vset.pattern.permute.xlu0 0
      %4692 = vperm.xlu0 %4691, %v4604
      %v4693 = vpop.permute.xlu0 %4692
      %4694 = vset.pattern.permute.xlu0 0
      %4695 = vperm.xlu0 %4694, %v4605
      %v4696 = vpop.permute.xlu0 %4695
      %4697 = vset.pattern.permute.xlu0 0
      %4698 = vperm.xlu0 %4697, %v4606
      %v4699 = vpop.permute.xlu0 %4698
      %4700 = vset.pattern.permute.xlu0 0
      %4701 = vperm.xlu0 %4700, %v4607
      %v4702 = vpop.permute.xlu0 %4701
      %4703 = vset.pattern.permute.xlu0 0
      %4704 = vperm.xlu0 %4703, %v4608
      %v4705 = vpop.permute.xlu0 %4704
      %4706 = vset.pattern.permute.xlu0 0
      %4707 = vperm.xlu0 %4706, %v4609
      %v4708 = vpop.permute.xlu0 %4707
      %4709 = vset.pattern.permute.xlu0 0
      %4710 = vperm.xlu0 %4709, %v4610
      %v4711 = vpop.permute.xlu0 %4710
      %4712 = vset.pattern.permute.xlu0 0
      %4713 = vperm.xlu0 %4712, %v4611
      %v4714 = vpop.permute.xlu0 %4713
      %4715 = vset.pattern.permute.xlu0 0
      %4716 = vperm.xlu0 %4715, %v4612
      %v4717 = vpop.permute.xlu0 %4716
      %4718 = vset.pattern.permute.xlu0 0
      %4719 = vperm.xlu0 %4718, %v4613
      %v4720 = vpop.permute.xlu0 %4719
      %4721 = vset.pattern.permute.xlu0 0
      %4722 = vperm.xlu0 %4721, %v4614
      %v4723 = vpop.permute.xlu0 %4722
      %4724 = vset.pattern.permute.xlu0 0
      %4725 = vperm.xlu0 %4724, %v4615
      %v4726 = vpop.permute.xlu0 %4725
      %4727 = vset.pattern.permute.xlu0 0
      %4728 = vperm.xlu0 %4727, %v4616
      %v4729 = vpop.permute.xlu0 %4728
      %vm4730 = vcmp.eq.s32.totalorder %v4621, %v4636
      %vm4731 = vcmp.eq.s32.totalorder %v4625, %v4636
      %vm4732 = vcmp.eq.s32.totalorder %v4629, %v4636
      %vm4733 = vcmp.eq.s32.totalorder %v4633, %v4636
      %vm4734 = vcmp.eq.s32.totalorder %v4621, %v4639
      %vm4735 = vcmp.eq.s32.totalorder %v4625, %v4639
      %vm4736 = vcmp.eq.s32.totalorder %v4629, %v4639
      %vm4737 = vcmp.eq.s32.totalorder %v4633, %v4639
      %vm4738 = vcmp.eq.s32.totalorder %v4621, %v4642
      %vm4739 = vcmp.eq.s32.totalorder %v4625, %v4642
      %vm4740 = vcmp.eq.s32.totalorder %v4629, %v4642
      %vm4741 = vcmp.eq.s32.totalorder %v4633, %v4642
      %vm4742 = vcmp.eq.s32.totalorder %v4621, %v4645
      %vm4743 = vcmp.eq.s32.totalorder %v4625, %v4645
      %vm4744 = vcmp.eq.s32.totalorder %v4629, %v4645
      %vm4745 = vcmp.eq.s32.totalorder %v4633, %v4645
      %vm4746 = vcmp.eq.s32.totalorder %v4621, %v4648
      %vm4747 = vcmp.eq.s32.totalorder %v4625, %v4648
      %vm4748 = vcmp.eq.s32.totalorder %v4629, %v4648
      %vm4749 = vcmp.eq.s32.totalorder %v4633, %v4648
      %vm4750 = vcmp.eq.s32.totalorder %v4621, %v4651
      %vm4751 = vcmp.eq.s32.totalorder %v4625, %v4651
      %vm4752 = vcmp.eq.s32.totalorder %v4629, %v4651
      %vm4753 = vcmp.eq.s32.totalorder %v4633, %v4651
      %vm4754 = vcmp.eq.s32.totalorder %v4621, %v4654
      %vm4755 = vcmp.eq.s32.totalorder %v4625, %v4654
      %vm4756 = vcmp.eq.s32.totalorder %v4629, %v4654
      %vm4757 = vcmp.eq.s32.totalorder %v4633, %v4654
      %vm4758 = vcmp.eq.s32.totalorder %v4621, %v4657
      %vm4759 = vcmp.eq.s32.totalorder %v4625, %v4657
      %vm4760 = vcmp.eq.s32.totalorder %v4629, %v4657
      %vm4761 = vcmp.eq.s32.totalorder %v4633, %v4657
      %vm4762 = vcmp.eq.s32.totalorder %v4621, %v4660
      %vm4763 = vcmp.eq.s32.totalorder %v4625, %v4660
      %vm4764 = vcmp.eq.s32.totalorder %v4629, %v4660
      %vm4765 = vcmp.eq.s32.totalorder %v4633, %v4660
      %vm4766 = vcmp.eq.s32.totalorder %v4621, %v4663
      %vm4767 = vcmp.eq.s32.totalorder %v4625, %v4663
      %vm4768 = vcmp.eq.s32.totalorder %v4629, %v4663
      %vm4769 = vcmp.eq.s32.totalorder %v4633, %v4663
      %vm4770 = vcmp.eq.s32.totalorder %v4621, %v4666
      %vm4771 = vcmp.eq.s32.totalorder %v4625, %v4666
      %vm4772 = vcmp.eq.s32.totalorder %v4629, %v4666
      %vm4773 = vcmp.eq.s32.totalorder %v4633, %v4666
      %vm4774 = vcmp.eq.s32.totalorder %v4621, %v4669
      %vm4775 = vcmp.eq.s32.totalorder %v4625, %v4669
      %vm4776 = vcmp.eq.s32.totalorder %v4629, %v4669
      %vm4777 = vcmp.eq.s32.totalorder %v4633, %v4669
      %vm4778 = vcmp.eq.s32.totalorder %v4621, %v4672
      %vm4779 = vcmp.eq.s32.totalorder %v4625, %v4672
      %vm4780 = vcmp.eq.s32.totalorder %v4629, %v4672
      %vm4781 = vcmp.eq.s32.totalorder %v4633, %v4672
      %vm4782 = vcmp.eq.s32.totalorder %v4621, %v4675
      %vm4783 = vcmp.eq.s32.totalorder %v4625, %v4675
      %vm4784 = vcmp.eq.s32.totalorder %v4629, %v4675
      %vm4785 = vcmp.eq.s32.totalorder %v4633, %v4675
      %vm4786 = vcmp.eq.s32.totalorder %v4621, %v4678
      %vm4787 = vcmp.eq.s32.totalorder %v4625, %v4678
      %vm4788 = vcmp.eq.s32.totalorder %v4629, %v4678
      %vm4789 = vcmp.eq.s32.totalorder %v4633, %v4678
      %vm4790 = vcmp.eq.s32.totalorder %v4621, %v4681
      %vm4791 = vcmp.eq.s32.totalorder %v4625, %v4681
      %vm4792 = vcmp.eq.s32.totalorder %v4629, %v4681
      %vm4793 = vcmp.eq.s32.totalorder %v4633, %v4681
      %vm4794 = vcmp.eq.s32.totalorder %v4621, %v4684
      %vm4795 = vcmp.eq.s32.totalorder %v4625, %v4684
      %vm4796 = vcmp.eq.s32.totalorder %v4629, %v4684
      %vm4797 = vcmp.eq.s32.totalorder %v4633, %v4684
      %vm4798 = vcmp.eq.s32.totalorder %v4621, %v4687
      %vm4799 = vcmp.eq.s32.totalorder %v4625, %v4687
      %vm4800 = vcmp.eq.s32.totalorder %v4629, %v4687
      %vm4801 = vcmp.eq.s32.totalorder %v4633, %v4687
      %vm4802 = vcmp.eq.s32.totalorder %v4621, %v4690
      %vm4803 = vcmp.eq.s32.totalorder %v4625, %v4690
      %vm4804 = vcmp.eq.s32.totalorder %v4629, %v4690
      %vm4805 = vcmp.eq.s32.totalorder %v4633, %v4690
      %vm4806 = vcmp.eq.s32.totalorder %v4621, %v4693
      %vm4807 = vcmp.eq.s32.totalorder %v4625, %v4693
      %vm4808 = vcmp.eq.s32.totalorder %v4629, %v4693
      %vm4809 = vcmp.eq.s32.totalorder %v4633, %v4693
      %vm4810 = vcmp.eq.s32.totalorder %v4621, %v4696
      %vm4811 = vcmp.eq.s32.totalorder %v4625, %v4696
      %vm4812 = vcmp.eq.s32.totalorder %v4629, %v4696
      %vm4813 = vcmp.eq.s32.totalorder %v4633, %v4696
      %vm4814 = vcmp.eq.s32.totalorder %v4621, %v4699
      %vm4815 = vcmp.eq.s32.totalorder %v4625, %v4699
      %vm4816 = vcmp.eq.s32.totalorder %v4629, %v4699
      %vm4817 = vcmp.eq.s32.totalorder %v4633, %v4699
      %vm4818 = vcmp.eq.s32.totalorder %v4621, %v4702
      %vm4819 = vcmp.eq.s32.totalorder %v4625, %v4702
      %vm4820 = vcmp.eq.s32.totalorder %v4629, %v4702
      %vm4821 = vcmp.eq.s32.totalorder %v4633, %v4702
      %vm4822 = vcmp.eq.s32.totalorder %v4621, %v4705
      %vm4823 = vcmp.eq.s32.totalorder %v4625, %v4705
      %vm4824 = vcmp.eq.s32.totalorder %v4629, %v4705
      %vm4825 = vcmp.eq.s32.totalorder %v4633, %v4705
      %vm4826 = vcmp.eq.s32.totalorder %v4621, %v4708
      %vm4827 = vcmp.eq.s32.totalorder %v4625, %v4708
      %vm4828 = vcmp.eq.s32.totalorder %v4629, %v4708
      %vm4829 = vcmp.eq.s32.totalorder %v4633, %v4708
      %vm4830 = vcmp.eq.s32.totalorder %v4621, %v4711
      %vm4831 = vcmp.eq.s32.totalorder %v4625, %v4711
      %vm4832 = vcmp.eq.s32.totalorder %v4629, %v4711
      %vm4833 = vcmp.eq.s32.totalorder %v4633, %v4711
      %vm4834 = vcmp.eq.s32.totalorder %v4621, %v4714
      %vm4835 = vcmp.eq.s32.totalorder %v4625, %v4714
      %vm4836 = vcmp.eq.s32.totalorder %v4629, %v4714
      %vm4837 = vcmp.eq.s32.totalorder %v4633, %v4714
      %vm4838 = vcmp.eq.s32.totalorder %v4621, %v4717
      %vm4839 = vcmp.eq.s32.totalorder %v4625, %v4717
      %vm4840 = vcmp.eq.s32.totalorder %v4629, %v4717
      %vm4841 = vcmp.eq.s32.totalorder %v4633, %v4717
      %vm4842 = vcmp.eq.s32.totalorder %v4621, %v4720
      %vm4843 = vcmp.eq.s32.totalorder %v4625, %v4720
      %vm4844 = vcmp.eq.s32.totalorder %v4629, %v4720
      %vm4845 = vcmp.eq.s32.totalorder %v4633, %v4720
      %vm4846 = vcmp.eq.s32.totalorder %v4621, %v4723
      %vm4847 = vcmp.eq.s32.totalorder %v4625, %v4723
      %vm4848 = vcmp.eq.s32.totalorder %v4629, %v4723
      %vm4849 = vcmp.eq.s32.totalorder %v4633, %v4723
      %vm4850 = vcmp.eq.s32.totalorder %v4621, %v4726
      %vm4851 = vcmp.eq.s32.totalorder %v4625, %v4726
      %vm4852 = vcmp.eq.s32.totalorder %v4629, %v4726
      %vm4853 = vcmp.eq.s32.totalorder %v4633, %v4726
      %vm4854 = vcmp.eq.s32.totalorder %v4621, %v4729
      %vm4855 = vcmp.eq.s32.totalorder %v4625, %v4729
      %vm4856 = vcmp.eq.s32.totalorder %v4629, %v4729
      %vm4857 = vcmp.eq.s32.totalorder %v4633, %v4729
      %v4858 = vmul.f32 %v4457, 2.0
      %v4859 = vmul.f32 %v4458, 2.0
      %v4860 = vmul.f32 %v4459, 2.0
      %v4861 = vmul.f32 %v4460, 2.0
      %v4862 = vmul.f32 %v4461, 2.0
      %v4863 = vmul.f32 %v4462, 2.0
      %v4864 = vmul.f32 %v4463, 2.0
      %v4865 = vmul.f32 %v4464, 2.0
      %v4866 = vmul.f32 %v4465, 2.0
      %v4867 = vmul.f32 %v4466, 2.0
      %v4868 = vmul.f32 %v4467, 2.0
      %v4869 = vmul.f32 %v4468, 2.0
      %v4870 = vmul.f32 %v4469, 2.0
      %v4871 = vmul.f32 %v4470, 2.0
      %v4872 = vmul.f32 %v4471, 2.0
      %v4873 = vmul.f32 %v4472, 2.0
      %v4874 = vmul.f32 %v4473, 2.0
      %v4875 = vmul.f32 %v4474, 2.0
      %v4876 = vmul.f32 %v4475, 2.0
      %v4877 = vmul.f32 %v4476, 2.0
      %v4878 = vmul.f32 %v4477, 2.0
      %v4879 = vmul.f32 %v4478, 2.0
      %v4880 = vmul.f32 %v4479, 2.0
      %v4881 = vmul.f32 %v4480, 2.0
      %v4882 = vmul.f32 %v4481, 2.0
      %v4883 = vmul.f32 %v4482, 2.0
      %v4884 = vmul.f32 %v4483, 2.0
      %v4885 = vmul.f32 %v4484, 2.0
      %v4886 = vmul.f32 %v4485, 2.0
      %v4887 = vmul.f32 %v4486, 2.0
      %v4888 = vmul.f32 %v4487, 2.0
      %v4889 = vmul.f32 %v4488, 2.0
      %v4890 = vmul.f32 %v4489, 2.0
      %v4891 = vmul.f32 %v4490, 2.0
      %v4892 = vmul.f32 %v4491, 2.0
      %v4893 = vmul.f32 %v4492, 2.0
      %v4894 = vmul.f32 %v4493, 2.0
      %v4895 = vmul.f32 %v4494, 2.0
      %v4896 = vmul.f32 %v4495, 2.0
      %v4897 = vmul.f32 %v4496, 2.0
      %v4898 = vmul.f32 %v4497, 2.0
      %v4899 = vmul.f32 %v4498, 2.0
      %v4900 = vmul.f32 %v4499, 2.0
      %v4901 = vmul.f32 %v4500, 2.0
      %v4902 = vmul.f32 %v4501, 2.0
      %v4903 = vmul.f32 %v4502, 2.0
      %v4904 = vmul.f32 %v4503, 2.0
      %v4905 = vmul.f32 %v4504, 2.0
      %v4906 = vmul.f32 %v4505, 2.0
      %v4907 = vmul.f32 %v4506, 2.0
      %v4908 = vmul.f32 %v4507, 2.0
      %v4909 = vmul.f32 %v4508, 2.0
      %v4910 = vmul.f32 %v4509, 2.0
      %v4911 = vmul.f32 %v4510, 2.0
      %v4912 = vmul.f32 %v4511, 2.0
      %v4913 = vmul.f32 %v4512, 2.0
      %v4914 = vmul.f32 %v4513, 2.0
      %v4915 = vmul.f32 %v4514, 2.0
      %v4916 = vmul.f32 %v4515, 2.0
      %v4917 = vmul.f32 %v4516, 2.0
      %v4918 = vmul.f32 %v4517, 2.0
      %v4919 = vmul.f32 %v4518, 2.0
      %v4920 = vmul.f32 %v4519, 2.0
      %v4921 = vmul.f32 %v4520, 2.0
      %v4922 = vmul.f32 %v4521, 2.0
      %v4923 = vmul.f32 %v4522, 2.0
      %v4924 = vmul.f32 %v4523, 2.0
      %v4925 = vmul.f32 %v4524, 2.0
      %v4926 = vmul.f32 %v4525, 2.0
      %v4927 = vmul.f32 %v4526, 2.0
      %v4928 = vmul.f32 %v4527, 2.0
      %v4929 = vmul.f32 %v4528, 2.0
      %v4930 = vmul.f32 %v4529, 2.0
      %v4931 = vmul.f32 %v4530, 2.0
      %v4932 = vmul.f32 %v4531, 2.0
      %v4933 = vmul.f32 %v4532, 2.0
      %v4934 = vmul.f32 %v4533, 2.0
      %v4935 = vmul.f32 %v4534, 2.0
      %v4936 = vmul.f32 %v4535, 2.0
      %v4937 = vmul.f32 %v4536, 2.0
      %v4938 = vmul.f32 %v4537, 2.0
      %v4939 = vmul.f32 %v4538, 2.0
      %v4940 = vmul.f32 %v4539, 2.0
      %v4941 = vmul.f32 %v4540, 2.0
      %v4942 = vmul.f32 %v4541, 2.0
      %v4943 = vmul.f32 %v4542, 2.0
      %v4944 = vmul.f32 %v4543, 2.0
      %v4945 = vmul.f32 %v4544, 2.0
      %v4946 = vmul.f32 %v4545, 2.0
      %v4947 = vmul.f32 %v4546, 2.0
      %v4948 = vmul.f32 %v4547, 2.0
      %v4949 = vmul.f32 %v4548, 2.0
      %v4950 = vmul.f32 %v4549, 2.0
      %v4951 = vmul.f32 %v4550, 2.0
      %v4952 = vmul.f32 %v4551, 2.0
      %v4953 = vmul.f32 %v4552, 2.0
      %v4954 = vmul.f32 %v4553, 2.0
      %v4955 = vmul.f32 %v4554, 2.0
      %v4956 = vmul.f32 %v4555, 2.0
      %v4957 = vmul.f32 %v4556, 2.0
      %v4958 = vmul.f32 %v4557, 2.0
      %v4959 = vmul.f32 %v4558, 2.0
      %v4960 = vmul.f32 %v4559, 2.0
      %v4961 = vmul.f32 %v4560, 2.0
      %v4962 = vmul.f32 %v4561, 2.0
      %v4963 = vmul.f32 %v4562, 2.0
      %v4964 = vmul.f32 %v4563, 2.0
      %v4965 = vmul.f32 %v4564, 2.0
      %v4966 = vmul.f32 %v4565, 2.0
      %v4967 = vmul.f32 %v4566, 2.0
      %v4968 = vmul.f32 %v4567, 2.0
      %v4969 = vmul.f32 %v4568, 2.0
      %v4970 = vmul.f32 %v4569, 2.0
      %v4971 = vmul.f32 %v4570, 2.0
      %v4972 = vmul.f32 %v4571, 2.0
      %v4973 = vmul.f32 %v4572, 2.0
      %v4974 = vmul.f32 %v4573, 2.0
      %v4975 = vmul.f32 %v4574, 2.0
      %v4976 = vmul.f32 %v4575, 2.0
      %v4977 = vmul.f32 %v4576, 2.0
      %v4978 = vmul.f32 %v4577, 2.0
      %v4979 = vmul.f32 %v4578, 2.0
      %v4980 = vmul.f32 %v4579, 2.0
      %v4981 = vmul.f32 %v4580, 2.0
      %v4982 = vmul.f32 %v4581, 2.0
      %v4983 = vmul.f32 %v4582, 2.0
      %v4984 = vmul.f32 %v4583, 2.0
      %v4985 = vmul.f32 %v4584, 2.0
      %v4986 = vld [vmem:[%s305] sm:$0xf]
      %v4988 = vlaneseq
      %v4989 = vshrl.u32 %v4988, 7
      %v4990 = vsub.s32 0, %v4989
      %v4991 = vrot.slane %v4986, %v4990
      %v4992 = vlaneseq
      %v4993 = vshrl.u32 %v4992, 7
      %v4994 = vsub.s32 1, %v4993
      %v4995 = vrot.slane %v4986, %v4994
      %v4996 = vlaneseq
      %v4997 = vshrl.u32 %v4996, 7
      %v4998 = vsub.s32 2, %v4997
      %v4999 = vrot.slane %v4986, %v4998
      %v5000 = vlaneseq
      %v5001 = vshrl.u32 %v5000, 7
      %v5002 = vsub.s32 3, %v5001
      %v5003 = vrot.slane %v4986, %v5002
      %v5008 = vadd.f32 %v4858, %v4991
      %v5009 = vadd.f32 %v4859, %v4995
      %v5010 = vadd.f32 %v4860, %v4999
      %v5011 = vadd.f32 %v4861, %v5003
      %v5012 = vadd.f32 %v4862, %v4991
      %v5013 = vadd.f32 %v4863, %v4995
      %v5014 = vadd.f32 %v4864, %v4999
      %v5015 = vadd.f32 %v4865, %v5003
      %v5016 = vadd.f32 %v4866, %v4991
      %v5017 = vadd.f32 %v4867, %v4995
      %v5018 = vadd.f32 %v4868, %v4999
      %v5019 = vadd.f32 %v4869, %v5003
      %v5020 = vadd.f32 %v4870, %v4991
      %v5021 = vadd.f32 %v4871, %v4995
      %v5022 = vadd.f32 %v4872, %v4999
      %v5023 = vadd.f32 %v4873, %v5003
      %v5024 = vadd.f32 %v4874, %v4991
      %v5025 = vadd.f32 %v4875, %v4995
      %v5026 = vadd.f32 %v4876, %v4999
      %v5027 = vadd.f32 %v4877, %v5003
      %v5028 = vadd.f32 %v4878, %v4991
      %v5029 = vadd.f32 %v4879, %v4995
      %v5030 = vadd.f32 %v4880, %v4999
      %v5031 = vadd.f32 %v4881, %v5003
      %v5032 = vadd.f32 %v4882, %v4991
      %v5033 = vadd.f32 %v4883, %v4995
      %v5034 = vadd.f32 %v4884, %v4999
      %v5035 = vadd.f32 %v4885, %v5003
      %v5036 = vadd.f32 %v4886, %v4991
      %v5037 = vadd.f32 %v4887, %v4995
      %v5038 = vadd.f32 %v4888, %v4999
      %v5039 = vadd.f32 %v4889, %v5003
      %v5040 = vadd.f32 %v4890, %v4991
      %v5041 = vadd.f32 %v4891, %v4995
      %v5042 = vadd.f32 %v4892, %v4999
      %v5043 = vadd.f32 %v4893, %v5003
      %v5044 = vadd.f32 %v4894, %v4991
      %v5045 = vadd.f32 %v4895, %v4995
      %v5046 = vadd.f32 %v4896, %v4999
      %v5047 = vadd.f32 %v4897, %v5003
      %v5048 = vadd.f32 %v4898, %v4991
      %v5049 = vadd.f32 %v4899, %v4995
      %v5050 = vadd.f32 %v4900, %v4999
      %v5051 = vadd.f32 %v4901, %v5003
      %v5052 = vadd.f32 %v4902, %v4991
      %v5053 = vadd.f32 %v4903, %v4995
      %v5054 = vadd.f32 %v4904, %v4999
      %v5055 = vadd.f32 %v4905, %v5003
      %v5056 = vadd.f32 %v4906, %v4991
      %v5057 = vadd.f32 %v4907, %v4995
      %v5058 = vadd.f32 %v4908, %v4999
      %v5059 = vadd.f32 %v4909, %v5003
      %v5060 = vadd.f32 %v4910, %v4991
      %v5061 = vadd.f32 %v4911, %v4995
      %v5062 = vadd.f32 %v4912, %v4999
      %v5063 = vadd.f32 %v4913, %v5003
      %v5064 = vadd.f32 %v4914, %v4991
      %v5065 = vadd.f32 %v4915, %v4995
      %v5066 = vadd.f32 %v4916, %v4999
      %v5067 = vadd.f32 %v4917, %v5003
      %v5068 = vadd.f32 %v4918, %v4991
      %v5069 = vadd.f32 %v4919, %v4995
      %v5070 = vadd.f32 %v4920, %v4999
      %v5071 = vadd.f32 %v4921, %v5003
      %v5072 = vadd.f32 %v4922, %v4991
      %v5073 = vadd.f32 %v4923, %v4995
      %v5074 = vadd.f32 %v4924, %v4999
      %v5075 = vadd.f32 %v4925, %v5003
      %v5076 = vadd.f32 %v4926, %v4991
      %v5077 = vadd.f32 %v4927, %v4995
      %v5078 = vadd.f32 %v4928, %v4999
      %v5079 = vadd.f32 %v4929, %v5003
      %v5080 = vadd.f32 %v4930, %v4991
      %v5081 = vadd.f32 %v4931, %v4995
      %v5082 = vadd.f32 %v4932, %v4999
      %v5083 = vadd.f32 %v4933, %v5003
      %v5084 = vadd.f32 %v4934, %v4991
      %v5085 = vadd.f32 %v4935, %v4995
      %v5086 = vadd.f32 %v4936, %v4999
      %v5087 = vadd.f32 %v4937, %v5003
      %v5088 = vadd.f32 %v4938, %v4991
      %v5089 = vadd.f32 %v4939, %v4995
      %v5090 = vadd.f32 %v4940, %v4999
      %v5091 = vadd.f32 %v4941, %v5003
      %v5092 = vadd.f32 %v4942, %v4991
      %v5093 = vadd.f32 %v4943, %v4995
      %v5094 = vadd.f32 %v4944, %v4999
      %v5095 = vadd.f32 %v4945, %v5003
      %v5096 = vadd.f32 %v4946, %v4991
      %v5097 = vadd.f32 %v4947, %v4995
      %v5098 = vadd.f32 %v4948, %v4999
      %v5099 = vadd.f32 %v4949, %v5003
      %v5100 = vadd.f32 %v4950, %v4991
      %v5101 = vadd.f32 %v4951, %v4995
      %v5102 = vadd.f32 %v4952, %v4999
      %v5103 = vadd.f32 %v4953, %v5003
      %v5104 = vadd.f32 %v4954, %v4991
      %v5105 = vadd.f32 %v4955, %v4995
      %v5106 = vadd.f32 %v4956, %v4999
      %v5107 = vadd.f32 %v4957, %v5003
      %v5108 = vadd.f32 %v4958, %v4991
      %v5109 = vadd.f32 %v4959, %v4995
      %v5110 = vadd.f32 %v4960, %v4999
      %v5111 = vadd.f32 %v4961, %v5003
      %v5112 = vadd.f32 %v4962, %v4991
      %v5113 = vadd.f32 %v4963, %v4995
      %v5114 = vadd.f32 %v4964, %v4999
      %v5115 = vadd.f32 %v4965, %v5003
      %v5116 = vadd.f32 %v4966, %v4991
      %v5117 = vadd.f32 %v4967, %v4995
      %v5118 = vadd.f32 %v4968, %v4999
      %v5119 = vadd.f32 %v4969, %v5003
      %v5120 = vadd.f32 %v4970, %v4991
      %v5121 = vadd.f32 %v4971, %v4995
      %v5122 = vadd.f32 %v4972, %v4999
      %v5123 = vadd.f32 %v4973, %v5003
      %v5124 = vadd.f32 %v4974, %v4991
      %v5125 = vadd.f32 %v4975, %v4995
      %v5126 = vadd.f32 %v4976, %v4999
      %v5127 = vadd.f32 %v4977, %v5003
      %v5128 = vadd.f32 %v4978, %v4991
      %v5129 = vadd.f32 %v4979, %v4995
      %v5130 = vadd.f32 %v4980, %v4999
      %v5131 = vadd.f32 %v4981, %v5003
      %v5132 = vadd.f32 %v4982, %v4991
      %v5133 = vadd.f32 %v4983, %v4995
      %v5134 = vadd.f32 %v4984, %v4999
      %v5135 = vadd.f32 %v4985, %v5003
      %v5136 = vsel %vm4730, 0.2, 0.0
      %v5137 = vsel %vm4731, 0.2, 0.0
      %v5138 = vsel %vm4732, 0.2, 0.0
      %v5139 = vsel %vm4733, 0.2, 0.0
      %v5140 = vsel %vm4734, 0.2, 0.0
      %v5141 = vsel %vm4735, 0.2, 0.0
      %v5142 = vsel %vm4736, 0.2, 0.0
      %v5143 = vsel %vm4737, 0.2, 0.0
      %v5144 = vsel %vm4738, 0.2, 0.0
      %v5145 = vsel %vm4739, 0.2, 0.0
      %v5146 = vsel %vm4740, 0.2, 0.0
      %v5147 = vsel %vm4741, 0.2, 0.0
      %v5148 = vsel %vm4742, 0.2, 0.0
      %v5149 = vsel %vm4743, 0.2, 0.0
      %v5150 = vsel %vm4744, 0.2, 0.0
      %v5151 = vsel %vm4745, 0.2, 0.0
      %v5152 = vsel %vm4746, 0.2, 0.0
      %v5153 = vsel %vm4747, 0.2, 0.0
      %v5154 = vsel %vm4748, 0.2, 0.0
      %v5155 = vsel %vm4749, 0.2, 0.0
      %v5156 = vsel %vm4750, 0.2, 0.0
      %v5157 = vsel %vm4751, 0.2, 0.0
      %v5158 = vsel %vm4752, 0.2, 0.0
      %v5159 = vsel %vm4753, 0.2, 0.0
      %v5160 = vsel %vm4754, 0.2, 0.0
      %v5161 = vsel %vm4755, 0.2, 0.0
      %v5162 = vsel %vm4756, 0.2, 0.0
      %v5163 = vsel %vm4757, 0.2, 0.0
      %v5164 = vsel %vm4758, 0.2, 0.0
      %v5165 = vsel %vm4759, 0.2, 0.0
      %v5166 = vsel %vm4760, 0.2, 0.0
      %v5167 = vsel %vm4761, 0.2, 0.0
      %v5168 = vsel %vm4762, 0.2, 0.0
      %v5169 = vsel %vm4763, 0.2, 0.0
      %v5170 = vsel %vm4764, 0.2, 0.0
      %v5171 = vsel %vm4765, 0.2, 0.0
      %v5172 = vsel %vm4766, 0.2, 0.0
      %v5173 = vsel %vm4767, 0.2, 0.0
      %v5174 = vsel %vm4768, 0.2, 0.0
      %v5175 = vsel %vm4769, 0.2, 0.0
      %v5176 = vsel %vm4770, 0.2, 0.0
      %v5177 = vsel %vm4771, 0.2, 0.0
      %v5178 = vsel %vm4772, 0.2, 0.0
      %v5179 = vsel %vm4773, 0.2, 0.0
      %v5180 = vsel %vm4774, 0.2, 0.0
      %v5181 = vsel %vm4775, 0.2, 0.0
      %v5182 = vsel %vm4776, 0.2, 0.0
      %v5183 = vsel %vm4777, 0.2, 0.0
      %v5184 = vsel %vm4778, 0.2, 0.0
      %v5185 = vsel %vm4779, 0.2, 0.0
      %v5186 = vsel %vm4780, 0.2, 0.0
      %v5187 = vsel %vm4781, 0.2, 0.0
      %v5188 = vsel %vm4782, 0.2, 0.0
      %v5189 = vsel %vm4783, 0.2, 0.0
      %v5190 = vsel %vm4784, 0.2, 0.0
      %v5191 = vsel %vm4785, 0.2, 0.0
      %v5192 = vsel %vm4786, 0.2, 0.0
      %v5193 = vsel %vm4787, 0.2, 0.0
      %v5194 = vsel %vm4788, 0.2, 0.0
      %v5195 = vsel %vm4789, 0.2, 0.0
      %v5196 = vsel %vm4790, 0.2, 0.0
      %v5197 = vsel %vm4791, 0.2, 0.0
      %v5198 = vsel %vm4792, 0.2, 0.0
      %v5199 = vsel %vm4793, 0.2, 0.0
      %v5200 = vsel %vm4794, 0.2, 0.0
      %v5201 = vsel %vm4795, 0.2, 0.0
      %v5202 = vsel %vm4796, 0.2, 0.0
      %v5203 = vsel %vm4797, 0.2, 0.0
      %v5204 = vsel %vm4798, 0.2, 0.0
      %v5205 = vsel %vm4799, 0.2, 0.0
      %v5206 = vsel %vm4800, 0.2, 0.0
      %v5207 = vsel %vm4801, 0.2, 0.0
      %v5208 = vsel %vm4802, 0.2, 0.0
      %v5209 = vsel %vm4803, 0.2, 0.0
      %v5210 = vsel %vm4804, 0.2, 0.0
      %v5211 = vsel %vm4805, 0.2, 0.0
      %v5212 = vsel %vm4806, 0.2, 0.0
      %v5213 = vsel %vm4807, 0.2, 0.0
      %v5214 = vsel %vm4808, 0.2, 0.0
      %v5215 = vsel %vm4809, 0.2, 0.0
      %v5216 = vsel %vm4810, 0.2, 0.0
      %v5217 = vsel %vm4811, 0.2, 0.0
      %v5218 = vsel %vm4812, 0.2, 0.0
      %v5219 = vsel %vm4813, 0.2, 0.0
      %v5220 = vsel %vm4814, 0.2, 0.0
      %v5221 = vsel %vm4815, 0.2, 0.0
      %v5222 = vsel %vm4816, 0.2, 0.0
      %v5223 = vsel %vm4817, 0.2, 0.0
      %v5224 = vsel %vm4818, 0.2, 0.0
      %v5225 = vsel %vm4819, 0.2, 0.0
      %v5226 = vsel %vm4820, 0.2, 0.0
      %v5227 = vsel %vm4821, 0.2, 0.0
      %v5228 = vsel %vm4822, 0.2, 0.0
      %v5229 = vsel %vm4823, 0.2, 0.0
      %v5230 = vsel %vm4824, 0.2, 0.0
      %v5231 = vsel %vm4825, 0.2, 0.0
      %v5232 = vsel %vm4826, 0.2, 0.0
      %v5233 = vsel %vm4827, 0.2, 0.0
      %v5234 = vsel %vm4828, 0.2, 0.0
      %v5235 = vsel %vm4829, 0.2, 0.0
      %v5236 = vsel %vm4830, 0.2, 0.0
      %v5237 = vsel %vm4831, 0.2, 0.0
      %v5238 = vsel %vm4832, 0.2, 0.0
      %v5239 = vsel %vm4833, 0.2, 0.0
      %v5240 = vsel %vm4834, 0.2, 0.0
      %v5241 = vsel %vm4835, 0.2, 0.0
      %v5242 = vsel %vm4836, 0.2, 0.0
      %v5243 = vsel %vm4837, 0.2, 0.0
      %v5244 = vsel %vm4838, 0.2, 0.0
      %v5245 = vsel %vm4839, 0.2, 0.0
      %v5246 = vsel %vm4840, 0.2, 0.0
      %v5247 = vsel %vm4841, 0.2, 0.0
      %v5248 = vsel %vm4842, 0.2, 0.0
      %v5249 = vsel %vm4843, 0.2, 0.0
      %v5250 = vsel %vm4844, 0.2, 0.0
      %v5251 = vsel %vm4845, 0.2, 0.0
      %v5252 = vsel %vm4846, 0.2, 0.0
      %v5253 = vsel %vm4847, 0.2, 0.0
      %v5254 = vsel %vm4848, 0.2, 0.0
      %v5255 = vsel %vm4849, 0.2, 0.0
      %v5256 = vsel %vm4850, 0.2, 0.0
      %v5257 = vsel %vm4851, 0.2, 0.0
      %v5258 = vsel %vm4852, 0.2, 0.0
      %v5259 = vsel %vm4853, 0.2, 0.0
      %v5260 = vsel %vm4854, 0.2, 0.0
      %v5261 = vsel %vm4855, 0.2, 0.0
      %v5262 = vsel %vm4856, 0.2, 0.0
      %v5263 = vsel %vm4857, 0.2, 0.0
      %v5264 = vsub.f32 %v5008, %v5136
      %v5265 = vsub.f32 %v5009, %v5137
      %v5266 = vsub.f32 %v5010, %v5138
      %v5267 = vsub.f32 %v5011, %v5139
      %v5268 = vsub.f32 %v5012, %v5140
      %v5269 = vsub.f32 %v5013, %v5141
      %v5270 = vsub.f32 %v5014, %v5142
      %v5271 = vsub.f32 %v5015, %v5143
      %v5272 = vsub.f32 %v5016, %v5144
      %v5273 = vsub.f32 %v5017, %v5145
      %v5274 = vsub.f32 %v5018, %v5146
      %v5275 = vsub.f32 %v5019, %v5147
      %v5276 = vsub.f32 %v5020, %v5148
      %v5277 = vsub.f32 %v5021, %v5149
      %v5278 = vsub.f32 %v5022, %v5150
      %v5279 = vsub.f32 %v5023, %v5151
      %v5280 = vsub.f32 %v5024, %v5152
      %v5281 = vsub.f32 %v5025, %v5153
      %v5282 = vsub.f32 %v5026, %v5154
      %v5283 = vsub.f32 %v5027, %v5155
      %v5284 = vsub.f32 %v5028, %v5156
      %v5285 = vsub.f32 %v5029, %v5157
      %v5286 = vsub.f32 %v5030, %v5158
      %v5287 = vsub.f32 %v5031, %v5159
      %v5288 = vsub.f32 %v5032, %v5160
      %v5289 = vsub.f32 %v5033, %v5161
      %v5290 = vsub.f32 %v5034, %v5162
      %v5291 = vsub.f32 %v5035, %v5163
      %v5292 = vsub.f32 %v5036, %v5164
      %v5293 = vsub.f32 %v5037, %v5165
      %v5294 = vsub.f32 %v5038, %v5166
      %v5295 = vsub.f32 %v5039, %v5167
      %v5296 = vsub.f32 %v5040, %v5168
      %v5297 = vsub.f32 %v5041, %v5169
      %v5298 = vsub.f32 %v5042, %v5170
      %v5299 = vsub.f32 %v5043, %v5171
      %v5300 = vsub.f32 %v5044, %v5172
      %v5301 = vsub.f32 %v5045, %v5173
      %v5302 = vsub.f32 %v5046, %v5174
      %v5303 = vsub.f32 %v5047, %v5175
      %v5304 = vsub.f32 %v5048, %v5176
      %v5305 = vsub.f32 %v5049, %v5177
      %v5306 = vsub.f32 %v5050, %v5178
      %v5307 = vsub.f32 %v5051, %v5179
      %v5308 = vsub.f32 %v5052, %v5180
      %v5309 = vsub.f32 %v5053, %v5181
      %v5310 = vsub.f32 %v5054, %v5182
      %v5311 = vsub.f32 %v5055, %v5183
      %v5312 = vsub.f32 %v5056, %v5184
      %v5313 = vsub.f32 %v5057, %v5185
      %v5314 = vsub.f32 %v5058, %v5186
      %v5315 = vsub.f32 %v5059, %v5187
      %v5316 = vsub.f32 %v5060, %v5188
      %v5317 = vsub.f32 %v5061, %v5189
      %v5318 = vsub.f32 %v5062, %v5190
      %v5319 = vsub.f32 %v5063, %v5191
      %v5320 = vsub.f32 %v5064, %v5192
      %v5321 = vsub.f32 %v5065, %v5193
      %v5322 = vsub.f32 %v5066, %v5194
      %v5323 = vsub.f32 %v5067, %v5195
      %v5324 = vsub.f32 %v5068, %v5196
      %v5325 = vsub.f32 %v5069, %v5197
      %v5326 = vsub.f32 %v5070, %v5198
      %v5327 = vsub.f32 %v5071, %v5199
      %v5328 = vsub.f32 %v5072, %v5200
      %v5329 = vsub.f32 %v5073, %v5201
      %v5330 = vsub.f32 %v5074, %v5202
      %v5331 = vsub.f32 %v5075, %v5203
      %v5332 = vsub.f32 %v5076, %v5204
      %v5333 = vsub.f32 %v5077, %v5205
      %v5334 = vsub.f32 %v5078, %v5206
      %v5335 = vsub.f32 %v5079, %v5207
      %v5336 = vsub.f32 %v5080, %v5208
      %v5337 = vsub.f32 %v5081, %v5209
      %v5338 = vsub.f32 %v5082, %v5210
      %v5339 = vsub.f32 %v5083, %v5211
      %v5340 = vsub.f32 %v5084, %v5212
      %v5341 = vsub.f32 %v5085, %v5213
      %v5342 = vsub.f32 %v5086, %v5214
      %v5343 = vsub.f32 %v5087, %v5215
      %v5344 = vsub.f32 %v5088, %v5216
      %v5345 = vsub.f32 %v5089, %v5217
      %v5346 = vsub.f32 %v5090, %v5218
      %v5347 = vsub.f32 %v5091, %v5219
      %v5348 = vsub.f32 %v5092, %v5220
      %v5349 = vsub.f32 %v5093, %v5221
      %v5350 = vsub.f32 %v5094, %v5222
      %v5351 = vsub.f32 %v5095, %v5223
      %v5352 = vsub.f32 %v5096, %v5224
      %v5353 = vsub.f32 %v5097, %v5225
      %v5354 = vsub.f32 %v5098, %v5226
      %v5355 = vsub.f32 %v5099, %v5227
      %v5356 = vsub.f32 %v5100, %v5228
      %v5357 = vsub.f32 %v5101, %v5229
      %v5358 = vsub.f32 %v5102, %v5230
      %v5359 = vsub.f32 %v5103, %v5231
      %v5360 = vsub.f32 %v5104, %v5232
      %v5361 = vsub.f32 %v5105, %v5233
      %v5362 = vsub.f32 %v5106, %v5234
      %v5363 = vsub.f32 %v5107, %v5235
      %v5364 = vsub.f32 %v5108, %v5236
      %v5365 = vsub.f32 %v5109, %v5237
      %v5366 = vsub.f32 %v5110, %v5238
      %v5367 = vsub.f32 %v5111, %v5239
      %v5368 = vsub.f32 %v5112, %v5240
      %v5369 = vsub.f32 %v5113, %v5241
      %v5370 = vsub.f32 %v5114, %v5242
      %v5371 = vsub.f32 %v5115, %v5243
      %v5372 = vsub.f32 %v5116, %v5244
      %v5373 = vsub.f32 %v5117, %v5245
      %v5374 = vsub.f32 %v5118, %v5246
      %v5375 = vsub.f32 %v5119, %v5247
      %v5376 = vsub.f32 %v5120, %v5248
      %v5377 = vsub.f32 %v5121, %v5249
      %v5378 = vsub.f32 %v5122, %v5250
      %v5379 = vsub.f32 %v5123, %v5251
      %v5380 = vsub.f32 %v5124, %v5252
      %v5381 = vsub.f32 %v5125, %v5253
      %v5382 = vsub.f32 %v5126, %v5254
      %v5383 = vsub.f32 %v5127, %v5255
      %v5384 = vsub.f32 %v5128, %v5256
      %v5385 = vsub.f32 %v5129, %v5257
      %v5386 = vsub.f32 %v5130, %v5258
      %v5387 = vsub.f32 %v5131, %v5259
      %v5388 = vsub.f32 %v5132, %v5260
      %v5389 = vsub.f32 %v5133, %v5261
      %v5390 = vsub.f32 %v5134, %v5262
      %v5391 = vsub.f32 %v5135, %v5263
      %v5392 = vld [vmem:[#allocation2] sm:$0xff]
      %v5393 = vld [vmem:[#allocation2 + $0x8] sm:$0xff]
      %v5394 = vld [vmem:[#allocation2 + $0x10] sm:$0xff]
      %v5395 = vld [vmem:[#allocation2 + $0x18] sm:$0xff]
      %v5396 = vld [vmem:[#allocation2 + $0x20] sm:$0xff]
      %v5397 = vld [vmem:[#allocation2 + $0x28] sm:$0xff]
      %v5398 = vld [vmem:[#allocation2 + $0x30] sm:$0xff]
      %v5399 = vld [vmem:[#allocation2 + $0x38] sm:$0xff]
      %v5400 = vld [vmem:[#allocation2 + $0x40] sm:$0xff]
      %v5401 = vld [vmem:[#allocation2 + $0x48] sm:$0xff]
      %v5402 = vld [vmem:[#allocation2 + $0x50] sm:$0xff]
      %v5403 = vld [vmem:[#allocation2 + $0x58] sm:$0xff]
      %v5404 = vld [vmem:[#allocation2 + $0x60] sm:$0xff]
      %v5405 = vld [vmem:[#allocation2 + $0x68] sm:$0xff]
      %v5406 = vld [vmem:[#allocation2 + $0x70] sm:$0xff]
      %v5407 = vld [vmem:[#allocation2 + $0x78] sm:$0xff]
      %v5408 = vld [vmem:[#allocation2 + $0x80] sm:$0xff]
      %v5409 = vld [vmem:[#allocation2 + $0x88] sm:$0xff]
      %v5410 = vld [vmem:[#allocation2 + $0x90] sm:$0xff]
      %v5411 = vld [vmem:[#allocation2 + $0x98] sm:$0xff]
      %v5412 = vld [vmem:[#allocation2 + $0xa0] sm:$0xff]
      %v5413 = vld [vmem:[#allocation2 + $0xa8] sm:$0xff]
      %v5414 = vld [vmem:[#allocation2 + $0xb0] sm:$0xff]
      %v5415 = vld [vmem:[#allocation2 + $0xb8] sm:$0xff]
      %v5416 = vld [vmem:[#allocation2 + $0xc0] sm:$0xff]
      %v5417 = vld [vmem:[#allocation2 + $0xc8] sm:$0xff]
      %v5418 = vld [vmem:[#allocation2 + $0xd0] sm:$0xff]
      %v5419 = vld [vmem:[#allocation2 + $0xd8] sm:$0xff]
      %v5420 = vld [vmem:[#allocation2 + $0xe0] sm:$0xff]
      %v5421 = vld [vmem:[#allocation2 + $0xe8] sm:$0xff]
      %v5422 = vld [vmem:[#allocation2 + $0xf0] sm:$0xff]
      %v5423 = vld [vmem:[#allocation2 + $0xf8] sm:$0xff]
      %v5424 = vmax.f32 %v5264, %v5265
      %v5425 = vmax.f32 %v5424, %v5266
      %v5426 = vmax.f32 %v5425, %v5267
      %5427 = vmax.xlane.f32.xlu0 %v5426
      %v5428 = vpop.xlane.xlu0 %5427
      %v5429 = vmax.f32 %v5268, %v5269
      %v5430 = vmax.f32 %v5429, %v5270
      %v5431 = vmax.f32 %v5430, %v5271
      %5432 = vmax.xlane.f32.xlu0 %v5431
      %v5433 = vpop.xlane.xlu0 %5432
      %v5434 = vmax.f32 %v5272, %v5273
      %v5435 = vmax.f32 %v5434, %v5274
      %v5436 = vmax.f32 %v5435, %v5275
      %5437 = vmax.xlane.f32.xlu0 %v5436
      %v5438 = vpop.xlane.xlu0 %5437
      %v5439 = vmax.f32 %v5276, %v5277
      %v5440 = vmax.f32 %v5439, %v5278
      %v5441 = vmax.f32 %v5440, %v5279
      %5442 = vmax.xlane.f32.xlu0 %v5441
      %v5443 = vpop.xlane.xlu0 %5442
      %v5444 = vmax.f32 %v5280, %v5281
      %v5445 = vmax.f32 %v5444, %v5282
      %v5446 = vmax.f32 %v5445, %v5283
      %5447 = vmax.xlane.f32.xlu0 %v5446
      %v5448 = vpop.xlane.xlu0 %5447
      %v5449 = vmax.f32 %v5284, %v5285
      %v5450 = vmax.f32 %v5449, %v5286
      %v5451 = vmax.f32 %v5450, %v5287
      %5452 = vmax.xlane.f32.xlu0 %v5451
      %v5453 = vpop.xlane.xlu0 %5452
      %v5454 = vmax.f32 %v5288, %v5289
      %v5455 = vmax.f32 %v5454, %v5290
      %v5456 = vmax.f32 %v5455, %v5291
      %5457 = vmax.xlane.f32.xlu0 %v5456
      %v5458 = vpop.xlane.xlu0 %5457
      %v5459 = vmax.f32 %v5292, %v5293
      %v5460 = vmax.f32 %v5459, %v5294
      %v5461 = vmax.f32 %v5460, %v5295
      %5462 = vmax.xlane.f32.xlu0 %v5461
      %v5463 = vpop.xlane.xlu0 %5462
      %v5464 = vmax.f32 %v5296, %v5297
      %v5465 = vmax.f32 %v5464, %v5298
      %v5466 = vmax.f32 %v5465, %v5299
      %5467 = vmax.xlane.f32.xlu0 %v5466
      %v5468 = vpop.xlane.xlu0 %5467
      %v5469 = vmax.f32 %v5300, %v5301
      %v5470 = vmax.f32 %v5469, %v5302
      %v5471 = vmax.f32 %v5470, %v5303
      %5472 = vmax.xlane.f32.xlu0 %v5471
      %v5473 = vpop.xlane.xlu0 %5472
      %v5474 = vmax.f32 %v5304, %v5305
      %v5475 = vmax.f32 %v5474, %v5306
      %v5476 = vmax.f32 %v5475, %v5307
      %5477 = vmax.xlane.f32.xlu0 %v5476
      %v5478 = vpop.xlane.xlu0 %5477
      %v5479 = vmax.f32 %v5308, %v5309
      %v5480 = vmax.f32 %v5479, %v5310
      %v5481 = vmax.f32 %v5480, %v5311
      %5482 = vmax.xlane.f32.xlu0 %v5481
      %v5483 = vpop.xlane.xlu0 %5482
      %v5484 = vmax.f32 %v5312, %v5313
      %v5485 = vmax.f32 %v5484, %v5314
      %v5486 = vmax.f32 %v5485, %v5315
      %5487 = vmax.xlane.f32.xlu0 %v5486
      %v5488 = vpop.xlane.xlu0 %5487
      %v5489 = vmax.f32 %v5316, %v5317
      %v5490 = vmax.f32 %v5489, %v5318
      %v5491 = vmax.f32 %v5490, %v5319
      %5492 = vmax.xlane.f32.xlu0 %v5491
      %v5493 = vpop.xlane.xlu0 %5492
      %v5494 = vmax.f32 %v5320, %v5321
      %v5495 = vmax.f32 %v5494, %v5322
      %v5496 = vmax.f32 %v5495, %v5323
      %5497 = vmax.xlane.f32.xlu0 %v5496
      %v5498 = vpop.xlane.xlu0 %5497
      %v5499 = vmax.f32 %v5324, %v5325
      %v5500 = vmax.f32 %v5499, %v5326
      %v5501 = vmax.f32 %v5500, %v5327
      %5502 = vmax.xlane.f32.xlu0 %v5501
      %v5503 = vpop.xlane.xlu0 %5502
      %v5504 = vmax.f32 %v5328, %v5329
      %v5505 = vmax.f32 %v5504, %v5330
      %v5506 = vmax.f32 %v5505, %v5331
      %5507 = vmax.xlane.f32.xlu0 %v5506
      %v5508 = vpop.xlane.xlu0 %5507
      %v5509 = vmax.f32 %v5332, %v5333
      %v5510 = vmax.f32 %v5509, %v5334
      %v5511 = vmax.f32 %v5510, %v5335
      %5512 = vmax.xlane.f32.xlu0 %v5511
      %v5513 = vpop.xlane.xlu0 %5512
      %v5514 = vmax.f32 %v5336, %v5337
      %v5515 = vmax.f32 %v5514, %v5338
      %v5516 = vmax.f32 %v5515, %v5339
      %5517 = vmax.xlane.f32.xlu0 %v5516
      %v5518 = vpop.xlane.xlu0 %5517
      %v5519 = vmax.f32 %v5340, %v5341
      %v5520 = vmax.f32 %v5519, %v5342
      %v5521 = vmax.f32 %v5520, %v5343
      %5522 = vmax.xlane.f32.xlu0 %v5521
      %v5523 = vpop.xlane.xlu0 %5522
      %v5524 = vmax.f32 %v5344, %v5345
      %v5525 = vmax.f32 %v5524, %v5346
      %v5526 = vmax.f32 %v5525, %v5347
      %5527 = vmax.xlane.f32.xlu0 %v5526
      %v5528 = vpop.xlane.xlu0 %5527
      %v5529 = vmax.f32 %v5348, %v5349
      %v5530 = vmax.f32 %v5529, %v5350
      %v5531 = vmax.f32 %v5530, %v5351
      %5532 = vmax.xlane.f32.xlu0 %v5531
      %v5533 = vpop.xlane.xlu0 %5532
      %v5534 = vmax.f32 %v5352, %v5353
      %v5535 = vmax.f32 %v5534, %v5354
      %v5536 = vmax.f32 %v5535, %v5355
      %5537 = vmax.xlane.f32.xlu0 %v5536
      %v5538 = vpop.xlane.xlu0 %5537
      %v5539 = vmax.f32 %v5356, %v5357
      %v5540 = vmax.f32 %v5539, %v5358
      %v5541 = vmax.f32 %v5540, %v5359
      %5542 = vmax.xlane.f32.xlu0 %v5541
      %v5543 = vpop.xlane.xlu0 %5542
      %v5544 = vmax.f32 %v5360, %v5361
      %v5545 = vmax.f32 %v5544, %v5362
      %v5546 = vmax.f32 %v5545, %v5363
      %5547 = vmax.xlane.f32.xlu0 %v5546
      %v5548 = vpop.xlane.xlu0 %5547
      %v5549 = vmax.f32 %v5364, %v5365
      %v5550 = vmax.f32 %v5549, %v5366
      %v5551 = vmax.f32 %v5550, %v5367
      %5552 = vmax.xlane.f32.xlu0 %v5551
      %v5553 = vpop.xlane.xlu0 %5552
      %v5554 = vmax.f32 %v5368, %v5369
      %v5555 = vmax.f32 %v5554, %v5370
      %v5556 = vmax.f32 %v5555, %v5371
      %5557 = vmax.xlane.f32.xlu0 %v5556
      %v5558 = vpop.xlane.xlu0 %5557
      %v5559 = vmax.f32 %v5372, %v5373
      %v5560 = vmax.f32 %v5559, %v5374
      %v5561 = vmax.f32 %v5560, %v5375
      %5562 = vmax.xlane.f32.xlu0 %v5561
      %v5563 = vpop.xlane.xlu0 %5562
      %v5564 = vmax.f32 %v5376, %v5377
      %v5565 = vmax.f32 %v5564, %v5378
      %v5566 = vmax.f32 %v5565, %v5379
      %5567 = vmax.xlane.f32.xlu0 %v5566
      %v5568 = vpop.xlane.xlu0 %5567
      %v5569 = vmax.f32 %v5380, %v5381
      %v5570 = vmax.f32 %v5569, %v5382
      %v5571 = vmax.f32 %v5570, %v5383
      %5572 = vmax.xlane.f32.xlu0 %v5571
      %v5573 = vpop.xlane.xlu0 %5572
      %v5574 = vmax.f32 %v5384, %v5385
      %v5575 = vmax.f32 %v5574, %v5386
      %v5576 = vmax.f32 %v5575, %v5387
      %5577 = vmax.xlane.f32.xlu0 %v5576
      %v5578 = vpop.xlane.xlu0 %5577
      %v5579 = vmax.f32 %v5388, %v5389
      %v5580 = vmax.f32 %v5579, %v5390
      %v5581 = vmax.f32 %v5580, %v5391
      %5582 = vmax.xlane.f32.xlu0 %v5581
      %v5583 = vpop.xlane.xlu0 %5582
      %v5584 = vmax.f32 %v5392, %v5428
      %v5585 = vmax.f32 %v5393, %v5433
      %v5586 = vmax.f32 %v5394, %v5438
      %v5587 = vmax.f32 %v5395, %v5443
      %v5588 = vmax.f32 %v5396, %v5448
      %v5589 = vmax.f32 %v5397, %v5453
      %v5590 = vmax.f32 %v5398, %v5458
      %v5591 = vmax.f32 %v5399, %v5463
      %v5592 = vmax.f32 %v5400, %v5468
      %v5593 = vmax.f32 %v5401, %v5473
      %v5594 = vmax.f32 %v5402, %v5478
      %v5595 = vmax.f32 %v5403, %v5483
      %v5596 = vmax.f32 %v5404, %v5488
      %v5597 = vmax.f32 %v5405, %v5493
      %v5598 = vmax.f32 %v5406, %v5498
      %v5599 = vmax.f32 %v5407, %v5503
      %v5600 = vmax.f32 %v5408, %v5508
      %v5601 = vmax.f32 %v5409, %v5513
      %v5602 = vmax.f32 %v5410, %v5518
      %v5603 = vmax.f32 %v5411, %v5523
      %v5604 = vmax.f32 %v5412, %v5528
      %v5605 = vmax.f32 %v5413, %v5533
      %v5606 = vmax.f32 %v5414, %v5538
      %v5607 = vmax.f32 %v5415, %v5543
      %v5608 = vmax.f32 %v5416, %v5548
      %v5609 = vmax.f32 %v5417, %v5553
      %v5610 = vmax.f32 %v5418, %v5558
      %v5611 = vmax.f32 %v5419, %v5563
      %v5612 = vmax.f32 %v5420, %v5568
      %v5613 = vmax.f32 %v5421, %v5573
      %v5614 = vmax.f32 %v5422, %v5578
      %v5615 = vmax.f32 %v5423, %v5583
      %v5616 = vld [vmem:[#allocation3] sm:$0xff]
      %v5617 = vld [vmem:[#allocation3 + $0x8] sm:$0xff]
      %v5618 = vld [vmem:[#allocation3 + $0x10] sm:$0xff]
      %v5619 = vld [vmem:[#allocation3 + $0x18] sm:$0xff]
      %v5620 = vld [vmem:[#allocation3 + $0x20] sm:$0xff]
      %v5621 = vld [vmem:[#allocation3 + $0x28] sm:$0xff]
      %v5622 = vld [vmem:[#allocation3 + $0x30] sm:$0xff]
      %v5623 = vld [vmem:[#allocation3 + $0x38] sm:$0xff]
      %v5624 = vld [vmem:[#allocation3 + $0x40] sm:$0xff]
      %v5625 = vld [vmem:[#allocation3 + $0x48] sm:$0xff]
      %v5626 = vld [vmem:[#allocation3 + $0x50] sm:$0xff]
      %v5627 = vld [vmem:[#allocation3 + $0x58] sm:$0xff]
      %v5628 = vld [vmem:[#allocation3 + $0x60] sm:$0xff]
      %v5629 = vld [vmem:[#allocation3 + $0x68] sm:$0xff]
      %v5630 = vld [vmem:[#allocation3 + $0x70] sm:$0xff]
      %v5631 = vld [vmem:[#allocation3 + $0x78] sm:$0xff]
      %v5632 = vld [vmem:[#allocation3 + $0x80] sm:$0xff]
      %v5633 = vld [vmem:[#allocation3 + $0x88] sm:$0xff]
      %v5634 = vld [vmem:[#allocation3 + $0x90] sm:$0xff]
      %v5635 = vld [vmem:[#allocation3 + $0x98] sm:$0xff]
      %v5636 = vld [vmem:[#allocation3 + $0xa0] sm:$0xff]
      %v5637 = vld [vmem:[#allocation3 + $0xa8] sm:$0xff]
      %v5638 = vld [vmem:[#allocation3 + $0xb0] sm:$0xff]
      %v5639 = vld [vmem:[#allocation3 + $0xb8] sm:$0xff]
      %v5640 = vld [vmem:[#allocation3 + $0xc0] sm:$0xff]
      %v5641 = vld [vmem:[#allocation3 + $0xc8] sm:$0xff]
      %v5642 = vld [vmem:[#allocation3 + $0xd0] sm:$0xff]
      %v5643 = vld [vmem:[#allocation3 + $0xd8] sm:$0xff]
      %v5644 = vld [vmem:[#allocation3 + $0xe0] sm:$0xff]
      %v5645 = vld [vmem:[#allocation3 + $0xe8] sm:$0xff]
      %v5646 = vld [vmem:[#allocation3 + $0xf0] sm:$0xff]
      %v5647 = vld [vmem:[#allocation3 + $0xf8] sm:$0xff]
      %v5648 = vsub.f32 %v5392, %v5584
      %v5649 = vsub.f32 %v5393, %v5585
      %v5650 = vsub.f32 %v5394, %v5586
      %v5651 = vsub.f32 %v5395, %v5587
      %v5652 = vsub.f32 %v5396, %v5588
      %v5653 = vsub.f32 %v5397, %v5589
      %v5654 = vsub.f32 %v5398, %v5590
      %v5655 = vsub.f32 %v5399, %v5591
      %v5656 = vsub.f32 %v5400, %v5592
      %v5657 = vsub.f32 %v5401, %v5593
      %v5658 = vsub.f32 %v5402, %v5594
      %v5659 = vsub.f32 %v5403, %v5595
      %v5660 = vsub.f32 %v5404, %v5596
      %v5661 = vsub.f32 %v5405, %v5597
      %v5662 = vsub.f32 %v5406, %v5598
      %v5663 = vsub.f32 %v5407, %v5599
      %v5664 = vsub.f32 %v5408, %v5600
      %v5665 = vsub.f32 %v5409, %v5601
      %v5666 = vsub.f32 %v5410, %v5602
      %v5667 = vsub.f32 %v5411, %v5603
      %v5668 = vsub.f32 %v5412, %v5604
      %v5669 = vsub.f32 %v5413, %v5605
      %v5670 = vsub.f32 %v5414, %v5606
      %v5671 = vsub.f32 %v5415, %v5607
      %v5672 = vsub.f32 %v5416, %v5608
      %v5673 = vsub.f32 %v5417, %v5609
      %v5674 = vsub.f32 %v5418, %v5610
      %v5675 = vsub.f32 %v5419, %v5611
      %v5676 = vsub.f32 %v5420, %v5612
      %v5677 = vsub.f32 %v5421, %v5613
      %v5678 = vsub.f32 %v5422, %v5614
      %v5679 = vsub.f32 %v5423, %v5615
      %v5680 = vmul.f32 %v5648, 1.442695
      %v5681 = vpow.pop %v5680
      %v5682 = vmul.f32 %v5649, 1.442695
      %v5683 = vpow.pop %v5682
      %v5684 = vmul.f32 %v5650, 1.442695
      %v5685 = vpow.pop %v5684
      %v5686 = vmul.f32 %v5651, 1.442695
      %v5687 = vpow.pop %v5686
      %v5688 = vmul.f32 %v5652, 1.442695
      %v5689 = vpow.pop %v5688
      %v5690 = vmul.f32 %v5653, 1.442695
      %v5691 = vpow.pop %v5690
      %v5692 = vmul.f32 %v5654, 1.442695
      %v5693 = vpow.pop %v5692
      %v5694 = vmul.f32 %v5655, 1.442695
      %v5695 = vpow.pop %v5694
      %v5696 = vmul.f32 %v5656, 1.442695
      %v5697 = vpow.pop %v5696
      %v5698 = vmul.f32 %v5657, 1.442695
      %v5699 = vpow.pop %v5698
      %v5700 = vmul.f32 %v5658, 1.442695
      %v5701 = vpow.pop %v5700
      %v5702 = vmul.f32 %v5659, 1.442695
      %v5703 = vpow.pop %v5702
      %v5704 = vmul.f32 %v5660, 1.442695
      %v5705 = vpow.pop %v5704
      %v5706 = vmul.f32 %v5661, 1.442695
      %v5707 = vpow.pop %v5706
      %v5708 = vmul.f32 %v5662, 1.442695
      %v5709 = vpow.pop %v5708
      %v5710 = vmul.f32 %v5663, 1.442695
      %v5711 = vpow.pop %v5710
      %v5712 = vmul.f32 %v5664, 1.442695
      %v5713 = vpow.pop %v5712
      %v5714 = vmul.f32 %v5665, 1.442695
      %v5715 = vpow.pop %v5714
      %v5716 = vmul.f32 %v5666, 1.442695
      %v5717 = vpow.pop %v5716
      %v5718 = vmul.f32 %v5667, 1.442695
      %v5719 = vpow.pop %v5718
      %v5720 = vmul.f32 %v5668, 1.442695
      %v5721 = vpow.pop %v5720
      %v5722 = vmul.f32 %v5669, 1.442695
      %v5723 = vpow.pop %v5722
      %v5724 = vmul.f32 %v5670, 1.442695
      %v5725 = vpow.pop %v5724
      %v5726 = vmul.f32 %v5671, 1.442695
      %v5727 = vpow.pop %v5726
      %v5728 = vmul.f32 %v5672, 1.442695
      %v5729 = vpow.pop %v5728
      %v5730 = vmul.f32 %v5673, 1.442695
      %v5731 = vpow.pop %v5730
      %v5732 = vmul.f32 %v5674, 1.442695
      %v5733 = vpow.pop %v5732
      %v5734 = vmul.f32 %v5675, 1.442695
      %v5735 = vpow.pop %v5734
      %v5736 = vmul.f32 %v5676, 1.442695
      %v5737 = vpow.pop %v5736
      %v5738 = vmul.f32 %v5677, 1.442695
      %v5739 = vpow.pop %v5738
      %v5740 = vmul.f32 %v5678, 1.442695
      %v5741 = vpow.pop %v5740
      %v5742 = vmul.f32 %v5679, 1.442695
      %v5743 = vpow.pop %v5742
      %v5744 = vmul.f32 %v5616, %v5681
      %v5745 = vmul.f32 %v5617, %v5683
      %v5746 = vmul.f32 %v5618, %v5685
      %v5747 = vmul.f32 %v5619, %v5687
      %v5748 = vmul.f32 %v5620, %v5689
      %v5749 = vmul.f32 %v5621, %v5691
      %v5750 = vmul.f32 %v5622, %v5693
      %v5751 = vmul.f32 %v5623, %v5695
      %v5752 = vmul.f32 %v5624, %v5697
      %v5753 = vmul.f32 %v5625, %v5699
      %v5754 = vmul.f32 %v5626, %v5701
      %v5755 = vmul.f32 %v5627, %v5703
      %v5756 = vmul.f32 %v5628, %v5705
      %v5757 = vmul.f32 %v5629, %v5707
      %v5758 = vmul.f32 %v5630, %v5709
      %v5759 = vmul.f32 %v5631, %v5711
      %v5760 = vmul.f32 %v5632, %v5713
      %v5761 = vmul.f32 %v5633, %v5715
      %v5762 = vmul.f32 %v5634, %v5717
      %v5763 = vmul.f32 %v5635, %v5719
      %v5764 = vmul.f32 %v5636, %v5721
      %v5765 = vmul.f32 %v5637, %v5723
      %v5766 = vmul.f32 %v5638, %v5725
      %v5767 = vmul.f32 %v5639, %v5727
      %v5768 = vmul.f32 %v5640, %v5729
      %v5769 = vmul.f32 %v5641, %v5731
      %v5770 = vmul.f32 %v5642, %v5733
      %v5771 = vmul.f32 %v5643, %v5735
      %v5772 = vmul.f32 %v5644, %v5737
      %v5773 = vmul.f32 %v5645, %v5739
      %v5774 = vmul.f32 %v5646, %v5741
      %v5775 = vmul.f32 %v5647, %v5743
      %5777 = vset.pattern.permute.xlu0 0
      %5778 = vperm.xlu0 %5777, %v5584
      %v5779 = vpop.permute.xlu0 %5778
      %5782 = vset.pattern.permute.xlu0 0
      %5783 = vperm.xlu0 %5782, %v5585
      %v5784 = vpop.permute.xlu0 %5783
      %5787 = vset.pattern.permute.xlu0 0
      %5788 = vperm.xlu0 %5787, %v5586
      %v5789 = vpop.permute.xlu0 %5788
      %5792 = vset.pattern.permute.xlu0 0
      %5793 = vperm.xlu0 %5792, %v5587
      %v5794 = vpop.permute.xlu0 %5793
      %5797 = vset.pattern.permute.xlu0 0
      %5798 = vperm.xlu0 %5797, %v5588
      %v5799 = vpop.permute.xlu0 %5798
      %5802 = vset.pattern.permute.xlu0 0
      %5803 = vperm.xlu0 %5802, %v5589
      %v5804 = vpop.permute.xlu0 %5803
      %5807 = vset.pattern.permute.xlu0 0
      %5808 = vperm.xlu0 %5807, %v5590
      %v5809 = vpop.permute.xlu0 %5808
      %5812 = vset.pattern.permute.xlu0 0
      %5813 = vperm.xlu0 %5812, %v5591
      %v5814 = vpop.permute.xlu0 %5813
      %5817 = vset.pattern.permute.xlu0 0
      %5818 = vperm.xlu0 %5817, %v5592
      %v5819 = vpop.permute.xlu0 %5818
      %5822 = vset.pattern.permute.xlu0 0
      %5823 = vperm.xlu0 %5822, %v5593
      %v5824 = vpop.permute.xlu0 %5823
      %5827 = vset.pattern.permute.xlu0 0
      %5828 = vperm.xlu0 %5827, %v5594
      %v5829 = vpop.permute.xlu0 %5828
      %5832 = vset.pattern.permute.xlu0 0
      %5833 = vperm.xlu0 %5832, %v5595
      %v5834 = vpop.permute.xlu0 %5833
      %5837 = vset.pattern.permute.xlu0 0
      %5838 = vperm.xlu0 %5837, %v5596
      %v5839 = vpop.permute.xlu0 %5838
      %5842 = vset.pattern.permute.xlu0 0
      %5843 = vperm.xlu0 %5842, %v5597
      %v5844 = vpop.permute.xlu0 %5843
      %5847 = vset.pattern.permute.xlu0 0
      %5848 = vperm.xlu0 %5847, %v5598
      %v5849 = vpop.permute.xlu0 %5848
      %5852 = vset.pattern.permute.xlu0 0
      %5853 = vperm.xlu0 %5852, %v5599
      %v5854 = vpop.permute.xlu0 %5853
      %5857 = vset.pattern.permute.xlu0 0
      %5858 = vperm.xlu0 %5857, %v5600
      %v5859 = vpop.permute.xlu0 %5858
      %5862 = vset.pattern.permute.xlu0 0
      %5863 = vperm.xlu0 %5862, %v5601
      %v5864 = vpop.permute.xlu0 %5863
      %5867 = vset.pattern.permute.xlu0 0
      %5868 = vperm.xlu0 %5867, %v5602
      %v5869 = vpop.permute.xlu0 %5868
      %5872 = vset.pattern.permute.xlu0 0
      %5873 = vperm.xlu0 %5872, %v5603
      %v5874 = vpop.permute.xlu0 %5873
      %5877 = vset.pattern.permute.xlu0 0
      %5878 = vperm.xlu0 %5877, %v5604
      %v5879 = vpop.permute.xlu0 %5878
      %5882 = vset.pattern.permute.xlu0 0
      %5883 = vperm.xlu0 %5882, %v5605
      %v5884 = vpop.permute.xlu0 %5883
      %5887 = vset.pattern.permute.xlu0 0
      %5888 = vperm.xlu0 %5887, %v5606
      %v5889 = vpop.permute.xlu0 %5888
      %5892 = vset.pattern.permute.xlu0 0
      %5893 = vperm.xlu0 %5892, %v5607
      %v5894 = vpop.permute.xlu0 %5893
      %5897 = vset.pattern.permute.xlu0 0
      %5898 = vperm.xlu0 %5897, %v5608
      %v5899 = vpop.permute.xlu0 %5898
      %5902 = vset.pattern.permute.xlu0 0
      %5903 = vperm.xlu0 %5902, %v5609
      %v5904 = vpop.permute.xlu0 %5903
      %5907 = vset.pattern.permute.xlu0 0
      %5908 = vperm.xlu0 %5907, %v5610
      %v5909 = vpop.permute.xlu0 %5908
      %5912 = vset.pattern.permute.xlu0 0
      %5913 = vperm.xlu0 %5912, %v5611
      %v5914 = vpop.permute.xlu0 %5913
      %5917 = vset.pattern.permute.xlu0 0
      %5918 = vperm.xlu0 %5917, %v5612
      %v5919 = vpop.permute.xlu0 %5918
      %5922 = vset.pattern.permute.xlu0 0
      %5923 = vperm.xlu0 %5922, %v5613
      %v5924 = vpop.permute.xlu0 %5923
      %5927 = vset.pattern.permute.xlu0 0
      %5928 = vperm.xlu0 %5927, %v5614
      %v5929 = vpop.permute.xlu0 %5928
      %5932 = vset.pattern.permute.xlu0 0
      %5933 = vperm.xlu0 %5932, %v5615
      %v5934 = vpop.permute.xlu0 %5933
      %v5936 = vsub.f32 %v5264, %v5779
      %v5937 = vsub.f32 %v5265, %v5779
      %v5938 = vsub.f32 %v5266, %v5779
      %v5939 = vsub.f32 %v5267, %v5779
      %v5940 = vsub.f32 %v5268, %v5784
      %v5941 = vsub.f32 %v5269, %v5784
      %v5942 = vsub.f32 %v5270, %v5784
      %v5943 = vsub.f32 %v5271, %v5784
      %v5944 = vsub.f32 %v5272, %v5789
      %v5945 = vsub.f32 %v5273, %v5789
      %v5946 = vsub.f32 %v5274, %v5789
      %v5947 = vsub.f32 %v5275, %v5789
      %v5948 = vsub.f32 %v5276, %v5794
      %v5949 = vsub.f32 %v5277, %v5794
      %v5950 = vsub.f32 %v5278, %v5794
      %v5951 = vsub.f32 %v5279, %v5794
      %v5952 = vsub.f32 %v5280, %v5799
      %v5953 = vsub.f32 %v5281, %v5799
      %v5954 = vsub.f32 %v5282, %v5799
      %v5955 = vsub.f32 %v5283, %v5799
      %v5956 = vsub.f32 %v5284, %v5804
      %v5957 = vsub.f32 %v5285, %v5804
      %v5958 = vsub.f32 %v5286, %v5804
      %v5959 = vsub.f32 %v5287, %v5804
      %v5960 = vsub.f32 %v5288, %v5809
      %v5961 = vsub.f32 %v5289, %v5809
      %v5962 = vsub.f32 %v5290, %v5809
      %v5963 = vsub.f32 %v5291, %v5809
      %v5964 = vsub.f32 %v5292, %v5814
      %v5965 = vsub.f32 %v5293, %v5814
      %v5966 = vsub.f32 %v5294, %v5814
      %v5967 = vsub.f32 %v5295, %v5814
      %v5968 = vsub.f32 %v5296, %v5819
      %v5969 = vsub.f32 %v5297, %v5819
      %v5970 = vsub.f32 %v5298, %v5819
      %v5971 = vsub.f32 %v5299, %v5819
      %v5972 = vsub.f32 %v5300, %v5824
      %v5973 = vsub.f32 %v5301, %v5824
      %v5974 = vsub.f32 %v5302, %v5824
      %v5975 = vsub.f32 %v5303, %v5824
      %v5976 = vsub.f32 %v5304, %v5829
      %v5977 = vsub.f32 %v5305, %v5829
      %v5978 = vsub.f32 %v5306, %v5829
      %v5979 = vsub.f32 %v5307, %v5829
      %v5980 = vsub.f32 %v5308, %v5834
      %v5981 = vsub.f32 %v5309, %v5834
      %v5982 = vsub.f32 %v5310, %v5834
      %v5983 = vsub.f32 %v5311, %v5834
      %v5984 = vsub.f32 %v5312, %v5839
      %v5985 = vsub.f32 %v5313, %v5839
      %v5986 = vsub.f32 %v5314, %v5839
      %v5987 = vsub.f32 %v5315, %v5839
      %v5988 = vsub.f32 %v5316, %v5844
      %v5989 = vsub.f32 %v5317, %v5844
      %v5990 = vsub.f32 %v5318, %v5844
      %v5991 = vsub.f32 %v5319, %v5844
      %v5992 = vsub.f32 %v5320, %v5849
      %v5993 = vsub.f32 %v5321, %v5849
      %v5994 = vsub.f32 %v5322, %v5849
      %v5995 = vsub.f32 %v5323, %v5849
      %v5996 = vsub.f32 %v5324, %v5854
      %v5997 = vsub.f32 %v5325, %v5854
      %v5998 = vsub.f32 %v5326, %v5854
      %v5999 = vsub.f32 %v5327, %v5854
      %v6000 = vsub.f32 %v5328, %v5859
      %v6001 = vsub.f32 %v5329, %v5859
      %v6002 = vsub.f32 %v5330, %v5859
      %v6003 = vsub.f32 %v5331, %v5859
      %v6004 = vsub.f32 %v5332, %v5864
      %v6005 = vsub.f32 %v5333, %v5864
      %v6006 = vsub.f32 %v5334, %v5864
      %v6007 = vsub.f32 %v5335, %v5864
      %v6008 = vsub.f32 %v5336, %v5869
      %v6009 = vsub.f32 %v5337, %v5869
      %v6010 = vsub.f32 %v5338, %v5869
      %v6011 = vsub.f32 %v5339, %v5869
      %v6012 = vsub.f32 %v5340, %v5874
      %v6013 = vsub.f32 %v5341, %v5874
      %v6014 = vsub.f32 %v5342, %v5874
      %v6015 = vsub.f32 %v5343, %v5874
      %v6016 = vsub.f32 %v5344, %v5879
      %v6017 = vsub.f32 %v5345, %v5879
      %v6018 = vsub.f32 %v5346, %v5879
      %v6019 = vsub.f32 %v5347, %v5879
      %v6020 = vsub.f32 %v5348, %v5884
      %v6021 = vsub.f32 %v5349, %v5884
      %v6022 = vsub.f32 %v5350, %v5884
      %v6023 = vsub.f32 %v5351, %v5884
      %v6024 = vsub.f32 %v5352, %v5889
      %v6025 = vsub.f32 %v5353, %v5889
      %v6026 = vsub.f32 %v5354, %v5889
      %v6027 = vsub.f32 %v5355, %v5889
      %v6028 = vsub.f32 %v5356, %v5894
      %v6029 = vsub.f32 %v5357, %v5894
      %v6030 = vsub.f32 %v5358, %v5894
      %v6031 = vsub.f32 %v5359, %v5894
      %v6032 = vsub.f32 %v5360, %v5899
      %v6033 = vsub.f32 %v5361, %v5899
      %v6034 = vsub.f32 %v5362, %v5899
      %v6035 = vsub.f32 %v5363, %v5899
      %v6036 = vsub.f32 %v5364, %v5904
      %v6037 = vsub.f32 %v5365, %v5904
      %v6038 = vsub.f32 %v5366, %v5904
      %v6039 = vsub.f32 %v5367, %v5904
      %v6040 = vsub.f32 %v5368, %v5909
      %v6041 = vsub.f32 %v5369, %v5909
      %v6042 = vsub.f32 %v5370, %v5909
      %v6043 = vsub.f32 %v5371, %v5909
      %v6044 = vsub.f32 %v5372, %v5914
      %v6045 = vsub.f32 %v5373, %v5914
      %v6046 = vsub.f32 %v5374, %v5914
      %v6047 = vsub.f32 %v5375, %v5914
      %v6048 = vsub.f32 %v5376, %v5919
      %v6049 = vsub.f32 %v5377, %v5919
      %v6050 = vsub.f32 %v5378, %v5919
      %v6051 = vsub.f32 %v5379, %v5919
      %v6052 = vsub.f32 %v5380, %v5924
      %v6053 = vsub.f32 %v5381, %v5924
      %v6054 = vsub.f32 %v5382, %v5924
      %v6055 = vsub.f32 %v5383, %v5924
      %v6056 = vsub.f32 %v5384, %v5929
      %v6057 = vsub.f32 %v5385, %v5929
      %v6058 = vsub.f32 %v5386, %v5929
      %v6059 = vsub.f32 %v5387, %v5929
      %v6060 = vsub.f32 %v5388, %v5934
      %v6061 = vsub.f32 %v5389, %v5934
      %v6062 = vsub.f32 %v5390, %v5934
      %v6063 = vsub.f32 %v5391, %v5934
      %v6064 = vmul.f32 %v5936, 1.442695
      %v6065 = vpow.pop %v6064
      %v6066 = vmul.f32 %v5937, 1.442695
      %v6067 = vpow.pop %v6066
      %v6068 = vmul.f32 %v5938, 1.442695
      %v6069 = vpow.pop %v6068
      %v6070 = vmul.f32 %v5939, 1.442695
      %v6071 = vpow.pop %v6070
      %v6072 = vmul.f32 %v5940, 1.442695
      %v6073 = vpow.pop %v6072
      %v6074 = vmul.f32 %v5941, 1.442695
      %v6075 = vpow.pop %v6074
      %v6076 = vmul.f32 %v5942, 1.442695
      %v6077 = vpow.pop %v6076
      %v6078 = vmul.f32 %v5943, 1.442695
      %v6079 = vpow.pop %v6078
      %v6080 = vmul.f32 %v5944, 1.442695
      %v6081 = vpow.pop %v6080
      %v6082 = vmul.f32 %v5945, 1.442695
      %v6083 = vpow.pop %v6082
      %v6084 = vmul.f32 %v5946, 1.442695
      %v6085 = vpow.pop %v6084
      %v6086 = vmul.f32 %v5947, 1.442695
      %v6087 = vpow.pop %v6086
      %v6088 = vmul.f32 %v5948, 1.442695
      %v6089 = vpow.pop %v6088
      %v6090 = vmul.f32 %v5949, 1.442695
      %v6091 = vpow.pop %v6090
      %v6092 = vmul.f32 %v5950, 1.442695
      %v6093 = vpow.pop %v6092
      %v6094 = vmul.f32 %v5951, 1.442695
      %v6095 = vpow.pop %v6094
      %v6096 = vmul.f32 %v5952, 1.442695
      %v6097 = vpow.pop %v6096
      %v6098 = vmul.f32 %v5953, 1.442695
      %v6099 = vpow.pop %v6098
      %v6100 = vmul.f32 %v5954, 1.442695
      %v6101 = vpow.pop %v6100
      %v6102 = vmul.f32 %v5955, 1.442695
      %v6103 = vpow.pop %v6102
      %v6104 = vmul.f32 %v5956, 1.442695
      %v6105 = vpow.pop %v6104
      %v6106 = vmul.f32 %v5957, 1.442695
      %v6107 = vpow.pop %v6106
      %v6108 = vmul.f32 %v5958, 1.442695
      %v6109 = vpow.pop %v6108
      %v6110 = vmul.f32 %v5959, 1.442695
      %v6111 = vpow.pop %v6110
      %v6112 = vmul.f32 %v5960, 1.442695
      %v6113 = vpow.pop %v6112
      %v6114 = vmul.f32 %v5961, 1.442695
      %v6115 = vpow.pop %v6114
      %v6116 = vmul.f32 %v5962, 1.442695
      %v6117 = vpow.pop %v6116
      %v6118 = vmul.f32 %v5963, 1.442695
      %v6119 = vpow.pop %v6118
      %v6120 = vmul.f32 %v5964, 1.442695
      %v6121 = vpow.pop %v6120
      %v6122 = vmul.f32 %v5965, 1.442695
      %v6123 = vpow.pop %v6122
      %v6124 = vmul.f32 %v5966, 1.442695
      %v6125 = vpow.pop %v6124
      %v6126 = vmul.f32 %v5967, 1.442695
      %v6127 = vpow.pop %v6126
      %v6128 = vmul.f32 %v5968, 1.442695
      %v6129 = vpow.pop %v6128
      %v6130 = vmul.f32 %v5969, 1.442695
      %v6131 = vpow.pop %v6130
      %v6132 = vmul.f32 %v5970, 1.442695
      %v6133 = vpow.pop %v6132
      %v6134 = vmul.f32 %v5971, 1.442695
      %v6135 = vpow.pop %v6134
      %v6136 = vmul.f32 %v5972, 1.442695
      %v6137 = vpow.pop %v6136
      %v6138 = vmul.f32 %v5973, 1.442695
      %v6139 = vpow.pop %v6138
      %v6140 = vmul.f32 %v5974, 1.442695
      %v6141 = vpow.pop %v6140
      %v6142 = vmul.f32 %v5975, 1.442695
      %v6143 = vpow.pop %v6142
      %v6144 = vmul.f32 %v5976, 1.442695
      %v6145 = vpow.pop %v6144
      %v6146 = vmul.f32 %v5977, 1.442695
      %v6147 = vpow.pop %v6146
      %v6148 = vmul.f32 %v5978, 1.442695
      %v6149 = vpow.pop %v6148
      %v6150 = vmul.f32 %v5979, 1.442695
      %v6151 = vpow.pop %v6150
      %v6152 = vmul.f32 %v5980, 1.442695
      %v6153 = vpow.pop %v6152
      %v6154 = vmul.f32 %v5981, 1.442695
      %v6155 = vpow.pop %v6154
      %v6156 = vmul.f32 %v5982, 1.442695
      %v6157 = vpow.pop %v6156
      %v6158 = vmul.f32 %v5983, 1.442695
      %v6159 = vpow.pop %v6158
      %v6160 = vmul.f32 %v5984, 1.442695
      %v6161 = vpow.pop %v6160
      %v6162 = vmul.f32 %v5985, 1.442695
      %v6163 = vpow.pop %v6162
      %v6164 = vmul.f32 %v5986, 1.442695
      %v6165 = vpow.pop %v6164
      %v6166 = vmul.f32 %v5987, 1.442695
      %v6167 = vpow.pop %v6166
      %v6168 = vmul.f32 %v5988, 1.442695
      %v6169 = vpow.pop %v6168
      %v6170 = vmul.f32 %v5989, 1.442695
      %v6171 = vpow.pop %v6170
      %v6172 = vmul.f32 %v5990, 1.442695
      %v6173 = vpow.pop %v6172
      %v6174 = vmul.f32 %v5991, 1.442695
      %v6175 = vpow.pop %v6174
      %v6176 = vmul.f32 %v5992, 1.442695
      %v6177 = vpow.pop %v6176
      %v6178 = vmul.f32 %v5993, 1.442695
      %v6179 = vpow.pop %v6178
      %v6180 = vmul.f32 %v5994, 1.442695
      %v6181 = vpow.pop %v6180
      %v6182 = vmul.f32 %v5995, 1.442695
      %v6183 = vpow.pop %v6182
      %v6184 = vmul.f32 %v5996, 1.442695
      %v6185 = vpow.pop %v6184
      %v6186 = vmul.f32 %v5997, 1.442695
      %v6187 = vpow.pop %v6186
      %v6188 = vmul.f32 %v5998, 1.442695
      %v6189 = vpow.pop %v6188
      %v6190 = vmul.f32 %v5999, 1.442695
      %v6191 = vpow.pop %v6190
      %v6192 = vmul.f32 %v6000, 1.442695
      %v6193 = vpow.pop %v6192
      %v6194 = vmul.f32 %v6001, 1.442695
      %v6195 = vpow.pop %v6194
      %v6196 = vmul.f32 %v6002, 1.442695
      %v6197 = vpow.pop %v6196
      %v6198 = vmul.f32 %v6003, 1.442695
      %v6199 = vpow.pop %v6198
      %v6200 = vmul.f32 %v6004, 1.442695
      %v6201 = vpow.pop %v6200
      %v6202 = vmul.f32 %v6005, 1.442695
      %v6203 = vpow.pop %v6202
      %v6204 = vmul.f32 %v6006, 1.442695
      %v6205 = vpow.pop %v6204
      %v6206 = vmul.f32 %v6007, 1.442695
      %v6207 = vpow.pop %v6206
      %v6208 = vmul.f32 %v6008, 1.442695
      %v6209 = vpow.pop %v6208
      %v6210 = vmul.f32 %v6009, 1.442695
      %v6211 = vpow.pop %v6210
      %v6212 = vmul.f32 %v6010, 1.442695
      %v6213 = vpow.pop %v6212
      %v6214 = vmul.f32 %v6011, 1.442695
      %v6215 = vpow.pop %v6214
      %v6216 = vmul.f32 %v6012, 1.442695
      %v6217 = vpow.pop %v6216
      %v6218 = vmul.f32 %v6013, 1.442695
      %v6219 = vpow.pop %v6218
      %v6220 = vmul.f32 %v6014, 1.442695
      %v6221 = vpow.pop %v6220
      %v6222 = vmul.f32 %v6015, 1.442695
      %v6223 = vpow.pop %v6222
      %v6224 = vmul.f32 %v6016, 1.442695
      %v6225 = vpow.pop %v6224
      %v6226 = vmul.f32 %v6017, 1.442695
      %v6227 = vpow.pop %v6226
      %v6228 = vmul.f32 %v6018, 1.442695
      %v6229 = vpow.pop %v6228
      %v6230 = vmul.f32 %v6019, 1.442695
      %v6231 = vpow.pop %v6230
      %v6232 = vmul.f32 %v6020, 1.442695
      %v6233 = vpow.pop %v6232
      %v6234 = vmul.f32 %v6021, 1.442695
      %v6235 = vpow.pop %v6234
      %v6236 = vmul.f32 %v6022, 1.442695
      %v6237 = vpow.pop %v6236
      %v6238 = vmul.f32 %v6023, 1.442695
      %v6239 = vpow.pop %v6238
      %v6240 = vmul.f32 %v6024, 1.442695
      %v6241 = vpow.pop %v6240
      %v6242 = vmul.f32 %v6025, 1.442695
      %v6243 = vpow.pop %v6242
      %v6244 = vmul.f32 %v6026, 1.442695
      %v6245 = vpow.pop %v6244
      %v6246 = vmul.f32 %v6027, 1.442695
      %v6247 = vpow.pop %v6246
      %v6248 = vmul.f32 %v6028, 1.442695
      %v6249 = vpow.pop %v6248
      %v6250 = vmul.f32 %v6029, 1.442695
      %v6251 = vpow.pop %v6250
      %v6252 = vmul.f32 %v6030, 1.442695
      %v6253 = vpow.pop %v6252
      %v6254 = vmul.f32 %v6031, 1.442695
      %v6255 = vpow.pop %v6254
      %v6256 = vmul.f32 %v6032, 1.442695
      %v6257 = vpow.pop %v6256
      %v6258 = vmul.f32 %v6033, 1.442695
      %v6259 = vpow.pop %v6258
      %v6260 = vmul.f32 %v6034, 1.442695
      %v6261 = vpow.pop %v6260
      %v6262 = vmul.f32 %v6035, 1.442695
      %v6263 = vpow.pop %v6262
      %v6264 = vmul.f32 %v6036, 1.442695
      %v6265 = vpow.pop %v6264
      %v6266 = vmul.f32 %v6037, 1.442695
      %v6267 = vpow.pop %v6266
      %v6268 = vmul.f32 %v6038, 1.442695
      %v6269 = vpow.pop %v6268
      %v6270 = vmul.f32 %v6039, 1.442695
      %v6271 = vpow.pop %v6270
      %v6272 = vmul.f32 %v6040, 1.442695
      %v6273 = vpow.pop %v6272
      %v6274 = vmul.f32 %v6041, 1.442695
      %v6275 = vpow.pop %v6274
      %v6276 = vmul.f32 %v6042, 1.442695
      %v6277 = vpow.pop %v6276
      %v6278 = vmul.f32 %v6043, 1.442695
      %v6279 = vpow.pop %v6278
      %v6280 = vmul.f32 %v6044, 1.442695
      %v6281 = vpow.pop %v6280
      %v6282 = vmul.f32 %v6045, 1.442695
      %v6283 = vpow.pop %v6282
      %v6284 = vmul.f32 %v6046, 1.442695
      %v6285 = vpow.pop %v6284
      %v6286 = vmul.f32 %v6047, 1.442695
      %v6287 = vpow.pop %v6286
      %v6288 = vmul.f32 %v6048, 1.442695
      %v6289 = vpow.pop %v6288
      %v6290 = vmul.f32 %v6049, 1.442695
      %v6291 = vpow.pop %v6290
      %v6292 = vmul.f32 %v6050, 1.442695
      %v6293 = vpow.pop %v6292
      %v6294 = vmul.f32 %v6051, 1.442695
      %v6295 = vpow.pop %v6294
      %v6296 = vmul.f32 %v6052, 1.442695
      %v6297 = vpow.pop %v6296
      %v6298 = vmul.f32 %v6053, 1.442695
      %v6299 = vpow.pop %v6298
      %v6300 = vmul.f32 %v6054, 1.442695
      %v6301 = vpow.pop %v6300
      %v6302 = vmul.f32 %v6055, 1.442695
      %v6303 = vpow.pop %v6302
      %v6304 = vmul.f32 %v6056, 1.442695
      %v6305 = vpow.pop %v6304
      %v6306 = vmul.f32 %v6057, 1.442695
      %v6307 = vpow.pop %v6306
      %v6308 = vmul.f32 %v6058, 1.442695
      %v6309 = vpow.pop %v6308
      %v6310 = vmul.f32 %v6059, 1.442695
      %v6311 = vpow.pop %v6310
      %v6312 = vmul.f32 %v6060, 1.442695
      %v6313 = vpow.pop %v6312
      %v6314 = vmul.f32 %v6061, 1.442695
      %v6315 = vpow.pop %v6314
      %v6316 = vmul.f32 %v6062, 1.442695
      %v6317 = vpow.pop %v6316
      %v6318 = vmul.f32 %v6063, 1.442695
      %v6319 = vpow.pop %v6318
      %v6320 = vadd.f32 %v6065, %v6067
      %v6321 = vadd.f32 %v6320, %v6069
      %v6322 = vadd.f32 %v6321, %v6071
      %6323 = vadd.xlane.f32.xlu0 %v6322
      %v6324 = vpop.xlane.xlu0 %6323
      %v6325 = vadd.f32 %v6073, %v6075
      %v6326 = vadd.f32 %v6325, %v6077
      %v6327 = vadd.f32 %v6326, %v6079
      %6328 = vadd.xlane.f32.xlu0 %v6327
      %v6329 = vpop.xlane.xlu0 %6328
      %v6330 = vadd.f32 %v6081, %v6083
      %v6331 = vadd.f32 %v6330, %v6085
      %v6332 = vadd.f32 %v6331, %v6087
      %6333 = vadd.xlane.f32.xlu0 %v6332
      %v6334 = vpop.xlane.xlu0 %6333
      %v6335 = vadd.f32 %v6089, %v6091
      %v6336 = vadd.f32 %v6335, %v6093
      %v6337 = vadd.f32 %v6336, %v6095
      %6338 = vadd.xlane.f32.xlu0 %v6337
      %v6339 = vpop.xlane.xlu0 %6338
      %v6340 = vadd.f32 %v6097, %v6099
      %v6341 = vadd.f32 %v6340, %v6101
      %v6342 = vadd.f32 %v6341, %v6103
      %6343 = vadd.xlane.f32.xlu0 %v6342
      %v6344 = vpop.xlane.xlu0 %6343
      %v6345 = vadd.f32 %v6105, %v6107
      %v6346 = vadd.f32 %v6345, %v6109
      %v6347 = vadd.f32 %v6346, %v6111
      %6348 = vadd.xlane.f32.xlu0 %v6347
      %v6349 = vpop.xlane.xlu0 %6348
      %v6350 = vadd.f32 %v6113, %v6115
      %v6351 = vadd.f32 %v6350, %v6117
      %v6352 = vadd.f32 %v6351, %v6119
      %6353 = vadd.xlane.f32.xlu0 %v6352
      %v6354 = vpop.xlane.xlu0 %6353
      %v6355 = vadd.f32 %v6121, %v6123
      %v6356 = vadd.f32 %v6355, %v6125
      %v6357 = vadd.f32 %v6356, %v6127
      %6358 = vadd.xlane.f32.xlu0 %v6357
      %v6359 = vpop.xlane.xlu0 %6358
      %v6360 = vadd.f32 %v6129, %v6131
      %v6361 = vadd.f32 %v6360, %v6133
      %v6362 = vadd.f32 %v6361, %v6135
      %6363 = vadd.xlane.f32.xlu0 %v6362
      %v6364 = vpop.xlane.xlu0 %6363
      %v6365 = vadd.f32 %v6137, %v6139
      %v6366 = vadd.f32 %v6365, %v6141
      %v6367 = vadd.f32 %v6366, %v6143
      %6368 = vadd.xlane.f32.xlu0 %v6367
      %v6369 = vpop.xlane.xlu0 %6368
      %v6370 = vadd.f32 %v6145, %v6147
      %v6371 = vadd.f32 %v6370, %v6149
      %v6372 = vadd.f32 %v6371, %v6151
      %6373 = vadd.xlane.f32.xlu0 %v6372
      %v6374 = vpop.xlane.xlu0 %6373
      %v6375 = vadd.f32 %v6153, %v6155
      %v6376 = vadd.f32 %v6375, %v6157
      %v6377 = vadd.f32 %v6376, %v6159
      %6378 = vadd.xlane.f32.xlu0 %v6377
      %v6379 = vpop.xlane.xlu0 %6378
      %v6380 = vadd.f32 %v6161, %v6163
      %v6381 = vadd.f32 %v6380, %v6165
      %v6382 = vadd.f32 %v6381, %v6167
      %6383 = vadd.xlane.f32.xlu0 %v6382
      %v6384 = vpop.xlane.xlu0 %6383
      %v6385 = vadd.f32 %v6169, %v6171
      %v6386 = vadd.f32 %v6385, %v6173
      %v6387 = vadd.f32 %v6386, %v6175
      %6388 = vadd.xlane.f32.xlu0 %v6387
      %v6389 = vpop.xlane.xlu0 %6388
      %v6390 = vadd.f32 %v6177, %v6179
      %v6391 = vadd.f32 %v6390, %v6181
      %v6392 = vadd.f32 %v6391, %v6183
      %6393 = vadd.xlane.f32.xlu0 %v6392
      %v6394 = vpop.xlane.xlu0 %6393
      %v6395 = vadd.f32 %v6185, %v6187
      %v6396 = vadd.f32 %v6395, %v6189
      %v6397 = vadd.f32 %v6396, %v6191
      %6398 = vadd.xlane.f32.xlu0 %v6397
      %v6399 = vpop.xlane.xlu0 %6398
      %v6400 = vadd.f32 %v6193, %v6195
      %v6401 = vadd.f32 %v6400, %v6197
      %v6402 = vadd.f32 %v6401, %v6199
      %6403 = vadd.xlane.f32.xlu0 %v6402
      %v6404 = vpop.xlane.xlu0 %6403
      %v6405 = vadd.f32 %v6201, %v6203
      %v6406 = vadd.f32 %v6405, %v6205
      %v6407 = vadd.f32 %v6406, %v6207
      %6408 = vadd.xlane.f32.xlu0 %v6407
      %v6409 = vpop.xlane.xlu0 %6408
      %v6410 = vadd.f32 %v6209, %v6211
      %v6411 = vadd.f32 %v6410, %v6213
      %v6412 = vadd.f32 %v6411, %v6215
      %6413 = vadd.xlane.f32.xlu0 %v6412
      %v6414 = vpop.xlane.xlu0 %6413
      %v6415 = vadd.f32 %v6217, %v6219
      %v6416 = vadd.f32 %v6415, %v6221
      %v6417 = vadd.f32 %v6416, %v6223
      %6418 = vadd.xlane.f32.xlu0 %v6417
      %v6419 = vpop.xlane.xlu0 %6418
      %v6420 = vadd.f32 %v6225, %v6227
      %v6421 = vadd.f32 %v6420, %v6229
      %v6422 = vadd.f32 %v6421, %v6231
      %6423 = vadd.xlane.f32.xlu0 %v6422
      %v6424 = vpop.xlane.xlu0 %6423
      %v6425 = vadd.f32 %v6233, %v6235
      %v6426 = vadd.f32 %v6425, %v6237
      %v6427 = vadd.f32 %v6426, %v6239
      %6428 = vadd.xlane.f32.xlu0 %v6427
      %v6429 = vpop.xlane.xlu0 %6428
      %v6430 = vadd.f32 %v6241, %v6243
      %v6431 = vadd.f32 %v6430, %v6245
      %v6432 = vadd.f32 %v6431, %v6247
      %6433 = vadd.xlane.f32.xlu0 %v6432
      %v6434 = vpop.xlane.xlu0 %6433
      %v6435 = vadd.f32 %v6249, %v6251
      %v6436 = vadd.f32 %v6435, %v6253
      %v6437 = vadd.f32 %v6436, %v6255
      %6438 = vadd.xlane.f32.xlu0 %v6437
      %v6439 = vpop.xlane.xlu0 %6438
      %v6440 = vadd.f32 %v6257, %v6259
      %v6441 = vadd.f32 %v6440, %v6261
      %v6442 = vadd.f32 %v6441, %v6263
      %6443 = vadd.xlane.f32.xlu0 %v6442
      %v6444 = vpop.xlane.xlu0 %6443
      %v6445 = vadd.f32 %v6265, %v6267
      %v6446 = vadd.f32 %v6445, %v6269
      %v6447 = vadd.f32 %v6446, %v6271
      %6448 = vadd.xlane.f32.xlu0 %v6447
      %v6449 = vpop.xlane.xlu0 %6448
      %v6450 = vadd.f32 %v6273, %v6275
      %v6451 = vadd.f32 %v6450, %v6277
      %v6452 = vadd.f32 %v6451, %v6279
      %6453 = vadd.xlane.f32.xlu0 %v6452
      %v6454 = vpop.xlane.xlu0 %6453
      %v6455 = vadd.f32 %v6281, %v6283
      %v6456 = vadd.f32 %v6455, %v6285
      %v6457 = vadd.f32 %v6456, %v6287
      %6458 = vadd.xlane.f32.xlu0 %v6457
      %v6459 = vpop.xlane.xlu0 %6458
      %v6460 = vadd.f32 %v6289, %v6291
      %v6461 = vadd.f32 %v6460, %v6293
      %v6462 = vadd.f32 %v6461, %v6295
      %6463 = vadd.xlane.f32.xlu0 %v6462
      %v6464 = vpop.xlane.xlu0 %6463
      %v6465 = vadd.f32 %v6297, %v6299
      %v6466 = vadd.f32 %v6465, %v6301
      %v6467 = vadd.f32 %v6466, %v6303
      %6468 = vadd.xlane.f32.xlu0 %v6467
      %v6469 = vpop.xlane.xlu0 %6468
      %v6470 = vadd.f32 %v6305, %v6307
      %v6471 = vadd.f32 %v6470, %v6309
      %v6472 = vadd.f32 %v6471, %v6311
      %6473 = vadd.xlane.f32.xlu0 %v6472
      %v6474 = vpop.xlane.xlu0 %6473
      %v6475 = vadd.f32 %v6313, %v6315
      %v6476 = vadd.f32 %v6475, %v6317
      %v6477 = vadd.f32 %v6476, %v6319
      %6478 = vadd.xlane.f32.xlu0 %v6477
      %v6479 = vpop.xlane.xlu0 %6478
      %v6480 = vadd.f32 %v5744, %v6324
      %v6481 = vadd.f32 %v5745, %v6329
      %v6482 = vadd.f32 %v5746, %v6334
      %v6483 = vadd.f32 %v5747, %v6339
      %v6484 = vadd.f32 %v5748, %v6344
      %v6485 = vadd.f32 %v5749, %v6349
      %v6486 = vadd.f32 %v5750, %v6354
      %v6487 = vadd.f32 %v5751, %v6359
      %v6488 = vadd.f32 %v5752, %v6364
      %v6489 = vadd.f32 %v5753, %v6369
      %v6490 = vadd.f32 %v5754, %v6374
      %v6491 = vadd.f32 %v5755, %v6379
      %v6492 = vadd.f32 %v5756, %v6384
      %v6493 = vadd.f32 %v5757, %v6389
      %v6494 = vadd.f32 %v5758, %v6394
      %v6495 = vadd.f32 %v5759, %v6399
      %v6496 = vadd.f32 %v5760, %v6404
      %v6497 = vadd.f32 %v5761, %v6409
      %v6498 = vadd.f32 %v5762, %v6414
      %v6499 = vadd.f32 %v5763, %v6419
      %v6500 = vadd.f32 %v5764, %v6424
      %v6501 = vadd.f32 %v5765, %v6429
      %v6502 = vadd.f32 %v5766, %v6434
      %v6503 = vadd.f32 %v5767, %v6439
      %v6504 = vadd.f32 %v5768, %v6444
      %v6505 = vadd.f32 %v5769, %v6449
      %v6506 = vadd.f32 %v5770, %v6454
      %v6507 = vadd.f32 %v5771, %v6459
      %v6508 = vadd.f32 %v5772, %v6464
      %v6509 = vadd.f32 %v5773, %v6469
      %v6510 = vadd.f32 %v5774, %v6474
      %v6511 = vadd.f32 %v5775, %v6479
      %vm6512 = vcmask 7168
      %6513 = vst.msk [vmem:[#allocation3] sm:$0xff] %vm6512, %v6480
      %6514 = vst.msk [vmem:[#allocation3 + $0x8] sm:$0xff] %vm6512, %v6481
      %6515 = vst.msk [vmem:[#allocation3 + $0x10] sm:$0xff] %vm6512, %v6482
      %6516 = vst.msk [vmem:[#allocation3 + $0x18] sm:$0xff] %vm6512, %v6483
      %6517 = vst.msk [vmem:[#allocation3 + $0x20] sm:$0xff] %vm6512, %v6484
      %6518 = vst.msk [vmem:[#allocation3 + $0x28] sm:$0xff] %vm6512, %v6485
      %6519 = vst.msk [vmem:[#allocation3 + $0x30] sm:$0xff] %vm6512, %v6486
      %6520 = vst.msk [vmem:[#allocation3 + $0x38] sm:$0xff] %vm6512, %v6487
      %6521 = vst.msk [vmem:[#allocation3 + $0x40] sm:$0xff] %vm6512, %v6488
      %6522 = vst.msk [vmem:[#allocation3 + $0x48] sm:$0xff] %vm6512, %v6489
      %6523 = vst.msk [vmem:[#allocation3 + $0x50] sm:$0xff] %vm6512, %v6490
      %6524 = vst.msk [vmem:[#allocation3 + $0x58] sm:$0xff] %vm6512, %v6491
      %6525 = vst.msk [vmem:[#allocation3 + $0x60] sm:$0xff] %vm6512, %v6492
      %6526 = vst.msk [vmem:[#allocation3 + $0x68] sm:$0xff] %vm6512, %v6493
      %6527 = vst.msk [vmem:[#allocation3 + $0x70] sm:$0xff] %vm6512, %v6494
      %6528 = vst.msk [vmem:[#allocation3 + $0x78] sm:$0xff] %vm6512, %v6495
      %6529 = vst.msk [vmem:[#allocation3 + $0x80] sm:$0xff] %vm6512, %v6496
      %6530 = vst.msk [vmem:[#allocation3 + $0x88] sm:$0xff] %vm6512, %v6497
      %6531 = vst.msk [vmem:[#allocation3 + $0x90] sm:$0xff] %vm6512, %v6498
      %6532 = vst.msk [vmem:[#allocation3 + $0x98] sm:$0xff] %vm6512, %v6499
      %6533 = vst.msk [vmem:[#allocation3 + $0xa0] sm:$0xff] %vm6512, %v6500
      %6534 = vst.msk [vmem:[#allocation3 + $0xa8] sm:$0xff] %vm6512, %v6501
      %6535 = vst.msk [vmem:[#allocation3 + $0xb0] sm:$0xff] %vm6512, %v6502
      %6536 = vst.msk [vmem:[#allocation3 + $0xb8] sm:$0xff] %vm6512, %v6503
      %6537 = vst.msk [vmem:[#allocation3 + $0xc0] sm:$0xff] %vm6512, %v6504
      %6538 = vst.msk [vmem:[#allocation3 + $0xc8] sm:$0xff] %vm6512, %v6505
      %6539 = vst.msk [vmem:[#allocation3 + $0xd0] sm:$0xff] %vm6512, %v6506
      %6540 = vst.msk [vmem:[#allocation3 + $0xd8] sm:$0xff] %vm6512, %v6507
      %6541 = vst.msk [vmem:[#allocation3 + $0xe0] sm:$0xff] %vm6512, %v6508
      %6542 = vst.msk [vmem:[#allocation3 + $0xe8] sm:$0xff] %vm6512, %v6509
      %6543 = vst.msk [vmem:[#allocation3 + $0xf0] sm:$0xff] %vm6512, %v6510
      %6544 = vst.msk [vmem:[#allocation3 + $0xf8] sm:$0xff] %vm6512, %v6511
      %v6545 = vld [vmem:[#allocation4] sm:$0xff]
      %v6546 = vld [vmem:[#allocation4 + $0x8] sm:$0xff]
      %v6547 = vld [vmem:[#allocation4 + $0x10] sm:$0xff]
      %v6548 = vld [vmem:[#allocation4 + $0x18] sm:$0xff]
      %v6549 = vld [vmem:[#allocation4 + $0x20] sm:$0xff]
      %v6550 = vld [vmem:[#allocation4 + $0x28] sm:$0xff]
      %v6551 = vld [vmem:[#allocation4 + $0x30] sm:$0xff]
      %v6552 = vld [vmem:[#allocation4 + $0x38] sm:$0xff]
      %v6553 = vld [vmem:[#allocation4 + $0x40] sm:$0xff]
      %v6554 = vld [vmem:[#allocation4 + $0x48] sm:$0xff]
      %v6555 = vld [vmem:[#allocation4 + $0x50] sm:$0xff]
      %v6556 = vld [vmem:[#allocation4 + $0x58] sm:$0xff]
      %v6557 = vld [vmem:[#allocation4 + $0x60] sm:$0xff]
      %v6558 = vld [vmem:[#allocation4 + $0x68] sm:$0xff]
      %v6559 = vld [vmem:[#allocation4 + $0x70] sm:$0xff]
      %v6560 = vld [vmem:[#allocation4 + $0x78] sm:$0xff]
      %v6561 = vld [vmem:[#allocation4 + $0x80] sm:$0xff]
      %v6562 = vld [vmem:[#allocation4 + $0x88] sm:$0xff]
      %v6563 = vld [vmem:[#allocation4 + $0x90] sm:$0xff]
      %v6564 = vld [vmem:[#allocation4 + $0x98] sm:$0xff]
      %v6565 = vld [vmem:[#allocation4 + $0xa0] sm:$0xff]
      %v6566 = vld [vmem:[#allocation4 + $0xa8] sm:$0xff]
      %v6567 = vld [vmem:[#allocation4 + $0xb0] sm:$0xff]
      %v6568 = vld [vmem:[#allocation4 + $0xb8] sm:$0xff]
      %v6569 = vld [vmem:[#allocation4 + $0xc0] sm:$0xff]
      %v6570 = vld [vmem:[#allocation4 + $0xc8] sm:$0xff]
      %v6571 = vld [vmem:[#allocation4 + $0xd0] sm:$0xff]
      %v6572 = vld [vmem:[#allocation4 + $0xd8] sm:$0xff]
      %v6573 = vld [vmem:[#allocation4 + $0xe0] sm:$0xff]
      %v6574 = vld [vmem:[#allocation4 + $0xe8] sm:$0xff]
      %v6575 = vld [vmem:[#allocation4 + $0xf0] sm:$0xff]
      %v6576 = vld [vmem:[#allocation4 + $0xf8] sm:$0xff]
      %v6577 = vsel %vm4730, %v5264, 0.0
      %v6578 = vsel %vm4731, %v5265, 0.0
      %v6579 = vsel %vm4732, %v5266, 0.0
      %v6580 = vsel %vm4733, %v5267, 0.0
      %v6581 = vsel %vm4734, %v5268, 0.0
      %v6582 = vsel %vm4735, %v5269, 0.0
      %v6583 = vsel %vm4736, %v5270, 0.0
      %v6584 = vsel %vm4737, %v5271, 0.0
      %v6585 = vsel %vm4738, %v5272, 0.0
      %v6586 = vsel %vm4739, %v5273, 0.0
      %v6587 = vsel %vm4740, %v5274, 0.0
      %v6588 = vsel %vm4741, %v5275, 0.0
      %v6589 = vsel %vm4742, %v5276, 0.0
      %v6590 = vsel %vm4743, %v5277, 0.0
      %v6591 = vsel %vm4744, %v5278, 0.0
      %v6592 = vsel %vm4745, %v5279, 0.0
      %v6593 = vsel %vm4746, %v5280, 0.0
      %v6594 = vsel %vm4747, %v5281, 0.0
      %v6595 = vsel %vm4748, %v5282, 0.0
      %v6596 = vsel %vm4749, %v5283, 0.0
      %v6597 = vsel %vm4750, %v5284, 0.0
      %v6598 = vsel %vm4751, %v5285, 0.0
      %v6599 = vsel %vm4752, %v5286, 0.0
      %v6600 = vsel %vm4753, %v5287, 0.0
      %v6601 = vsel %vm4754, %v5288, 0.0
      %v6602 = vsel %vm4755, %v5289, 0.0
      %v6603 = vsel %vm4756, %v5290, 0.0
      %v6604 = vsel %vm4757, %v5291, 0.0
      %v6605 = vsel %vm4758, %v5292, 0.0
      %v6606 = vsel %vm4759, %v5293, 0.0
      %v6607 = vsel %vm4760, %v5294, 0.0
      %v6608 = vsel %vm4761, %v5295, 0.0
      %v6609 = vsel %vm4762, %v5296, 0.0
      %v6610 = vsel %vm4763, %v5297, 0.0
      %v6611 = vsel %vm4764, %v5298, 0.0
      %v6612 = vsel %vm4765, %v5299, 0.0
      %v6613 = vsel %vm4766, %v5300, 0.0
      %v6614 = vsel %vm4767, %v5301, 0.0
      %v6615 = vsel %vm4768, %v5302, 0.0
      %v6616 = vsel %vm4769, %v5303, 0.0
      %v6617 = vsel %vm4770, %v5304, 0.0
      %v6618 = vsel %vm4771, %v5305, 0.0
      %v6619 = vsel %vm4772, %v5306, 0.0
      %v6620 = vsel %vm4773, %v5307, 0.0
      %v6621 = vsel %vm4774, %v5308, 0.0
      %v6622 = vsel %vm4775, %v5309, 0.0
      %v6623 = vsel %vm4776, %v5310, 0.0
      %v6624 = vsel %vm4777, %v5311, 0.0
      %v6625 = vsel %vm4778, %v5312, 0.0
      %v6626 = vsel %vm4779, %v5313, 0.0
      %v6627 = vsel %vm4780, %v5314, 0.0
      %v6628 = vsel %vm4781, %v5315, 0.0
      %v6629 = vsel %vm4782, %v5316, 0.0
      %v6630 = vsel %vm4783, %v5317, 0.0
      %v6631 = vsel %vm4784, %v5318, 0.0
      %v6632 = vsel %vm4785, %v5319, 0.0
      %v6633 = vsel %vm4786, %v5320, 0.0
      %v6634 = vsel %vm4787, %v5321, 0.0
      %v6635 = vsel %vm4788, %v5322, 0.0
      %v6636 = vsel %vm4789, %v5323, 0.0
      %v6637 = vsel %vm4790, %v5324, 0.0
      %v6638 = vsel %vm4791, %v5325, 0.0
      %v6639 = vsel %vm4792, %v5326, 0.0
      %v6640 = vsel %vm4793, %v5327, 0.0
      %v6641 = vsel %vm4794, %v5328, 0.0
      %v6642 = vsel %vm4795, %v5329, 0.0
      %v6643 = vsel %vm4796, %v5330, 0.0
      %v6644 = vsel %vm4797, %v5331, 0.0
      %v6645 = vsel %vm4798, %v5332, 0.0
      %v6646 = vsel %vm4799, %v5333, 0.0
      %v6647 = vsel %vm4800, %v5334, 0.0
      %v6648 = vsel %vm4801, %v5335, 0.0
      %v6649 = vsel %vm4802, %v5336, 0.0
      %v6650 = vsel %vm4803, %v5337, 0.0
      %v6651 = vsel %vm4804, %v5338, 0.0
      %v6652 = vsel %vm4805, %v5339, 0.0
      %v6653 = vsel %vm4806, %v5340, 0.0
      %v6654 = vsel %vm4807, %v5341, 0.0
      %v6655 = vsel %vm4808, %v5342, 0.0
      %v6656 = vsel %vm4809, %v5343, 0.0
      %v6657 = vsel %vm4810, %v5344, 0.0
      %v6658 = vsel %vm4811, %v5345, 0.0
      %v6659 = vsel %vm4812, %v5346, 0.0
      %v6660 = vsel %vm4813, %v5347, 0.0
      %v6661 = vsel %vm4814, %v5348, 0.0
      %v6662 = vsel %vm4815, %v5349, 0.0
      %v6663 = vsel %vm4816, %v5350, 0.0
      %v6664 = vsel %vm4817, %v5351, 0.0
      %v6665 = vsel %vm4818, %v5352, 0.0
      %v6666 = vsel %vm4819, %v5353, 0.0
      %v6667 = vsel %vm4820, %v5354, 0.0
      %v6668 = vsel %vm4821, %v5355, 0.0
      %v6669 = vsel %vm4822, %v5356, 0.0
      %v6670 = vsel %vm4823, %v5357, 0.0
      %v6671 = vsel %vm4824, %v5358, 0.0
      %v6672 = vsel %vm4825, %v5359, 0.0
      %v6673 = vsel %vm4826, %v5360, 0.0
      %v6674 = vsel %vm4827, %v5361, 0.0
      %v6675 = vsel %vm4828, %v5362, 0.0
      %v6676 = vsel %vm4829, %v5363, 0.0
      %v6677 = vsel %vm4830, %v5364, 0.0
      %v6678 = vsel %vm4831, %v5365, 0.0
      %v6679 = vsel %vm4832, %v5366, 0.0
      %v6680 = vsel %vm4833, %v5367, 0.0
      %v6681 = vsel %vm4834, %v5368, 0.0
      %v6682 = vsel %vm4835, %v5369, 0.0
      %v6683 = vsel %vm4836, %v5370, 0.0
      %v6684 = vsel %vm4837, %v5371, 0.0
      %v6685 = vsel %vm4838, %v5372, 0.0
      %v6686 = vsel %vm4839, %v5373, 0.0
      %v6687 = vsel %vm4840, %v5374, 0.0
      %v6688 = vsel %vm4841, %v5375, 0.0
      %v6689 = vsel %vm4842, %v5376, 0.0
      %v6690 = vsel %vm4843, %v5377, 0.0
      %v6691 = vsel %vm4844, %v5378, 0.0
      %v6692 = vsel %vm4845, %v5379, 0.0
      %v6693 = vsel %vm4846, %v5380, 0.0
      %v6694 = vsel %vm4847, %v5381, 0.0
      %v6695 = vsel %vm4848, %v5382, 0.0
      %v6696 = vsel %vm4849, %v5383, 0.0
      %v6697 = vsel %vm4850, %v5384, 0.0
      %v6698 = vsel %vm4851, %v5385, 0.0
      %v6699 = vsel %vm4852, %v5386, 0.0
      %v6700 = vsel %vm4853, %v5387, 0.0
      %v6701 = vsel %vm4854, %v5388, 0.0
      %v6702 = vsel %vm4855, %v5389, 0.0
      %v6703 = vsel %vm4856, %v5390, 0.0
      %v6704 = vsel %vm4857, %v5391, 0.0
      %v6705 = vadd.f32 %v6577, %v6578
      %v6706 = vadd.f32 %v6705, %v6579
      %v6707 = vadd.f32 %v6706, %v6580
      %6708 = vadd.xlane.f32.xlu0 %v6707
      %v6709 = vpop.xlane.xlu0 %6708
      %v6710 = vadd.f32 %v6581, %v6582
      %v6711 = vadd.f32 %v6710, %v6583
      %v6712 = vadd.f32 %v6711, %v6584
      %6713 = vadd.xlane.f32.xlu0 %v6712
      %v6714 = vpop.xlane.xlu0 %6713
      %v6715 = vadd.f32 %v6585, %v6586
      %v6716 = vadd.f32 %v6715, %v6587
      %v6717 = vadd.f32 %v6716, %v6588
      %6718 = vadd.xlane.f32.xlu0 %v6717
      %v6719 = vpop.xlane.xlu0 %6718
      %v6720 = vadd.f32 %v6589, %v6590
      %v6721 = vadd.f32 %v6720, %v6591
      %v6722 = vadd.f32 %v6721, %v6592
      %6723 = vadd.xlane.f32.xlu0 %v6722
      %v6724 = vpop.xlane.xlu0 %6723
      %v6725 = vadd.f32 %v6593, %v6594
      %v6726 = vadd.f32 %v6725, %v6595
      %v6727 = vadd.f32 %v6726, %v6596
      %6728 = vadd.xlane.f32.xlu0 %v6727
      %v6729 = vpop.xlane.xlu0 %6728
      %v6730 = vadd.f32 %v6597, %v6598
      %v6731 = vadd.f32 %v6730, %v6599
      %v6732 = vadd.f32 %v6731, %v6600
      %6733 = vadd.xlane.f32.xlu0 %v6732
      %v6734 = vpop.xlane.xlu0 %6733
      %v6735 = vadd.f32 %v6601, %v6602
      %v6736 = vadd.f32 %v6735, %v6603
      %v6737 = vadd.f32 %v6736, %v6604
      %6738 = vadd.xlane.f32.xlu0 %v6737
      %v6739 = vpop.xlane.xlu0 %6738
      %v6740 = vadd.f32 %v6605, %v6606
      %v6741 = vadd.f32 %v6740, %v6607
      %v6742 = vadd.f32 %v6741, %v6608
      %6743 = vadd.xlane.f32.xlu0 %v6742
      %v6744 = vpop.xlane.xlu0 %6743
      %v6745 = vadd.f32 %v6609, %v6610
      %v6746 = vadd.f32 %v6745, %v6611
      %v6747 = vadd.f32 %v6746, %v6612
      %6748 = vadd.xlane.f32.xlu0 %v6747
      %v6749 = vpop.xlane.xlu0 %6748
      %v6750 = vadd.f32 %v6613, %v6614
      %v6751 = vadd.f32 %v6750, %v6615
      %v6752 = vadd.f32 %v6751, %v6616
      %6753 = vadd.xlane.f32.xlu0 %v6752
      %v6754 = vpop.xlane.xlu0 %6753
      %v6755 = vadd.f32 %v6617, %v6618
      %v6756 = vadd.f32 %v6755, %v6619
      %v6757 = vadd.f32 %v6756, %v6620
      %6758 = vadd.xlane.f32.xlu0 %v6757
      %v6759 = vpop.xlane.xlu0 %6758
      %v6760 = vadd.f32 %v6621, %v6622
      %v6761 = vadd.f32 %v6760, %v6623
      %v6762 = vadd.f32 %v6761, %v6624
      %6763 = vadd.xlane.f32.xlu0 %v6762
      %v6764 = vpop.xlane.xlu0 %6763
      %v6765 = vadd.f32 %v6625, %v6626
      %v6766 = vadd.f32 %v6765, %v6627
      %v6767 = vadd.f32 %v6766, %v6628
      %6768 = vadd.xlane.f32.xlu0 %v6767
      %v6769 = vpop.xlane.xlu0 %6768
      %v6770 = vadd.f32 %v6629, %v6630
      %v6771 = vadd.f32 %v6770, %v6631
      %v6772 = vadd.f32 %v6771, %v6632
      %6773 = vadd.xlane.f32.xlu0 %v6772
      %v6774 = vpop.xlane.xlu0 %6773
      %v6775 = vadd.f32 %v6633, %v6634
      %v6776 = vadd.f32 %v6775, %v6635
      %v6777 = vadd.f32 %v6776, %v6636
      %6778 = vadd.xlane.f32.xlu0 %v6777
      %v6779 = vpop.xlane.xlu0 %6778
      %v6780 = vadd.f32 %v6637, %v6638
      %v6781 = vadd.f32 %v6780, %v6639
      %v6782 = vadd.f32 %v6781, %v6640
      %6783 = vadd.xlane.f32.xlu0 %v6782
      %v6784 = vpop.xlane.xlu0 %6783
      %v6785 = vadd.f32 %v6641, %v6642
      %v6786 = vadd.f32 %v6785, %v6643
      %v6787 = vadd.f32 %v6786, %v6644
      %6788 = vadd.xlane.f32.xlu0 %v6787
      %v6789 = vpop.xlane.xlu0 %6788
      %v6790 = vadd.f32 %v6645, %v6646
      %v6791 = vadd.f32 %v6790, %v6647
      %v6792 = vadd.f32 %v6791, %v6648
      %6793 = vadd.xlane.f32.xlu0 %v6792
      %v6794 = vpop.xlane.xlu0 %6793
      %v6795 = vadd.f32 %v6649, %v6650
      %v6796 = vadd.f32 %v6795, %v6651
      %v6797 = vadd.f32 %v6796, %v6652
      %6798 = vadd.xlane.f32.xlu0 %v6797
      %v6799 = vpop.xlane.xlu0 %6798
      %v6800 = vadd.f32 %v6653, %v6654
      %v6801 = vadd.f32 %v6800, %v6655
      %v6802 = vadd.f32 %v6801, %v6656
      %6803 = vadd.xlane.f32.xlu0 %v6802
      %v6804 = vpop.xlane.xlu0 %6803
      %v6805 = vadd.f32 %v6657, %v6658
      %v6806 = vadd.f32 %v6805, %v6659
      %v6807 = vadd.f32 %v6806, %v6660
      %6808 = vadd.xlane.f32.xlu0 %v6807
      %v6809 = vpop.xlane.xlu0 %6808
      %v6810 = vadd.f32 %v6661, %v6662
      %v6811 = vadd.f32 %v6810, %v6663
      %v6812 = vadd.f32 %v6811, %v6664
      %6813 = vadd.xlane.f32.xlu0 %v6812
      %v6814 = vpop.xlane.xlu0 %6813
      %v6815 = vadd.f32 %v6665, %v6666
      %v6816 = vadd.f32 %v6815, %v6667
      %v6817 = vadd.f32 %v6816, %v6668
      %6818 = vadd.xlane.f32.xlu0 %v6817
      %v6819 = vpop.xlane.xlu0 %6818
      %v6820 = vadd.f32 %v6669, %v6670
      %v6821 = vadd.f32 %v6820, %v6671
      %v6822 = vadd.f32 %v6821, %v6672
      %6823 = vadd.xlane.f32.xlu0 %v6822
      %v6824 = vpop.xlane.xlu0 %6823
      %v6825 = vadd.f32 %v6673, %v6674
      %v6826 = vadd.f32 %v6825, %v6675
      %v6827 = vadd.f32 %v6826, %v6676
      %6828 = vadd.xlane.f32.xlu0 %v6827
      %v6829 = vpop.xlane.xlu0 %6828
      %v6830 = vadd.f32 %v6677, %v6678
      %v6831 = vadd.f32 %v6830, %v6679
      %v6832 = vadd.f32 %v6831, %v6680
      %6833 = vadd.xlane.f32.xlu0 %v6832
      %v6834 = vpop.xlane.xlu0 %6833
      %v6835 = vadd.f32 %v6681, %v6682
      %v6836 = vadd.f32 %v6835, %v6683
      %v6837 = vadd.f32 %v6836, %v6684
      %6838 = vadd.xlane.f32.xlu0 %v6837
      %v6839 = vpop.xlane.xlu0 %6838
      %v6840 = vadd.f32 %v6685, %v6686
      %v6841 = vadd.f32 %v6840, %v6687
      %v6842 = vadd.f32 %v6841, %v6688
      %6843 = vadd.xlane.f32.xlu0 %v6842
      %v6844 = vpop.xlane.xlu0 %6843
      %v6845 = vadd.f32 %v6689, %v6690
      %v6846 = vadd.f32 %v6845, %v6691
      %v6847 = vadd.f32 %v6846, %v6692
      %6848 = vadd.xlane.f32.xlu0 %v6847
      %v6849 = vpop.xlane.xlu0 %6848
      %v6850 = vadd.f32 %v6693, %v6694
      %v6851 = vadd.f32 %v6850, %v6695
      %v6852 = vadd.f32 %v6851, %v6696
      %6853 = vadd.xlane.f32.xlu0 %v6852
      %v6854 = vpop.xlane.xlu0 %6853
      %v6855 = vadd.f32 %v6697, %v6698
      %v6856 = vadd.f32 %v6855, %v6699
      %v6857 = vadd.f32 %v6856, %v6700
      %6858 = vadd.xlane.f32.xlu0 %v6857
      %v6859 = vpop.xlane.xlu0 %6858
      %v6860 = vadd.f32 %v6701, %v6702
      %v6861 = vadd.f32 %v6860, %v6703
      %v6862 = vadd.f32 %v6861, %v6704
      %6863 = vadd.xlane.f32.xlu0 %v6862
      %v6864 = vpop.xlane.xlu0 %6863
      %v6865 = vadd.f32 %v6545, %v6709
      %v6866 = vadd.f32 %v6546, %v6714
      %v6867 = vadd.f32 %v6547, %v6719
      %v6868 = vadd.f32 %v6548, %v6724
      %v6869 = vadd.f32 %v6549, %v6729
      %v6870 = vadd.f32 %v6550, %v6734
      %v6871 = vadd.f32 %v6551, %v6739
      %v6872 = vadd.f32 %v6552, %v6744
      %v6873 = vadd.f32 %v6553, %v6749
      %v6874 = vadd.f32 %v6554, %v6754
      %v6875 = vadd.f32 %v6555, %v6759
      %v6876 = vadd.f32 %v6556, %v6764
      %v6877 = vadd.f32 %v6557, %v6769
      %v6878 = vadd.f32 %v6558, %v6774
      %v6879 = vadd.f32 %v6559, %v6779
      %v6880 = vadd.f32 %v6560, %v6784
      %v6881 = vadd.f32 %v6561, %v6789
      %v6882 = vadd.f32 %v6562, %v6794
      %v6883 = vadd.f32 %v6563, %v6799
      %v6884 = vadd.f32 %v6564, %v6804
      %v6885 = vadd.f32 %v6565, %v6809
      %v6886 = vadd.f32 %v6566, %v6814
      %v6887 = vadd.f32 %v6567, %v6819
      %v6888 = vadd.f32 %v6568, %v6824
      %v6889 = vadd.f32 %v6569, %v6829
      %v6890 = vadd.f32 %v6570, %v6834
      %v6891 = vadd.f32 %v6571, %v6839
      %v6892 = vadd.f32 %v6572, %v6844
      %v6893 = vadd.f32 %v6573, %v6849
      %v6894 = vadd.f32 %v6574, %v6854
      %v6895 = vadd.f32 %v6575, %v6859
      %v6896 = vadd.f32 %v6576, %v6864
      %6897 = vst.msk [vmem:[#allocation4] sm:$0xff] %vm6512, %v6865
      %6898 = vst.msk [vmem:[#allocation4 + $0x8] sm:$0xff] %vm6512, %v6866
      %6899 = vst.msk [vmem:[#allocation4 + $0x10] sm:$0xff] %vm6512, %v6867
      %6900 = vst.msk [vmem:[#allocation4 + $0x18] sm:$0xff] %vm6512, %v6868
      %6901 = vst.msk [vmem:[#allocation4 + $0x20] sm:$0xff] %vm6512, %v6869
      %6902 = vst.msk [vmem:[#allocation4 + $0x28] sm:$0xff] %vm6512, %v6870
      %6903 = vst.msk [vmem:[#allocation4 + $0x30] sm:$0xff] %vm6512, %v6871
      %6904 = vst.msk [vmem:[#allocation4 + $0x38] sm:$0xff] %vm6512, %v6872
      %6905 = vst.msk [vmem:[#allocation4 + $0x40] sm:$0xff] %vm6512, %v6873
      %6906 = vst.msk [vmem:[#allocation4 + $0x48] sm:$0xff] %vm6512, %v6874
      %6907 = vst.msk [vmem:[#allocation4 + $0x50] sm:$0xff] %vm6512, %v6875
      %6908 = vst.msk [vmem:[#allocation4 + $0x58] sm:$0xff] %vm6512, %v6876
      %6909 = vst.msk [vmem:[#allocation4 + $0x60] sm:$0xff] %vm6512, %v6877
      %6910 = vst.msk [vmem:[#allocation4 + $0x68] sm:$0xff] %vm6512, %v6878
      %6911 = vst.msk [vmem:[#allocation4 + $0x70] sm:$0xff] %vm6512, %v6879
      %6912 = vst.msk [vmem:[#allocation4 + $0x78] sm:$0xff] %vm6512, %v6880
      %6913 = vst.msk [vmem:[#allocation4 + $0x80] sm:$0xff] %vm6512, %v6881
      %6914 = vst.msk [vmem:[#allocation4 + $0x88] sm:$0xff] %vm6512, %v6882
      %6915 = vst.msk [vmem:[#allocation4 + $0x90] sm:$0xff] %vm6512, %v6883
      %6916 = vst.msk [vmem:[#allocation4 + $0x98] sm:$0xff] %vm6512, %v6884
      %6917 = vst.msk [vmem:[#allocation4 + $0xa0] sm:$0xff] %vm6512, %v6885
      %6918 = vst.msk [vmem:[#allocation4 + $0xa8] sm:$0xff] %vm6512, %v6886
      %6919 = vst.msk [vmem:[#allocation4 + $0xb0] sm:$0xff] %vm6512, %v6887
      %6920 = vst.msk [vmem:[#allocation4 + $0xb8] sm:$0xff] %vm6512, %v6888
      %6921 = vst.msk [vmem:[#allocation4 + $0xc0] sm:$0xff] %vm6512, %v6889
      %6922 = vst.msk [vmem:[#allocation4 + $0xc8] sm:$0xff] %vm6512, %v6890
      %6923 = vst.msk [vmem:[#allocation4 + $0xd0] sm:$0xff] %vm6512, %v6891
      %6924 = vst.msk [vmem:[#allocation4 + $0xd8] sm:$0xff] %vm6512, %v6892
      %6925 = vst.msk [vmem:[#allocation4 + $0xe0] sm:$0xff] %vm6512, %v6893
      %6926 = vst.msk [vmem:[#allocation4 + $0xe8] sm:$0xff] %vm6512, %v6894
      %6927 = vst.msk [vmem:[#allocation4 + $0xf0] sm:$0xff] %vm6512, %v6895
      %6928 = vst.msk [vmem:[#allocation4 + $0xf8] sm:$0xff] %vm6512, %v6896
      %6929 = vst.msk [vmem:[#allocation2] sm:$0xff] %vm6512, %v5584
      %6930 = vst.msk [vmem:[#allocation2 + $0x8] sm:$0xff] %vm6512, %v5585
      %6931 = vst.msk [vmem:[#allocation2 + $0x10] sm:$0xff] %vm6512, %v5586
      %6932 = vst.msk [vmem:[#allocation2 + $0x18] sm:$0xff] %vm6512, %v5587
      %6933 = vst.msk [vmem:[#allocation2 + $0x20] sm:$0xff] %vm6512, %v5588
      %6934 = vst.msk [vmem:[#allocation2 + $0x28] sm:$0xff] %vm6512, %v5589
      %6935 = vst.msk [vmem:[#allocation2 + $0x30] sm:$0xff] %vm6512, %v5590
      %6936 = vst.msk [vmem:[#allocation2 + $0x38] sm:$0xff] %vm6512, %v5591
      %6937 = vst.msk [vmem:[#allocation2 + $0x40] sm:$0xff] %vm6512, %v5592
      %6938 = vst.msk [vmem:[#allocation2 + $0x48] sm:$0xff] %vm6512, %v5593
      %6939 = vst.msk [vmem:[#allocation2 + $0x50] sm:$0xff] %vm6512, %v5594
      %6940 = vst.msk [vmem:[#allocation2 + $0x58] sm:$0xff] %vm6512, %v5595
      %6941 = vst.msk [vmem:[#allocation2 + $0x60] sm:$0xff] %vm6512, %v5596
      %6942 = vst.msk [vmem:[#allocation2 + $0x68] sm:$0xff] %vm6512, %v5597
      %6943 = vst.msk [vmem:[#allocation2 + $0x70] sm:$0xff] %vm6512, %v5598
      %6944 = vst.msk [vmem:[#allocation2 + $0x78] sm:$0xff] %vm6512, %v5599
      %6945 = vst.msk [vmem:[#allocation2 + $0x80] sm:$0xff] %vm6512, %v5600
      %6946 = vst.msk [vmem:[#allocation2 + $0x88] sm:$0xff] %vm6512, %v5601
      %6947 = vst.msk [vmem:[#allocation2 + $0x90] sm:$0xff] %vm6512, %v5602
      %6948 = vst.msk [vmem:[#allocation2 + $0x98] sm:$0xff] %vm6512, %v5603
      %6949 = vst.msk [vmem:[#allocation2 + $0xa0] sm:$0xff] %vm6512, %v5604
      %6950 = vst.msk [vmem:[#allocation2 + $0xa8] sm:$0xff] %vm6512, %v5605
      %6951 = vst.msk [vmem:[#allocation2 + $0xb0] sm:$0xff] %vm6512, %v5606
      %6952 = vst.msk [vmem:[#allocation2 + $0xb8] sm:$0xff] %vm6512, %v5607
      %6953 = vst.msk [vmem:[#allocation2 + $0xc0] sm:$0xff] %vm6512, %v5608
      %6954 = vst.msk [vmem:[#allocation2 + $0xc8] sm:$0xff] %vm6512, %v5609
      %6955 = vst.msk [vmem:[#allocation2 + $0xd0] sm:$0xff] %vm6512, %v5610
      %6956 = vst.msk [vmem:[#allocation2 + $0xd8] sm:$0xff] %vm6512, %v5611
      %6957 = vst.msk [vmem:[#allocation2 + $0xe0] sm:$0xff] %vm6512, %v5612
      %6958 = vst.msk [vmem:[#allocation2 + $0xe8] sm:$0xff] %vm6512, %v5613
      %6959 = vst.msk [vmem:[#allocation2 + $0xf0] sm:$0xff] %vm6512, %v5614
      %6960 = vst.msk [vmem:[#allocation2 + $0xf8] sm:$0xff] %vm6512, %v5615
      %p6961 = scmp.eq.s32.totalorder %s21, 1
      // Predicated region
      $region45: #{tpu_custom_call.1} parent=39 // pred_check
        %p6962 = pneg %p6961
      $region46: #{tpu_custom_call.1} parent=39 // pred_check_branch
        %6964 = sbr.rel (%p6962) target = $region48
      $region47: #{tpu_custom_call.1} parent=39 // pred_region
        %v6965 = vld [vmem:[#allocation2] sm:$0xff]
        %v6966 = vld [vmem:[#allocation2 + $0x8] sm:$0xff]
        %v6967 = vld [vmem:[#allocation2 + $0x10] sm:$0xff]
        %v6968 = vld [vmem:[#allocation2 + $0x18] sm:$0xff]
        %v6969 = vld [vmem:[#allocation2 + $0x20] sm:$0xff]
        %v6970 = vld [vmem:[#allocation2 + $0x28] sm:$0xff]
        %v6971 = vld [vmem:[#allocation2 + $0x30] sm:$0xff]
        %v6972 = vld [vmem:[#allocation2 + $0x38] sm:$0xff]
        %v6973 = vld [vmem:[#allocation2 + $0x40] sm:$0xff]
        %v6974 = vld [vmem:[#allocation2 + $0x48] sm:$0xff]
        %v6975 = vld [vmem:[#allocation2 + $0x50] sm:$0xff]
        %v6976 = vld [vmem:[#allocation2 + $0x58] sm:$0xff]
        %v6977 = vld [vmem:[#allocation2 + $0x60] sm:$0xff]
        %v6978 = vld [vmem:[#allocation2 + $0x68] sm:$0xff]
        %v6979 = vld [vmem:[#allocation2 + $0x70] sm:$0xff]
        %v6980 = vld [vmem:[#allocation2 + $0x78] sm:$0xff]
        %v6981 = vld [vmem:[#allocation2 + $0x80] sm:$0xff]
        %v6982 = vld [vmem:[#allocation2 + $0x88] sm:$0xff]
        %v6983 = vld [vmem:[#allocation2 + $0x90] sm:$0xff]
        %v6984 = vld [vmem:[#allocation2 + $0x98] sm:$0xff]
        %v6985 = vld [vmem:[#allocation2 + $0xa0] sm:$0xff]
        %v6986 = vld [vmem:[#allocation2 + $0xa8] sm:$0xff]
        %v6987 = vld [vmem:[#allocation2 + $0xb0] sm:$0xff]
        %v6988 = vld [vmem:[#allocation2 + $0xb8] sm:$0xff]
        %v6989 = vld [vmem:[#allocation2 + $0xc0] sm:$0xff]
        %v6990 = vld [vmem:[#allocation2 + $0xc8] sm:$0xff]
        %v6991 = vld [vmem:[#allocation2 + $0xd0] sm:$0xff]
        %v6992 = vld [vmem:[#allocation2 + $0xd8] sm:$0xff]
        %v6993 = vld [vmem:[#allocation2 + $0xe0] sm:$0xff]
        %v6994 = vld [vmem:[#allocation2 + $0xe8] sm:$0xff]
        %v6995 = vld [vmem:[#allocation2 + $0xf0] sm:$0xff]
        %v6996 = vld [vmem:[#allocation2 + $0xf8] sm:$0xff]
        %v6997 = vld [vmem:[#allocation3] sm:$0xff]
        %v6998 = vld [vmem:[#allocation3 + $0x8] sm:$0xff]
        %v6999 = vld [vmem:[#allocation3 + $0x10] sm:$0xff]
        %v7000 = vld [vmem:[#allocation3 + $0x18] sm:$0xff]
        %v7001 = vld [vmem:[#allocation3 + $0x20] sm:$0xff]
        %v7002 = vld [vmem:[#allocation3 + $0x28] sm:$0xff]
        %v7003 = vld [vmem:[#allocation3 + $0x30] sm:$0xff]
        %v7004 = vld [vmem:[#allocation3 + $0x38] sm:$0xff]
        %v7005 = vld [vmem:[#allocation3 + $0x40] sm:$0xff]
        %v7006 = vld [vmem:[#allocation3 + $0x48] sm:$0xff]
        %v7007 = vld [vmem:[#allocation3 + $0x50] sm:$0xff]
        %v7008 = vld [vmem:[#allocation3 + $0x58] sm:$0xff]
        %v7009 = vld [vmem:[#allocation3 + $0x60] sm:$0xff]
        %v7010 = vld [vmem:[#allocation3 + $0x68] sm:$0xff]
        %v7011 = vld [vmem:[#allocation3 + $0x70] sm:$0xff]
        %v7012 = vld [vmem:[#allocation3 + $0x78] sm:$0xff]
        %v7013 = vld [vmem:[#allocation3 + $0x80] sm:$0xff]
        %v7014 = vld [vmem:[#allocation3 + $0x88] sm:$0xff]
        %v7015 = vld [vmem:[#allocation3 + $0x90] sm:$0xff]
        %v7016 = vld [vmem:[#allocation3 + $0x98] sm:$0xff]
        %v7017 = vld [vmem:[#allocation3 + $0xa0] sm:$0xff]
        %v7018 = vld [vmem:[#allocation3 + $0xa8] sm:$0xff]
        %v7019 = vld [vmem:[#allocation3 + $0xb0] sm:$0xff]
        %v7020 = vld [vmem:[#allocation3 + $0xb8] sm:$0xff]
        %v7021 = vld [vmem:[#allocation3 + $0xc0] sm:$0xff]
        %v7022 = vld [vmem:[#allocation3 + $0xc8] sm:$0xff]
        %v7023 = vld [vmem:[#allocation3 + $0xd0] sm:$0xff]
        %v7024 = vld [vmem:[#allocation3 + $0xd8] sm:$0xff]
        %v7025 = vld [vmem:[#allocation3 + $0xe0] sm:$0xff]
        %v7026 = vld [vmem:[#allocation3 + $0xe8] sm:$0xff]
        %v7027 = vld [vmem:[#allocation3 + $0xf0] sm:$0xff]
        %v7028 = vld [vmem:[#allocation3 + $0xf8] sm:$0xff]
        %v7029 = vlog2.pop %v6997
        %v7030 = vmul.f32 %v7029, 0.6931472
        %v7031 = vlog2.pop %v6998
        %v7032 = vmul.f32 %v7031, 0.6931472
        %v7033 = vlog2.pop %v6999
        %v7034 = vmul.f32 %v7033, 0.6931472
        %v7035 = vlog2.pop %v7000
        %v7036 = vmul.f32 %v7035, 0.6931472
        %v7037 = vlog2.pop %v7001
        %v7038 = vmul.f32 %v7037, 0.6931472
        %v7039 = vlog2.pop %v7002
        %v7040 = vmul.f32 %v7039, 0.6931472
        %v7041 = vlog2.pop %v7003
        %v7042 = vmul.f32 %v7041, 0.6931472
        %v7043 = vlog2.pop %v7004
        %v7044 = vmul.f32 %v7043, 0.6931472
        %v7045 = vlog2.pop %v7005
        %v7046 = vmul.f32 %v7045, 0.6931472
        %v7047 = vlog2.pop %v7006
        %v7048 = vmul.f32 %v7047, 0.6931472
        %v7049 = vlog2.pop %v7007
        %v7050 = vmul.f32 %v7049, 0.6931472
        %v7051 = vlog2.pop %v7008
        %v7052 = vmul.f32 %v7051, 0.6931472
        %v7053 = vlog2.pop %v7009
        %v7054 = vmul.f32 %v7053, 0.6931472
        %v7055 = vlog2.pop %v7010
        %v7056 = vmul.f32 %v7055, 0.6931472
        %v7057 = vlog2.pop %v7011
        %v7058 = vmul.f32 %v7057, 0.6931472
        %v7059 = vlog2.pop %v7012
        %v7060 = vmul.f32 %v7059, 0.6931472
        %v7061 = vlog2.pop %v7013
        %v7062 = vmul.f32 %v7061, 0.6931472
        %v7063 = vlog2.pop %v7014
        %v7064 = vmul.f32 %v7063, 0.6931472
        %v7065 = vlog2.pop %v7015
        %v7066 = vmul.f32 %v7065, 0.6931472
        %v7067 = vlog2.pop %v7016
        %v7068 = vmul.f32 %v7067, 0.6931472
        %v7069 = vlog2.pop %v7017
        %v7070 = vmul.f32 %v7069, 0.6931472
        %v7071 = vlog2.pop %v7018
        %v7072 = vmul.f32 %v7071, 0.6931472
        %v7073 = vlog2.pop %v7019
        %v7074 = vmul.f32 %v7073, 0.6931472
        %v7075 = vlog2.pop %v7020
        %v7076 = vmul.f32 %v7075, 0.6931472
        %v7077 = vlog2.pop %v7021
        %v7078 = vmul.f32 %v7077, 0.6931472
        %v7079 = vlog2.pop %v7022
        %v7080 = vmul.f32 %v7079, 0.6931472
        %v7081 = vlog2.pop %v7023
        %v7082 = vmul.f32 %v7081, 0.6931472
        %v7083 = vlog2.pop %v7024
        %v7084 = vmul.f32 %v7083, 0.6931472
        %v7085 = vlog2.pop %v7025
        %v7086 = vmul.f32 %v7085, 0.6931472
        %v7087 = vlog2.pop %v7026
        %v7088 = vmul.f32 %v7087, 0.6931472
        %v7089 = vlog2.pop %v7027
        %v7090 = vmul.f32 %v7089, 0.6931472
        %v7091 = vlog2.pop %v7028
        %v7092 = vmul.f32 %v7091, 0.6931472
        %v7093 = vadd.f32 %v6965, %v7030
        %v7094 = vadd.f32 %v6966, %v7032
        %v7095 = vadd.f32 %v6967, %v7034
        %v7096 = vadd.f32 %v6968, %v7036
        %v7097 = vadd.f32 %v6969, %v7038
        %v7098 = vadd.f32 %v6970, %v7040
        %v7099 = vadd.f32 %v6971, %v7042
        %v7100 = vadd.f32 %v6972, %v7044
        %v7101 = vadd.f32 %v6973, %v7046
        %v7102 = vadd.f32 %v6974, %v7048
        %v7103 = vadd.f32 %v6975, %v7050
        %v7104 = vadd.f32 %v6976, %v7052
        %v7105 = vadd.f32 %v6977, %v7054
        %v7106 = vadd.f32 %v6978, %v7056
        %v7107 = vadd.f32 %v6979, %v7058
        %v7108 = vadd.f32 %v6980, %v7060
        %v7109 = vadd.f32 %v6981, %v7062
        %v7110 = vadd.f32 %v6982, %v7064
        %v7111 = vadd.f32 %v6983, %v7066
        %v7112 = vadd.f32 %v6984, %v7068
        %v7113 = vadd.f32 %v6985, %v7070
        %v7114 = vadd.f32 %v6986, %v7072
        %v7115 = vadd.f32 %v6987, %v7074
        %v7116 = vadd.f32 %v6988, %v7076
        %v7117 = vadd.f32 %v6989, %v7078
        %v7118 = vadd.f32 %v6990, %v7080
        %v7119 = vadd.f32 %v6991, %v7082
        %v7120 = vadd.f32 %v6992, %v7084
        %v7121 = vadd.f32 %v6993, %v7086
        %v7122 = vadd.f32 %v6994, %v7088
        %v7123 = vadd.f32 %v6995, %v7090
        %v7124 = vadd.f32 %v6996, %v7092
        %v7125 = vld [vmem:[#allocation4] sm:$0xff]
        %v7126 = vld [vmem:[#allocation4 + $0x8] sm:$0xff]
        %v7127 = vld [vmem:[#allocation4 + $0x10] sm:$0xff]
        %v7128 = vld [vmem:[#allocation4 + $0x18] sm:$0xff]
        %v7129 = vld [vmem:[#allocation4 + $0x20] sm:$0xff]
        %v7130 = vld [vmem:[#allocation4 + $0x28] sm:$0xff]
        %v7131 = vld [vmem:[#allocation4 + $0x30] sm:$0xff]
        %v7132 = vld [vmem:[#allocation4 + $0x38] sm:$0xff]
        %v7133 = vld [vmem:[#allocation4 + $0x40] sm:$0xff]
        %v7134 = vld [vmem:[#allocation4 + $0x48] sm:$0xff]
        %v7135 = vld [vmem:[#allocation4 + $0x50] sm:$0xff]
        %v7136 = vld [vmem:[#allocation4 + $0x58] sm:$0xff]
        %v7137 = vld [vmem:[#allocation4 + $0x60] sm:$0xff]
        %v7138 = vld [vmem:[#allocation4 + $0x68] sm:$0xff]
        %v7139 = vld [vmem:[#allocation4 + $0x70] sm:$0xff]
        %v7140 = vld [vmem:[#allocation4 + $0x78] sm:$0xff]
        %v7141 = vld [vmem:[#allocation4 + $0x80] sm:$0xff]
        %v7142 = vld [vmem:[#allocation4 + $0x88] sm:$0xff]
        %v7143 = vld [vmem:[#allocation4 + $0x90] sm:$0xff]
        %v7144 = vld [vmem:[#allocation4 + $0x98] sm:$0xff]
        %v7145 = vld [vmem:[#allocation4 + $0xa0] sm:$0xff]
        %v7146 = vld [vmem:[#allocation4 + $0xa8] sm:$0xff]
        %v7147 = vld [vmem:[#allocation4 + $0xb0] sm:$0xff]
        %v7148 = vld [vmem:[#allocation4 + $0xb8] sm:$0xff]
        %v7149 = vld [vmem:[#allocation4 + $0xc0] sm:$0xff]
        %v7150 = vld [vmem:[#allocation4 + $0xc8] sm:$0xff]
        %v7151 = vld [vmem:[#allocation4 + $0xd0] sm:$0xff]
        %v7152 = vld [vmem:[#allocation4 + $0xd8] sm:$0xff]
        %v7153 = vld [vmem:[#allocation4 + $0xe0] sm:$0xff]
        %v7154 = vld [vmem:[#allocation4 + $0xe8] sm:$0xff]
        %v7155 = vld [vmem:[#allocation4 + $0xf0] sm:$0xff]
        %v7156 = vld [vmem:[#allocation4 + $0xf8] sm:$0xff]
        %v7157 = vsub.f32 %v7093, %v7125
        %v7158 = vsub.f32 %v7094, %v7126
        %v7159 = vsub.f32 %v7095, %v7127
        %v7160 = vsub.f32 %v7096, %v7128
        %v7161 = vsub.f32 %v7097, %v7129
        %v7162 = vsub.f32 %v7098, %v7130
        %v7163 = vsub.f32 %v7099, %v7131
        %v7164 = vsub.f32 %v7100, %v7132
        %v7165 = vsub.f32 %v7101, %v7133
        %v7166 = vsub.f32 %v7102, %v7134
        %v7167 = vsub.f32 %v7103, %v7135
        %v7168 = vsub.f32 %v7104, %v7136
        %v7169 = vsub.f32 %v7105, %v7137
        %v7170 = vsub.f32 %v7106, %v7138
        %v7171 = vsub.f32 %v7107, %v7139
        %v7172 = vsub.f32 %v7108, %v7140
        %v7173 = vsub.f32 %v7109, %v7141
        %v7174 = vsub.f32 %v7110, %v7142
        %v7175 = vsub.f32 %v7111, %v7143
        %v7176 = vsub.f32 %v7112, %v7144
        %v7177 = vsub.f32 %v7113, %v7145
        %v7178 = vsub.f32 %v7114, %v7146
        %v7179 = vsub.f32 %v7115, %v7147
        %v7180 = vsub.f32 %v7116, %v7148
        %v7181 = vsub.f32 %v7117, %v7149
        %v7182 = vsub.f32 %v7118, %v7150
        %v7183 = vsub.f32 %v7119, %v7151
        %v7184 = vsub.f32 %v7120, %v7152
        %v7185 = vsub.f32 %v7121, %v7153
        %v7186 = vsub.f32 %v7122, %v7154
        %v7187 = vsub.f32 %v7123, %v7155
        %v7188 = vsub.f32 %v7124, %v7156
        %7189 = vst.msk [vmem:[%s314] sm:$0xff] %vm6512, %v7157
        %7190 = vst.msk [vmem:[%s314 + $0x8] sm:$0xff] %vm6512, %v7158
        %7191 = vst.msk [vmem:[%s314 + $0x10] sm:$0xff] %vm6512, %v7159
        %7192 = vst.msk [vmem:[%s314 + $0x18] sm:$0xff] %vm6512, %v7160
        %7193 = vst.msk [vmem:[%s314 + $0x20] sm:$0xff] %vm6512, %v7161
        %7194 = vst.msk [vmem:[%s314 + $0x28] sm:$0xff] %vm6512, %v7162
        %7195 = vst.msk [vmem:[%s314 + $0x30] sm:$0xff] %vm6512, %v7163
        %7196 = vst.msk [vmem:[%s314 + $0x38] sm:$0xff] %vm6512, %v7164
        %7197 = vst.msk [vmem:[%s314 + $0x40] sm:$0xff] %vm6512, %v7165
        %7198 = vst.msk [vmem:[%s314 + $0x48] sm:$0xff] %vm6512, %v7166
        %7199 = vst.msk [vmem:[%s314 + $0x50] sm:$0xff] %vm6512, %v7167
        %7200 = vst.msk [vmem:[%s314 + $0x58] sm:$0xff] %vm6512, %v7168
        %7201 = vst.msk [vmem:[%s314 + $0x60] sm:$0xff] %vm6512, %v7169
        %7202 = vst.msk [vmem:[%s314 + $0x68] sm:$0xff] %vm6512, %v7170
        %7203 = vst.msk [vmem:[%s314 + $0x70] sm:$0xff] %vm6512, %v7171
        %7204 = vst.msk [vmem:[%s314 + $0x78] sm:$0xff] %vm6512, %v7172
        %7205 = vst.msk [vmem:[%s314 + $0x80] sm:$0xff] %vm6512, %v7173
        %7206 = vst.msk [vmem:[%s314 + $0x88] sm:$0xff] %vm6512, %v7174
        %7207 = vst.msk [vmem:[%s314 + $0x90] sm:$0xff] %vm6512, %v7175
        %7208 = vst.msk [vmem:[%s314 + $0x98] sm:$0xff] %vm6512, %v7176
        %7209 = vst.msk [vmem:[%s314 + $0xa0] sm:$0xff] %vm6512, %v7177
        %7210 = vst.msk [vmem:[%s314 + $0xa8] sm:$0xff] %vm6512, %v7178
        %7211 = vst.msk [vmem:[%s314 + $0xb0] sm:$0xff] %vm6512, %v7179
        %7212 = vst.msk [vmem:[%s314 + $0xb8] sm:$0xff] %vm6512, %v7180
        %7213 = vst.msk [vmem:[%s314 + $0xc0] sm:$0xff] %vm6512, %v7181
        %7214 = vst.msk [vmem:[%s314 + $0xc8] sm:$0xff] %vm6512, %v7182
        %7215 = vst.msk [vmem:[%s314 + $0xd0] sm:$0xff] %vm6512, %v7183
        %7216 = vst.msk [vmem:[%s314 + $0xd8] sm:$0xff] %vm6512, %v7184
        %7217 = vst.msk [vmem:[%s314 + $0xe0] sm:$0xff] %vm6512, %v7185
        %7218 = vst.msk [vmem:[%s314 + $0xe8] sm:$0xff] %vm6512, %v7186
        %7219 = vst.msk [vmem:[%s314 + $0xf0] sm:$0xff] %vm6512, %v7187
        %7220 = vst.msk [vmem:[%s314 + $0xf8] sm:$0xff] %vm6512, %v7188
      $region48: #{tpu_custom_call.1} parent=39 // pred_fallthru
        _
      %s7221 = smul.u32 32, %s20
      %p7222 = scmp.lt.s32.totalorder %s7221, 63
      %s7223 = scalar_select %p7222, %s7221, 63
      %s7224 = smul.addr %s7223, 8
      %s7225 = scalar_lea.vmem %s5, %s7224
      // Predicated region
      $region49: #{tpu_custom_call.1} parent=39 // pred_check
        %p7226 = pneg %p176
      $region50: #{tpu_custom_call.1} parent=39 // pred_check_branch
        %7228 = sbr.rel (%p7226) target = $region52
      $region51: #{tpu_custom_call.1} parent=39 // pred_region
        %s7229 = smul.u32 32, %s20
      $region52: #{tpu_custom_call.1} parent=39 // pred_fallthru
        _
    $region40: #{tpu_custom_call.1} parent=5 // pred_fallthru
      _
    %p7230 = scmp.le.s32.totalorder 2, %s11
    // Predicated region
    $region53: #{tpu_custom_call.1} parent=5 // pred_check
      %p7231 = pneg %p7230
    $region54: #{tpu_custom_call.1} parent=5 // pred_check_branch
      %7233 = sbr.rel (%p7231) target = $region56
    $region55: #{tpu_custom_call.1} parent=5 // pred_region
      %s7234 = ssub.s32 %s11, 2
      // Predicated region
      $region57: #{tpu_custom_call.1} parent=55 // pred_check
        %p7235 = pneg %p182
      $region58: #{tpu_custom_call.1} parent=55 // pred_check_branch
        %7237 = sbr.rel (%p7235) target = $region60
      $region59: #{tpu_custom_call.1} parent=55 // pred_region
        %s7238 = smul.u32 32, %s22
        %p7239 = scmp.lt.s32.totalorder %s7238, 63
        %s7240 = scalar_select %p7239, %s7238, 63
        %s7241 = smul.addr %s7240, 8
        %s7242 = scalar_lea.vmem %s5, %s7241
      $region60: #{tpu_custom_call.1} parent=55 // pred_fallthru
        _
    $region56: #{tpu_custom_call.1} parent=5 // pred_fallthru
      _
  $region6: #{tpu_custom_call.1} parent=0 // loop_footer
    %s15 = sadd.s32 1, %s11
  $region7: #{tpu_custom_call.1} parent=0 // loop_footer_branch
    %10 = sbr.rel target = $region3
  $region8: #{tpu_custom_call.1} parent=0 // loop_exit
    _

</llo_original>
